<compile_context>
chip_gen: v7x
topology: tpu7x:2x2x1
jax: 0.10.0
libtpu: 0.0.40
codegen_flags: <defaults>
</compile_context>

<pallas_src>
import jax
import jax.numpy as jnp
from jax import lax
from jax.experimental import pallas as pl
from jax.experimental.pallas import tpu as pltpu

EPS = 1e-5      # PyTorch BatchNorm2d default eps
LANES = 128     # TPU lane width; channels padded up to this inside the kernel


def _resblock_kernel(x_ref, w1_ref, w2_ref, g1_ref, b1_ref, g2_ref, b2_ref,
                     out_ref, pad_ref, patch_ref):
    # x_ref     : (N, H, W, C)        real-channel NHWC input, f32
    # w1_ref    : (9*Cp, Cp)          im2col conv1 weight (channel-padded HWIO)
    # w2_ref    : (9*Cp, Cp)          im2col conv2 weight (channel-padded HWIO)
    # g*/b*     : (1, Cp)             BN gamma/beta, zero-padded to Cp lanes
    # out_ref   : (N*H*W, Cp)         lane-dense output (wrapper slices [:, :C])
    # pad_ref   : (N, H+2, W+2, Cp)   spatially padded activation scratch
    # patch_ref : (N*H*W, 9*Cp)       im2col patch scratch (reused by both convs)
    N, H, W, C = x_ref.shape
    Cp = out_ref.shape[-1]
    Hp, Wp = H + 2, W + 2
    rows = N * H * W
    inv_rows = 1.0 / rows

    # ---- zero only the 1-pixel halo of the padded scratch.  The interior is
    #      always fully overwritten (first with x, then with relu(bn(conv1))),
    #      so no full-buffer zeroing and no re-zero between the two convs.
    zrow = jnp.zeros((N, 1, Wp, Cp), jnp.float32)
    zcol = jnp.zeros((N, Hp, 1, Cp), jnp.float32)
    pad_ref[:, 0:1, :, :] = zrow
    pad_ref[:, Hp - 1:Hp, :, :] = zrow
    pad_ref[:, :, 0:1, :] = zcol
    pad_ref[:, :, Wp - 1:Wp, :] = zcol

    # ---- channel-pad x: C -> Cp on the MXU via x @ [I_C | 0].  This keeps all
    #      downstream VPU/XLU/store work lane-dense and avoids masked lane
    #      writes; it also doubles as the residual term.
    eye_pad = (lax.broadcasted_iota(jnp.int32, (C, Cp), 0) ==
               lax.broadcasted_iota(jnp.int32, (C, Cp), 1)).astype(jnp.float32)
    x_cp = jnp.dot(x_ref[...].reshape(rows, C), eye_pad,
                   preferred_element_type=jnp.float32)            # (rows, Cp)
    pad_ref[:, 1:H + 1, 1:W + 1, :] = x_cp.reshape(N, H, W, Cp)

    def im2col():
        # Pack the 9 shifted windows into one lane-aligned (rows, 9*Cp) patch
        # so each conv is a single MXU matmul with K = 9*Cp.
        for t in range(9):
            dy, dx = t // 3, t % 3
            win = pad_ref[:, dy:dy + H, dx:dx + W, :]             # (N, H, W, Cp)
            patch_ref[:, t * Cp:(t + 1) * Cp] = win.reshape(rows, Cp)
        return patch_ref[...]                                     # (rows, 9*Cp)

    def batchnorm(y, g_ref, b_ref):
        # Training-mode BN (batch stats over N*H*W, biased var), single pass:
        # var = E[y^2] - E[y]^2, then one fused scale/shift over y.
        s = jnp.sum(y, axis=0, keepdims=True)                     # (1, Cp)
        sq = jnp.sum(y * y, axis=0, keepdims=True)                # (1, Cp)
        mean = s * inv_rows
        var = jnp.maximum(sq * inv_rows - mean * mean, 0.0)
        scale = g_ref[...] * lax.rsqrt(var + EPS)                 # (1, Cp)
        shift = b_ref[...] - mean * scale                         # (1, Cp)
        return y * scale + shift

    # ---- conv1 (single im2col matmul) -> bn1 -> relu1 ----
    y = jnp.dot(im2col(), w1_ref[...], preferred_element_type=jnp.float32)
    y = jnp.maximum(batchnorm(y, g1_ref, b1_ref), 0.0)            # (rows, Cp)

    # Reuse the same padded scratch for conv2's input: halo is still zero and
    # the padded channels of y are exactly zero (padded gamma/beta are zero).
    pad_ref[:, 1:H + 1, 1:W + 1, :] = y.reshape(N, H, W, Cp)

    # ---- conv2 (single im2col matmul) -> bn2 -> +residual -> relu2 ----
    y2 = jnp.dot(im2col(), w2_ref[...], preferred_element_type=jnp.float32)
    y2 = batchnorm(y2, g2_ref, b2_ref)
    out_ref[...] = jnp.maximum(y2 + x_cp, 0.0)                    # lane-dense store


def _prep_conv_weight(w_oihw, cp):
    # PyTorch OIHW (Cout, Cin, 3, 3) -> HWIO -> zero-pad channels to cp
    # -> flatten to the (9*cp, cp) im2col layout (row index = dy*3*cp + dx*cp + ci).
    cout, cin, kh, kw = w_oihw.shape
    w = jnp.transpose(w_oihw, (2, 3, 1, 0))                       # (3, 3, Cin, Cout)
    w = jnp.pad(w, ((0, 0), (0, 0), (0, cp - cin), (0, cp - cout)))
    return w.reshape(kh * kw * cp, cp).astype(jnp.float32)


def _prep_bn_param(p, cp):
    return jnp.pad(p.reshape(1, -1), ((0, 0), (0, cp - p.shape[0]))).astype(jnp.float32)


def resblock_pallas(x_nchw, w1_oihw, w2_oihw, g1, b1, g2, b2):
    """x_nchw: (N, C, H, W) f32; conv weights in PyTorch OIHW layout (bias=False)."""
    N, C, H, W = x_nchw.shape
    cp = LANES
    rows = N * H * W

    # Only wrapper-side glue is the NCHW -> NHWC layout change (tiny);
    # spatial + channel zero-padding happen inside the kernel.
    x_nhwc = jnp.transpose(x_nchw, (0, 2, 3, 1)).astype(jnp.float32)

    vmem = pl.BlockSpec(memory_space=pltpu.MemorySpace.VMEM)
    out = pl.pallas_call(
        _resblock_kernel,
        out_shape=jax.ShapeDtypeStruct((rows, cp), jnp.float32),
        in_specs=[vmem] * 7,
        out_specs=vmem,
        scratch_shapes=[
            pltpu.VMEM((N, H + 2, W + 2, cp), jnp.float32),   # padded activation
            pltpu.VMEM((rows, 9 * cp), jnp.float32),          # im2col patch (reused)
        ],
        compiler_params=pltpu.CompilerParams(
            vmem_limit_bytes=32 * 1024 * 1024),
    )(x_nhwc,
      _prep_conv_weight(w1_oihw, cp), _prep_conv_weight(w2_oihw, cp),
      _prep_bn_param(g1, cp), _prep_bn_param(b1, cp),
      _prep_bn_param(g2, cp), _prep_bn_param(b2, cp))

    # Slice away padded channels, restore NCHW.
    out = out[:, :C].reshape(N, H, W, C)
    return jnp.transpose(out, (0, 3, 1, 2))


def resblock_reference(x, w1, w2, g1, b1, g2, b2):
    """Pure-JAX reference mirroring the PyTorch module (training-mode BN)."""
    def conv(h, w):
        return lax.conv_general_dilated(
            h, w, window_strides=(1, 1), padding="SAME",
            dimension_numbers=("NCHW", "OIHW", "NCHW"))

    def bn(h, g, b):
        mean = jnp.mean(h, axis=(0, 2, 3), keepdims=True)
        var = jnp.mean((h - mean) ** 2, axis=(0, 2, 3), keepdims=True)
        return ((h - mean) * lax.rsqrt(var + EPS)
                * g.reshape(1, -1, 1, 1) + b.reshape(1, -1, 1, 1))

    y = jax.nn.relu(bn(conv(x, w1), g1, b1))
    y = bn(conv(y, w2), g2, b2)
    return jax.nn.relu(y + x)


if __name__ == "__main__":
    N, C, H, W = 2, 4, 16, 16   # in_channel == out_channel (required for residual add)
    key = jax.random.PRNGKey(0)
    kx, k1, k2, kg1, kb1, kg2, kb2 = jax.random.split(key, 7)

    x = jax.random.normal(kx, (N, C, H, W), jnp.float32)
    # Conv2d weights, PyTorch OIHW layout, bias=False
    w1 = jax.random.normal(k1, (C, C, 3, 3), jnp.float32) * 0.1
    w2 = jax.random.normal(k2, (C, C, 3, 3), jnp.float32) * 0.1
    # BatchNorm affine params (non-trivial values to exercise the affine path)
    g1 = 1.0 + 0.1 * jax.random.normal(kg1, (C,), jnp.float32)
    b1 = 0.1 * jax.random.normal(kb1, (C,), jnp.float32)
    g2 = 1.0 + 0.1 * jax.random.normal(kg2, (C,), jnp.float32)
    b2 = 0.1 * jax.random.normal(kb2, (C,), jnp.float32)

    out = jax.block_until_ready(resblock_pallas(x, w1, w2, g1, b1, g2, b2))
    ref = resblock_reference(x, w1, w2, g1, b1, g2, b2)

    assert out.shape == (N, C, H, W)
    max_err = jnp.max(jnp.abs(out - ref))
    assert jnp.allclose(out, ref, atol=1e-3, rtol=1e-3), f"max abs err {max_err}"

    print("KERNEL_OK")
</pallas_src>

<mosaic_0001>
module attributes {stable_mosaic.version = 11 : i64} {
  func.func @_resblock_kernel(%arg0: memref<2x16x16x4xf32, #tpu.memory_space<vmem>>, %arg1: memref<1152x128xf32, #tpu.memory_space<vmem>>, %arg2: memref<1152x128xf32, #tpu.memory_space<vmem>>, %arg3: memref<1x128xf32, #tpu.memory_space<vmem>>, %arg4: memref<1x128xf32, #tpu.memory_space<vmem>>, %arg5: memref<1x128xf32, #tpu.memory_space<vmem>>, %arg6: memref<1x128xf32, #tpu.memory_space<vmem>>, %arg7: memref<512x128xf32, #tpu.memory_space<vmem>>, %arg8: memref<2x18x18x128xf32, #tpu.memory_space<vmem>>, %arg9: memref<512x1152xf32, #tpu.memory_space<vmem>>) attributes {dimension_semantics = [], scalar_prefetch = 0 : i64, scratch_operands = 2 : i64, tpu.core_type = #tpu.core_type<tc>} {
    %cst = arith.constant 0.000000e+00 : f32
    %0 = vector.broadcast %cst : f32 to vector<2x1x18x128xf32>
    %cst_0 = arith.constant 0.000000e+00 : f32
    %1 = vector.broadcast %cst_0 : f32 to vector<2x18x1x128xf32>
    %c0 = arith.constant 0 : index
    %c0_1 = arith.constant 0 : index
    %c0_2 = arith.constant 0 : index
    %c0_3 = arith.constant 0 : index
    %2 = vector.load %arg8[%c0, %c0_1, %c0_2, %c0_3] : memref<2x18x18x128xf32, #tpu.memory_space<vmem>>, vector<2x1x18x128xf32>
    tpu.vector_store %arg8[%c0, %c0_1, %c0_2, %c0_3], %0 {strides = array<i32>} : memref<2x18x18x128xf32, #tpu.memory_space<vmem>>, vector<2x1x18x128xf32>,
    %c0_4 = arith.constant 0 : index
    %c17 = arith.constant 17 : index
    %c0_5 = arith.constant 0 : index
    %c0_6 = arith.constant 0 : index
    %3 = vector.load %arg8[%c0_4, %c17, %c0_5, %c0_6] : memref<2x18x18x128xf32, #tpu.memory_space<vmem>>, vector<2x1x18x128xf32>
    tpu.vector_store %arg8[%c0_4, %c17, %c0_5, %c0_6], %0 {strides = array<i32>} : memref<2x18x18x128xf32, #tpu.memory_space<vmem>>, vector<2x1x18x128xf32>,
    %c0_7 = arith.constant 0 : index
    %c0_8 = arith.constant 0 : index
    %c0_9 = arith.constant 0 : index
    %c0_10 = arith.constant 0 : index
    %4 = vector.load %arg8[%c0_7, %c0_8, %c0_9, %c0_10] : memref<2x18x18x128xf32, #tpu.memory_space<vmem>>, vector<2x18x1x128xf32>
    tpu.vector_store %arg8[%c0_7, %c0_8, %c0_9, %c0_10], %1 {strides = array<i32>} : memref<2x18x18x128xf32, #tpu.memory_space<vmem>>, vector<2x18x1x128xf32>,
    %c0_11 = arith.constant 0 : index
    %c0_12 = arith.constant 0 : index
    %c17_13 = arith.constant 17 : index
    %c0_14 = arith.constant 0 : index
    %5 = vector.load %arg8[%c0_11, %c0_12, %c17_13, %c0_14] : memref<2x18x18x128xf32, #tpu.memory_space<vmem>>, vector<2x18x1x128xf32>
    tpu.vector_store %arg8[%c0_11, %c0_12, %c17_13, %c0_14], %1 {strides = array<i32>} : memref<2x18x18x128xf32, #tpu.memory_space<vmem>>, vector<2x18x1x128xf32>,
    %6 = tpu.iota {dimensions = array<i32: 0>} : vector<4x128xi32>
    %7 = tpu.iota {dimensions = array<i32: 1>} : vector<4x128xi32>
    %8 = arith.cmpi eq, %6, %7 : vector<4x128xi32>
    %9 = arith.extui %8 : vector<4x128xi1> to vector<4x128xi32>
    %10 = arith.sitofp %9 : vector<4x128xi32> to vector<4x128xf32>
    %c0_15 = arith.constant 0 : index
    %c0_16 = arith.constant 0 : index
    %c0_17 = arith.constant 0 : index
    %c0_18 = arith.constant 0 : index
    %11 = vector.load %arg0[%c0_15, %c0_16, %c0_17, %c0_18] : memref<2x16x16x4xf32, #tpu.memory_space<vmem>>, vector<2x16x16x4xf32>
    %12 = vector.shape_cast %11 : vector<2x16x16x4xf32> to vector<512x4xf32>
    %cst_19 = arith.constant dense<0.000000e+00> : vector<512x128xf32>
    %13 = tpu.matmul %12, %10, %cst_19 {dimension_numbers = #tpu.dot_dimension_numbers<[1], [0], [0], [1], [0, 0, 1, 1], [], []>} : vector<512x4xf32>, vector<4x128xf32>, vector<512x128xf32> -> vector<512x128xf32>
    %14 = vector.shape_cast %13 : vector<512x128xf32> to vector<2x16x16x128xf32>
    %c0_20 = arith.constant 0 : index
    %c1 = arith.constant 1 : index
    %c1_21 = arith.constant 1 : index
    %c0_22 = arith.constant 0 : index
    %15 = vector.load %arg8[%c0_20, %c1, %c1_21, %c0_22] : memref<2x18x18x128xf32, #tpu.memory_space<vmem>>, vector<2x16x16x128xf32>
    tpu.vector_store %arg8[%c0_20, %c1, %c1_21, %c0_22], %14 {strides = array<i32>} : memref<2x18x18x128xf32, #tpu.memory_space<vmem>>, vector<2x16x16x128xf32>,
    %c0_23 = arith.constant 0 : index
    %c0_24 = arith.constant 0 : index
    %c0_25 = arith.constant 0 : index
    %c0_26 = arith.constant 0 : index
    %16 = vector.load %arg8[%c0_23, %c0_24, %c0_25, %c0_26] : memref<2x18x18x128xf32, #tpu.memory_space<vmem>>, vector<2x16x16x128xf32>
    %17 = vector.shape_cast %16 : vector<2x16x16x128xf32> to vector<512x128xf32>
    %c0_27 = arith.constant 0 : index
    %c0_28 = arith.constant 0 : index
    %18 = vector.load %arg9[%c0_27, %c0_28] : memref<512x1152xf32, #tpu.memory_space<vmem>>, vector<512x128xf32>
    tpu.vector_store %arg9[%c0_27, %c0_28], %17 {strides = array<i32>} : memref<512x1152xf32, #tpu.memory_space<vmem>>, vector<512x128xf32>,
    %c0_29 = arith.constant 0 : index
    %c0_30 = arith.constant 0 : index
    %c1_31 = arith.constant 1 : index
    %c0_32 = arith.constant 0 : index
    %19 = vector.load %arg8[%c0_29, %c0_30, %c1_31, %c0_32] : memref<2x18x18x128xf32, #tpu.memory_space<vmem>>, vector<2x16x16x128xf32>
    %20 = vector.shape_cast %19 : vector<2x16x16x128xf32> to vector<512x128xf32>
    %c0_33 = arith.constant 0 : index
    %c128 = arith.constant 128 : index
    %21 = vector.load %arg9[%c0_33, %c128] : memref<512x1152xf32, #tpu.memory_space<vmem>>, vector<512x128xf32>
    tpu.vector_store %arg9[%c0_33, %c128], %20 {strides = array<i32>} : memref<512x1152xf32, #tpu.memory_space<vmem>>, vector<512x128xf32>,
    %c0_34 = arith.constant 0 : index
    %c0_35 = arith.constant 0 : index
    %c2 = arith.constant 2 : index
    %c0_36 = arith.constant 0 : index
    %22 = vector.load %arg8[%c0_34, %c0_35, %c2, %c0_36] : memref<2x18x18x128xf32, #tpu.memory_space<vmem>>, vector<2x16x16x128xf32>
    %23 = vector.shape_cast %22 : vector<2x16x16x128xf32> to vector<512x128xf32>
    %c0_37 = arith.constant 0 : index
    %c256 = arith.constant 256 : index
    %24 = vector.load %arg9[%c0_37, %c256] : memref<512x1152xf32, #tpu.memory_space<vmem>>, vector<512x128xf32>
    tpu.vector_store %arg9[%c0_37, %c256], %23 {strides = array<i32>} : memref<512x1152xf32, #tpu.memory_space<vmem>>, vector<512x128xf32>,
    %c0_38 = arith.constant 0 : index
    %c1_39 = arith.constant 1 : index
    %c0_40 = arith.constant 0 : index
    %c0_41 = arith.constant 0 : index
    %25 = vector.load %arg8[%c0_38, %c1_39, %c0_40, %c0_41] : memref<2x18x18x128xf32, #tpu.memory_space<vmem>>, vector<2x16x16x128xf32>
    %26 = vector.shape_cast %25 : vector<2x16x16x128xf32> to vector<512x128xf32>
    %c0_42 = arith.constant 0 : index
    %c384 = arith.constant 384 : index
    %27 = vector.load %arg9[%c0_42, %c384] : memref<512x1152xf32, #tpu.memory_space<vmem>>, vector<512x128xf32>
    tpu.vector_store %arg9[%c0_42, %c384], %26 {strides = array<i32>} : memref<512x1152xf32, #tpu.memory_space<vmem>>, vector<512x128xf32>,
    %c0_43 = arith.constant 0 : index
    %c1_44 = arith.constant 1 : index
    %c1_45 = arith.constant 1 : index
    %c0_46 = arith.constant 0 : index
    %28 = vector.load %arg8[%c0_43, %c1_44, %c1_45, %c0_46] : memref<2x18x18x128xf32, #tpu.memory_space<vmem>>, vector<2x16x16x128xf32>
    %29 = vector.shape_cast %28 : vector<2x16x16x128xf32> to vector<512x128xf32>
    %c0_47 = arith.constant 0 : index
    %c512 = arith.constant 512 : index
    %30 = vector.load %arg9[%c0_47, %c512] : memref<512x1152xf32, #tpu.memory_space<vmem>>, vector<512x128xf32>
    tpu.vector_store %arg9[%c0_47, %c512], %29 {strides = array<i32>} : memref<512x1152xf32, #tpu.memory_space<vmem>>, vector<512x128xf32>,
    %c0_48 = arith.constant 0 : index
    %c1_49 = arith.constant 1 : index
    %c2_50 = arith.constant 2 : index
    %c0_51 = arith.constant 0 : index
    %31 = vector.load %arg8[%c0_48, %c1_49, %c2_50, %c0_51] : memref<2x18x18x128xf32, #tpu.memory_space<vmem>>, vector<2x16x16x128xf32>
    %32 = vector.shape_cast %31 : vector<2x16x16x128xf32> to vector<512x128xf32>
    %c0_52 = arith.constant 0 : index
    %c640 = arith.constant 640 : index
    %33 = vector.load %arg9[%c0_52, %c640] : memref<512x1152xf32, #tpu.memory_space<vmem>>, vector<512x128xf32>
    tpu.vector_store %arg9[%c0_52, %c640], %32 {strides = array<i32>} : memref<512x1152xf32, #tpu.memory_space<vmem>>, vector<512x128xf32>,
    %c0_53 = arith.constant 0 : index
    %c2_54 = arith.constant 2 : index
    %c0_55 = arith.constant 0 : index
    %c0_56 = arith.constant 0 : index
    %34 = vector.load %arg8[%c0_53, %c2_54, %c0_55, %c0_56] : memref<2x18x18x128xf32, #tpu.memory_space<vmem>>, vector<2x16x16x128xf32>
    %35 = vector.shape_cast %34 : vector<2x16x16x128xf32> to vector<512x128xf32>
    %c0_57 = arith.constant 0 : index
    %c768 = arith.constant 768 : index
    %36 = vector.load %arg9[%c0_57, %c768] : memref<512x1152xf32, #tpu.memory_space<vmem>>, vector<512x128xf32>
    tpu.vector_store %arg9[%c0_57, %c768], %35 {strides = array<i32>} : memref<512x1152xf32, #tpu.memory_space<vmem>>, vector<512x128xf32>,
    %c0_58 = arith.constant 0 : index
    %c2_59 = arith.constant 2 : index
    %c1_60 = arith.constant 1 : index
    %c0_61 = arith.constant 0 : index
    %37 = vector.load %arg8[%c0_58, %c2_59, %c1_60, %c0_61] : memref<2x18x18x128xf32, #tpu.memory_space<vmem>>, vector<2x16x16x128xf32>
    %38 = vector.shape_cast %37 : vector<2x16x16x128xf32> to vector<512x128xf32>
    %c0_62 = arith.constant 0 : index
    %c896 = arith.constant 896 : index
    %39 = vector.load %arg9[%c0_62, %c896] : memref<512x1152xf32, #tpu.memory_space<vmem>>, vector<512x128xf32>
    tpu.vector_store %arg9[%c0_62, %c896], %38 {strides = array<i32>} : memref<512x1152xf32, #tpu.memory_space<vmem>>, vector<512x128xf32>,
    %c0_63 = arith.constant 0 : index
    %c2_64 = arith.constant 2 : index
    %c2_65 = arith.constant 2 : index
    %c0_66 = arith.constant 0 : index
    %40 = vector.load %arg8[%c0_63, %c2_64, %c2_65, %c0_66] : memref<2x18x18x128xf32, #tpu.memory_space<vmem>>, vector<2x16x16x128xf32>
    %41 = vector.shape_cast %40 : vector<2x16x16x128xf32> to vector<512x128xf32>
    %c0_67 = arith.constant 0 : index
    %c1024 = arith.constant 1024 : index
    %42 = vector.load %arg9[%c0_67, %c1024] : memref<512x1152xf32, #tpu.memory_space<vmem>>, vector<512x128xf32>
    tpu.vector_store %arg9[%c0_67, %c1024], %41 {strides = array<i32>} : memref<512x1152xf32, #tpu.memory_space<vmem>>, vector<512x128xf32>,
    %c0_68 = arith.constant 0 : index
    %c0_69 = arith.constant 0 : index
    %43 = vector.load %arg9[%c0_68, %c0_69] : memref<512x1152xf32, #tpu.memory_space<vmem>>, vector<512x1152xf32>
    %c0_70 = arith.constant 0 : index
    %c0_71 = arith.constant 0 : index
    %44 = vector.load %arg1[%c0_70, %c0_71] : memref<1152x128xf32, #tpu.memory_space<vmem>>, vector<1152x128xf32>
    %cst_72 = arith.constant dense<0.000000e+00> : vector<512x128xf32>
    %45 = tpu.matmul %43, %44, %cst_72 {dimension_numbers = #tpu.dot_dimension_numbers<[1], [0], [0], [1], [0, 0, 1, 1], [], []>} : vector<512x1152xf32>, vector<1152x128xf32>, vector<512x128xf32> -> vector<512x128xf32>
    %cst_73 = arith.constant dense<0.000000e+00> : vector<128xf32>
    %46 = vector.multi_reduction <add>, %45, %cst_73 [0] : vector<512x128xf32> to vector<128xf32>
    %47 = vector.shape_cast %46 : vector<128xf32> to vector<1x128xf32>
    %48 = arith.mulf %45, %45 : vector<512x128xf32>
    %cst_74 = arith.constant dense<0.000000e+00> : vector<128xf32>
    %49 = vector.multi_reduction <add>, %48, %cst_74 [0] : vector<512x128xf32> to vector<128xf32>
    %50 = vector.shape_cast %49 : vector<128xf32> to vector<1x128xf32>
    %cst_75 = arith.constant 0.001953125 : f32
    %51 = vector.broadcast %cst_75 : f32 to vector<1x128xf32>
    %52 = arith.mulf %47, %51 : vector<1x128xf32>
    %cst_76 = arith.constant 0.001953125 : f32
    %53 = vector.broadcast %cst_76 : f32 to vector<1x128xf32>
    %54 = arith.mulf %50, %53 : vector<1x128xf32>
    %55 = arith.mulf %52, %52 : vector<1x128xf32>
    %56 = arith.subf %54, %55 : vector<1x128xf32>
    %cst_77 = arith.constant 0.000000e+00 : f32
    %57 = vector.broadcast %cst_77 : f32 to vector<1x128xf32>
    %58 = arith.maximumf %56, %57 : vector<1x128xf32>
    %c0_78 = arith.constant 0 : index
    %c0_79 = arith.constant 0 : index
    %59 = vector.load %arg3[%c0_78, %c0_79] : memref<1x128xf32, #tpu.memory_space<vmem>>, vector<1x128xf32>
    %cst_80 = arith.constant 9.99999974E-6 : f32
    %60 = vector.broadcast %cst_80 : f32 to vector<1x128xf32>
    %61 = arith.addf %58, %60 : vector<1x128xf32>
    %62 = math.rsqrt %61 : vector<1x128xf32>
    %63 = arith.mulf %59, %62 : vector<1x128xf32>
    %c0_81 = arith.constant 0 : index
    %c0_82 = arith.constant 0 : index
    %64 = vector.load %arg4[%c0_81, %c0_82] : memref<1x128xf32, #tpu.memory_space<vmem>>, vector<1x128xf32>
    %65 = arith.mulf %52, %63 : vector<1x128xf32>
    %66 = arith.subf %64, %65 : vector<1x128xf32>
    %67 = vector.broadcast %63 : vector<1x128xf32> to vector<512x128xf32>
    %68 = arith.mulf %45, %67 : vector<512x128xf32>
    %69 = vector.broadcast %66 : vector<1x128xf32> to vector<512x128xf32>
    %70 = arith.addf %68, %69 : vector<512x128xf32>
    %cst_83 = arith.constant 0.000000e+00 : f32
    %71 = vector.broadcast %cst_83 : f32 to vector<512x128xf32>
    %72 = arith.maximumf %70, %71 : vector<512x128xf32>
    %73 = vector.shape_cast %72 : vector<512x128xf32> to vector<2x16x16x128xf32>
    %c0_84 = arith.constant 0 : index
    %c1_85 = arith.constant 1 : index
    %c1_86 = arith.constant 1 : index
    %c0_87 = arith.constant 0 : index
    %74 = vector.load %arg8[%c0_84, %c1_85, %c1_86, %c0_87] : memref<2x18x18x128xf32, #tpu.memory_space<vmem>>, vector<2x16x16x128xf32>
    tpu.vector_store %arg8[%c0_84, %c1_85, %c1_86, %c0_87], %73 {strides = array<i32>} : memref<2x18x18x128xf32, #tpu.memory_space<vmem>>, vector<2x16x16x128xf32>,
    %c0_88 = arith.constant 0 : index
    %c0_89 = arith.constant 0 : index
    %c0_90 = arith.constant 0 : index
    %c0_91 = arith.constant 0 : index
    %75 = vector.load %arg8[%c0_88, %c0_89, %c0_90, %c0_91] : memref<2x18x18x128xf32, #tpu.memory_space<vmem>>, vector<2x16x16x128xf32>
    %76 = vector.shape_cast %75 : vector<2x16x16x128xf32> to vector<512x128xf32>
    %c0_92 = arith.constant 0 : index
    %c0_93 = arith.constant 0 : index
    %77 = vector.load %arg9[%c0_92, %c0_93] : memref<512x1152xf32, #tpu.memory_space<vmem>>, vector<512x128xf32>
    tpu.vector_store %arg9[%c0_92, %c0_93], %76 {strides = array<i32>} : memref<512x1152xf32, #tpu.memory_space<vmem>>, vector<512x128xf32>,
    %c0_94 = arith.constant 0 : index
    %c0_95 = arith.constant 0 : index
    %c1_96 = arith.constant 1 : index
    %c0_97 = arith.constant 0 : index
    %78 = vector.load %arg8[%c0_94, %c0_95, %c1_96, %c0_97] : memref<2x18x18x128xf32, #tpu.memory_space<vmem>>, vector<2x16x16x128xf32>
    %79 = vector.shape_cast %78 : vector<2x16x16x128xf32> to vector<512x128xf32>
    %c0_98 = arith.constant 0 : index
    %c128_99 = arith.constant 128 : index
    %80 = vector.load %arg9[%c0_98, %c128_99] : memref<512x1152xf32, #tpu.memory_space<vmem>>, vector<512x128xf32>
    tpu.vector_store %arg9[%c0_98, %c128_99], %79 {strides = array<i32>} : memref<512x1152xf32, #tpu.memory_space<vmem>>, vector<512x128xf32>,
    %c0_100 = arith.constant 0 : index
    %c0_101 = arith.constant 0 : index
    %c2_102 = arith.constant 2 : index
    %c0_103 = arith.constant 0 : index
    %81 = vector.load %arg8[%c0_100, %c0_101, %c2_102, %c0_103] : memref<2x18x18x128xf32, #tpu.memory_space<vmem>>, vector<2x16x16x128xf32>
    %82 = vector.shape_cast %81 : vector<2x16x16x128xf32> to vector<512x128xf32>
    %c0_104 = arith.constant 0 : index
    %c256_105 = arith.constant 256 : index
    %83 = vector.load %arg9[%c0_104, %c256_105] : memref<512x1152xf32, #tpu.memory_space<vmem>>, vector<512x128xf32>
    tpu.vector_store %arg9[%c0_104, %c256_105], %82 {strides = array<i32>} : memref<512x1152xf32, #tpu.memory_space<vmem>>, vector<512x128xf32>,
    %c0_106 = arith.constant 0 : index
    %c1_107 = arith.constant 1 : index
    %c0_108 = arith.constant 0 : index
    %c0_109 = arith.constant 0 : index
    %84 = vector.load %arg8[%c0_106, %c1_107, %c0_108, %c0_109] : memref<2x18x18x128xf32, #tpu.memory_space<vmem>>, vector<2x16x16x128xf32>
    %85 = vector.shape_cast %84 : vector<2x16x16x128xf32> to vector<512x128xf32>
    %c0_110 = arith.constant 0 : index
    %c384_111 = arith.constant 384 : index
    %86 = vector.load %arg9[%c0_110, %c384_111] : memref<512x1152xf32, #tpu.memory_space<vmem>>, vector<512x128xf32>
    tpu.vector_store %arg9[%c0_110, %c384_111], %85 {strides = array<i32>} : memref<512x1152xf32, #tpu.memory_space<vmem>>, vector<512x128xf32>,
    %c0_112 = arith.constant 0 : index
    %c1_113 = arith.constant 1 : index
    %c1_114 = arith.constant 1 : index
    %c0_115 = arith.constant 0 : index
    %87 = vector.load %arg8[%c0_112, %c1_113, %c1_114, %c0_115] : memref<2x18x18x128xf32, #tpu.memory_space<vmem>>, vector<2x16x16x128xf32>
    %88 = vector.shape_cast %87 : vector<2x16x16x128xf32> to vector<512x128xf32>
    %c0_116 = arith.constant 0 : index
    %c512_117 = arith.constant 512 : index
    %89 = vector.load %arg9[%c0_116, %c512_117] : memref<512x1152xf32, #tpu.memory_space<vmem>>, vector<512x128xf32>
    tpu.vector_store %arg9[%c0_116, %c512_117], %88 {strides = array<i32>} : memref<512x1152xf32, #tpu.memory_space<vmem>>, vector<512x128xf32>,
    %c0_118 = arith.constant 0 : index
    %c1_119 = arith.constant 1 : index
    %c2_120 = arith.constant 2 : index
    %c0_121 = arith.constant 0 : index
    %90 = vector.load %arg8[%c0_118, %c1_119, %c2_120, %c0_121] : memref<2x18x18x128xf32, #tpu.memory_space<vmem>>, vector<2x16x16x128xf32>
    %91 = vector.shape_cast %90 : vector<2x16x16x128xf32> to vector<512x128xf32>
    %c0_122 = arith.constant 0 : index
    %c640_123 = arith.constant 640 : index
    %92 = vector.load %arg9[%c0_122, %c640_123] : memref<512x1152xf32, #tpu.memory_space<vmem>>, vector<512x128xf32>
    tpu.vector_store %arg9[%c0_122, %c640_123], %91 {strides = array<i32>} : memref<512x1152xf32, #tpu.memory_space<vmem>>, vector<512x128xf32>,
    %c0_124 = arith.constant 0 : index
    %c2_125 = arith.constant 2 : index
    %c0_126 = arith.constant 0 : index
    %c0_127 = arith.constant 0 : index
    %93 = vector.load %arg8[%c0_124, %c2_125, %c0_126, %c0_127] : memref<2x18x18x128xf32, #tpu.memory_space<vmem>>, vector<2x16x16x128xf32>
    %94 = vector.shape_cast %93 : vector<2x16x16x128xf32> to vector<512x128xf32>
    %c0_128 = arith.constant 0 : index
    %c768_129 = arith.constant 768 : index
    %95 = vector.load %arg9[%c0_128, %c768_129] : memref<512x1152xf32, #tpu.memory_space<vmem>>, vector<512x128xf32>
    tpu.vector_store %arg9[%c0_128, %c768_129], %94 {strides = array<i32>} : memref<512x1152xf32, #tpu.memory_space<vmem>>, vector<512x128xf32>,
    %c0_130 = arith.constant 0 : index
    %c2_131 = arith.constant 2 : index
    %c1_132 = arith.constant 1 : index
    %c0_133 = arith.constant 0 : index
    %96 = vector.load %arg8[%c0_130, %c2_131, %c1_132, %c0_133] : memref<2x18x18x128xf32, #tpu.memory_space<vmem>>, vector<2x16x16x128xf32>
    %97 = vector.shape_cast %96 : vector<2x16x16x128xf32> to vector<512x128xf32>
    %c0_134 = arith.constant 0 : index
    %c896_135 = arith.constant 896 : index
    %98 = vector.load %arg9[%c0_134, %c896_135] : memref<512x1152xf32, #tpu.memory_space<vmem>>, vector<512x128xf32>
    tpu.vector_store %arg9[%c0_134, %c896_135], %97 {strides = array<i32>} : memref<512x1152xf32, #tpu.memory_space<vmem>>, vector<512x128xf32>,
    %c0_136 = arith.constant 0 : index
    %c2_137 = arith.constant 2 : index
    %c2_138 = arith.constant 2 : index
    %c0_139 = arith.constant 0 : index
    %99 = vector.load %arg8[%c0_136, %c2_137, %c2_138, %c0_139] : memref<2x18x18x128xf32, #tpu.memory_space<vmem>>, vector<2x16x16x128xf32>
    %100 = vector.shape_cast %99 : vector<2x16x16x128xf32> to vector<512x128xf32>
    %c0_140 = arith.constant 0 : index
    %c1024_141 = arith.constant 1024 : index
    %101 = vector.load %arg9[%c0_140, %c1024_141] : memref<512x1152xf32, #tpu.memory_space<vmem>>, vector<512x128xf32>
    tpu.vector_store %arg9[%c0_140, %c1024_141], %100 {strides = array<i32>} : memref<512x1152xf32, #tpu.memory_space<vmem>>, vector<512x128xf32>,
    %c0_142 = arith.constant 0 : index
    %c0_143 = arith.constant 0 : index
    %102 = vector.load %arg9[%c0_142, %c0_143] : memref<512x1152xf32, #tpu.memory_space<vmem>>, vector<512x1152xf32>
    %c0_144 = arith.constant 0 : index
    %c0_145 = arith.constant 0 : index
    %103 = vector.load %arg2[%c0_144, %c0_145] : memref<1152x128xf32, #tpu.memory_space<vmem>>, vector<1152x128xf32>
    %cst_146 = arith.constant dense<0.000000e+00> : vector<512x128xf32>
    %104 = tpu.matmul %102, %103, %cst_146 {dimension_numbers = #tpu.dot_dimension_numbers<[1], [0], [0], [1], [0, 0, 1, 1], [], []>} : vector<512x1152xf32>, vector<1152x128xf32>, vector<512x128xf32> -> vector<512x128xf32>
    %cst_147 = arith.constant dense<0.000000e+00> : vector<128xf32>
    %105 = vector.multi_reduction <add>, %104, %cst_147 [0] : vector<512x128xf32> to vector<128xf32>
    %106 = vector.shape_cast %105 : vector<128xf32> to vector<1x128xf32>
    %107 = arith.mulf %104, %104 : vector<512x128xf32>
    %cst_148 = arith.constant dense<0.000000e+00> : vector<128xf32>
    %108 = vector.multi_reduction <add>, %107, %cst_148 [0] : vector<512x128xf32> to vector<128xf32>
    %109 = vector.shape_cast %108 : vector<128xf32> to vector<1x128xf32>
    %cst_149 = arith.constant 0.001953125 : f32
    %110 = vector.broadcast %cst_149 : f32 to vector<1x128xf32>
    %111 = arith.mulf %106, %110 : vector<1x128xf32>
    %cst_150 = arith.constant 0.001953125 : f32
    %112 = vector.broadcast %cst_150 : f32 to vector<1x128xf32>
    %113 = arith.mulf %109, %112 : vector<1x128xf32>
    %114 = arith.mulf %111, %111 : vector<1x128xf32>
    %115 = arith.subf %113, %114 : vector<1x128xf32>
    %cst_151 = arith.constant 0.000000e+00 : f32
    %116 = vector.broadcast %cst_151 : f32 to vector<1x128xf32>
    %117 = arith.maximumf %115, %116 : vector<1x128xf32>
    %c0_152 = arith.constant 0 : index
    %c0_153 = arith.constant 0 : index
    %118 = vector.load %arg5[%c0_152, %c0_153] : memref<1x128xf32, #tpu.memory_space<vmem>>, vector<1x128xf32>
    %cst_154 = arith.constant 9.99999974E-6 : f32
    %119 = vector.broadcast %cst_154 : f32 to vector<1x128xf32>
    %120 = arith.addf %117, %119 : vector<1x128xf32>
    %121 = math.rsqrt %120 : vector<1x128xf32>
    %122 = arith.mulf %118, %121 : vector<1x128xf32>
    %c0_155 = arith.constant 0 : index
    %c0_156 = arith.constant 0 : index
    %123 = vector.load %arg6[%c0_155, %c0_156] : memref<1x128xf32, #tpu.memory_space<vmem>>, vector<1x128xf32>
    %124 = arith.mulf %111, %122 : vector<1x128xf32>
    %125 = arith.subf %123, %124 : vector<1x128xf32>
    %126 = vector.broadcast %122 : vector<1x128xf32> to vector<512x128xf32>
    %127 = arith.mulf %104, %126 : vector<512x128xf32>
    %128 = vector.broadcast %125 : vector<1x128xf32> to vector<512x128xf32>
    %129 = arith.addf %127, %128 : vector<512x128xf32>
    %130 = arith.addf %129, %13 : vector<512x128xf32>
    %cst_157 = arith.constant 0.000000e+00 : f32
    %131 = vector.broadcast %cst_157 : f32 to vector<512x128xf32>
    %132 = arith.maximumf %130, %131 : vector<512x128xf32>
    %c0_158 = arith.constant 0 : index
    %c0_159 = arith.constant 0 : index
    %133 = vector.load %arg7[%c0_158, %c0_159] : memref<512x128xf32, #tpu.memory_space<vmem>>, vector<512x128xf32>
    tpu.vector_store %arg7[%c0_158, %c0_159], %132 {strides = array<i32>} : memref<512x128xf32, #tpu.memory_space<vmem>>, vector<512x128xf32>,
    return
  }
}

</mosaic_0001>

<llo_original>
// kernel: tpu_custom_call.1
$region0: #{tpu_custom_call.1}
  #allocation0 [shape = 'u32[]', space=smem, size = 0x4, offset = 0x4, fixed_abs, tag = 'smem constant byte address 0x4 - core index']
  #allocation1 [shape = 'u32[144,128]{1,0:T(1,128)}', space=vmem, size = 0x12000, scoped, tag = 'internal scratch']
  #allocation2 [shape = 'f32[2,18,18,128]{3,2,1,0:T(8,128)}', space=vmem, size = 0x6c000, scoped, tag = 'scratch operand']
  #allocation3 [shape = 'f32[512,1152]{1,0:T(8,128)}', space=vmem, size = 0x240000, scoped, tag = 'scratch operand']
  %s0 = inlined_call_operand.vmem [shape: f32[2,16,16,4], index: 0, kind: input, shape index: {}]
  %s1 = inlined_call_operand.hbm [shape: f32[1152,128], index: 1, kind: input, shape index: {}]
  %s2 = inlined_call_operand.hbm [shape: f32[1152,128], index: 2, kind: input, shape index: {}]
  %s3 = inlined_call_operand.vmem [shape: f32[1,128], index: 3, kind: input, shape index: {}]
  %s4 = inlined_call_operand.vmem [shape: f32[1,128], index: 4, kind: input, shape index: {}]
  %s5 = inlined_call_operand.vmem [shape: f32[1,128], index: 5, kind: input, shape index: {}]
  %s6 = inlined_call_operand.vmem [shape: f32[1,128], index: 6, kind: input, shape index: {}]
  %s7 = inlined_call_operand.hbm [shape: f32[512,128], index: 7, kind: output, shape index: {}]
  %s8 = sld [smem:[#allocation0]]
  $region46: #{tpu_custom_call.1} parent=0
    _
  %s10 = ssub.s32 1, %s8
  %s11 = scalar_select 0, %s10, %s8
  $region1: #{tpu_custom_call.1} parent=0
    #allocation4 [shape = 'u8[589824]{0}', space=vmem, size = 0x90000, scoped, tag = 'input window, operand 1, single buffered']
    #allocation5 [shape = 's32[1]{0}', space=sflag, size = 0x4, scoped, tag = 'scoped memory for tpu_custom_call.1']
    #allocation6 [shape = 's32[1]{0}', space=sflag, size = 0x4, scoped, tag = 'scoped memory for tpu_custom_call.1']
    #allocation7 [shape = 'u8[589824]{0}', space=vmem, size = 0x90000, scoped, tag = 'input window, operand 2, single buffered']
    #allocation8 [shape = 's32[1]{0}', space=sflag, size = 0x4, scoped, tag = 'scoped memory for tpu_custom_call.1']
    #allocation9 [shape = 'u8[262144]{0}', space=vmem, size = 0x40000, scoped, tag = 'output window, operand 0, single buffered']
    %12 = vsyncpa [#allocation5], 0
    %13 = vsyncpa [#allocation8], 0
    %14 = vsyncpa [#allocation6], 0
    // Predicated region
    $region2: #{tpu_custom_call.1} parent=1 // pred_check
      _
    $region3: #{tpu_custom_call.1} parent=1 // pred_check_branch
      %16 = sbr.rel (0) target = $region5
    $region4: #{tpu_custom_call.1} parent=1 // pred_region
      _
    $region5: #{tpu_custom_call.1} parent=1 // pred_fallthru
      _
    // Predicated region
    $region6: #{tpu_custom_call.1} parent=1 // pred_check
      _
    $region7: #{tpu_custom_call.1} parent=1 // pred_check_branch
      %18 = sbr.rel (0) target = $region9
    $region8: #{tpu_custom_call.1} parent=1 // pred_region
      %s20 = ssub.s32 18432, 18432
      %21 = vsyncadd [#allocation5], %s20
      %s22 = sshll.u32 [#allocation4], 4
      %s23 = int_to_ptr.vmem [resolvable:$true] %s22
      %28 = dma.hbm_to_vmem [thread:$0]  %s1, 18432, %s23, [#allocation5], 128, 128, 8
    $region9: #{tpu_custom_call.1} parent=1 // pred_fallthru
      _
    // Predicated region
    $region10: #{tpu_custom_call.1} parent=1 // pred_check
      _
    $region11: #{tpu_custom_call.1} parent=1 // pred_check_branch
      %30 = sbr.rel (0) target = $region13
    $region12: #{tpu_custom_call.1} parent=1 // pred_region
      %s32 = ssub.s32 18432, 18432
      %33 = vsyncadd [#allocation8], %s32
      %s34 = sshll.u32 [#allocation7], 4
      %s35 = int_to_ptr.vmem [resolvable:$true] %s34
      %40 = dma.hbm_to_vmem [thread:$0]  %s2, 18432, %s35, [#allocation8], 128, 128, 8
    $region13: #{tpu_custom_call.1} parent=1 // pred_fallthru
      _
    // Predicated region
    $region14: #{tpu_custom_call.1} parent=1 // pred_check
      _
    $region15: #{tpu_custom_call.1} parent=1 // pred_check_branch
      %42 = sbr.rel (0) target = $region17
    $region16: #{tpu_custom_call.1} parent=1 // pred_region
      _
    $region17: #{tpu_custom_call.1} parent=1 // pred_fallthru
      _
    // Predicated region
    $region18: #{tpu_custom_call.1} parent=1 // pred_check
      _
    $region19: #{tpu_custom_call.1} parent=1 // pred_check_branch
      %44 = sbr.rel (0) target = $region21
    $region20: #{tpu_custom_call.1} parent=1 // pred_region
      _
    $region21: #{tpu_custom_call.1} parent=1 // pred_fallthru
      _
    // Predicated region
    $region22: #{tpu_custom_call.1} parent=1 // pred_check
      _
    $region23: #{tpu_custom_call.1} parent=1 // pred_check_branch
      %46 = sbr.rel (0) target = $region25
    $region24: #{tpu_custom_call.1} parent=1 // pred_region
      _
    $region25: #{tpu_custom_call.1} parent=1 // pred_fallthru
      _
    // Predicated region
    $region26: #{tpu_custom_call.1} parent=1 // pred_check
      _
    $region27: #{tpu_custom_call.1} parent=1 // pred_check_branch
      %48 = sbr.rel (0) target = $region29
    $region28: #{tpu_custom_call.1} parent=1 // pred_region
      _
    $region29: #{tpu_custom_call.1} parent=1 // pred_fallthru
      _
    // Predicated region
    $region30: #{tpu_custom_call.1} parent=1 // pred_check
      _
    $region31: #{tpu_custom_call.1} parent=1 // pred_check_branch
      %50 = sbr.rel (0) target = $region33
    $region32: #{tpu_custom_call.1} parent=1 // pred_region
      %51 = dma.done [#allocation5], 18432
    $region33: #{tpu_custom_call.1} parent=1 // pred_fallthru
      _
    // Predicated region
    $region34: #{tpu_custom_call.1} parent=1 // pred_check
      _
    $region35: #{tpu_custom_call.1} parent=1 // pred_check_branch
      %53 = sbr.rel (0) target = $region37
    $region36: #{tpu_custom_call.1} parent=1 // pred_region
      %54 = dma.done [#allocation8], 18432
    $region37: #{tpu_custom_call.1} parent=1 // pred_fallthru
      _
    %55 = vst [vmem:[#allocation2] sm:$0xff] 0.0
    %56 = vst [vmem:[#allocation2 + $0x8] sm:$0xff] 0.0
    %57 = vst [vmem:[#allocation2 + $0x10] sm:$0x3] 0.0
    %58 = vst [vmem:[#allocation2 + $0x1b0] sm:$0xff] 0.0
    %59 = vst [vmem:[#allocation2 + $0x1b8] sm:$0xff] 0.0
    %60 = vst [vmem:[#allocation2 + $0x1c0] sm:$0x3] 0.0
    %s61 = scalar_lea.vmem [#allocation2], 408
    %62 = vst [vmem:[%s61] sm:$0xff] 0.0
    %63 = vst [vmem:[%s61 + $0x8] sm:$0xff] 0.0
    %64 = vst [vmem:[%s61 + $0x10] sm:$0x3] 0.0
    %65 = vst [vmem:[%s61 + $0x1b0] sm:$0xff] 0.0
    %66 = vst [vmem:[%s61 + $0x1b8] sm:$0xff] 0.0
    %67 = vst [vmem:[%s61 + $0x1c0] sm:$0x3] 0.0
    %68 = vst [vmem:[#allocation2] sm:$0x1] 0.0
    %69 = vst [vmem:[#allocation2 + $0x18] sm:$0x1] 0.0
    %70 = vst [vmem:[#allocation2 + $0x30] sm:$0x1] 0.0
    %71 = vst [vmem:[#allocation2 + $0x48] sm:$0x1] 0.0
    %72 = vst [vmem:[#allocation2 + $0x60] sm:$0x1] 0.0
    %73 = vst [vmem:[#allocation2 + $0x78] sm:$0x1] 0.0
    %74 = vst [vmem:[#allocation2 + $0x90] sm:$0x1] 0.0
    %75 = vst [vmem:[#allocation2 + $0xa8] sm:$0x1] 0.0
    %76 = vst [vmem:[#allocation2 + $0xc0] sm:$0x1] 0.0
    %77 = vst [vmem:[#allocation2 + $0xd8] sm:$0x1] 0.0
    %78 = vst [vmem:[#allocation2 + $0xf0] sm:$0x1] 0.0
    %79 = vst [vmem:[#allocation2 + $0x108] sm:$0x1] 0.0
    %80 = vst [vmem:[#allocation2 + $0x120] sm:$0x1] 0.0
    %81 = vst [vmem:[#allocation2 + $0x138] sm:$0x1] 0.0
    %82 = vst [vmem:[#allocation2 + $0x150] sm:$0x1] 0.0
    %83 = vst [vmem:[#allocation2 + $0x168] sm:$0x1] 0.0
    %84 = vst [vmem:[#allocation2 + $0x180] sm:$0x1] 0.0
    %85 = vst [vmem:[#allocation2 + $0x198] sm:$0x1] 0.0
    %86 = vst [vmem:[#allocation2 + $0x1b0] sm:$0x1] 0.0
    %87 = vst [vmem:[#allocation2 + $0x1c8] sm:$0x1] 0.0
    %88 = vst [vmem:[#allocation2 + $0x1e0] sm:$0x1] 0.0
    %89 = vst [vmem:[#allocation2 + $0x1f8] sm:$0x1] 0.0
    %90 = vst [vmem:[#allocation2 + $0x210] sm:$0x1] 0.0
    %91 = vst [vmem:[#allocation2 + $0x228] sm:$0x1] 0.0
    %92 = vst [vmem:[#allocation2 + $0x240] sm:$0x1] 0.0
    %93 = vst [vmem:[#allocation2 + $0x258] sm:$0x1] 0.0
    %94 = vst [vmem:[#allocation2 + $0x270] sm:$0x1] 0.0
    %95 = vst [vmem:[#allocation2 + $0x288] sm:$0x1] 0.0
    %96 = vst [vmem:[#allocation2 + $0x2a0] sm:$0x1] 0.0
    %97 = vst [vmem:[#allocation2 + $0x2b8] sm:$0x1] 0.0
    %98 = vst [vmem:[#allocation2 + $0x2d0] sm:$0x1] 0.0
    %99 = vst [vmem:[#allocation2 + $0x2e8] sm:$0x1] 0.0
    %100 = vst [vmem:[#allocation2 + $0x300] sm:$0x1] 0.0
    %101 = vst [vmem:[#allocation2 + $0x318] sm:$0x1] 0.0
    %102 = vst [vmem:[#allocation2 + $0x330] sm:$0x1] 0.0
    %103 = vst [vmem:[#allocation2 + $0x348] sm:$0x1] 0.0
    %104 = vst [vmem:[#allocation2 + $0x11] sm:$0x1] 0.0
    %105 = vst [vmem:[#allocation2 + $0x29] sm:$0x1] 0.0
    %106 = vst [vmem:[#allocation2 + $0x41] sm:$0x1] 0.0
    %107 = vst [vmem:[#allocation2 + $0x59] sm:$0x1] 0.0
    %108 = vst [vmem:[#allocation2 + $0x71] sm:$0x1] 0.0
    %109 = vst [vmem:[#allocation2 + $0x89] sm:$0x1] 0.0
    %110 = vst [vmem:[#allocation2 + $0xa1] sm:$0x1] 0.0
    %111 = vst [vmem:[#allocation2 + $0xb9] sm:$0x1] 0.0
    %112 = vst [vmem:[#allocation2 + $0xd1] sm:$0x1] 0.0
    %113 = vst [vmem:[#allocation2 + $0xe9] sm:$0x1] 0.0
    %114 = vst [vmem:[#allocation2 + $0x101] sm:$0x1] 0.0
    %115 = vst [vmem:[#allocation2 + $0x119] sm:$0x1] 0.0
    %116 = vst [vmem:[#allocation2 + $0x131] sm:$0x1] 0.0
    %117 = vst [vmem:[#allocation2 + $0x149] sm:$0x1] 0.0
    %118 = vst [vmem:[#allocation2 + $0x161] sm:$0x1] 0.0
    %119 = vst [vmem:[#allocation2 + $0x179] sm:$0x1] 0.0
    %120 = vst [vmem:[#allocation2 + $0x191] sm:$0x1] 0.0
    %121 = vst [vmem:[#allocation2 + $0x1a9] sm:$0x1] 0.0
    %122 = vst [vmem:[#allocation2 + $0x1c1] sm:$0x1] 0.0
    %123 = vst [vmem:[#allocation2 + $0x1d9] sm:$0x1] 0.0
    %124 = vst [vmem:[#allocation2 + $0x1f1] sm:$0x1] 0.0
    %125 = vst [vmem:[#allocation2 + $0x209] sm:$0x1] 0.0
    %126 = vst [vmem:[#allocation2 + $0x221] sm:$0x1] 0.0
    %127 = vst [vmem:[#allocation2 + $0x239] sm:$0x1] 0.0
    %128 = vst [vmem:[#allocation2 + $0x251] sm:$0x1] 0.0
    %129 = vst [vmem:[#allocation2 + $0x269] sm:$0x1] 0.0
    %130 = vst [vmem:[#allocation2 + $0x281] sm:$0x1] 0.0
    %131 = vst [vmem:[#allocation2 + $0x299] sm:$0x1] 0.0
    %132 = vst [vmem:[#allocation2 + $0x2b1] sm:$0x1] 0.0
    %133 = vst [vmem:[#allocation2 + $0x2c9] sm:$0x1] 0.0
    %134 = vst [vmem:[#allocation2 + $0x2e1] sm:$0x1] 0.0
    %135 = vst [vmem:[#allocation2 + $0x2f9] sm:$0x1] 0.0
    %136 = vst [vmem:[#allocation2 + $0x311] sm:$0x1] 0.0
    %137 = vst [vmem:[#allocation2 + $0x329] sm:$0x1] 0.0
    %138 = vst [vmem:[#allocation2 + $0x341] sm:$0x1] 0.0
    %139 = vst [vmem:[#allocation2 + $0x359] sm:$0x1] 0.0
    %v140 = vlaneseq
    %v141 = vshrl.u32 %v140, 7
    %v142 = vlaneseq
    %v143 = vand.u32 %v142, 127
    %vm144 = vcmp.eq.s32.totalorder %v141, %v143
    %v145 = vsel %vm144, 1, 0
    %v146 = vcvt.s32.f32 %v145
    %v147 = vld [vmem:[%s0] sm:$0xff]
    %v148 = vld [vmem:[%s0 + $0x8] sm:$0xff]
    %v149 = vld [vmem:[%s0 + $0x10] sm:$0xff]
    %v150 = vld [vmem:[%s0 + $0x18] sm:$0xff]
    %v151 = vld [vmem:[%s0 + $0x20] sm:$0xff]
    %v152 = vld [vmem:[%s0 + $0x28] sm:$0xff]
    %v153 = vld [vmem:[%s0 + $0x30] sm:$0xff]
    %v154 = vld [vmem:[%s0 + $0x38] sm:$0xff]
    %v155 = vld [vmem:[%s0 + $0x40] sm:$0xff]
    %v156 = vld [vmem:[%s0 + $0x48] sm:$0xff]
    %v157 = vld [vmem:[%s0 + $0x50] sm:$0xff]
    %v158 = vld [vmem:[%s0 + $0x58] sm:$0xff]
    %v159 = vld [vmem:[%s0 + $0x60] sm:$0xff]
    %v160 = vld [vmem:[%s0 + $0x68] sm:$0xff]
    %v161 = vld [vmem:[%s0 + $0x70] sm:$0xff]
    %v162 = vld [vmem:[%s0 + $0x78] sm:$0xff]
    %v163 = vld [vmem:[%s0 + $0x80] sm:$0xff]
    %v164 = vld [vmem:[%s0 + $0x88] sm:$0xff]
    %v165 = vld [vmem:[%s0 + $0x90] sm:$0xff]
    %v166 = vld [vmem:[%s0 + $0x98] sm:$0xff]
    %v167 = vld [vmem:[%s0 + $0xa0] sm:$0xff]
    %v168 = vld [vmem:[%s0 + $0xa8] sm:$0xff]
    %v169 = vld [vmem:[%s0 + $0xb0] sm:$0xff]
    %v170 = vld [vmem:[%s0 + $0xb8] sm:$0xff]
    %v171 = vld [vmem:[%s0 + $0xc0] sm:$0xff]
    %v172 = vld [vmem:[%s0 + $0xc8] sm:$0xff]
    %v173 = vld [vmem:[%s0 + $0xd0] sm:$0xff]
    %v174 = vld [vmem:[%s0 + $0xd8] sm:$0xff]
    %v175 = vld [vmem:[%s0 + $0xe0] sm:$0xff]
    %v176 = vld [vmem:[%s0 + $0xe8] sm:$0xff]
    %v177 = vld [vmem:[%s0 + $0xf0] sm:$0xff]
    %v178 = vld [vmem:[%s0 + $0xf8] sm:$0xff]
    %v179 = vld [vmem:[%s0 + $0x100] sm:$0xff]
    %v180 = vld [vmem:[%s0 + $0x108] sm:$0xff]
    %v181 = vld [vmem:[%s0 + $0x110] sm:$0xff]
    %v182 = vld [vmem:[%s0 + $0x118] sm:$0xff]
    %v183 = vld [vmem:[%s0 + $0x120] sm:$0xff]
    %v184 = vld [vmem:[%s0 + $0x128] sm:$0xff]
    %v185 = vld [vmem:[%s0 + $0x130] sm:$0xff]
    %v186 = vld [vmem:[%s0 + $0x138] sm:$0xff]
    %v187 = vld [vmem:[%s0 + $0x140] sm:$0xff]
    %v188 = vld [vmem:[%s0 + $0x148] sm:$0xff]
    %v189 = vld [vmem:[%s0 + $0x150] sm:$0xff]
    %v190 = vld [vmem:[%s0 + $0x158] sm:$0xff]
    %v191 = vld [vmem:[%s0 + $0x160] sm:$0xff]
    %v192 = vld [vmem:[%s0 + $0x168] sm:$0xff]
    %v193 = vld [vmem:[%s0 + $0x170] sm:$0xff]
    %v194 = vld [vmem:[%s0 + $0x178] sm:$0xff]
    %v195 = vld [vmem:[%s0 + $0x180] sm:$0xff]
    %v196 = vld [vmem:[%s0 + $0x188] sm:$0xff]
    %v197 = vld [vmem:[%s0 + $0x190] sm:$0xff]
    %v198 = vld [vmem:[%s0 + $0x198] sm:$0xff]
    %v199 = vld [vmem:[%s0 + $0x1a0] sm:$0xff]
    %v200 = vld [vmem:[%s0 + $0x1a8] sm:$0xff]
    %v201 = vld [vmem:[%s0 + $0x1b0] sm:$0xff]
    %v202 = vld [vmem:[%s0 + $0x1b8] sm:$0xff]
    %v203 = vld [vmem:[%s0 + $0x1c0] sm:$0xff]
    %v204 = vld [vmem:[%s0 + $0x1c8] sm:$0xff]
    %v205 = vld [vmem:[%s0 + $0x1d0] sm:$0xff]
    %v206 = vld [vmem:[%s0 + $0x1d8] sm:$0xff]
    %v207 = vld [vmem:[%s0 + $0x1e0] sm:$0xff]
    %v208 = vld [vmem:[%s0 + $0x1e8] sm:$0xff]
    %v209 = vld [vmem:[%s0 + $0x1f0] sm:$0xff]
    %v210 = vld [vmem:[%s0 + $0x1f8] sm:$0xff]
    %vm211 = vcmask 31744
    %v213 = vsel %vm211, %v147, 0
    %v216 = vsel %vm211, %v148, 0
    %v219 = vsel %vm211, %v149, 0
    %v222 = vsel %vm211, %v150, 0
    %v225 = vsel %vm211, %v151, 0
    %v228 = vsel %vm211, %v152, 0
    %v231 = vsel %vm211, %v153, 0
    %v234 = vsel %vm211, %v154, 0
    %v237 = vsel %vm211, %v155, 0
    %v240 = vsel %vm211, %v156, 0
    %v243 = vsel %vm211, %v157, 0
    %v246 = vsel %vm211, %v158, 0
    %v249 = vsel %vm211, %v159, 0
    %v252 = vsel %vm211, %v160, 0
    %v255 = vsel %vm211, %v161, 0
    %v258 = vsel %vm211, %v162, 0
    %v261 = vsel %vm211, %v163, 0
    %v264 = vsel %vm211, %v164, 0
    %v267 = vsel %vm211, %v165, 0
    %v270 = vsel %vm211, %v166, 0
    %v273 = vsel %vm211, %v167, 0
    %v276 = vsel %vm211, %v168, 0
    %v279 = vsel %vm211, %v169, 0
    %v282 = vsel %vm211, %v170, 0
    %v285 = vsel %vm211, %v171, 0
    %v288 = vsel %vm211, %v172, 0
    %v291 = vsel %vm211, %v173, 0
    %v294 = vsel %vm211, %v174, 0
    %v297 = vsel %vm211, %v175, 0
    %v300 = vsel %vm211, %v176, 0
    %v303 = vsel %vm211, %v177, 0
    %v306 = vsel %vm211, %v178, 0
    %v309 = vsel %vm211, %v179, 0
    %v312 = vsel %vm211, %v180, 0
    %v315 = vsel %vm211, %v181, 0
    %v318 = vsel %vm211, %v182, 0
    %v321 = vsel %vm211, %v183, 0
    %v324 = vsel %vm211, %v184, 0
    %v327 = vsel %vm211, %v185, 0
    %v330 = vsel %vm211, %v186, 0
    %v333 = vsel %vm211, %v187, 0
    %v336 = vsel %vm211, %v188, 0
    %v339 = vsel %vm211, %v189, 0
    %v342 = vsel %vm211, %v190, 0
    %v345 = vsel %vm211, %v191, 0
    %v348 = vsel %vm211, %v192, 0
    %v351 = vsel %vm211, %v193, 0
    %v354 = vsel %vm211, %v194, 0
    %v357 = vsel %vm211, %v195, 0
    %v360 = vsel %vm211, %v196, 0
    %v363 = vsel %vm211, %v197, 0
    %v366 = vsel %vm211, %v198, 0
    %v369 = vsel %vm211, %v199, 0
    %v372 = vsel %vm211, %v200, 0
    %v375 = vsel %vm211, %v201, 0
    %v378 = vsel %vm211, %v202, 0
    %v381 = vsel %vm211, %v203, 0
    %v384 = vsel %vm211, %v204, 0
    %v387 = vsel %vm211, %v205, 0
    %v390 = vsel %vm211, %v206, 0
    %v393 = vsel %vm211, %v207, 0
    %v396 = vsel %vm211, %v208, 0
    %v399 = vsel %vm211, %v209, 0
    %v402 = vsel %vm211, %v210, 0
    %vm404 = vcmask 1043456
    %v406 = vsel %vm404, %v146, 0
    %408 = vmatprep.subr.mxu0 0.0
    %409 = vmatpush1.msra.mxu0 %v406
    %410 = vmatprep.subr.mxu0 0.0
    %411 = vmatpush1.msra.mxu0 0.0
    %412 = vmatprep.subr.mxu0 0.0
    %413 = vmatpush1.msra.mxu0 0.0
    %414 = vmatprep.subr.mxu0 0.0
    %415 = vmatpush1.msra.mxu0 0.0
    %416 = vmatprep.subr.mxu0 0.0
    %417 = vmatpush1.msra.mxu0 0.0
    %418 = vmatprep.subr.mxu0 0.0
    %419 = vmatpush1.msra.mxu0 0.0
    %420 = vmatprep.subr.mxu0 0.0
    %421 = vmatpush1.msra.mxu0 0.0
    %422 = vmatprep.subr.mxu0 0.0
    %423 = vmatpush1.msra.mxu0 0.0
    %424 = vmatprep.subr.mxu0 0.0
    %425 = vmatpush1.msra.mxu0 0.0
    %426 = vmatprep.subr.mxu0 0.0
    %427 = vmatpush1.msra.mxu0 0.0
    %428 = vmatprep.subr.mxu0 0.0
    %429 = vmatpush1.msra.mxu0 0.0
    %430 = vmatprep.subr.mxu0 0.0
    %431 = vmatpush1.msra.mxu0 0.0
    %432 = vmatprep.subr.mxu0 0.0
    %433 = vmatpush1.msra.mxu0 0.0
    %434 = vmatprep.subr.mxu0 0.0
    %435 = vmatpush1.msra.mxu0 0.0
    %436 = vmatprep.subr.mxu0 0.0
    %437 = vmatpush1.msra.mxu0 0.0
    %438 = vmatprep.subr.mxu0 0.0
    %439 = vmatpush1.msra.mxu0 0.0
    %440 = vmatprep.subr.mxu0 0.0
    %441 = vmatpush1.msra.mxu0 0.0
    %442 = vmatprep.subr.mxu0 0.0
    %443 = vmatpush1.msra.mxu0 0.0
    %444 = vmatprep.subr.mxu0 0.0
    %445 = vmatpush1.msra.mxu0 0.0
    %446 = vmatprep.subr.mxu0 0.0
    %447 = vmatpush1.msra.mxu0 0.0
    %448 = vmatprep.subr.mxu0 0.0
    %449 = vmatpush1.msra.mxu0 0.0
    %450 = vmatprep.subr.mxu0 0.0
    %451 = vmatpush1.msra.mxu0 0.0
    %452 = vmatprep.subr.mxu0 0.0
    %453 = vmatpush1.msra.mxu0 0.0
    %454 = vmatprep.subr.mxu0 0.0
    %455 = vmatpush1.msra.mxu0 0.0
    %456 = vmatprep.subr.mxu0 0.0
    %457 = vmatpush1.msra.mxu0 0.0
    %458 = vmatprep.subr.mxu0 0.0
    %459 = vmatpush1.msra.mxu0 0.0
    %460 = vmatprep.subr.mxu0 0.0
    %461 = vmatpush1.msra.mxu0 0.0
    %462 = vmatprep.subr.mxu0 0.0
    %463 = vmatpush1.msra.mxu0 0.0
    %464 = vmatprep.subr.mxu0 0.0
    %465 = vmatpush1.msra.mxu0 0.0
    %466 = vmatprep.subr.mxu0 0.0
    %467 = vmatpush1.msra.mxu0 0.0
    %468 = vmatprep.subr.mxu0 0.0
    %469 = vmatpush1.msra.mxu0 0.0
    %470 = vmatprep.subr.mxu0 0.0
    %471 = vmatpush1.msra.mxu0 0.0
    %472 = vmatprep.mubr.f32.mxu0 0.0
    %473 = vmatmul.mubr.f32.gmra.mrb[0].mxu0 %v213
    %v474 = vpop.f32.mrb[0].mxu0
    %v475 = vadd.f32 0.0, %v474
    %v476 = vpop.f32.mrb[0].mxu0
    %477 = vmatprep.mubr.f32.mxu0 0.0
    %478 = vmatmul.mubr.f32.gmra.mrb[0].mxu0 %v216
    %v479 = vpop.f32.mrb[0].mxu0
    %v480 = vadd.f32 0.0, %v479
    %v481 = vpop.f32.mrb[0].mxu0
    %482 = vmatprep.mubr.f32.mxu0 0.0
    %483 = vmatmul.mubr.f32.gmra.mrb[0].mxu0 %v219
    %v484 = vpop.f32.mrb[0].mxu0
    %v485 = vadd.f32 0.0, %v484
    %v486 = vpop.f32.mrb[0].mxu0
    %487 = vmatprep.mubr.f32.mxu0 0.0
    %488 = vmatmul.mubr.f32.gmra.mrb[0].mxu0 %v222
    %v489 = vpop.f32.mrb[0].mxu0
    %v490 = vadd.f32 0.0, %v489
    %v491 = vpop.f32.mrb[0].mxu0
    %492 = vmatprep.mubr.f32.mxu0 0.0
    %493 = vmatmul.mubr.f32.gmra.mrb[0].mxu0 %v225
    %v494 = vpop.f32.mrb[0].mxu0
    %v495 = vadd.f32 0.0, %v494
    %v496 = vpop.f32.mrb[0].mxu0
    %497 = vmatprep.mubr.f32.mxu0 0.0
    %498 = vmatmul.mubr.f32.gmra.mrb[0].mxu0 %v228
    %v499 = vpop.f32.mrb[0].mxu0
    %v500 = vadd.f32 0.0, %v499
    %v501 = vpop.f32.mrb[0].mxu0
    %502 = vmatprep.mubr.f32.mxu0 0.0
    %503 = vmatmul.mubr.f32.gmra.mrb[0].mxu0 %v231
    %v504 = vpop.f32.mrb[0].mxu0
    %v505 = vadd.f32 0.0, %v504
    %v506 = vpop.f32.mrb[0].mxu0
    %507 = vmatprep.mubr.f32.mxu0 0.0
    %508 = vmatmul.mubr.f32.gmra.mrb[0].mxu0 %v234
    %v509 = vpop.f32.mrb[0].mxu0
    %v510 = vadd.f32 0.0, %v509
    %v511 = vpop.f32.mrb[0].mxu0
    %512 = vmatprep.mubr.f32.mxu0 0.0
    %513 = vmatmul.mubr.f32.gmra.mrb[0].mxu0 %v237
    %v514 = vpop.f32.mrb[0].mxu0
    %v515 = vadd.f32 0.0, %v514
    %v516 = vpop.f32.mrb[0].mxu0
    %517 = vmatprep.mubr.f32.mxu0 0.0
    %518 = vmatmul.mubr.f32.gmra.mrb[0].mxu0 %v240
    %v519 = vpop.f32.mrb[0].mxu0
    %v520 = vadd.f32 0.0, %v519
    %v521 = vpop.f32.mrb[0].mxu0
    %522 = vmatprep.mubr.f32.mxu0 0.0
    %523 = vmatmul.mubr.f32.gmra.mrb[0].mxu0 %v243
    %v524 = vpop.f32.mrb[0].mxu0
    %v525 = vadd.f32 0.0, %v524
    %v526 = vpop.f32.mrb[0].mxu0
    %527 = vmatprep.mubr.f32.mxu0 0.0
    %528 = vmatmul.mubr.f32.gmra.mrb[0].mxu0 %v246
    %v529 = vpop.f32.mrb[0].mxu0
    %v530 = vadd.f32 0.0, %v529
    %v531 = vpop.f32.mrb[0].mxu0
    %532 = vmatprep.mubr.f32.mxu0 0.0
    %533 = vmatmul.mubr.f32.gmra.mrb[0].mxu0 %v249
    %v534 = vpop.f32.mrb[0].mxu0
    %v535 = vadd.f32 0.0, %v534
    %v536 = vpop.f32.mrb[0].mxu0
    %537 = vmatprep.mubr.f32.mxu0 0.0
    %538 = vmatmul.mubr.f32.gmra.mrb[0].mxu0 %v252
    %v539 = vpop.f32.mrb[0].mxu0
    %v540 = vadd.f32 0.0, %v539
    %v541 = vpop.f32.mrb[0].mxu0
    %542 = vmatprep.mubr.f32.mxu0 0.0
    %543 = vmatmul.mubr.f32.gmra.mrb[0].mxu0 %v255
    %v544 = vpop.f32.mrb[0].mxu0
    %v545 = vadd.f32 0.0, %v544
    %v546 = vpop.f32.mrb[0].mxu0
    %547 = vmatprep.mubr.f32.mxu0 0.0
    %548 = vmatmul.mubr.f32.gmra.mrb[0].mxu0 %v258
    %v549 = vpop.f32.mrb[0].mxu0
    %v550 = vadd.f32 0.0, %v549
    %v551 = vpop.f32.mrb[0].mxu0
    %552 = vmatprep.mubr.f32.mxu0 0.0
    %553 = vmatmul.mubr.f32.gmra.mrb[0].mxu0 %v261
    %v554 = vpop.f32.mrb[0].mxu0
    %v555 = vadd.f32 0.0, %v554
    %v556 = vpop.f32.mrb[0].mxu0
    %557 = vmatprep.mubr.f32.mxu0 0.0
    %558 = vmatmul.mubr.f32.gmra.mrb[0].mxu0 %v264
    %v559 = vpop.f32.mrb[0].mxu0
    %v560 = vadd.f32 0.0, %v559
    %v561 = vpop.f32.mrb[0].mxu0
    %562 = vmatprep.mubr.f32.mxu0 0.0
    %563 = vmatmul.mubr.f32.gmra.mrb[0].mxu0 %v267
    %v564 = vpop.f32.mrb[0].mxu0
    %v565 = vadd.f32 0.0, %v564
    %v566 = vpop.f32.mrb[0].mxu0
    %567 = vmatprep.mubr.f32.mxu0 0.0
    %568 = vmatmul.mubr.f32.gmra.mrb[0].mxu0 %v270
    %v569 = vpop.f32.mrb[0].mxu0
    %v570 = vadd.f32 0.0, %v569
    %v571 = vpop.f32.mrb[0].mxu0
    %572 = vmatprep.mubr.f32.mxu0 0.0
    %573 = vmatmul.mubr.f32.gmra.mrb[0].mxu0 %v273
    %v574 = vpop.f32.mrb[0].mxu0
    %v575 = vadd.f32 0.0, %v574
    %v576 = vpop.f32.mrb[0].mxu0
    %577 = vmatprep.mubr.f32.mxu0 0.0
    %578 = vmatmul.mubr.f32.gmra.mrb[0].mxu0 %v276
    %v579 = vpop.f32.mrb[0].mxu0
    %v580 = vadd.f32 0.0, %v579
    %v581 = vpop.f32.mrb[0].mxu0
    %582 = vmatprep.mubr.f32.mxu0 0.0
    %583 = vmatmul.mubr.f32.gmra.mrb[0].mxu0 %v279
    %v584 = vpop.f32.mrb[0].mxu0
    %v585 = vadd.f32 0.0, %v584
    %v586 = vpop.f32.mrb[0].mxu0
    %587 = vmatprep.mubr.f32.mxu0 0.0
    %588 = vmatmul.mubr.f32.gmra.mrb[0].mxu0 %v282
    %v589 = vpop.f32.mrb[0].mxu0
    %v590 = vadd.f32 0.0, %v589
    %v591 = vpop.f32.mrb[0].mxu0
    %592 = vmatprep.mubr.f32.mxu0 0.0
    %593 = vmatmul.mubr.f32.gmra.mrb[0].mxu0 %v285
    %v594 = vpop.f32.mrb[0].mxu0
    %v595 = vadd.f32 0.0, %v594
    %v596 = vpop.f32.mrb[0].mxu0
    %597 = vmatprep.mubr.f32.mxu0 0.0
    %598 = vmatmul.mubr.f32.gmra.mrb[0].mxu0 %v288
    %v599 = vpop.f32.mrb[0].mxu0
    %v600 = vadd.f32 0.0, %v599
    %v601 = vpop.f32.mrb[0].mxu0
    %602 = vmatprep.mubr.f32.mxu0 0.0
    %603 = vmatmul.mubr.f32.gmra.mrb[0].mxu0 %v291
    %v604 = vpop.f32.mrb[0].mxu0
    %v605 = vadd.f32 0.0, %v604
    %v606 = vpop.f32.mrb[0].mxu0
    %607 = vmatprep.mubr.f32.mxu0 0.0
    %608 = vmatmul.mubr.f32.gmra.mrb[0].mxu0 %v294
    %v609 = vpop.f32.mrb[0].mxu0
    %v610 = vadd.f32 0.0, %v609
    %v611 = vpop.f32.mrb[0].mxu0
    %612 = vmatprep.mubr.f32.mxu0 0.0
    %613 = vmatmul.mubr.f32.gmra.mrb[0].mxu0 %v297
    %v614 = vpop.f32.mrb[0].mxu0
    %v615 = vadd.f32 0.0, %v614
    %v616 = vpop.f32.mrb[0].mxu0
    %617 = vmatprep.mubr.f32.mxu0 0.0
    %618 = vmatmul.mubr.f32.gmra.mrb[0].mxu0 %v300
    %v619 = vpop.f32.mrb[0].mxu0
    %v620 = vadd.f32 0.0, %v619
    %v621 = vpop.f32.mrb[0].mxu0
    %622 = vmatprep.mubr.f32.mxu0 0.0
    %623 = vmatmul.mubr.f32.gmra.mrb[0].mxu0 %v303
    %v624 = vpop.f32.mrb[0].mxu0
    %v625 = vadd.f32 0.0, %v624
    %v626 = vpop.f32.mrb[0].mxu0
    %627 = vmatprep.mubr.f32.mxu0 0.0
    %628 = vmatmul.mubr.f32.gmra.mrb[0].mxu0 %v306
    %v629 = vpop.f32.mrb[0].mxu0
    %v630 = vadd.f32 0.0, %v629
    %v631 = vpop.f32.mrb[0].mxu0
    %632 = vmatprep.mubr.f32.mxu0 0.0
    %633 = vmatmul.mubr.f32.gmra.mrb[0].mxu0 %v309
    %v634 = vpop.f32.mrb[0].mxu0
    %v635 = vadd.f32 0.0, %v634
    %v636 = vpop.f32.mrb[0].mxu0
    %637 = vmatprep.mubr.f32.mxu0 0.0
    %638 = vmatmul.mubr.f32.gmra.mrb[0].mxu0 %v312
    %v639 = vpop.f32.mrb[0].mxu0
    %v640 = vadd.f32 0.0, %v639
    %v641 = vpop.f32.mrb[0].mxu0
    %642 = vmatprep.mubr.f32.mxu0 0.0
    %643 = vmatmul.mubr.f32.gmra.mrb[0].mxu0 %v315
    %v644 = vpop.f32.mrb[0].mxu0
    %v645 = vadd.f32 0.0, %v644
    %v646 = vpop.f32.mrb[0].mxu0
    %647 = vmatprep.mubr.f32.mxu0 0.0
    %648 = vmatmul.mubr.f32.gmra.mrb[0].mxu0 %v318
    %v649 = vpop.f32.mrb[0].mxu0
    %v650 = vadd.f32 0.0, %v649
    %v651 = vpop.f32.mrb[0].mxu0
    %652 = vmatprep.mubr.f32.mxu0 0.0
    %653 = vmatmul.mubr.f32.gmra.mrb[0].mxu0 %v321
    %v654 = vpop.f32.mrb[0].mxu0
    %v655 = vadd.f32 0.0, %v654
    %v656 = vpop.f32.mrb[0].mxu0
    %657 = vmatprep.mubr.f32.mxu0 0.0
    %658 = vmatmul.mubr.f32.gmra.mrb[0].mxu0 %v324
    %v659 = vpop.f32.mrb[0].mxu0
    %v660 = vadd.f32 0.0, %v659
    %v661 = vpop.f32.mrb[0].mxu0
    %662 = vmatprep.mubr.f32.mxu0 0.0
    %663 = vmatmul.mubr.f32.gmra.mrb[0].mxu0 %v327
    %v664 = vpop.f32.mrb[0].mxu0
    %v665 = vadd.f32 0.0, %v664
    %v666 = vpop.f32.mrb[0].mxu0
    %667 = vmatprep.mubr.f32.mxu0 0.0
    %668 = vmatmul.mubr.f32.gmra.mrb[0].mxu0 %v330
    %v669 = vpop.f32.mrb[0].mxu0
    %v670 = vadd.f32 0.0, %v669
    %v671 = vpop.f32.mrb[0].mxu0
    %672 = vmatprep.mubr.f32.mxu0 0.0
    %673 = vmatmul.mubr.f32.gmra.mrb[0].mxu0 %v333
    %v674 = vpop.f32.mrb[0].mxu0
    %v675 = vadd.f32 0.0, %v674
    %v676 = vpop.f32.mrb[0].mxu0
    %677 = vmatprep.mubr.f32.mxu0 0.0
    %678 = vmatmul.mubr.f32.gmra.mrb[0].mxu0 %v336
    %v679 = vpop.f32.mrb[0].mxu0
    %v680 = vadd.f32 0.0, %v679
    %v681 = vpop.f32.mrb[0].mxu0
    %682 = vmatprep.mubr.f32.mxu0 0.0
    %683 = vmatmul.mubr.f32.gmra.mrb[0].mxu0 %v339
    %v684 = vpop.f32.mrb[0].mxu0
    %v685 = vadd.f32 0.0, %v684
    %v686 = vpop.f32.mrb[0].mxu0
    %687 = vmatprep.mubr.f32.mxu0 0.0
    %688 = vmatmul.mubr.f32.gmra.mrb[0].mxu0 %v342
    %v689 = vpop.f32.mrb[0].mxu0
    %v690 = vadd.f32 0.0, %v689
    %v691 = vpop.f32.mrb[0].mxu0
    %692 = vmatprep.mubr.f32.mxu0 0.0
    %693 = vmatmul.mubr.f32.gmra.mrb[0].mxu0 %v345
    %v694 = vpop.f32.mrb[0].mxu0
    %v695 = vadd.f32 0.0, %v694
    %v696 = vpop.f32.mrb[0].mxu0
    %697 = vmatprep.mubr.f32.mxu0 0.0
    %698 = vmatmul.mubr.f32.gmra.mrb[0].mxu0 %v348
    %v699 = vpop.f32.mrb[0].mxu0
    %v700 = vadd.f32 0.0, %v699
    %v701 = vpop.f32.mrb[0].mxu0
    %702 = vmatprep.mubr.f32.mxu0 0.0
    %703 = vmatmul.mubr.f32.gmra.mrb[0].mxu0 %v351
    %v704 = vpop.f32.mrb[0].mxu0
    %v705 = vadd.f32 0.0, %v704
    %v706 = vpop.f32.mrb[0].mxu0
    %707 = vmatprep.mubr.f32.mxu0 0.0
    %708 = vmatmul.mubr.f32.gmra.mrb[0].mxu0 %v354
    %v709 = vpop.f32.mrb[0].mxu0
    %v710 = vadd.f32 0.0, %v709
    %v711 = vpop.f32.mrb[0].mxu0
    %712 = vmatprep.mubr.f32.mxu0 0.0
    %713 = vmatmul.mubr.f32.gmra.mrb[0].mxu0 %v357
    %v714 = vpop.f32.mrb[0].mxu0
    %v715 = vadd.f32 0.0, %v714
    %v716 = vpop.f32.mrb[0].mxu0
    %717 = vmatprep.mubr.f32.mxu0 0.0
    %718 = vmatmul.mubr.f32.gmra.mrb[0].mxu0 %v360
    %v719 = vpop.f32.mrb[0].mxu0
    %v720 = vadd.f32 0.0, %v719
    %v721 = vpop.f32.mrb[0].mxu0
    %722 = vmatprep.mubr.f32.mxu0 0.0
    %723 = vmatmul.mubr.f32.gmra.mrb[0].mxu0 %v363
    %v724 = vpop.f32.mrb[0].mxu0
    %v725 = vadd.f32 0.0, %v724
    %v726 = vpop.f32.mrb[0].mxu0
    %727 = vmatprep.mubr.f32.mxu0 0.0
    %728 = vmatmul.mubr.f32.gmra.mrb[0].mxu0 %v366
    %v729 = vpop.f32.mrb[0].mxu0
    %v730 = vadd.f32 0.0, %v729
    %v731 = vpop.f32.mrb[0].mxu0
    %732 = vmatprep.mubr.f32.mxu0 0.0
    %733 = vmatmul.mubr.f32.gmra.mrb[0].mxu0 %v369
    %v734 = vpop.f32.mrb[0].mxu0
    %v735 = vadd.f32 0.0, %v734
    %v736 = vpop.f32.mrb[0].mxu0
    %737 = vmatprep.mubr.f32.mxu0 0.0
    %738 = vmatmul.mubr.f32.gmra.mrb[0].mxu0 %v372
    %v739 = vpop.f32.mrb[0].mxu0
    %v740 = vadd.f32 0.0, %v739
    %v741 = vpop.f32.mrb[0].mxu0
    %742 = vmatprep.mubr.f32.mxu0 0.0
    %743 = vmatmul.mubr.f32.gmra.mrb[0].mxu0 %v375
    %v744 = vpop.f32.mrb[0].mxu0
    %v745 = vadd.f32 0.0, %v744
    %v746 = vpop.f32.mrb[0].mxu0
    %747 = vmatprep.mubr.f32.mxu0 0.0
    %748 = vmatmul.mubr.f32.gmra.mrb[0].mxu0 %v378
    %v749 = vpop.f32.mrb[0].mxu0
    %v750 = vadd.f32 0.0, %v749
    %v751 = vpop.f32.mrb[0].mxu0
    %752 = vmatprep.mubr.f32.mxu0 0.0
    %753 = vmatmul.mubr.f32.gmra.mrb[0].mxu0 %v381
    %v754 = vpop.f32.mrb[0].mxu0
    %v755 = vadd.f32 0.0, %v754
    %v756 = vpop.f32.mrb[0].mxu0
    %757 = vmatprep.mubr.f32.mxu0 0.0
    %758 = vmatmul.mubr.f32.gmra.mrb[0].mxu0 %v384
    %v759 = vpop.f32.mrb[0].mxu0
    %v760 = vadd.f32 0.0, %v759
    %v761 = vpop.f32.mrb[0].mxu0
    %762 = vmatprep.mubr.f32.mxu0 0.0
    %763 = vmatmul.mubr.f32.gmra.mrb[0].mxu0 %v387
    %v764 = vpop.f32.mrb[0].mxu0
    %v765 = vadd.f32 0.0, %v764
    %v766 = vpop.f32.mrb[0].mxu0
    %767 = vmatprep.mubr.f32.mxu0 0.0
    %768 = vmatmul.mubr.f32.gmra.mrb[0].mxu0 %v390
    %v769 = vpop.f32.mrb[0].mxu0
    %v770 = vadd.f32 0.0, %v769
    %v771 = vpop.f32.mrb[0].mxu0
    %772 = vmatprep.mubr.f32.mxu0 0.0
    %773 = vmatmul.mubr.f32.gmra.mrb[0].mxu0 %v393
    %v774 = vpop.f32.mrb[0].mxu0
    %v775 = vadd.f32 0.0, %v774
    %v776 = vpop.f32.mrb[0].mxu0
    %777 = vmatprep.mubr.f32.mxu0 0.0
    %778 = vmatmul.mubr.f32.gmra.mrb[0].mxu0 %v396
    %v779 = vpop.f32.mrb[0].mxu0
    %v780 = vadd.f32 0.0, %v779
    %v781 = vpop.f32.mrb[0].mxu0
    %782 = vmatprep.mubr.f32.mxu0 0.0
    %783 = vmatmul.mubr.f32.gmra.mrb[0].mxu0 %v399
    %v784 = vpop.f32.mrb[0].mxu0
    %v785 = vadd.f32 0.0, %v784
    %v786 = vpop.f32.mrb[0].mxu0
    %787 = vmatprep.mubr.f32.mxu0 0.0
    %788 = vmatmul.mubr.f32.gmra.mrb[0].mxu0 %v402
    %v789 = vpop.f32.mrb[0].mxu0
    %v790 = vadd.f32 0.0, %v789
    %v791 = vpop.f32.mrb[0].mxu0
    %792 = vdwg.mxu0
    %s793 = scalar_lea.vmem [#allocation2], 24
    %794 = vst [vmem:[%s793 + $0x1] sm:$0xff] %v475
    %795 = vst [vmem:[%s793 + $0x9] sm:$0xff] %v480
    %796 = vst [vmem:[%s793 + $0x19] sm:$0xff] %v485
    %797 = vst [vmem:[%s793 + $0x21] sm:$0xff] %v490
    %798 = vst [vmem:[%s793 + $0x31] sm:$0xff] %v495
    %799 = vst [vmem:[%s793 + $0x39] sm:$0xff] %v500
    %800 = vst [vmem:[%s793 + $0x49] sm:$0xff] %v505
    %801 = vst [vmem:[%s793 + $0x51] sm:$0xff] %v510
    %802 = vst [vmem:[%s793 + $0x61] sm:$0xff] %v515
    %803 = vst [vmem:[%s793 + $0x69] sm:$0xff] %v520
    %804 = vst [vmem:[%s793 + $0x79] sm:$0xff] %v525
    %805 = vst [vmem:[%s793 + $0x81] sm:$0xff] %v530
    %806 = vst [vmem:[%s793 + $0x91] sm:$0xff] %v535
    %807 = vst [vmem:[%s793 + $0x99] sm:$0xff] %v540
    %808 = vst [vmem:[%s793 + $0xa9] sm:$0xff] %v545
    %809 = vst [vmem:[%s793 + $0xb1] sm:$0xff] %v550
    %810 = vst [vmem:[%s793 + $0xc1] sm:$0xff] %v555
    %811 = vst [vmem:[%s793 + $0xc9] sm:$0xff] %v560
    %812 = vst [vmem:[%s793 + $0xd9] sm:$0xff] %v565
    %813 = vst [vmem:[%s793 + $0xe1] sm:$0xff] %v570
    %814 = vst [vmem:[%s793 + $0xf1] sm:$0xff] %v575
    %815 = vst [vmem:[%s793 + $0xf9] sm:$0xff] %v580
    %816 = vst [vmem:[%s793 + $0x109] sm:$0xff] %v585
    %817 = vst [vmem:[%s793 + $0x111] sm:$0xff] %v590
    %818 = vst [vmem:[%s793 + $0x121] sm:$0xff] %v595
    %819 = vst [vmem:[%s793 + $0x129] sm:$0xff] %v600
    %820 = vst [vmem:[%s793 + $0x139] sm:$0xff] %v605
    %821 = vst [vmem:[%s793 + $0x141] sm:$0xff] %v610
    %822 = vst [vmem:[%s793 + $0x151] sm:$0xff] %v615
    %823 = vst [vmem:[%s793 + $0x159] sm:$0xff] %v620
    %824 = vst [vmem:[%s793 + $0x169] sm:$0xff] %v625
    %825 = vst [vmem:[%s793 + $0x171] sm:$0xff] %v630
    %826 = vst [vmem:[%s793 + $0x1b1] sm:$0xff] %v635
    %827 = vst [vmem:[%s793 + $0x1b9] sm:$0xff] %v640
    %828 = vst [vmem:[%s793 + $0x1c9] sm:$0xff] %v645
    %829 = vst [vmem:[%s793 + $0x1d1] sm:$0xff] %v650
    %830 = vst [vmem:[%s793 + $0x1e1] sm:$0xff] %v655
    %831 = vst [vmem:[%s793 + $0x1e9] sm:$0xff] %v660
    %832 = vst [vmem:[%s793 + $0x1f9] sm:$0xff] %v665
    %833 = vst [vmem:[%s793 + $0x201] sm:$0xff] %v670
    %834 = vst [vmem:[%s793 + $0x211] sm:$0xff] %v675
    %835 = vst [vmem:[%s793 + $0x219] sm:$0xff] %v680
    %836 = vst [vmem:[%s793 + $0x229] sm:$0xff] %v685
    %837 = vst [vmem:[%s793 + $0x231] sm:$0xff] %v690
    %838 = vst [vmem:[%s793 + $0x241] sm:$0xff] %v695
    %839 = vst [vmem:[%s793 + $0x249] sm:$0xff] %v700
    %840 = vst [vmem:[%s793 + $0x259] sm:$0xff] %v705
    %841 = vst [vmem:[%s793 + $0x261] sm:$0xff] %v710
    %842 = vst [vmem:[%s793 + $0x271] sm:$0xff] %v715
    %843 = vst [vmem:[%s793 + $0x279] sm:$0xff] %v720
    %844 = vst [vmem:[%s793 + $0x289] sm:$0xff] %v725
    %845 = vst [vmem:[%s793 + $0x291] sm:$0xff] %v730
    %846 = vst [vmem:[%s793 + $0x2a1] sm:$0xff] %v735
    %847 = vst [vmem:[%s793 + $0x2a9] sm:$0xff] %v740
    %848 = vst [vmem:[%s793 + $0x2b9] sm:$0xff] %v745
    %849 = vst [vmem:[%s793 + $0x2c1] sm:$0xff] %v750
    %850 = vst [vmem:[%s793 + $0x2d1] sm:$0xff] %v755
    %851 = vst [vmem:[%s793 + $0x2d9] sm:$0xff] %v760
    %852 = vst [vmem:[%s793 + $0x2e9] sm:$0xff] %v765
    %853 = vst [vmem:[%s793 + $0x2f1] sm:$0xff] %v770
    %854 = vst [vmem:[%s793 + $0x301] sm:$0xff] %v775
    %855 = vst [vmem:[%s793 + $0x309] sm:$0xff] %v780
    %856 = vst [vmem:[%s793 + $0x319] sm:$0xff] %v785
    %857 = vst [vmem:[%s793 + $0x321] sm:$0xff] %v790
    %v858 = vld [vmem:[#allocation2] sm:$0xff]
    %v859 = vld [vmem:[#allocation2 + $0x8] sm:$0xff]
    %v860 = vld [vmem:[#allocation2 + $0x18] sm:$0xff]
    %v861 = vld [vmem:[#allocation2 + $0x20] sm:$0xff]
    %v862 = vld [vmem:[#allocation2 + $0x30] sm:$0xff]
    %v863 = vld [vmem:[#allocation2 + $0x38] sm:$0xff]
    %v864 = vld [vmem:[#allocation2 + $0x48] sm:$0xff]
    %v865 = vld [vmem:[#allocation2 + $0x50] sm:$0xff]
    %v866 = vld [vmem:[#allocation2 + $0x60] sm:$0xff]
    %v867 = vld [vmem:[#allocation2 + $0x68] sm:$0xff]
    %v868 = vld [vmem:[#allocation2 + $0x78] sm:$0xff]
    %v869 = vld [vmem:[#allocation2 + $0x80] sm:$0xff]
    %v870 = vld [vmem:[#allocation2 + $0x90] sm:$0xff]
    %v871 = vld [vmem:[#allocation2 + $0x98] sm:$0xff]
    %v872 = vld [vmem:[#allocation2 + $0xa8] sm:$0xff]
    %v873 = vld [vmem:[#allocation2 + $0xb0] sm:$0xff]
    %v874 = vld [vmem:[#allocation2 + $0xc0] sm:$0xff]
    %v875 = vld [vmem:[#allocation2 + $0xc8] sm:$0xff]
    %v876 = vld [vmem:[#allocation2 + $0xd8] sm:$0xff]
    %v877 = vld [vmem:[#allocation2 + $0xe0] sm:$0xff]
    %v878 = vld [vmem:[#allocation2 + $0xf0] sm:$0xff]
    %v879 = vld [vmem:[#allocation2 + $0xf8] sm:$0xff]
    %v880 = vld [vmem:[#allocation2 + $0x108] sm:$0xff]
    %v881 = vld [vmem:[#allocation2 + $0x110] sm:$0xff]
    %v882 = vld [vmem:[#allocation2 + $0x120] sm:$0xff]
    %v883 = vld [vmem:[#allocation2 + $0x128] sm:$0xff]
    %v884 = vld [vmem:[#allocation2 + $0x138] sm:$0xff]
    %v885 = vld [vmem:[#allocation2 + $0x140] sm:$0xff]
    %v886 = vld [vmem:[#allocation2 + $0x150] sm:$0xff]
    %v887 = vld [vmem:[#allocation2 + $0x158] sm:$0xff]
    %v888 = vld [vmem:[#allocation2 + $0x168] sm:$0xff]
    %v889 = vld [vmem:[#allocation2 + $0x170] sm:$0xff]
    %v890 = vld [vmem:[#allocation2 + $0x1b0] sm:$0xff]
    %v891 = vld [vmem:[#allocation2 + $0x1b8] sm:$0xff]
    %v892 = vld [vmem:[#allocation2 + $0x1c8] sm:$0xff]
    %v893 = vld [vmem:[#allocation2 + $0x1d0] sm:$0xff]
    %v894 = vld [vmem:[#allocation2 + $0x1e0] sm:$0xff]
    %v895 = vld [vmem:[#allocation2 + $0x1e8] sm:$0xff]
    %v896 = vld [vmem:[#allocation2 + $0x1f8] sm:$0xff]
    %v897 = vld [vmem:[#allocation2 + $0x200] sm:$0xff]
    %v898 = vld [vmem:[#allocation2 + $0x210] sm:$0xff]
    %v899 = vld [vmem:[#allocation2 + $0x218] sm:$0xff]
    %v900 = vld [vmem:[#allocation2 + $0x228] sm:$0xff]
    %v901 = vld [vmem:[#allocation2 + $0x230] sm:$0xff]
    %v902 = vld [vmem:[#allocation2 + $0x240] sm:$0xff]
    %v903 = vld [vmem:[#allocation2 + $0x248] sm:$0xff]
    %v904 = vld [vmem:[#allocation2 + $0x258] sm:$0xff]
    %v905 = vld [vmem:[#allocation2 + $0x260] sm:$0xff]
    %v906 = vld [vmem:[#allocation2 + $0x270] sm:$0xff]
    %v907 = vld [vmem:[#allocation2 + $0x278] sm:$0xff]
    %v908 = vld [vmem:[#allocation2 + $0x288] sm:$0xff]
    %v909 = vld [vmem:[#allocation2 + $0x290] sm:$0xff]
    %v910 = vld [vmem:[#allocation2 + $0x2a0] sm:$0xff]
    %v911 = vld [vmem:[#allocation2 + $0x2a8] sm:$0xff]
    %v912 = vld [vmem:[#allocation2 + $0x2b8] sm:$0xff]
    %v913 = vld [vmem:[#allocation2 + $0x2c0] sm:$0xff]
    %v914 = vld [vmem:[#allocation2 + $0x2d0] sm:$0xff]
    %v915 = vld [vmem:[#allocation2 + $0x2d8] sm:$0xff]
    %v916 = vld [vmem:[#allocation2 + $0x2e8] sm:$0xff]
    %v917 = vld [vmem:[#allocation2 + $0x2f0] sm:$0xff]
    %v918 = vld [vmem:[#allocation2 + $0x300] sm:$0xff]
    %v919 = vld [vmem:[#allocation2 + $0x308] sm:$0xff]
    %v920 = vld [vmem:[#allocation2 + $0x318] sm:$0xff]
    %v921 = vld [vmem:[#allocation2 + $0x320] sm:$0xff]
    %922 = vst [vmem:[#allocation3] sm:$0xff] %v858
    %923 = vst [vmem:[#allocation3 + $0x48] sm:$0xff] %v859
    %924 = vst [vmem:[#allocation3 + $0x90] sm:$0xff] %v860
    %925 = vst [vmem:[#allocation3 + $0xd8] sm:$0xff] %v861
    %926 = vst [vmem:[#allocation3 + $0x120] sm:$0xff] %v862
    %927 = vst [vmem:[#allocation3 + $0x168] sm:$0xff] %v863
    %928 = vst [vmem:[#allocation3 + $0x1b0] sm:$0xff] %v864
    %929 = vst [vmem:[#allocation3 + $0x1f8] sm:$0xff] %v865
    %930 = vst [vmem:[#allocation3 + $0x240] sm:$0xff] %v866
    %931 = vst [vmem:[#allocation3 + $0x288] sm:$0xff] %v867
    %932 = vst [vmem:[#allocation3 + $0x2d0] sm:$0xff] %v868
    %933 = vst [vmem:[#allocation3 + $0x318] sm:$0xff] %v869
    %934 = vst [vmem:[#allocation3 + $0x360] sm:$0xff] %v870
    %935 = vst [vmem:[#allocation3 + $0x3a8] sm:$0xff] %v871
    %936 = vst [vmem:[#allocation3 + $0x3f0] sm:$0xff] %v872
    %937 = vst [vmem:[#allocation3 + $0x438] sm:$0xff] %v873
    %938 = vst [vmem:[#allocation3 + $0x480] sm:$0xff] %v874
    %939 = vst [vmem:[#allocation3 + $0x4c8] sm:$0xff] %v875
    %940 = vst [vmem:[#allocation3 + $0x510] sm:$0xff] %v876
    %941 = vst [vmem:[#allocation3 + $0x558] sm:$0xff] %v877
    %942 = vst [vmem:[#allocation3 + $0x5a0] sm:$0xff] %v878
    %943 = vst [vmem:[#allocation3 + $0x5e8] sm:$0xff] %v879
    %944 = vst [vmem:[#allocation3 + $0x630] sm:$0xff] %v880
    %945 = vst [vmem:[#allocation3 + $0x678] sm:$0xff] %v881
    %946 = vst [vmem:[#allocation3 + $0x6c0] sm:$0xff] %v882
    %947 = vst [vmem:[#allocation3 + $0x708] sm:$0xff] %v883
    %948 = vst [vmem:[#allocation3 + $0x750] sm:$0xff] %v884
    %949 = vst [vmem:[#allocation3 + $0x798] sm:$0xff] %v885
    %950 = vst [vmem:[#allocation3 + $0x7e0] sm:$0xff] %v886
    %951 = vst [vmem:[#allocation3 + $0x828] sm:$0xff] %v887
    %952 = vst [vmem:[#allocation3 + $0x870] sm:$0xff] %v888
    %953 = vst [vmem:[#allocation3 + $0x8b8] sm:$0xff] %v889
    %954 = vst [vmem:[#allocation3 + $0x900] sm:$0xff] %v890
    %955 = vst [vmem:[#allocation3 + $0x948] sm:$0xff] %v891
    %956 = vst [vmem:[#allocation3 + $0x990] sm:$0xff] %v892
    %957 = vst [vmem:[#allocation3 + $0x9d8] sm:$0xff] %v893
    %958 = vst [vmem:[#allocation3 + $0xa20] sm:$0xff] %v894
    %959 = vst [vmem:[#allocation3 + $0xa68] sm:$0xff] %v895
    %960 = vst [vmem:[#allocation3 + $0xab0] sm:$0xff] %v896
    %961 = vst [vmem:[#allocation3 + $0xaf8] sm:$0xff] %v897
    %962 = vst [vmem:[#allocation3 + $0xb40] sm:$0xff] %v898
    %963 = vst [vmem:[#allocation3 + $0xb88] sm:$0xff] %v899
    %964 = vst [vmem:[#allocation3 + $0xbd0] sm:$0xff] %v900
    %965 = vst [vmem:[#allocation3 + $0xc18] sm:$0xff] %v901
    %966 = vst [vmem:[#allocation3 + $0xc60] sm:$0xff] %v902
    %967 = vst [vmem:[#allocation3 + $0xca8] sm:$0xff] %v903
    %968 = vst [vmem:[#allocation3 + $0xcf0] sm:$0xff] %v904
    %969 = vst [vmem:[#allocation3 + $0xd38] sm:$0xff] %v905
    %970 = vst [vmem:[#allocation3 + $0xd80] sm:$0xff] %v906
    %971 = vst [vmem:[#allocation3 + $0xdc8] sm:$0xff] %v907
    %972 = vst [vmem:[#allocation3 + $0xe10] sm:$0xff] %v908
    %973 = vst [vmem:[#allocation3 + $0xe58] sm:$0xff] %v909
    %974 = vst [vmem:[#allocation3 + $0xea0] sm:$0xff] %v910
    %975 = vst [vmem:[#allocation3 + $0xee8] sm:$0xff] %v911
    %976 = vst [vmem:[#allocation3 + $0xf30] sm:$0xff] %v912
    %977 = vst [vmem:[#allocation3 + $0xf78] sm:$0xff] %v913
    %978 = vst [vmem:[#allocation3 + $0xfc0] sm:$0xff] %v914
    %979 = vst [vmem:[#allocation3 + $0x1008] sm:$0xff] %v915
    %980 = vst [vmem:[#allocation3 + $0x1050] sm:$0xff] %v916
    %981 = vst [vmem:[#allocation3 + $0x1098] sm:$0xff] %v917
    %982 = vst [vmem:[#allocation3 + $0x10e0] sm:$0xff] %v918
    %983 = vst [vmem:[#allocation3 + $0x1128] sm:$0xff] %v919
    %984 = vst [vmem:[#allocation3 + $0x1170] sm:$0xff] %v920
    %985 = vst [vmem:[#allocation3 + $0x11b8] sm:$0xff] %v921
    %v986 = vld [vmem:[#allocation2 + $0x1] sm:$0xff]
    %v987 = vld [vmem:[#allocation2 + $0x9] sm:$0xff]
    %v988 = vld [vmem:[#allocation2 + $0x19] sm:$0xff]
    %v989 = vld [vmem:[#allocation2 + $0x21] sm:$0xff]
    %v990 = vld [vmem:[#allocation2 + $0x31] sm:$0xff]
    %v991 = vld [vmem:[#allocation2 + $0x39] sm:$0xff]
    %v992 = vld [vmem:[#allocation2 + $0x49] sm:$0xff]
    %v993 = vld [vmem:[#allocation2 + $0x51] sm:$0xff]
    %v994 = vld [vmem:[#allocation2 + $0x61] sm:$0xff]
    %v995 = vld [vmem:[#allocation2 + $0x69] sm:$0xff]
    %v996 = vld [vmem:[#allocation2 + $0x79] sm:$0xff]
    %v997 = vld [vmem:[#allocation2 + $0x81] sm:$0xff]
    %v998 = vld [vmem:[#allocation2 + $0x91] sm:$0xff]
    %v999 = vld [vmem:[#allocation2 + $0x99] sm:$0xff]
    %v1000 = vld [vmem:[#allocation2 + $0xa9] sm:$0xff]
    %v1001 = vld [vmem:[#allocation2 + $0xb1] sm:$0xff]
    %v1002 = vld [vmem:[#allocation2 + $0xc1] sm:$0xff]
    %v1003 = vld [vmem:[#allocation2 + $0xc9] sm:$0xff]
    %v1004 = vld [vmem:[#allocation2 + $0xd9] sm:$0xff]
    %v1005 = vld [vmem:[#allocation2 + $0xe1] sm:$0xff]
    %v1006 = vld [vmem:[#allocation2 + $0xf1] sm:$0xff]
    %v1007 = vld [vmem:[#allocation2 + $0xf9] sm:$0xff]
    %v1008 = vld [vmem:[#allocation2 + $0x109] sm:$0xff]
    %v1009 = vld [vmem:[#allocation2 + $0x111] sm:$0xff]
    %v1010 = vld [vmem:[#allocation2 + $0x121] sm:$0xff]
    %v1011 = vld [vmem:[#allocation2 + $0x129] sm:$0xff]
    %v1012 = vld [vmem:[#allocation2 + $0x139] sm:$0xff]
    %v1013 = vld [vmem:[#allocation2 + $0x141] sm:$0xff]
    %v1014 = vld [vmem:[#allocation2 + $0x151] sm:$0xff]
    %v1015 = vld [vmem:[#allocation2 + $0x159] sm:$0xff]
    %v1016 = vld [vmem:[#allocation2 + $0x169] sm:$0xff]
    %v1017 = vld [vmem:[#allocation2 + $0x171] sm:$0xff]
    %v1018 = vld [vmem:[#allocation2 + $0x1b1] sm:$0xff]
    %v1019 = vld [vmem:[#allocation2 + $0x1b9] sm:$0xff]
    %v1020 = vld [vmem:[#allocation2 + $0x1c9] sm:$0xff]
    %v1021 = vld [vmem:[#allocation2 + $0x1d1] sm:$0xff]
    %v1022 = vld [vmem:[#allocation2 + $0x1e1] sm:$0xff]
    %v1023 = vld [vmem:[#allocation2 + $0x1e9] sm:$0xff]
    %v1024 = vld [vmem:[#allocation2 + $0x1f9] sm:$0xff]
    %v1025 = vld [vmem:[#allocation2 + $0x201] sm:$0xff]
    %v1026 = vld [vmem:[#allocation2 + $0x211] sm:$0xff]
    %v1027 = vld [vmem:[#allocation2 + $0x219] sm:$0xff]
    %v1028 = vld [vmem:[#allocation2 + $0x229] sm:$0xff]
    %v1029 = vld [vmem:[#allocation2 + $0x231] sm:$0xff]
    %v1030 = vld [vmem:[#allocation2 + $0x241] sm:$0xff]
    %v1031 = vld [vmem:[#allocation2 + $0x249] sm:$0xff]
    %v1032 = vld [vmem:[#allocation2 + $0x259] sm:$0xff]
    %v1033 = vld [vmem:[#allocation2 + $0x261] sm:$0xff]
    %v1034 = vld [vmem:[#allocation2 + $0x271] sm:$0xff]
    %v1035 = vld [vmem:[#allocation2 + $0x279] sm:$0xff]
    %v1036 = vld [vmem:[#allocation2 + $0x289] sm:$0xff]
    %v1037 = vld [vmem:[#allocation2 + $0x291] sm:$0xff]
    %v1038 = vld [vmem:[#allocation2 + $0x2a1] sm:$0xff]
    %v1039 = vld [vmem:[#allocation2 + $0x2a9] sm:$0xff]
    %v1040 = vld [vmem:[#allocation2 + $0x2b9] sm:$0xff]
    %v1041 = vld [vmem:[#allocation2 + $0x2c1] sm:$0xff]
    %v1042 = vld [vmem:[#allocation2 + $0x2d1] sm:$0xff]
    %v1043 = vld [vmem:[#allocation2 + $0x2d9] sm:$0xff]
    %v1044 = vld [vmem:[#allocation2 + $0x2e9] sm:$0xff]
    %v1045 = vld [vmem:[#allocation2 + $0x2f1] sm:$0xff]
    %v1046 = vld [vmem:[#allocation2 + $0x301] sm:$0xff]
    %v1047 = vld [vmem:[#allocation2 + $0x309] sm:$0xff]
    %v1048 = vld [vmem:[#allocation2 + $0x319] sm:$0xff]
    %v1049 = vld [vmem:[#allocation2 + $0x321] sm:$0xff]
    %1050 = vst [vmem:[#allocation3 + $0x8] sm:$0xff] %v986
    %1051 = vst [vmem:[#allocation3 + $0x50] sm:$0xff] %v987
    %1052 = vst [vmem:[#allocation3 + $0x98] sm:$0xff] %v988
    %1053 = vst [vmem:[#allocation3 + $0xe0] sm:$0xff] %v989
    %1054 = vst [vmem:[#allocation3 + $0x128] sm:$0xff] %v990
    %1055 = vst [vmem:[#allocation3 + $0x170] sm:$0xff] %v991
    %1056 = vst [vmem:[#allocation3 + $0x1b8] sm:$0xff] %v992
    %1057 = vst [vmem:[#allocation3 + $0x200] sm:$0xff] %v993
    %1058 = vst [vmem:[#allocation3 + $0x248] sm:$0xff] %v994
    %1059 = vst [vmem:[#allocation3 + $0x290] sm:$0xff] %v995
    %1060 = vst [vmem:[#allocation3 + $0x2d8] sm:$0xff] %v996
    %1061 = vst [vmem:[#allocation3 + $0x320] sm:$0xff] %v997
    %1062 = vst [vmem:[#allocation3 + $0x368] sm:$0xff] %v998
    %1063 = vst [vmem:[#allocation3 + $0x3b0] sm:$0xff] %v999
    %1064 = vst [vmem:[#allocation3 + $0x3f8] sm:$0xff] %v1000
    %1065 = vst [vmem:[#allocation3 + $0x440] sm:$0xff] %v1001
    %1066 = vst [vmem:[#allocation3 + $0x488] sm:$0xff] %v1002
    %1067 = vst [vmem:[#allocation3 + $0x4d0] sm:$0xff] %v1003
    %1068 = vst [vmem:[#allocation3 + $0x518] sm:$0xff] %v1004
    %1069 = vst [vmem:[#allocation3 + $0x560] sm:$0xff] %v1005
    %1070 = vst [vmem:[#allocation3 + $0x5a8] sm:$0xff] %v1006
    %1071 = vst [vmem:[#allocation3 + $0x5f0] sm:$0xff] %v1007
    %1072 = vst [vmem:[#allocation3 + $0x638] sm:$0xff] %v1008
    %1073 = vst [vmem:[#allocation3 + $0x680] sm:$0xff] %v1009
    %1074 = vst [vmem:[#allocation3 + $0x6c8] sm:$0xff] %v1010
    %1075 = vst [vmem:[#allocation3 + $0x710] sm:$0xff] %v1011
    %1076 = vst [vmem:[#allocation3 + $0x758] sm:$0xff] %v1012
    %1077 = vst [vmem:[#allocation3 + $0x7a0] sm:$0xff] %v1013
    %1078 = vst [vmem:[#allocation3 + $0x7e8] sm:$0xff] %v1014
    %1079 = vst [vmem:[#allocation3 + $0x830] sm:$0xff] %v1015
    %1080 = vst [vmem:[#allocation3 + $0x878] sm:$0xff] %v1016
    %1081 = vst [vmem:[#allocation3 + $0x8c0] sm:$0xff] %v1017
    %1082 = vst [vmem:[#allocation3 + $0x908] sm:$0xff] %v1018
    %1083 = vst [vmem:[#allocation3 + $0x950] sm:$0xff] %v1019
    %1084 = vst [vmem:[#allocation3 + $0x998] sm:$0xff] %v1020
    %1085 = vst [vmem:[#allocation3 + $0x9e0] sm:$0xff] %v1021
    %1086 = vst [vmem:[#allocation3 + $0xa28] sm:$0xff] %v1022
    %1087 = vst [vmem:[#allocation3 + $0xa70] sm:$0xff] %v1023
    %1088 = vst [vmem:[#allocation3 + $0xab8] sm:$0xff] %v1024
    %1089 = vst [vmem:[#allocation3 + $0xb00] sm:$0xff] %v1025
    %1090 = vst [vmem:[#allocation3 + $0xb48] sm:$0xff] %v1026
    %1091 = vst [vmem:[#allocation3 + $0xb90] sm:$0xff] %v1027
    %1092 = vst [vmem:[#allocation3 + $0xbd8] sm:$0xff] %v1028
    %1093 = vst [vmem:[#allocation3 + $0xc20] sm:$0xff] %v1029
    %1094 = vst [vmem:[#allocation3 + $0xc68] sm:$0xff] %v1030
    %1095 = vst [vmem:[#allocation3 + $0xcb0] sm:$0xff] %v1031
    %1096 = vst [vmem:[#allocation3 + $0xcf8] sm:$0xff] %v1032
    %1097 = vst [vmem:[#allocation3 + $0xd40] sm:$0xff] %v1033
    %1098 = vst [vmem:[#allocation3 + $0xd88] sm:$0xff] %v1034
    %1099 = vst [vmem:[#allocation3 + $0xdd0] sm:$0xff] %v1035
    %1100 = vst [vmem:[#allocation3 + $0xe18] sm:$0xff] %v1036
    %1101 = vst [vmem:[#allocation3 + $0xe60] sm:$0xff] %v1037
    %1102 = vst [vmem:[#allocation3 + $0xea8] sm:$0xff] %v1038
    %1103 = vst [vmem:[#allocation3 + $0xef0] sm:$0xff] %v1039
    %1104 = vst [vmem:[#allocation3 + $0xf38] sm:$0xff] %v1040
    %1105 = vst [vmem:[#allocation3 + $0xf80] sm:$0xff] %v1041
    %1106 = vst [vmem:[#allocation3 + $0xfc8] sm:$0xff] %v1042
    %1107 = vst [vmem:[#allocation3 + $0x1010] sm:$0xff] %v1043
    %1108 = vst [vmem:[#allocation3 + $0x1058] sm:$0xff] %v1044
    %1109 = vst [vmem:[#allocation3 + $0x10a0] sm:$0xff] %v1045
    %1110 = vst [vmem:[#allocation3 + $0x10e8] sm:$0xff] %v1046
    %1111 = vst [vmem:[#allocation3 + $0x1130] sm:$0xff] %v1047
    %1112 = vst [vmem:[#allocation3 + $0x1178] sm:$0xff] %v1048
    %1113 = vst [vmem:[#allocation3 + $0x11c0] sm:$0xff] %v1049
    %v1114 = vld [vmem:[#allocation2 + $0x2] sm:$0xff]
    %v1115 = vld [vmem:[#allocation2 + $0xa] sm:$0xff]
    %v1116 = vld [vmem:[#allocation2 + $0x1a] sm:$0xff]
    %v1117 = vld [vmem:[#allocation2 + $0x22] sm:$0xff]
    %v1118 = vld [vmem:[#allocation2 + $0x32] sm:$0xff]
    %v1119 = vld [vmem:[#allocation2 + $0x3a] sm:$0xff]
    %v1120 = vld [vmem:[#allocation2 + $0x4a] sm:$0xff]
    %v1121 = vld [vmem:[#allocation2 + $0x52] sm:$0xff]
    %v1122 = vld [vmem:[#allocation2 + $0x62] sm:$0xff]
    %v1123 = vld [vmem:[#allocation2 + $0x6a] sm:$0xff]
    %v1124 = vld [vmem:[#allocation2 + $0x7a] sm:$0xff]
    %v1125 = vld [vmem:[#allocation2 + $0x82] sm:$0xff]
    %v1126 = vld [vmem:[#allocation2 + $0x92] sm:$0xff]
    %v1127 = vld [vmem:[#allocation2 + $0x9a] sm:$0xff]
    %v1128 = vld [vmem:[#allocation2 + $0xaa] sm:$0xff]
    %v1129 = vld [vmem:[#allocation2 + $0xb2] sm:$0xff]
    %v1130 = vld [vmem:[#allocation2 + $0xc2] sm:$0xff]
    %v1131 = vld [vmem:[#allocation2 + $0xca] sm:$0xff]
    %v1132 = vld [vmem:[#allocation2 + $0xda] sm:$0xff]
    %v1133 = vld [vmem:[#allocation2 + $0xe2] sm:$0xff]
    %v1134 = vld [vmem:[#allocation2 + $0xf2] sm:$0xff]
    %v1135 = vld [vmem:[#allocation2 + $0xfa] sm:$0xff]
    %v1136 = vld [vmem:[#allocation2 + $0x10a] sm:$0xff]
    %v1137 = vld [vmem:[#allocation2 + $0x112] sm:$0xff]
    %v1138 = vld [vmem:[#allocation2 + $0x122] sm:$0xff]
    %v1139 = vld [vmem:[#allocation2 + $0x12a] sm:$0xff]
    %v1140 = vld [vmem:[#allocation2 + $0x13a] sm:$0xff]
    %v1141 = vld [vmem:[#allocation2 + $0x142] sm:$0xff]
    %v1142 = vld [vmem:[#allocation2 + $0x152] sm:$0xff]
    %v1143 = vld [vmem:[#allocation2 + $0x15a] sm:$0xff]
    %v1144 = vld [vmem:[#allocation2 + $0x16a] sm:$0xff]
    %v1145 = vld [vmem:[#allocation2 + $0x172] sm:$0xff]
    %v1146 = vld [vmem:[#allocation2 + $0x1b2] sm:$0xff]
    %v1147 = vld [vmem:[#allocation2 + $0x1ba] sm:$0xff]
    %v1148 = vld [vmem:[#allocation2 + $0x1ca] sm:$0xff]
    %v1149 = vld [vmem:[#allocation2 + $0x1d2] sm:$0xff]
    %v1150 = vld [vmem:[#allocation2 + $0x1e2] sm:$0xff]
    %v1151 = vld [vmem:[#allocation2 + $0x1ea] sm:$0xff]
    %v1152 = vld [vmem:[#allocation2 + $0x1fa] sm:$0xff]
    %v1153 = vld [vmem:[#allocation2 + $0x202] sm:$0xff]
    %v1154 = vld [vmem:[#allocation2 + $0x212] sm:$0xff]
    %v1155 = vld [vmem:[#allocation2 + $0x21a] sm:$0xff]
    %v1156 = vld [vmem:[#allocation2 + $0x22a] sm:$0xff]
    %v1157 = vld [vmem:[#allocation2 + $0x232] sm:$0xff]
    %v1158 = vld [vmem:[#allocation2 + $0x242] sm:$0xff]
    %v1159 = vld [vmem:[#allocation2 + $0x24a] sm:$0xff]
    %v1160 = vld [vmem:[#allocation2 + $0x25a] sm:$0xff]
    %v1161 = vld [vmem:[#allocation2 + $0x262] sm:$0xff]
    %v1162 = vld [vmem:[#allocation2 + $0x272] sm:$0xff]
    %v1163 = vld [vmem:[#allocation2 + $0x27a] sm:$0xff]
    %v1164 = vld [vmem:[#allocation2 + $0x28a] sm:$0xff]
    %v1165 = vld [vmem:[#allocation2 + $0x292] sm:$0xff]
    %v1166 = vld [vmem:[#allocation2 + $0x2a2] sm:$0xff]
    %v1167 = vld [vmem:[#allocation2 + $0x2aa] sm:$0xff]
    %v1168 = vld [vmem:[#allocation2 + $0x2ba] sm:$0xff]
    %v1169 = vld [vmem:[#allocation2 + $0x2c2] sm:$0xff]
    %v1170 = vld [vmem:[#allocation2 + $0x2d2] sm:$0xff]
    %v1171 = vld [vmem:[#allocation2 + $0x2da] sm:$0xff]
    %v1172 = vld [vmem:[#allocation2 + $0x2ea] sm:$0xff]
    %v1173 = vld [vmem:[#allocation2 + $0x2f2] sm:$0xff]
    %v1174 = vld [vmem:[#allocation2 + $0x302] sm:$0xff]
    %v1175 = vld [vmem:[#allocation2 + $0x30a] sm:$0xff]
    %v1176 = vld [vmem:[#allocation2 + $0x31a] sm:$0xff]
    %v1177 = vld [vmem:[#allocation2 + $0x322] sm:$0xff]
    %1178 = vst [vmem:[#allocation3 + $0x10] sm:$0xff] %v1114
    %1179 = vst [vmem:[#allocation3 + $0x58] sm:$0xff] %v1115
    %1180 = vst [vmem:[#allocation3 + $0xa0] sm:$0xff] %v1116
    %1181 = vst [vmem:[#allocation3 + $0xe8] sm:$0xff] %v1117
    %1182 = vst [vmem:[#allocation3 + $0x130] sm:$0xff] %v1118
    %1183 = vst [vmem:[#allocation3 + $0x178] sm:$0xff] %v1119
    %1184 = vst [vmem:[#allocation3 + $0x1c0] sm:$0xff] %v1120
    %1185 = vst [vmem:[#allocation3 + $0x208] sm:$0xff] %v1121
    %1186 = vst [vmem:[#allocation3 + $0x250] sm:$0xff] %v1122
    %1187 = vst [vmem:[#allocation3 + $0x298] sm:$0xff] %v1123
    %1188 = vst [vmem:[#allocation3 + $0x2e0] sm:$0xff] %v1124
    %1189 = vst [vmem:[#allocation3 + $0x328] sm:$0xff] %v1125
    %1190 = vst [vmem:[#allocation3 + $0x370] sm:$0xff] %v1126
    %1191 = vst [vmem:[#allocation3 + $0x3b8] sm:$0xff] %v1127
    %1192 = vst [vmem:[#allocation3 + $0x400] sm:$0xff] %v1128
    %1193 = vst [vmem:[#allocation3 + $0x448] sm:$0xff] %v1129
    %1194 = vst [vmem:[#allocation3 + $0x490] sm:$0xff] %v1130
    %1195 = vst [vmem:[#allocation3 + $0x4d8] sm:$0xff] %v1131
    %1196 = vst [vmem:[#allocation3 + $0x520] sm:$0xff] %v1132
    %1197 = vst [vmem:[#allocation3 + $0x568] sm:$0xff] %v1133
    %1198 = vst [vmem:[#allocation3 + $0x5b0] sm:$0xff] %v1134
    %1199 = vst [vmem:[#allocation3 + $0x5f8] sm:$0xff] %v1135
    %1200 = vst [vmem:[#allocation3 + $0x640] sm:$0xff] %v1136
    %1201 = vst [vmem:[#allocation3 + $0x688] sm:$0xff] %v1137
    %1202 = vst [vmem:[#allocation3 + $0x6d0] sm:$0xff] %v1138
    %1203 = vst [vmem:[#allocation3 + $0x718] sm:$0xff] %v1139
    %1204 = vst [vmem:[#allocation3 + $0x760] sm:$0xff] %v1140
    %1205 = vst [vmem:[#allocation3 + $0x7a8] sm:$0xff] %v1141
    %1206 = vst [vmem:[#allocation3 + $0x7f0] sm:$0xff] %v1142
    %1207 = vst [vmem:[#allocation3 + $0x838] sm:$0xff] %v1143
    %1208 = vst [vmem:[#allocation3 + $0x880] sm:$0xff] %v1144
    %1209 = vst [vmem:[#allocation3 + $0x8c8] sm:$0xff] %v1145
    %1210 = vst [vmem:[#allocation3 + $0x910] sm:$0xff] %v1146
    %1211 = vst [vmem:[#allocation3 + $0x958] sm:$0xff] %v1147
    %1212 = vst [vmem:[#allocation3 + $0x9a0] sm:$0xff] %v1148
    %1213 = vst [vmem:[#allocation3 + $0x9e8] sm:$0xff] %v1149
    %1214 = vst [vmem:[#allocation3 + $0xa30] sm:$0xff] %v1150
    %1215 = vst [vmem:[#allocation3 + $0xa78] sm:$0xff] %v1151
    %1216 = vst [vmem:[#allocation3 + $0xac0] sm:$0xff] %v1152
    %1217 = vst [vmem:[#allocation3 + $0xb08] sm:$0xff] %v1153
    %1218 = vst [vmem:[#allocation3 + $0xb50] sm:$0xff] %v1154
    %1219 = vst [vmem:[#allocation3 + $0xb98] sm:$0xff] %v1155
    %1220 = vst [vmem:[#allocation3 + $0xbe0] sm:$0xff] %v1156
    %1221 = vst [vmem:[#allocation3 + $0xc28] sm:$0xff] %v1157
    %1222 = vst [vmem:[#allocation3 + $0xc70] sm:$0xff] %v1158
    %1223 = vst [vmem:[#allocation3 + $0xcb8] sm:$0xff] %v1159
    %1224 = vst [vmem:[#allocation3 + $0xd00] sm:$0xff] %v1160
    %1225 = vst [vmem:[#allocation3 + $0xd48] sm:$0xff] %v1161
    %1226 = vst [vmem:[#allocation3 + $0xd90] sm:$0xff] %v1162
    %1227 = vst [vmem:[#allocation3 + $0xdd8] sm:$0xff] %v1163
    %1228 = vst [vmem:[#allocation3 + $0xe20] sm:$0xff] %v1164
    %1229 = vst [vmem:[#allocation3 + $0xe68] sm:$0xff] %v1165
    %1230 = vst [vmem:[#allocation3 + $0xeb0] sm:$0xff] %v1166
    %1231 = vst [vmem:[#allocation3 + $0xef8] sm:$0xff] %v1167
    %1232 = vst [vmem:[#allocation3 + $0xf40] sm:$0xff] %v1168
    %1233 = vst [vmem:[#allocation3 + $0xf88] sm:$0xff] %v1169
    %1234 = vst [vmem:[#allocation3 + $0xfd0] sm:$0xff] %v1170
    %1235 = vst [vmem:[#allocation3 + $0x1018] sm:$0xff] %v1171
    %1236 = vst [vmem:[#allocation3 + $0x1060] sm:$0xff] %v1172
    %1237 = vst [vmem:[#allocation3 + $0x10a8] sm:$0xff] %v1173
    %1238 = vst [vmem:[#allocation3 + $0x10f0] sm:$0xff] %v1174
    %1239 = vst [vmem:[#allocation3 + $0x1138] sm:$0xff] %v1175
    %1240 = vst [vmem:[#allocation3 + $0x1180] sm:$0xff] %v1176
    %1241 = vst [vmem:[#allocation3 + $0x11c8] sm:$0xff] %v1177
    %v1242 = vld [vmem:[%s793] sm:$0xff]
    %v1243 = vld [vmem:[%s793 + $0x8] sm:$0xff]
    %v1244 = vld [vmem:[%s793 + $0x18] sm:$0xff]
    %v1245 = vld [vmem:[%s793 + $0x20] sm:$0xff]
    %v1246 = vld [vmem:[%s793 + $0x30] sm:$0xff]
    %v1247 = vld [vmem:[%s793 + $0x38] sm:$0xff]
    %v1248 = vld [vmem:[%s793 + $0x48] sm:$0xff]
    %v1249 = vld [vmem:[%s793 + $0x50] sm:$0xff]
    %v1250 = vld [vmem:[%s793 + $0x60] sm:$0xff]
    %v1251 = vld [vmem:[%s793 + $0x68] sm:$0xff]
    %v1252 = vld [vmem:[%s793 + $0x78] sm:$0xff]
    %v1253 = vld [vmem:[%s793 + $0x80] sm:$0xff]
    %v1254 = vld [vmem:[%s793 + $0x90] sm:$0xff]
    %v1255 = vld [vmem:[%s793 + $0x98] sm:$0xff]
    %v1256 = vld [vmem:[%s793 + $0xa8] sm:$0xff]
    %v1257 = vld [vmem:[%s793 + $0xb0] sm:$0xff]
    %v1258 = vld [vmem:[%s793 + $0xc0] sm:$0xff]
    %v1259 = vld [vmem:[%s793 + $0xc8] sm:$0xff]
    %v1260 = vld [vmem:[%s793 + $0xd8] sm:$0xff]
    %v1261 = vld [vmem:[%s793 + $0xe0] sm:$0xff]
    %v1262 = vld [vmem:[%s793 + $0xf0] sm:$0xff]
    %v1263 = vld [vmem:[%s793 + $0xf8] sm:$0xff]
    %v1264 = vld [vmem:[%s793 + $0x108] sm:$0xff]
    %v1265 = vld [vmem:[%s793 + $0x110] sm:$0xff]
    %v1266 = vld [vmem:[%s793 + $0x120] sm:$0xff]
    %v1267 = vld [vmem:[%s793 + $0x128] sm:$0xff]
    %v1268 = vld [vmem:[%s793 + $0x138] sm:$0xff]
    %v1269 = vld [vmem:[%s793 + $0x140] sm:$0xff]
    %v1270 = vld [vmem:[%s793 + $0x150] sm:$0xff]
    %v1271 = vld [vmem:[%s793 + $0x158] sm:$0xff]
    %v1272 = vld [vmem:[%s793 + $0x168] sm:$0xff]
    %v1273 = vld [vmem:[%s793 + $0x170] sm:$0xff]
    %v1274 = vld [vmem:[%s793 + $0x1b0] sm:$0xff]
    %v1275 = vld [vmem:[%s793 + $0x1b8] sm:$0xff]
    %v1276 = vld [vmem:[%s793 + $0x1c8] sm:$0xff]
    %v1277 = vld [vmem:[%s793 + $0x1d0] sm:$0xff]
    %v1278 = vld [vmem:[%s793 + $0x1e0] sm:$0xff]
    %v1279 = vld [vmem:[%s793 + $0x1e8] sm:$0xff]
    %v1280 = vld [vmem:[%s793 + $0x1f8] sm:$0xff]
    %v1281 = vld [vmem:[%s793 + $0x200] sm:$0xff]
    %v1282 = vld [vmem:[%s793 + $0x210] sm:$0xff]
    %v1283 = vld [vmem:[%s793 + $0x218] sm:$0xff]
    %v1284 = vld [vmem:[%s793 + $0x228] sm:$0xff]
    %v1285 = vld [vmem:[%s793 + $0x230] sm:$0xff]
    %v1286 = vld [vmem:[%s793 + $0x240] sm:$0xff]
    %v1287 = vld [vmem:[%s793 + $0x248] sm:$0xff]
    %v1288 = vld [vmem:[%s793 + $0x258] sm:$0xff]
    %v1289 = vld [vmem:[%s793 + $0x260] sm:$0xff]
    %v1290 = vld [vmem:[%s793 + $0x270] sm:$0xff]
    %v1291 = vld [vmem:[%s793 + $0x278] sm:$0xff]
    %v1292 = vld [vmem:[%s793 + $0x288] sm:$0xff]
    %v1293 = vld [vmem:[%s793 + $0x290] sm:$0xff]
    %v1294 = vld [vmem:[%s793 + $0x2a0] sm:$0xff]
    %v1295 = vld [vmem:[%s793 + $0x2a8] sm:$0xff]
    %v1296 = vld [vmem:[%s793 + $0x2b8] sm:$0xff]
    %v1297 = vld [vmem:[%s793 + $0x2c0] sm:$0xff]
    %v1298 = vld [vmem:[%s793 + $0x2d0] sm:$0xff]
    %v1299 = vld [vmem:[%s793 + $0x2d8] sm:$0xff]
    %v1300 = vld [vmem:[%s793 + $0x2e8] sm:$0xff]
    %v1301 = vld [vmem:[%s793 + $0x2f0] sm:$0xff]
    %v1302 = vld [vmem:[%s793 + $0x300] sm:$0xff]
    %v1303 = vld [vmem:[%s793 + $0x308] sm:$0xff]
    %v1304 = vld [vmem:[%s793 + $0x318] sm:$0xff]
    %v1305 = vld [vmem:[%s793 + $0x320] sm:$0xff]
    %1306 = vst [vmem:[#allocation3 + $0x18] sm:$0xff] %v1242
    %1307 = vst [vmem:[#allocation3 + $0x60] sm:$0xff] %v1243
    %1308 = vst [vmem:[#allocation3 + $0xa8] sm:$0xff] %v1244
    %1309 = vst [vmem:[#allocation3 + $0xf0] sm:$0xff] %v1245
    %1310 = vst [vmem:[#allocation3 + $0x138] sm:$0xff] %v1246
    %1311 = vst [vmem:[#allocation3 + $0x180] sm:$0xff] %v1247
    %1312 = vst [vmem:[#allocation3 + $0x1c8] sm:$0xff] %v1248
    %1313 = vst [vmem:[#allocation3 + $0x210] sm:$0xff] %v1249
    %1314 = vst [vmem:[#allocation3 + $0x258] sm:$0xff] %v1250
    %1315 = vst [vmem:[#allocation3 + $0x2a0] sm:$0xff] %v1251
    %1316 = vst [vmem:[#allocation3 + $0x2e8] sm:$0xff] %v1252
    %1317 = vst [vmem:[#allocation3 + $0x330] sm:$0xff] %v1253
    %1318 = vst [vmem:[#allocation3 + $0x378] sm:$0xff] %v1254
    %1319 = vst [vmem:[#allocation3 + $0x3c0] sm:$0xff] %v1255
    %1320 = vst [vmem:[#allocation3 + $0x408] sm:$0xff] %v1256
    %1321 = vst [vmem:[#allocation3 + $0x450] sm:$0xff] %v1257
    %1322 = vst [vmem:[#allocation3 + $0x498] sm:$0xff] %v1258
    %1323 = vst [vmem:[#allocation3 + $0x4e0] sm:$0xff] %v1259
    %1324 = vst [vmem:[#allocation3 + $0x528] sm:$0xff] %v1260
    %1325 = vst [vmem:[#allocation3 + $0x570] sm:$0xff] %v1261
    %1326 = vst [vmem:[#allocation3 + $0x5b8] sm:$0xff] %v1262
    %1327 = vst [vmem:[#allocation3 + $0x600] sm:$0xff] %v1263
    %1328 = vst [vmem:[#allocation3 + $0x648] sm:$0xff] %v1264
    %1329 = vst [vmem:[#allocation3 + $0x690] sm:$0xff] %v1265
    %1330 = vst [vmem:[#allocation3 + $0x6d8] sm:$0xff] %v1266
    %1331 = vst [vmem:[#allocation3 + $0x720] sm:$0xff] %v1267
    %1332 = vst [vmem:[#allocation3 + $0x768] sm:$0xff] %v1268
    %1333 = vst [vmem:[#allocation3 + $0x7b0] sm:$0xff] %v1269
    %1334 = vst [vmem:[#allocation3 + $0x7f8] sm:$0xff] %v1270
    %1335 = vst [vmem:[#allocation3 + $0x840] sm:$0xff] %v1271
    %1336 = vst [vmem:[#allocation3 + $0x888] sm:$0xff] %v1272
    %1337 = vst [vmem:[#allocation3 + $0x8d0] sm:$0xff] %v1273
    %1338 = vst [vmem:[#allocation3 + $0x918] sm:$0xff] %v1274
    %1339 = vst [vmem:[#allocation3 + $0x960] sm:$0xff] %v1275
    %1340 = vst [vmem:[#allocation3 + $0x9a8] sm:$0xff] %v1276
    %1341 = vst [vmem:[#allocation3 + $0x9f0] sm:$0xff] %v1277
    %1342 = vst [vmem:[#allocation3 + $0xa38] sm:$0xff] %v1278
    %1343 = vst [vmem:[#allocation3 + $0xa80] sm:$0xff] %v1279
    %1344 = vst [vmem:[#allocation3 + $0xac8] sm:$0xff] %v1280
    %1345 = vst [vmem:[#allocation3 + $0xb10] sm:$0xff] %v1281
    %1346 = vst [vmem:[#allocation3 + $0xb58] sm:$0xff] %v1282
    %1347 = vst [vmem:[#allocation3 + $0xba0] sm:$0xff] %v1283
    %1348 = vst [vmem:[#allocation3 + $0xbe8] sm:$0xff] %v1284
    %1349 = vst [vmem:[#allocation3 + $0xc30] sm:$0xff] %v1285
    %1350 = vst [vmem:[#allocation3 + $0xc78] sm:$0xff] %v1286
    %1351 = vst [vmem:[#allocation3 + $0xcc0] sm:$0xff] %v1287
    %1352 = vst [vmem:[#allocation3 + $0xd08] sm:$0xff] %v1288
    %1353 = vst [vmem:[#allocation3 + $0xd50] sm:$0xff] %v1289
    %1354 = vst [vmem:[#allocation3 + $0xd98] sm:$0xff] %v1290
    %1355 = vst [vmem:[#allocation3 + $0xde0] sm:$0xff] %v1291
    %1356 = vst [vmem:[#allocation3 + $0xe28] sm:$0xff] %v1292
    %1357 = vst [vmem:[#allocation3 + $0xe70] sm:$0xff] %v1293
    %1358 = vst [vmem:[#allocation3 + $0xeb8] sm:$0xff] %v1294
    %1359 = vst [vmem:[#allocation3 + $0xf00] sm:$0xff] %v1295
    %1360 = vst [vmem:[#allocation3 + $0xf48] sm:$0xff] %v1296
    %1361 = vst [vmem:[#allocation3 + $0xf90] sm:$0xff] %v1297
    %1362 = vst [vmem:[#allocation3 + $0xfd8] sm:$0xff] %v1298
    %1363 = vst [vmem:[#allocation3 + $0x1020] sm:$0xff] %v1299
    %1364 = vst [vmem:[#allocation3 + $0x1068] sm:$0xff] %v1300
    %1365 = vst [vmem:[#allocation3 + $0x10b0] sm:$0xff] %v1301
    %1366 = vst [vmem:[#allocation3 + $0x10f8] sm:$0xff] %v1302
    %1367 = vst [vmem:[#allocation3 + $0x1140] sm:$0xff] %v1303
    %1368 = vst [vmem:[#allocation3 + $0x1188] sm:$0xff] %v1304
    %1369 = vst [vmem:[#allocation3 + $0x11d0] sm:$0xff] %v1305
    %v1370 = vld [vmem:[%s793 + $0x1] sm:$0xff]
    %v1371 = vld [vmem:[%s793 + $0x9] sm:$0xff]
    %v1372 = vld [vmem:[%s793 + $0x19] sm:$0xff]
    %v1373 = vld [vmem:[%s793 + $0x21] sm:$0xff]
    %v1374 = vld [vmem:[%s793 + $0x31] sm:$0xff]
    %v1375 = vld [vmem:[%s793 + $0x39] sm:$0xff]
    %v1376 = vld [vmem:[%s793 + $0x49] sm:$0xff]
    %v1377 = vld [vmem:[%s793 + $0x51] sm:$0xff]
    %v1378 = vld [vmem:[%s793 + $0x61] sm:$0xff]
    %v1379 = vld [vmem:[%s793 + $0x69] sm:$0xff]
    %v1380 = vld [vmem:[%s793 + $0x79] sm:$0xff]
    %v1381 = vld [vmem:[%s793 + $0x81] sm:$0xff]
    %v1382 = vld [vmem:[%s793 + $0x91] sm:$0xff]
    %v1383 = vld [vmem:[%s793 + $0x99] sm:$0xff]
    %v1384 = vld [vmem:[%s793 + $0xa9] sm:$0xff]
    %v1385 = vld [vmem:[%s793 + $0xb1] sm:$0xff]
    %v1386 = vld [vmem:[%s793 + $0xc1] sm:$0xff]
    %v1387 = vld [vmem:[%s793 + $0xc9] sm:$0xff]
    %v1388 = vld [vmem:[%s793 + $0xd9] sm:$0xff]
    %v1389 = vld [vmem:[%s793 + $0xe1] sm:$0xff]
    %v1390 = vld [vmem:[%s793 + $0xf1] sm:$0xff]
    %v1391 = vld [vmem:[%s793 + $0xf9] sm:$0xff]
    %v1392 = vld [vmem:[%s793 + $0x109] sm:$0xff]
    %v1393 = vld [vmem:[%s793 + $0x111] sm:$0xff]
    %v1394 = vld [vmem:[%s793 + $0x121] sm:$0xff]
    %v1395 = vld [vmem:[%s793 + $0x129] sm:$0xff]
    %v1396 = vld [vmem:[%s793 + $0x139] sm:$0xff]
    %v1397 = vld [vmem:[%s793 + $0x141] sm:$0xff]
    %v1398 = vld [vmem:[%s793 + $0x151] sm:$0xff]
    %v1399 = vld [vmem:[%s793 + $0x159] sm:$0xff]
    %v1400 = vld [vmem:[%s793 + $0x169] sm:$0xff]
    %v1401 = vld [vmem:[%s793 + $0x171] sm:$0xff]
    %v1402 = vld [vmem:[%s793 + $0x1b1] sm:$0xff]
    %v1403 = vld [vmem:[%s793 + $0x1b9] sm:$0xff]
    %v1404 = vld [vmem:[%s793 + $0x1c9] sm:$0xff]
    %v1405 = vld [vmem:[%s793 + $0x1d1] sm:$0xff]
    %v1406 = vld [vmem:[%s793 + $0x1e1] sm:$0xff]
    %v1407 = vld [vmem:[%s793 + $0x1e9] sm:$0xff]
    %v1408 = vld [vmem:[%s793 + $0x1f9] sm:$0xff]
    %v1409 = vld [vmem:[%s793 + $0x201] sm:$0xff]
    %v1410 = vld [vmem:[%s793 + $0x211] sm:$0xff]
    %v1411 = vld [vmem:[%s793 + $0x219] sm:$0xff]
    %v1412 = vld [vmem:[%s793 + $0x229] sm:$0xff]
    %v1413 = vld [vmem:[%s793 + $0x231] sm:$0xff]
    %v1414 = vld [vmem:[%s793 + $0x241] sm:$0xff]
    %v1415 = vld [vmem:[%s793 + $0x249] sm:$0xff]
    %v1416 = vld [vmem:[%s793 + $0x259] sm:$0xff]
    %v1417 = vld [vmem:[%s793 + $0x261] sm:$0xff]
    %v1418 = vld [vmem:[%s793 + $0x271] sm:$0xff]
    %v1419 = vld [vmem:[%s793 + $0x279] sm:$0xff]
    %v1420 = vld [vmem:[%s793 + $0x289] sm:$0xff]
    %v1421 = vld [vmem:[%s793 + $0x291] sm:$0xff]
    %v1422 = vld [vmem:[%s793 + $0x2a1] sm:$0xff]
    %v1423 = vld [vmem:[%s793 + $0x2a9] sm:$0xff]
    %v1424 = vld [vmem:[%s793 + $0x2b9] sm:$0xff]
    %v1425 = vld [vmem:[%s793 + $0x2c1] sm:$0xff]
    %v1426 = vld [vmem:[%s793 + $0x2d1] sm:$0xff]
    %v1427 = vld [vmem:[%s793 + $0x2d9] sm:$0xff]
    %v1428 = vld [vmem:[%s793 + $0x2e9] sm:$0xff]
    %v1429 = vld [vmem:[%s793 + $0x2f1] sm:$0xff]
    %v1430 = vld [vmem:[%s793 + $0x301] sm:$0xff]
    %v1431 = vld [vmem:[%s793 + $0x309] sm:$0xff]
    %v1432 = vld [vmem:[%s793 + $0x319] sm:$0xff]
    %v1433 = vld [vmem:[%s793 + $0x321] sm:$0xff]
    %1434 = vst [vmem:[#allocation3 + $0x20] sm:$0xff] %v1370
    %1435 = vst [vmem:[#allocation3 + $0x68] sm:$0xff] %v1371
    %1436 = vst [vmem:[#allocation3 + $0xb0] sm:$0xff] %v1372
    %1437 = vst [vmem:[#allocation3 + $0xf8] sm:$0xff] %v1373
    %1438 = vst [vmem:[#allocation3 + $0x140] sm:$0xff] %v1374
    %1439 = vst [vmem:[#allocation3 + $0x188] sm:$0xff] %v1375
    %1440 = vst [vmem:[#allocation3 + $0x1d0] sm:$0xff] %v1376
    %1441 = vst [vmem:[#allocation3 + $0x218] sm:$0xff] %v1377
    %1442 = vst [vmem:[#allocation3 + $0x260] sm:$0xff] %v1378
    %1443 = vst [vmem:[#allocation3 + $0x2a8] sm:$0xff] %v1379
    %1444 = vst [vmem:[#allocation3 + $0x2f0] sm:$0xff] %v1380
    %1445 = vst [vmem:[#allocation3 + $0x338] sm:$0xff] %v1381
    %1446 = vst [vmem:[#allocation3 + $0x380] sm:$0xff] %v1382
    %1447 = vst [vmem:[#allocation3 + $0x3c8] sm:$0xff] %v1383
    %1448 = vst [vmem:[#allocation3 + $0x410] sm:$0xff] %v1384
    %1449 = vst [vmem:[#allocation3 + $0x458] sm:$0xff] %v1385
    %1450 = vst [vmem:[#allocation3 + $0x4a0] sm:$0xff] %v1386
    %1451 = vst [vmem:[#allocation3 + $0x4e8] sm:$0xff] %v1387
    %1452 = vst [vmem:[#allocation3 + $0x530] sm:$0xff] %v1388
    %1453 = vst [vmem:[#allocation3 + $0x578] sm:$0xff] %v1389
    %1454 = vst [vmem:[#allocation3 + $0x5c0] sm:$0xff] %v1390
    %1455 = vst [vmem:[#allocation3 + $0x608] sm:$0xff] %v1391
    %1456 = vst [vmem:[#allocation3 + $0x650] sm:$0xff] %v1392
    %1457 = vst [vmem:[#allocation3 + $0x698] sm:$0xff] %v1393
    %1458 = vst [vmem:[#allocation3 + $0x6e0] sm:$0xff] %v1394
    %1459 = vst [vmem:[#allocation3 + $0x728] sm:$0xff] %v1395
    %1460 = vst [vmem:[#allocation3 + $0x770] sm:$0xff] %v1396
    %1461 = vst [vmem:[#allocation3 + $0x7b8] sm:$0xff] %v1397
    %1462 = vst [vmem:[#allocation3 + $0x800] sm:$0xff] %v1398
    %1463 = vst [vmem:[#allocation3 + $0x848] sm:$0xff] %v1399
    %1464 = vst [vmem:[#allocation3 + $0x890] sm:$0xff] %v1400
    %1465 = vst [vmem:[#allocation3 + $0x8d8] sm:$0xff] %v1401
    %1466 = vst [vmem:[#allocation3 + $0x920] sm:$0xff] %v1402
    %1467 = vst [vmem:[#allocation3 + $0x968] sm:$0xff] %v1403
    %1468 = vst [vmem:[#allocation3 + $0x9b0] sm:$0xff] %v1404
    %1469 = vst [vmem:[#allocation3 + $0x9f8] sm:$0xff] %v1405
    %1470 = vst [vmem:[#allocation3 + $0xa40] sm:$0xff] %v1406
    %1471 = vst [vmem:[#allocation3 + $0xa88] sm:$0xff] %v1407
    %1472 = vst [vmem:[#allocation3 + $0xad0] sm:$0xff] %v1408
    %1473 = vst [vmem:[#allocation3 + $0xb18] sm:$0xff] %v1409
    %1474 = vst [vmem:[#allocation3 + $0xb60] sm:$0xff] %v1410
    %1475 = vst [vmem:[#allocation3 + $0xba8] sm:$0xff] %v1411
    %1476 = vst [vmem:[#allocation3 + $0xbf0] sm:$0xff] %v1412
    %1477 = vst [vmem:[#allocation3 + $0xc38] sm:$0xff] %v1413
    %1478 = vst [vmem:[#allocation3 + $0xc80] sm:$0xff] %v1414
    %1479 = vst [vmem:[#allocation3 + $0xcc8] sm:$0xff] %v1415
    %1480 = vst [vmem:[#allocation3 + $0xd10] sm:$0xff] %v1416
    %1481 = vst [vmem:[#allocation3 + $0xd58] sm:$0xff] %v1417
    %1482 = vst [vmem:[#allocation3 + $0xda0] sm:$0xff] %v1418
    %1483 = vst [vmem:[#allocation3 + $0xde8] sm:$0xff] %v1419
    %1484 = vst [vmem:[#allocation3 + $0xe30] sm:$0xff] %v1420
    %1485 = vst [vmem:[#allocation3 + $0xe78] sm:$0xff] %v1421
    %1486 = vst [vmem:[#allocation3 + $0xec0] sm:$0xff] %v1422
    %1487 = vst [vmem:[#allocation3 + $0xf08] sm:$0xff] %v1423
    %1488 = vst [vmem:[#allocation3 + $0xf50] sm:$0xff] %v1424
    %1489 = vst [vmem:[#allocation3 + $0xf98] sm:$0xff] %v1425
    %1490 = vst [vmem:[#allocation3 + $0xfe0] sm:$0xff] %v1426
    %1491 = vst [vmem:[#allocation3 + $0x1028] sm:$0xff] %v1427
    %1492 = vst [vmem:[#allocation3 + $0x1070] sm:$0xff] %v1428
    %1493 = vst [vmem:[#allocation3 + $0x10b8] sm:$0xff] %v1429
    %1494 = vst [vmem:[#allocation3 + $0x1100] sm:$0xff] %v1430
    %1495 = vst [vmem:[#allocation3 + $0x1148] sm:$0xff] %v1431
    %1496 = vst [vmem:[#allocation3 + $0x1190] sm:$0xff] %v1432
    %1497 = vst [vmem:[#allocation3 + $0x11d8] sm:$0xff] %v1433
    %v1498 = vld [vmem:[%s793 + $0x2] sm:$0xff]
    %v1499 = vld [vmem:[%s793 + $0xa] sm:$0xff]
    %v1500 = vld [vmem:[%s793 + $0x1a] sm:$0xff]
    %v1501 = vld [vmem:[%s793 + $0x22] sm:$0xff]
    %v1502 = vld [vmem:[%s793 + $0x32] sm:$0xff]
    %v1503 = vld [vmem:[%s793 + $0x3a] sm:$0xff]
    %v1504 = vld [vmem:[%s793 + $0x4a] sm:$0xff]
    %v1505 = vld [vmem:[%s793 + $0x52] sm:$0xff]
    %v1506 = vld [vmem:[%s793 + $0x62] sm:$0xff]
    %v1507 = vld [vmem:[%s793 + $0x6a] sm:$0xff]
    %v1508 = vld [vmem:[%s793 + $0x7a] sm:$0xff]
    %v1509 = vld [vmem:[%s793 + $0x82] sm:$0xff]
    %v1510 = vld [vmem:[%s793 + $0x92] sm:$0xff]
    %v1511 = vld [vmem:[%s793 + $0x9a] sm:$0xff]
    %v1512 = vld [vmem:[%s793 + $0xaa] sm:$0xff]
    %v1513 = vld [vmem:[%s793 + $0xb2] sm:$0xff]
    %v1514 = vld [vmem:[%s793 + $0xc2] sm:$0xff]
    %v1515 = vld [vmem:[%s793 + $0xca] sm:$0xff]
    %v1516 = vld [vmem:[%s793 + $0xda] sm:$0xff]
    %v1517 = vld [vmem:[%s793 + $0xe2] sm:$0xff]
    %v1518 = vld [vmem:[%s793 + $0xf2] sm:$0xff]
    %v1519 = vld [vmem:[%s793 + $0xfa] sm:$0xff]
    %v1520 = vld [vmem:[%s793 + $0x10a] sm:$0xff]
    %v1521 = vld [vmem:[%s793 + $0x112] sm:$0xff]
    %v1522 = vld [vmem:[%s793 + $0x122] sm:$0xff]
    %v1523 = vld [vmem:[%s793 + $0x12a] sm:$0xff]
    %v1524 = vld [vmem:[%s793 + $0x13a] sm:$0xff]
    %v1525 = vld [vmem:[%s793 + $0x142] sm:$0xff]
    %v1526 = vld [vmem:[%s793 + $0x152] sm:$0xff]
    %v1527 = vld [vmem:[%s793 + $0x15a] sm:$0xff]
    %v1528 = vld [vmem:[%s793 + $0x16a] sm:$0xff]
    %v1529 = vld [vmem:[%s793 + $0x172] sm:$0xff]
    %v1530 = vld [vmem:[%s793 + $0x1b2] sm:$0xff]
    %v1531 = vld [vmem:[%s793 + $0x1ba] sm:$0xff]
    %v1532 = vld [vmem:[%s793 + $0x1ca] sm:$0xff]
    %v1533 = vld [vmem:[%s793 + $0x1d2] sm:$0xff]
    %v1534 = vld [vmem:[%s793 + $0x1e2] sm:$0xff]
    %v1535 = vld [vmem:[%s793 + $0x1ea] sm:$0xff]
    %v1536 = vld [vmem:[%s793 + $0x1fa] sm:$0xff]
    %v1537 = vld [vmem:[%s793 + $0x202] sm:$0xff]
    %v1538 = vld [vmem:[%s793 + $0x212] sm:$0xff]
    %v1539 = vld [vmem:[%s793 + $0x21a] sm:$0xff]
    %v1540 = vld [vmem:[%s793 + $0x22a] sm:$0xff]
    %v1541 = vld [vmem:[%s793 + $0x232] sm:$0xff]
    %v1542 = vld [vmem:[%s793 + $0x242] sm:$0xff]
    %v1543 = vld [vmem:[%s793 + $0x24a] sm:$0xff]
    %v1544 = vld [vmem:[%s793 + $0x25a] sm:$0xff]
    %v1545 = vld [vmem:[%s793 + $0x262] sm:$0xff]
    %v1546 = vld [vmem:[%s793 + $0x272] sm:$0xff]
    %v1547 = vld [vmem:[%s793 + $0x27a] sm:$0xff]
    %v1548 = vld [vmem:[%s793 + $0x28a] sm:$0xff]
    %v1549 = vld [vmem:[%s793 + $0x292] sm:$0xff]
    %v1550 = vld [vmem:[%s793 + $0x2a2] sm:$0xff]
    %v1551 = vld [vmem:[%s793 + $0x2aa] sm:$0xff]
    %v1552 = vld [vmem:[%s793 + $0x2ba] sm:$0xff]
    %v1553 = vld [vmem:[%s793 + $0x2c2] sm:$0xff]
    %v1554 = vld [vmem:[%s793 + $0x2d2] sm:$0xff]
    %v1555 = vld [vmem:[%s793 + $0x2da] sm:$0xff]
    %v1556 = vld [vmem:[%s793 + $0x2ea] sm:$0xff]
    %v1557 = vld [vmem:[%s793 + $0x2f2] sm:$0xff]
    %v1558 = vld [vmem:[%s793 + $0x302] sm:$0xff]
    %v1559 = vld [vmem:[%s793 + $0x30a] sm:$0xff]
    %v1560 = vld [vmem:[%s793 + $0x31a] sm:$0xff]
    %v1561 = vld [vmem:[%s793 + $0x322] sm:$0xff]
    %1562 = vst [vmem:[#allocation3 + $0x28] sm:$0xff] %v1498
    %1563 = vst [vmem:[#allocation3 + $0x70] sm:$0xff] %v1499
    %1564 = vst [vmem:[#allocation3 + $0xb8] sm:$0xff] %v1500
    %1565 = vst [vmem:[#allocation3 + $0x100] sm:$0xff] %v1501
    %1566 = vst [vmem:[#allocation3 + $0x148] sm:$0xff] %v1502
    %1567 = vst [vmem:[#allocation3 + $0x190] sm:$0xff] %v1503
    %1568 = vst [vmem:[#allocation3 + $0x1d8] sm:$0xff] %v1504
    %1569 = vst [vmem:[#allocation3 + $0x220] sm:$0xff] %v1505
    %1570 = vst [vmem:[#allocation3 + $0x268] sm:$0xff] %v1506
    %1571 = vst [vmem:[#allocation3 + $0x2b0] sm:$0xff] %v1507
    %1572 = vst [vmem:[#allocation3 + $0x2f8] sm:$0xff] %v1508
    %1573 = vst [vmem:[#allocation3 + $0x340] sm:$0xff] %v1509
    %1574 = vst [vmem:[#allocation3 + $0x388] sm:$0xff] %v1510
    %1575 = vst [vmem:[#allocation3 + $0x3d0] sm:$0xff] %v1511
    %1576 = vst [vmem:[#allocation3 + $0x418] sm:$0xff] %v1512
    %1577 = vst [vmem:[#allocation3 + $0x460] sm:$0xff] %v1513
    %1578 = vst [vmem:[#allocation3 + $0x4a8] sm:$0xff] %v1514
    %1579 = vst [vmem:[#allocation3 + $0x4f0] sm:$0xff] %v1515
    %1580 = vst [vmem:[#allocation3 + $0x538] sm:$0xff] %v1516
    %1581 = vst [vmem:[#allocation3 + $0x580] sm:$0xff] %v1517
    %1582 = vst [vmem:[#allocation3 + $0x5c8] sm:$0xff] %v1518
    %1583 = vst [vmem:[#allocation3 + $0x610] sm:$0xff] %v1519
    %1584 = vst [vmem:[#allocation3 + $0x658] sm:$0xff] %v1520
    %1585 = vst [vmem:[#allocation3 + $0x6a0] sm:$0xff] %v1521
    %1586 = vst [vmem:[#allocation3 + $0x6e8] sm:$0xff] %v1522
    %1587 = vst [vmem:[#allocation3 + $0x730] sm:$0xff] %v1523
    %1588 = vst [vmem:[#allocation3 + $0x778] sm:$0xff] %v1524
    %1589 = vst [vmem:[#allocation3 + $0x7c0] sm:$0xff] %v1525
    %1590 = vst [vmem:[#allocation3 + $0x808] sm:$0xff] %v1526
    %1591 = vst [vmem:[#allocation3 + $0x850] sm:$0xff] %v1527
    %1592 = vst [vmem:[#allocation3 + $0x898] sm:$0xff] %v1528
    %1593 = vst [vmem:[#allocation3 + $0x8e0] sm:$0xff] %v1529
    %1594 = vst [vmem:[#allocation3 + $0x928] sm:$0xff] %v1530
    %1595 = vst [vmem:[#allocation3 + $0x970] sm:$0xff] %v1531
    %1596 = vst [vmem:[#allocation3 + $0x9b8] sm:$0xff] %v1532
    %1597 = vst [vmem:[#allocation3 + $0xa00] sm:$0xff] %v1533
    %1598 = vst [vmem:[#allocation3 + $0xa48] sm:$0xff] %v1534
    %1599 = vst [vmem:[#allocation3 + $0xa90] sm:$0xff] %v1535
    %1600 = vst [vmem:[#allocation3 + $0xad8] sm:$0xff] %v1536
    %1601 = vst [vmem:[#allocation3 + $0xb20] sm:$0xff] %v1537
    %1602 = vst [vmem:[#allocation3 + $0xb68] sm:$0xff] %v1538
    %1603 = vst [vmem:[#allocation3 + $0xbb0] sm:$0xff] %v1539
    %1604 = vst [vmem:[#allocation3 + $0xbf8] sm:$0xff] %v1540
    %1605 = vst [vmem:[#allocation3 + $0xc40] sm:$0xff] %v1541
    %1606 = vst [vmem:[#allocation3 + $0xc88] sm:$0xff] %v1542
    %1607 = vst [vmem:[#allocation3 + $0xcd0] sm:$0xff] %v1543
    %1608 = vst [vmem:[#allocation3 + $0xd18] sm:$0xff] %v1544
    %1609 = vst [vmem:[#allocation3 + $0xd60] sm:$0xff] %v1545
    %1610 = vst [vmem:[#allocation3 + $0xda8] sm:$0xff] %v1546
    %1611 = vst [vmem:[#allocation3 + $0xdf0] sm:$0xff] %v1547
    %1612 = vst [vmem:[#allocation3 + $0xe38] sm:$0xff] %v1548
    %1613 = vst [vmem:[#allocation3 + $0xe80] sm:$0xff] %v1549
    %1614 = vst [vmem:[#allocation3 + $0xec8] sm:$0xff] %v1550
    %1615 = vst [vmem:[#allocation3 + $0xf10] sm:$0xff] %v1551
    %1616 = vst [vmem:[#allocation3 + $0xf58] sm:$0xff] %v1552
    %1617 = vst [vmem:[#allocation3 + $0xfa0] sm:$0xff] %v1553
    %1618 = vst [vmem:[#allocation3 + $0xfe8] sm:$0xff] %v1554
    %1619 = vst [vmem:[#allocation3 + $0x1030] sm:$0xff] %v1555
    %1620 = vst [vmem:[#allocation3 + $0x1078] sm:$0xff] %v1556
    %1621 = vst [vmem:[#allocation3 + $0x10c0] sm:$0xff] %v1557
    %1622 = vst [vmem:[#allocation3 + $0x1108] sm:$0xff] %v1558
    %1623 = vst [vmem:[#allocation3 + $0x1150] sm:$0xff] %v1559
    %1624 = vst [vmem:[#allocation3 + $0x1198] sm:$0xff] %v1560
    %1625 = vst [vmem:[#allocation3 + $0x11e0] sm:$0xff] %v1561
    %s1626 = scalar_lea.vmem [#allocation2], 48
    %v1627 = vld [vmem:[%s1626] sm:$0xff]
    %v1628 = vld [vmem:[%s1626 + $0x8] sm:$0xff]
    %v1629 = vld [vmem:[%s1626 + $0x18] sm:$0xff]
    %v1630 = vld [vmem:[%s1626 + $0x20] sm:$0xff]
    %v1631 = vld [vmem:[%s1626 + $0x30] sm:$0xff]
    %v1632 = vld [vmem:[%s1626 + $0x38] sm:$0xff]
    %v1633 = vld [vmem:[%s1626 + $0x48] sm:$0xff]
    %v1634 = vld [vmem:[%s1626 + $0x50] sm:$0xff]
    %v1635 = vld [vmem:[%s1626 + $0x60] sm:$0xff]
    %v1636 = vld [vmem:[%s1626 + $0x68] sm:$0xff]
    %v1637 = vld [vmem:[%s1626 + $0x78] sm:$0xff]
    %v1638 = vld [vmem:[%s1626 + $0x80] sm:$0xff]
    %v1639 = vld [vmem:[%s1626 + $0x90] sm:$0xff]
    %v1640 = vld [vmem:[%s1626 + $0x98] sm:$0xff]
    %v1641 = vld [vmem:[%s1626 + $0xa8] sm:$0xff]
    %v1642 = vld [vmem:[%s1626 + $0xb0] sm:$0xff]
    %v1643 = vld [vmem:[%s1626 + $0xc0] sm:$0xff]
    %v1644 = vld [vmem:[%s1626 + $0xc8] sm:$0xff]
    %v1645 = vld [vmem:[%s1626 + $0xd8] sm:$0xff]
    %v1646 = vld [vmem:[%s1626 + $0xe0] sm:$0xff]
    %v1647 = vld [vmem:[%s1626 + $0xf0] sm:$0xff]
    %v1648 = vld [vmem:[%s1626 + $0xf8] sm:$0xff]
    %v1649 = vld [vmem:[%s1626 + $0x108] sm:$0xff]
    %v1650 = vld [vmem:[%s1626 + $0x110] sm:$0xff]
    %v1651 = vld [vmem:[%s1626 + $0x120] sm:$0xff]
    %v1652 = vld [vmem:[%s1626 + $0x128] sm:$0xff]
    %v1653 = vld [vmem:[%s1626 + $0x138] sm:$0xff]
    %v1654 = vld [vmem:[%s1626 + $0x140] sm:$0xff]
    %v1655 = vld [vmem:[%s1626 + $0x150] sm:$0xff]
    %v1656 = vld [vmem:[%s1626 + $0x158] sm:$0xff]
    %v1657 = vld [vmem:[%s1626 + $0x168] sm:$0xff]
    %v1658 = vld [vmem:[%s1626 + $0x170] sm:$0xff]
    %v1659 = vld [vmem:[%s1626 + $0x1b0] sm:$0xff]
    %v1660 = vld [vmem:[%s1626 + $0x1b8] sm:$0xff]
    %v1661 = vld [vmem:[%s1626 + $0x1c8] sm:$0xff]
    %v1662 = vld [vmem:[%s1626 + $0x1d0] sm:$0xff]
    %v1663 = vld [vmem:[%s1626 + $0x1e0] sm:$0xff]
    %v1664 = vld [vmem:[%s1626 + $0x1e8] sm:$0xff]
    %v1665 = vld [vmem:[%s1626 + $0x1f8] sm:$0xff]
    %v1666 = vld [vmem:[%s1626 + $0x200] sm:$0xff]
    %v1667 = vld [vmem:[%s1626 + $0x210] sm:$0xff]
    %v1668 = vld [vmem:[%s1626 + $0x218] sm:$0xff]
    %v1669 = vld [vmem:[%s1626 + $0x228] sm:$0xff]
    %v1670 = vld [vmem:[%s1626 + $0x230] sm:$0xff]
    %v1671 = vld [vmem:[%s1626 + $0x240] sm:$0xff]
    %v1672 = vld [vmem:[%s1626 + $0x248] sm:$0xff]
    %v1673 = vld [vmem:[%s1626 + $0x258] sm:$0xff]
    %v1674 = vld [vmem:[%s1626 + $0x260] sm:$0xff]
    %v1675 = vld [vmem:[%s1626 + $0x270] sm:$0xff]
    %v1676 = vld [vmem:[%s1626 + $0x278] sm:$0xff]
    %v1677 = vld [vmem:[%s1626 + $0x288] sm:$0xff]
    %v1678 = vld [vmem:[%s1626 + $0x290] sm:$0xff]
    %v1679 = vld [vmem:[%s1626 + $0x2a0] sm:$0xff]
    %v1680 = vld [vmem:[%s1626 + $0x2a8] sm:$0xff]
    %v1681 = vld [vmem:[%s1626 + $0x2b8] sm:$0xff]
    %v1682 = vld [vmem:[%s1626 + $0x2c0] sm:$0xff]
    %v1683 = vld [vmem:[%s1626 + $0x2d0] sm:$0xff]
    %v1684 = vld [vmem:[%s1626 + $0x2d8] sm:$0xff]
    %v1685 = vld [vmem:[%s1626 + $0x2e8] sm:$0xff]
    %v1686 = vld [vmem:[%s1626 + $0x2f0] sm:$0xff]
    %v1687 = vld [vmem:[%s1626 + $0x300] sm:$0xff]
    %v1688 = vld [vmem:[%s1626 + $0x308] sm:$0xff]
    %v1689 = vld [vmem:[%s1626 + $0x318] sm:$0xff]
    %v1690 = vld [vmem:[%s1626 + $0x320] sm:$0xff]
    %1691 = vst [vmem:[#allocation3 + $0x30] sm:$0xff] %v1627
    %1692 = vst [vmem:[#allocation3 + $0x78] sm:$0xff] %v1628
    %1693 = vst [vmem:[#allocation3 + $0xc0] sm:$0xff] %v1629
    %1694 = vst [vmem:[#allocation3 + $0x108] sm:$0xff] %v1630
    %1695 = vst [vmem:[#allocation3 + $0x150] sm:$0xff] %v1631
    %1696 = vst [vmem:[#allocation3 + $0x198] sm:$0xff] %v1632
    %1697 = vst [vmem:[#allocation3 + $0x1e0] sm:$0xff] %v1633
    %1698 = vst [vmem:[#allocation3 + $0x228] sm:$0xff] %v1634
    %1699 = vst [vmem:[#allocation3 + $0x270] sm:$0xff] %v1635
    %1700 = vst [vmem:[#allocation3 + $0x2b8] sm:$0xff] %v1636
    %1701 = vst [vmem:[#allocation3 + $0x300] sm:$0xff] %v1637
    %1702 = vst [vmem:[#allocation3 + $0x348] sm:$0xff] %v1638
    %1703 = vst [vmem:[#allocation3 + $0x390] sm:$0xff] %v1639
    %1704 = vst [vmem:[#allocation3 + $0x3d8] sm:$0xff] %v1640
    %1705 = vst [vmem:[#allocation3 + $0x420] sm:$0xff] %v1641
    %1706 = vst [vmem:[#allocation3 + $0x468] sm:$0xff] %v1642
    %1707 = vst [vmem:[#allocation3 + $0x4b0] sm:$0xff] %v1643
    %1708 = vst [vmem:[#allocation3 + $0x4f8] sm:$0xff] %v1644
    %1709 = vst [vmem:[#allocation3 + $0x540] sm:$0xff] %v1645
    %1710 = vst [vmem:[#allocation3 + $0x588] sm:$0xff] %v1646
    %1711 = vst [vmem:[#allocation3 + $0x5d0] sm:$0xff] %v1647
    %1712 = vst [vmem:[#allocation3 + $0x618] sm:$0xff] %v1648
    %1713 = vst [vmem:[#allocation3 + $0x660] sm:$0xff] %v1649
    %1714 = vst [vmem:[#allocation3 + $0x6a8] sm:$0xff] %v1650
    %1715 = vst [vmem:[#allocation3 + $0x6f0] sm:$0xff] %v1651
    %1716 = vst [vmem:[#allocation3 + $0x738] sm:$0xff] %v1652
    %1717 = vst [vmem:[#allocation3 + $0x780] sm:$0xff] %v1653
    %1718 = vst [vmem:[#allocation3 + $0x7c8] sm:$0xff] %v1654
    %1719 = vst [vmem:[#allocation3 + $0x810] sm:$0xff] %v1655
    %1720 = vst [vmem:[#allocation3 + $0x858] sm:$0xff] %v1656
    %1721 = vst [vmem:[#allocation3 + $0x8a0] sm:$0xff] %v1657
    %1722 = vst [vmem:[#allocation3 + $0x8e8] sm:$0xff] %v1658
    %1723 = vst [vmem:[#allocation3 + $0x930] sm:$0xff] %v1659
    %1724 = vst [vmem:[#allocation3 + $0x978] sm:$0xff] %v1660
    %1725 = vst [vmem:[#allocation3 + $0x9c0] sm:$0xff] %v1661
    %1726 = vst [vmem:[#allocation3 + $0xa08] sm:$0xff] %v1662
    %1727 = vst [vmem:[#allocation3 + $0xa50] sm:$0xff] %v1663
    %1728 = vst [vmem:[#allocation3 + $0xa98] sm:$0xff] %v1664
    %1729 = vst [vmem:[#allocation3 + $0xae0] sm:$0xff] %v1665
    %1730 = vst [vmem:[#allocation3 + $0xb28] sm:$0xff] %v1666
    %1731 = vst [vmem:[#allocation3 + $0xb70] sm:$0xff] %v1667
    %1732 = vst [vmem:[#allocation3 + $0xbb8] sm:$0xff] %v1668
    %1733 = vst [vmem:[#allocation3 + $0xc00] sm:$0xff] %v1669
    %1734 = vst [vmem:[#allocation3 + $0xc48] sm:$0xff] %v1670
    %1735 = vst [vmem:[#allocation3 + $0xc90] sm:$0xff] %v1671
    %1736 = vst [vmem:[#allocation3 + $0xcd8] sm:$0xff] %v1672
    %1737 = vst [vmem:[#allocation3 + $0xd20] sm:$0xff] %v1673
    %1738 = vst [vmem:[#allocation3 + $0xd68] sm:$0xff] %v1674
    %1739 = vst [vmem:[#allocation3 + $0xdb0] sm:$0xff] %v1675
    %1740 = vst [vmem:[#allocation3 + $0xdf8] sm:$0xff] %v1676
    %1741 = vst [vmem:[#allocation3 + $0xe40] sm:$0xff] %v1677
    %1742 = vst [vmem:[#allocation3 + $0xe88] sm:$0xff] %v1678
    %1743 = vst [vmem:[#allocation3 + $0xed0] sm:$0xff] %v1679
    %1744 = vst [vmem:[#allocation3 + $0xf18] sm:$0xff] %v1680
    %1745 = vst [vmem:[#allocation3 + $0xf60] sm:$0xff] %v1681
    %1746 = vst [vmem:[#allocation3 + $0xfa8] sm:$0xff] %v1682
    %1747 = vst [vmem:[#allocation3 + $0xff0] sm:$0xff] %v1683
    %1748 = vst [vmem:[#allocation3 + $0x1038] sm:$0xff] %v1684
    %1749 = vst [vmem:[#allocation3 + $0x1080] sm:$0xff] %v1685
    %1750 = vst [vmem:[#allocation3 + $0x10c8] sm:$0xff] %v1686
    %1751 = vst [vmem:[#allocation3 + $0x1110] sm:$0xff] %v1687
    %1752 = vst [vmem:[#allocation3 + $0x1158] sm:$0xff] %v1688
    %1753 = vst [vmem:[#allocation3 + $0x11a0] sm:$0xff] %v1689
    %1754 = vst [vmem:[#allocation3 + $0x11e8] sm:$0xff] %v1690
    %v1755 = vld [vmem:[%s1626 + $0x1] sm:$0xff]
    %v1756 = vld [vmem:[%s1626 + $0x9] sm:$0xff]
    %v1757 = vld [vmem:[%s1626 + $0x19] sm:$0xff]
    %v1758 = vld [vmem:[%s1626 + $0x21] sm:$0xff]
    %v1759 = vld [vmem:[%s1626 + $0x31] sm:$0xff]
    %v1760 = vld [vmem:[%s1626 + $0x39] sm:$0xff]
    %v1761 = vld [vmem:[%s1626 + $0x49] sm:$0xff]
    %v1762 = vld [vmem:[%s1626 + $0x51] sm:$0xff]
    %v1763 = vld [vmem:[%s1626 + $0x61] sm:$0xff]
    %v1764 = vld [vmem:[%s1626 + $0x69] sm:$0xff]
    %v1765 = vld [vmem:[%s1626 + $0x79] sm:$0xff]
    %v1766 = vld [vmem:[%s1626 + $0x81] sm:$0xff]
    %v1767 = vld [vmem:[%s1626 + $0x91] sm:$0xff]
    %v1768 = vld [vmem:[%s1626 + $0x99] sm:$0xff]
    %v1769 = vld [vmem:[%s1626 + $0xa9] sm:$0xff]
    %v1770 = vld [vmem:[%s1626 + $0xb1] sm:$0xff]
    %v1771 = vld [vmem:[%s1626 + $0xc1] sm:$0xff]
    %v1772 = vld [vmem:[%s1626 + $0xc9] sm:$0xff]
    %v1773 = vld [vmem:[%s1626 + $0xd9] sm:$0xff]
    %v1774 = vld [vmem:[%s1626 + $0xe1] sm:$0xff]
    %v1775 = vld [vmem:[%s1626 + $0xf1] sm:$0xff]
    %v1776 = vld [vmem:[%s1626 + $0xf9] sm:$0xff]
    %v1777 = vld [vmem:[%s1626 + $0x109] sm:$0xff]
    %v1778 = vld [vmem:[%s1626 + $0x111] sm:$0xff]
    %v1779 = vld [vmem:[%s1626 + $0x121] sm:$0xff]
    %v1780 = vld [vmem:[%s1626 + $0x129] sm:$0xff]
    %v1781 = vld [vmem:[%s1626 + $0x139] sm:$0xff]
    %v1782 = vld [vmem:[%s1626 + $0x141] sm:$0xff]
    %v1783 = vld [vmem:[%s1626 + $0x151] sm:$0xff]
    %v1784 = vld [vmem:[%s1626 + $0x159] sm:$0xff]
    %v1785 = vld [vmem:[%s1626 + $0x169] sm:$0xff]
    %v1786 = vld [vmem:[%s1626 + $0x171] sm:$0xff]
    %v1787 = vld [vmem:[%s1626 + $0x1b1] sm:$0xff]
    %v1788 = vld [vmem:[%s1626 + $0x1b9] sm:$0xff]
    %v1789 = vld [vmem:[%s1626 + $0x1c9] sm:$0xff]
    %v1790 = vld [vmem:[%s1626 + $0x1d1] sm:$0xff]
    %v1791 = vld [vmem:[%s1626 + $0x1e1] sm:$0xff]
    %v1792 = vld [vmem:[%s1626 + $0x1e9] sm:$0xff]
    %v1793 = vld [vmem:[%s1626 + $0x1f9] sm:$0xff]
    %v1794 = vld [vmem:[%s1626 + $0x201] sm:$0xff]
    %v1795 = vld [vmem:[%s1626 + $0x211] sm:$0xff]
    %v1796 = vld [vmem:[%s1626 + $0x219] sm:$0xff]
    %v1797 = vld [vmem:[%s1626 + $0x229] sm:$0xff]
    %v1798 = vld [vmem:[%s1626 + $0x231] sm:$0xff]
    %v1799 = vld [vmem:[%s1626 + $0x241] sm:$0xff]
    %v1800 = vld [vmem:[%s1626 + $0x249] sm:$0xff]
    %v1801 = vld [vmem:[%s1626 + $0x259] sm:$0xff]
    %v1802 = vld [vmem:[%s1626 + $0x261] sm:$0xff]
    %v1803 = vld [vmem:[%s1626 + $0x271] sm:$0xff]
    %v1804 = vld [vmem:[%s1626 + $0x279] sm:$0xff]
    %v1805 = vld [vmem:[%s1626 + $0x289] sm:$0xff]
    %v1806 = vld [vmem:[%s1626 + $0x291] sm:$0xff]
    %v1807 = vld [vmem:[%s1626 + $0x2a1] sm:$0xff]
    %v1808 = vld [vmem:[%s1626 + $0x2a9] sm:$0xff]
    %v1809 = vld [vmem:[%s1626 + $0x2b9] sm:$0xff]
    %v1810 = vld [vmem:[%s1626 + $0x2c1] sm:$0xff]
    %v1811 = vld [vmem:[%s1626 + $0x2d1] sm:$0xff]
    %v1812 = vld [vmem:[%s1626 + $0x2d9] sm:$0xff]
    %v1813 = vld [vmem:[%s1626 + $0x2e9] sm:$0xff]
    %v1814 = vld [vmem:[%s1626 + $0x2f1] sm:$0xff]
    %v1815 = vld [vmem:[%s1626 + $0x301] sm:$0xff]
    %v1816 = vld [vmem:[%s1626 + $0x309] sm:$0xff]
    %v1817 = vld [vmem:[%s1626 + $0x319] sm:$0xff]
    %v1818 = vld [vmem:[%s1626 + $0x321] sm:$0xff]
    %1819 = vst [vmem:[#allocation3 + $0x38] sm:$0xff] %v1755
    %1820 = vst [vmem:[#allocation3 + $0x80] sm:$0xff] %v1756
    %1821 = vst [vmem:[#allocation3 + $0xc8] sm:$0xff] %v1757
    %1822 = vst [vmem:[#allocation3 + $0x110] sm:$0xff] %v1758
    %1823 = vst [vmem:[#allocation3 + $0x158] sm:$0xff] %v1759
    %1824 = vst [vmem:[#allocation3 + $0x1a0] sm:$0xff] %v1760
    %1825 = vst [vmem:[#allocation3 + $0x1e8] sm:$0xff] %v1761
    %1826 = vst [vmem:[#allocation3 + $0x230] sm:$0xff] %v1762
    %1827 = vst [vmem:[#allocation3 + $0x278] sm:$0xff] %v1763
    %1828 = vst [vmem:[#allocation3 + $0x2c0] sm:$0xff] %v1764
    %1829 = vst [vmem:[#allocation3 + $0x308] sm:$0xff] %v1765
    %1830 = vst [vmem:[#allocation3 + $0x350] sm:$0xff] %v1766
    %1831 = vst [vmem:[#allocation3 + $0x398] sm:$0xff] %v1767
    %1832 = vst [vmem:[#allocation3 + $0x3e0] sm:$0xff] %v1768
    %1833 = vst [vmem:[#allocation3 + $0x428] sm:$0xff] %v1769
    %1834 = vst [vmem:[#allocation3 + $0x470] sm:$0xff] %v1770
    %1835 = vst [vmem:[#allocation3 + $0x4b8] sm:$0xff] %v1771
    %1836 = vst [vmem:[#allocation3 + $0x500] sm:$0xff] %v1772
    %1837 = vst [vmem:[#allocation3 + $0x548] sm:$0xff] %v1773
    %1838 = vst [vmem:[#allocation3 + $0x590] sm:$0xff] %v1774
    %1839 = vst [vmem:[#allocation3 + $0x5d8] sm:$0xff] %v1775
    %1840 = vst [vmem:[#allocation3 + $0x620] sm:$0xff] %v1776
    %1841 = vst [vmem:[#allocation3 + $0x668] sm:$0xff] %v1777
    %1842 = vst [vmem:[#allocation3 + $0x6b0] sm:$0xff] %v1778
    %1843 = vst [vmem:[#allocation3 + $0x6f8] sm:$0xff] %v1779
    %1844 = vst [vmem:[#allocation3 + $0x740] sm:$0xff] %v1780
    %1845 = vst [vmem:[#allocation3 + $0x788] sm:$0xff] %v1781
    %1846 = vst [vmem:[#allocation3 + $0x7d0] sm:$0xff] %v1782
    %1847 = vst [vmem:[#allocation3 + $0x818] sm:$0xff] %v1783
    %1848 = vst [vmem:[#allocation3 + $0x860] sm:$0xff] %v1784
    %1849 = vst [vmem:[#allocation3 + $0x8a8] sm:$0xff] %v1785
    %1850 = vst [vmem:[#allocation3 + $0x8f0] sm:$0xff] %v1786
    %1851 = vst [vmem:[#allocation3 + $0x938] sm:$0xff] %v1787
    %1852 = vst [vmem:[#allocation3 + $0x980] sm:$0xff] %v1788
    %1853 = vst [vmem:[#allocation3 + $0x9c8] sm:$0xff] %v1789
    %1854 = vst [vmem:[#allocation3 + $0xa10] sm:$0xff] %v1790
    %1855 = vst [vmem:[#allocation3 + $0xa58] sm:$0xff] %v1791
    %1856 = vst [vmem:[#allocation3 + $0xaa0] sm:$0xff] %v1792
    %1857 = vst [vmem:[#allocation3 + $0xae8] sm:$0xff] %v1793
    %1858 = vst [vmem:[#allocation3 + $0xb30] sm:$0xff] %v1794
    %1859 = vst [vmem:[#allocation3 + $0xb78] sm:$0xff] %v1795
    %1860 = vst [vmem:[#allocation3 + $0xbc0] sm:$0xff] %v1796
    %1861 = vst [vmem:[#allocation3 + $0xc08] sm:$0xff] %v1797
    %1862 = vst [vmem:[#allocation3 + $0xc50] sm:$0xff] %v1798
    %1863 = vst [vmem:[#allocation3 + $0xc98] sm:$0xff] %v1799
    %1864 = vst [vmem:[#allocation3 + $0xce0] sm:$0xff] %v1800
    %1865 = vst [vmem:[#allocation3 + $0xd28] sm:$0xff] %v1801
    %1866 = vst [vmem:[#allocation3 + $0xd70] sm:$0xff] %v1802
    %1867 = vst [vmem:[#allocation3 + $0xdb8] sm:$0xff] %v1803
    %1868 = vst [vmem:[#allocation3 + $0xe00] sm:$0xff] %v1804
    %1869 = vst [vmem:[#allocation3 + $0xe48] sm:$0xff] %v1805
    %1870 = vst [vmem:[#allocation3 + $0xe90] sm:$0xff] %v1806
    %1871 = vst [vmem:[#allocation3 + $0xed8] sm:$0xff] %v1807
    %1872 = vst [vmem:[#allocation3 + $0xf20] sm:$0xff] %v1808
    %1873 = vst [vmem:[#allocation3 + $0xf68] sm:$0xff] %v1809
    %1874 = vst [vmem:[#allocation3 + $0xfb0] sm:$0xff] %v1810
    %1875 = vst [vmem:[#allocation3 + $0xff8] sm:$0xff] %v1811
    %1876 = vst [vmem:[#allocation3 + $0x1040] sm:$0xff] %v1812
    %1877 = vst [vmem:[#allocation3 + $0x1088] sm:$0xff] %v1813
    %1878 = vst [vmem:[#allocation3 + $0x10d0] sm:$0xff] %v1814
    %1879 = vst [vmem:[#allocation3 + $0x1118] sm:$0xff] %v1815
    %1880 = vst [vmem:[#allocation3 + $0x1160] sm:$0xff] %v1816
    %1881 = vst [vmem:[#allocation3 + $0x11a8] sm:$0xff] %v1817
    %1882 = vst [vmem:[#allocation3 + $0x11f0] sm:$0xff] %v1818
    %v1883 = vld [vmem:[%s1626 + $0x2] sm:$0xff]
    %v1884 = vld [vmem:[%s1626 + $0xa] sm:$0xff]
    %v1885 = vld [vmem:[%s1626 + $0x1a] sm:$0xff]
    %v1886 = vld [vmem:[%s1626 + $0x22] sm:$0xff]
    %v1887 = vld [vmem:[%s1626 + $0x32] sm:$0xff]
    %v1888 = vld [vmem:[%s1626 + $0x3a] sm:$0xff]
    %v1889 = vld [vmem:[%s1626 + $0x4a] sm:$0xff]
    %v1890 = vld [vmem:[%s1626 + $0x52] sm:$0xff]
    %v1891 = vld [vmem:[%s1626 + $0x62] sm:$0xff]
    %v1892 = vld [vmem:[%s1626 + $0x6a] sm:$0xff]
    %v1893 = vld [vmem:[%s1626 + $0x7a] sm:$0xff]
    %v1894 = vld [vmem:[%s1626 + $0x82] sm:$0xff]
    %v1895 = vld [vmem:[%s1626 + $0x92] sm:$0xff]
    %v1896 = vld [vmem:[%s1626 + $0x9a] sm:$0xff]
    %v1897 = vld [vmem:[%s1626 + $0xaa] sm:$0xff]
    %v1898 = vld [vmem:[%s1626 + $0xb2] sm:$0xff]
    %v1899 = vld [vmem:[%s1626 + $0xc2] sm:$0xff]
    %v1900 = vld [vmem:[%s1626 + $0xca] sm:$0xff]
    %v1901 = vld [vmem:[%s1626 + $0xda] sm:$0xff]
    %v1902 = vld [vmem:[%s1626 + $0xe2] sm:$0xff]
    %v1903 = vld [vmem:[%s1626 + $0xf2] sm:$0xff]
    %v1904 = vld [vmem:[%s1626 + $0xfa] sm:$0xff]
    %v1905 = vld [vmem:[%s1626 + $0x10a] sm:$0xff]
    %v1906 = vld [vmem:[%s1626 + $0x112] sm:$0xff]
    %v1907 = vld [vmem:[%s1626 + $0x122] sm:$0xff]
    %v1908 = vld [vmem:[%s1626 + $0x12a] sm:$0xff]
    %v1909 = vld [vmem:[%s1626 + $0x13a] sm:$0xff]
    %v1910 = vld [vmem:[%s1626 + $0x142] sm:$0xff]
    %v1911 = vld [vmem:[%s1626 + $0x152] sm:$0xff]
    %v1912 = vld [vmem:[%s1626 + $0x15a] sm:$0xff]
    %v1913 = vld [vmem:[%s1626 + $0x16a] sm:$0xff]
    %v1914 = vld [vmem:[%s1626 + $0x172] sm:$0xff]
    %v1915 = vld [vmem:[%s1626 + $0x1b2] sm:$0xff]
    %v1916 = vld [vmem:[%s1626 + $0x1ba] sm:$0xff]
    %v1917 = vld [vmem:[%s1626 + $0x1ca] sm:$0xff]
    %v1918 = vld [vmem:[%s1626 + $0x1d2] sm:$0xff]
    %v1919 = vld [vmem:[%s1626 + $0x1e2] sm:$0xff]
    %v1920 = vld [vmem:[%s1626 + $0x1ea] sm:$0xff]
    %v1921 = vld [vmem:[%s1626 + $0x1fa] sm:$0xff]
    %v1922 = vld [vmem:[%s1626 + $0x202] sm:$0xff]
    %v1923 = vld [vmem:[%s1626 + $0x212] sm:$0xff]
    %v1924 = vld [vmem:[%s1626 + $0x21a] sm:$0xff]
    %v1925 = vld [vmem:[%s1626 + $0x22a] sm:$0xff]
    %v1926 = vld [vmem:[%s1626 + $0x232] sm:$0xff]
    %v1927 = vld [vmem:[%s1626 + $0x242] sm:$0xff]
    %v1928 = vld [vmem:[%s1626 + $0x24a] sm:$0xff]
    %v1929 = vld [vmem:[%s1626 + $0x25a] sm:$0xff]
    %v1930 = vld [vmem:[%s1626 + $0x262] sm:$0xff]
    %v1931 = vld [vmem:[%s1626 + $0x272] sm:$0xff]
    %v1932 = vld [vmem:[%s1626 + $0x27a] sm:$0xff]
    %v1933 = vld [vmem:[%s1626 + $0x28a] sm:$0xff]
    %v1934 = vld [vmem:[%s1626 + $0x292] sm:$0xff]
    %v1935 = vld [vmem:[%s1626 + $0x2a2] sm:$0xff]
    %v1936 = vld [vmem:[%s1626 + $0x2aa] sm:$0xff]
    %v1937 = vld [vmem:[%s1626 + $0x2ba] sm:$0xff]
    %v1938 = vld [vmem:[%s1626 + $0x2c2] sm:$0xff]
    %v1939 = vld [vmem:[%s1626 + $0x2d2] sm:$0xff]
    %v1940 = vld [vmem:[%s1626 + $0x2da] sm:$0xff]
    %v1941 = vld [vmem:[%s1626 + $0x2ea] sm:$0xff]
    %v1942 = vld [vmem:[%s1626 + $0x2f2] sm:$0xff]
    %v1943 = vld [vmem:[%s1626 + $0x302] sm:$0xff]
    %v1944 = vld [vmem:[%s1626 + $0x30a] sm:$0xff]
    %v1945 = vld [vmem:[%s1626 + $0x31a] sm:$0xff]
    %v1946 = vld [vmem:[%s1626 + $0x322] sm:$0xff]
    %1947 = vst [vmem:[#allocation3 + $0x40] sm:$0xff] %v1883
    %1948 = vst [vmem:[#allocation3 + $0x88] sm:$0xff] %v1884
    %1949 = vst [vmem:[#allocation3 + $0xd0] sm:$0xff] %v1885
    %1950 = vst [vmem:[#allocation3 + $0x118] sm:$0xff] %v1886
    %1951 = vst [vmem:[#allocation3 + $0x160] sm:$0xff] %v1887
    %1952 = vst [vmem:[#allocation3 + $0x1a8] sm:$0xff] %v1888
    %1953 = vst [vmem:[#allocation3 + $0x1f0] sm:$0xff] %v1889
    %1954 = vst [vmem:[#allocation3 + $0x238] sm:$0xff] %v1890
    %1955 = vst [vmem:[#allocation3 + $0x280] sm:$0xff] %v1891
    %1956 = vst [vmem:[#allocation3 + $0x2c8] sm:$0xff] %v1892
    %1957 = vst [vmem:[#allocation3 + $0x310] sm:$0xff] %v1893
    %1958 = vst [vmem:[#allocation3 + $0x358] sm:$0xff] %v1894
    %1959 = vst [vmem:[#allocation3 + $0x3a0] sm:$0xff] %v1895
    %1960 = vst [vmem:[#allocation3 + $0x3e8] sm:$0xff] %v1896
    %1961 = vst [vmem:[#allocation3 + $0x430] sm:$0xff] %v1897
    %1962 = vst [vmem:[#allocation3 + $0x478] sm:$0xff] %v1898
    %1963 = vst [vmem:[#allocation3 + $0x4c0] sm:$0xff] %v1899
    %1964 = vst [vmem:[#allocation3 + $0x508] sm:$0xff] %v1900
    %1965 = vst [vmem:[#allocation3 + $0x550] sm:$0xff] %v1901
    %1966 = vst [vmem:[#allocation3 + $0x598] sm:$0xff] %v1902
    %1967 = vst [vmem:[#allocation3 + $0x5e0] sm:$0xff] %v1903
    %1968 = vst [vmem:[#allocation3 + $0x628] sm:$0xff] %v1904
    %1969 = vst [vmem:[#allocation3 + $0x670] sm:$0xff] %v1905
    %1970 = vst [vmem:[#allocation3 + $0x6b8] sm:$0xff] %v1906
    %1971 = vst [vmem:[#allocation3 + $0x700] sm:$0xff] %v1907
    %1972 = vst [vmem:[#allocation3 + $0x748] sm:$0xff] %v1908
    %1973 = vst [vmem:[#allocation3 + $0x790] sm:$0xff] %v1909
    %1974 = vst [vmem:[#allocation3 + $0x7d8] sm:$0xff] %v1910
    %1975 = vst [vmem:[#allocation3 + $0x820] sm:$0xff] %v1911
    %1976 = vst [vmem:[#allocation3 + $0x868] sm:$0xff] %v1912
    %1977 = vst [vmem:[#allocation3 + $0x8b0] sm:$0xff] %v1913
    %1978 = vst [vmem:[#allocation3 + $0x8f8] sm:$0xff] %v1914
    %1979 = vst [vmem:[#allocation3 + $0x940] sm:$0xff] %v1915
    %1980 = vst [vmem:[#allocation3 + $0x988] sm:$0xff] %v1916
    %1981 = vst [vmem:[#allocation3 + $0x9d0] sm:$0xff] %v1917
    %1982 = vst [vmem:[#allocation3 + $0xa18] sm:$0xff] %v1918
    %1983 = vst [vmem:[#allocation3 + $0xa60] sm:$0xff] %v1919
    %1984 = vst [vmem:[#allocation3 + $0xaa8] sm:$0xff] %v1920
    %1985 = vst [vmem:[#allocation3 + $0xaf0] sm:$0xff] %v1921
    %1986 = vst [vmem:[#allocation3 + $0xb38] sm:$0xff] %v1922
    %1987 = vst [vmem:[#allocation3 + $0xb80] sm:$0xff] %v1923
    %1988 = vst [vmem:[#allocation3 + $0xbc8] sm:$0xff] %v1924
    %1989 = vst [vmem:[#allocation3 + $0xc10] sm:$0xff] %v1925
    %1990 = vst [vmem:[#allocation3 + $0xc58] sm:$0xff] %v1926
    %1991 = vst [vmem:[#allocation3 + $0xca0] sm:$0xff] %v1927
    %1992 = vst [vmem:[#allocation3 + $0xce8] sm:$0xff] %v1928
    %1993 = vst [vmem:[#allocation3 + $0xd30] sm:$0xff] %v1929
    %1994 = vst [vmem:[#allocation3 + $0xd78] sm:$0xff] %v1930
    %1995 = vst [vmem:[#allocation3 + $0xdc0] sm:$0xff] %v1931
    %1996 = vst [vmem:[#allocation3 + $0xe08] sm:$0xff] %v1932
    %1997 = vst [vmem:[#allocation3 + $0xe50] sm:$0xff] %v1933
    %1998 = vst [vmem:[#allocation3 + $0xe98] sm:$0xff] %v1934
    %1999 = vst [vmem:[#allocation3 + $0xee0] sm:$0xff] %v1935
    %2000 = vst [vmem:[#allocation3 + $0xf28] sm:$0xff] %v1936
    %2001 = vst [vmem:[#allocation3 + $0xf70] sm:$0xff] %v1937
    %2002 = vst [vmem:[#allocation3 + $0xfb8] sm:$0xff] %v1938
    %2003 = vst [vmem:[#allocation3 + $0x1000] sm:$0xff] %v1939
    %2004 = vst [vmem:[#allocation3 + $0x1048] sm:$0xff] %v1940
    %2005 = vst [vmem:[#allocation3 + $0x1090] sm:$0xff] %v1941
    %2006 = vst [vmem:[#allocation3 + $0x10d8] sm:$0xff] %v1942
    %2007 = vst [vmem:[#allocation3 + $0x1120] sm:$0xff] %v1943
    %2008 = vst [vmem:[#allocation3 + $0x1168] sm:$0xff] %v1944
    %2009 = vst [vmem:[#allocation3 + $0x11b0] sm:$0xff] %v1945
    %2010 = vst [vmem:[#allocation3 + $0x11f8] sm:$0xff] %v1946
    %v2011 = vld [vmem:[#allocation3] sm:$0xff]
    %v2012 = vld [vmem:[#allocation3 + $0x8] sm:$0xff]
    %v2013 = vld [vmem:[#allocation3 + $0x10] sm:$0xff]
    %v2014 = vld [vmem:[#allocation3 + $0x18] sm:$0xff]
    %v2015 = vld [vmem:[#allocation3 + $0x20] sm:$0xff]
    %v2016 = vld [vmem:[#allocation3 + $0x28] sm:$0xff]
    %v2017 = vld [vmem:[#allocation3 + $0x30] sm:$0xff]
    %v2018 = vld [vmem:[#allocation3 + $0x38] sm:$0xff]
    %v2019 = vld [vmem:[#allocation3 + $0x40] sm:$0xff]
    %v2020 = vld [vmem:[#allocation3 + $0x48] sm:$0xff]
    %v2021 = vld [vmem:[#allocation3 + $0x50] sm:$0xff]
    %v2022 = vld [vmem:[#allocation3 + $0x58] sm:$0xff]
    %v2023 = vld [vmem:[#allocation3 + $0x60] sm:$0xff]
    %v2024 = vld [vmem:[#allocation3 + $0x68] sm:$0xff]
    %v2025 = vld [vmem:[#allocation3 + $0x70] sm:$0xff]
    %v2026 = vld [vmem:[#allocation3 + $0x78] sm:$0xff]
    %v2027 = vld [vmem:[#allocation3 + $0x80] sm:$0xff]
    %v2028 = vld [vmem:[#allocation3 + $0x88] sm:$0xff]
    %v2029 = vld [vmem:[#allocation3 + $0x90] sm:$0xff]
    %v2030 = vld [vmem:[#allocation3 + $0x98] sm:$0xff]
    %v2031 = vld [vmem:[#allocation3 + $0xa0] sm:$0xff]
    %v2032 = vld [vmem:[#allocation3 + $0xa8] sm:$0xff]
    %v2033 = vld [vmem:[#allocation3 + $0xb0] sm:$0xff]
    %v2034 = vld [vmem:[#allocation3 + $0xb8] sm:$0xff]
    %v2035 = vld [vmem:[#allocation3 + $0xc0] sm:$0xff]
    %v2036 = vld [vmem:[#allocation3 + $0xc8] sm:$0xff]
    %v2037 = vld [vmem:[#allocation3 + $0xd0] sm:$0xff]
    %v2038 = vld [vmem:[#allocation3 + $0xd8] sm:$0xff]
    %v2039 = vld [vmem:[#allocation3 + $0xe0] sm:$0xff]
    %v2040 = vld [vmem:[#allocation3 + $0xe8] sm:$0xff]
    %v2041 = vld [vmem:[#allocation3 + $0xf0] sm:$0xff]
    %v2042 = vld [vmem:[#allocation3 + $0xf8] sm:$0xff]
    %v2043 = vld [vmem:[#allocation3 + $0x100] sm:$0xff]
    %v2044 = vld [vmem:[#allocation3 + $0x108] sm:$0xff]
    %v2045 = vld [vmem:[#allocation3 + $0x110] sm:$0xff]
    %v2046 = vld [vmem:[#allocation3 + $0x118] sm:$0xff]
    %v2047 = vld [vmem:[#allocation3 + $0x120] sm:$0xff]
    %v2048 = vld [vmem:[#allocation3 + $0x128] sm:$0xff]
    %v2049 = vld [vmem:[#allocation3 + $0x130] sm:$0xff]
    %v2050 = vld [vmem:[#allocation3 + $0x138] sm:$0xff]
    %v2051 = vld [vmem:[#allocation3 + $0x140] sm:$0xff]
    %v2052 = vld [vmem:[#allocation3 + $0x148] sm:$0xff]
    %v2053 = vld [vmem:[#allocation3 + $0x150] sm:$0xff]
    %v2054 = vld [vmem:[#allocation3 + $0x158] sm:$0xff]
    %v2055 = vld [vmem:[#allocation3 + $0x160] sm:$0xff]
    %v2056 = vld [vmem:[#allocation3 + $0x168] sm:$0xff]
    %v2057 = vld [vmem:[#allocation3 + $0x170] sm:$0xff]
    %v2058 = vld [vmem:[#allocation3 + $0x178] sm:$0xff]
    %v2059 = vld [vmem:[#allocation3 + $0x180] sm:$0xff]
    %v2060 = vld [vmem:[#allocation3 + $0x188] sm:$0xff]
    %v2061 = vld [vmem:[#allocation3 + $0x190] sm:$0xff]
    %v2062 = vld [vmem:[#allocation3 + $0x198] sm:$0xff]
    %v2063 = vld [vmem:[#allocation3 + $0x1a0] sm:$0xff]
    %v2064 = vld [vmem:[#allocation3 + $0x1a8] sm:$0xff]
    %v2065 = vld [vmem:[#allocation3 + $0x1b0] sm:$0xff]
    %v2066 = vld [vmem:[#allocation3 + $0x1b8] sm:$0xff]
    %v2067 = vld [vmem:[#allocation3 + $0x1c0] sm:$0xff]
    %v2068 = vld [vmem:[#allocation3 + $0x1c8] sm:$0xff]
    %v2069 = vld [vmem:[#allocation3 + $0x1d0] sm:$0xff]
    %v2070 = vld [vmem:[#allocation3 + $0x1d8] sm:$0xff]
    %v2071 = vld [vmem:[#allocation3 + $0x1e0] sm:$0xff]
    %v2072 = vld [vmem:[#allocation3 + $0x1e8] sm:$0xff]
    %v2073 = vld [vmem:[#allocation3 + $0x1f0] sm:$0xff]
    %v2074 = vld [vmem:[#allocation3 + $0x1f8] sm:$0xff]
    %v2075 = vld [vmem:[#allocation3 + $0x200] sm:$0xff]
    %v2076 = vld [vmem:[#allocation3 + $0x208] sm:$0xff]
    %v2077 = vld [vmem:[#allocation3 + $0x210] sm:$0xff]
    %v2078 = vld [vmem:[#allocation3 + $0x218] sm:$0xff]
    %v2079 = vld [vmem:[#allocation3 + $0x220] sm:$0xff]
    %v2080 = vld [vmem:[#allocation3 + $0x228] sm:$0xff]
    %v2081 = vld [vmem:[#allocation3 + $0x230] sm:$0xff]
    %v2082 = vld [vmem:[#allocation3 + $0x238] sm:$0xff]
    %v2083 = vld [vmem:[#allocation3 + $0x240] sm:$0xff]
    %v2084 = vld [vmem:[#allocation3 + $0x248] sm:$0xff]
    %v2085 = vld [vmem:[#allocation3 + $0x250] sm:$0xff]
    %v2086 = vld [vmem:[#allocation3 + $0x258] sm:$0xff]
    %v2087 = vld [vmem:[#allocation3 + $0x260] sm:$0xff]
    %v2088 = vld [vmem:[#allocation3 + $0x268] sm:$0xff]
    %v2089 = vld [vmem:[#allocation3 + $0x270] sm:$0xff]
    %v2090 = vld [vmem:[#allocation3 + $0x278] sm:$0xff]
    %v2091 = vld [vmem:[#allocation3 + $0x280] sm:$0xff]
    %v2092 = vld [vmem:[#allocation3 + $0x288] sm:$0xff]
    %v2093 = vld [vmem:[#allocation3 + $0x290] sm:$0xff]
    %v2094 = vld [vmem:[#allocation3 + $0x298] sm:$0xff]
    %v2095 = vld [vmem:[#allocation3 + $0x2a0] sm:$0xff]
    %v2096 = vld [vmem:[#allocation3 + $0x2a8] sm:$0xff]
    %v2097 = vld [vmem:[#allocation3 + $0x2b0] sm:$0xff]
    %v2098 = vld [vmem:[#allocation3 + $0x2b8] sm:$0xff]
    %v2099 = vld [vmem:[#allocation3 + $0x2c0] sm:$0xff]
    %v2100 = vld [vmem:[#allocation3 + $0x2c8] sm:$0xff]
    %v2101 = vld [vmem:[#allocation3 + $0x2d0] sm:$0xff]
    %v2102 = vld [vmem:[#allocation3 + $0x2d8] sm:$0xff]
    %v2103 = vld [vmem:[#allocation3 + $0x2e0] sm:$0xff]
    %v2104 = vld [vmem:[#allocation3 + $0x2e8] sm:$0xff]
    %v2105 = vld [vmem:[#allocation3 + $0x2f0] sm:$0xff]
    %v2106 = vld [vmem:[#allocation3 + $0x2f8] sm:$0xff]
    %v2107 = vld [vmem:[#allocation3 + $0x300] sm:$0xff]
    %v2108 = vld [vmem:[#allocation3 + $0x308] sm:$0xff]
    %v2109 = vld [vmem:[#allocation3 + $0x310] sm:$0xff]
    %v2110 = vld [vmem:[#allocation3 + $0x318] sm:$0xff]
    %v2111 = vld [vmem:[#allocation3 + $0x320] sm:$0xff]
    %v2112 = vld [vmem:[#allocation3 + $0x328] sm:$0xff]
    %v2113 = vld [vmem:[#allocation3 + $0x330] sm:$0xff]
    %v2114 = vld [vmem:[#allocation3 + $0x338] sm:$0xff]
    %v2115 = vld [vmem:[#allocation3 + $0x340] sm:$0xff]
    %v2116 = vld [vmem:[#allocation3 + $0x348] sm:$0xff]
    %v2117 = vld [vmem:[#allocation3 + $0x350] sm:$0xff]
    %v2118 = vld [vmem:[#allocation3 + $0x358] sm:$0xff]
    %v2119 = vld [vmem:[#allocation3 + $0x360] sm:$0xff]
    %v2120 = vld [vmem:[#allocation3 + $0x368] sm:$0xff]
    %v2121 = vld [vmem:[#allocation3 + $0x370] sm:$0xff]
    %v2122 = vld [vmem:[#allocation3 + $0x378] sm:$0xff]
    %v2123 = vld [vmem:[#allocation3 + $0x380] sm:$0xff]
    %v2124 = vld [vmem:[#allocation3 + $0x388] sm:$0xff]
    %v2125 = vld [vmem:[#allocation3 + $0x390] sm:$0xff]
    %v2126 = vld [vmem:[#allocation3 + $0x398] sm:$0xff]
    %v2127 = vld [vmem:[#allocation3 + $0x3a0] sm:$0xff]
    %v2128 = vld [vmem:[#allocation3 + $0x3a8] sm:$0xff]
    %v2129 = vld [vmem:[#allocation3 + $0x3b0] sm:$0xff]
    %v2130 = vld [vmem:[#allocation3 + $0x3b8] sm:$0xff]
    %v2131 = vld [vmem:[#allocation3 + $0x3c0] sm:$0xff]
    %v2132 = vld [vmem:[#allocation3 + $0x3c8] sm:$0xff]
    %v2133 = vld [vmem:[#allocation3 + $0x3d0] sm:$0xff]
    %v2134 = vld [vmem:[#allocation3 + $0x3d8] sm:$0xff]
    %v2135 = vld [vmem:[#allocation3 + $0x3e0] sm:$0xff]
    %v2136 = vld [vmem:[#allocation3 + $0x3e8] sm:$0xff]
    %v2137 = vld [vmem:[#allocation3 + $0x3f0] sm:$0xff]
    %v2138 = vld [vmem:[#allocation3 + $0x3f8] sm:$0xff]
    %v2139 = vld [vmem:[#allocation3 + $0x400] sm:$0xff]
    %v2140 = vld [vmem:[#allocation3 + $0x408] sm:$0xff]
    %v2141 = vld [vmem:[#allocation3 + $0x410] sm:$0xff]
    %v2142 = vld [vmem:[#allocation3 + $0x418] sm:$0xff]
    %v2143 = vld [vmem:[#allocation3 + $0x420] sm:$0xff]
    %v2144 = vld [vmem:[#allocation3 + $0x428] sm:$0xff]
    %v2145 = vld [vmem:[#allocation3 + $0x430] sm:$0xff]
    %v2146 = vld [vmem:[#allocation3 + $0x438] sm:$0xff]
    %v2147 = vld [vmem:[#allocation3 + $0x440] sm:$0xff]
    %v2148 = vld [vmem:[#allocation3 + $0x448] sm:$0xff]
    %v2149 = vld [vmem:[#allocation3 + $0x450] sm:$0xff]
    %v2150 = vld [vmem:[#allocation3 + $0x458] sm:$0xff]
    %v2151 = vld [vmem:[#allocation3 + $0x460] sm:$0xff]
    %v2152 = vld [vmem:[#allocation3 + $0x468] sm:$0xff]
    %v2153 = vld [vmem:[#allocation3 + $0x470] sm:$0xff]
    %v2154 = vld [vmem:[#allocation3 + $0x478] sm:$0xff]
    %v2155 = vld [vmem:[#allocation3 + $0x480] sm:$0xff]
    %v2156 = vld [vmem:[#allocation3 + $0x488] sm:$0xff]
    %v2157 = vld [vmem:[#allocation3 + $0x490] sm:$0xff]
    %v2158 = vld [vmem:[#allocation3 + $0x498] sm:$0xff]
    %v2159 = vld [vmem:[#allocation3 + $0x4a0] sm:$0xff]
    %v2160 = vld [vmem:[#allocation3 + $0x4a8] sm:$0xff]
    %v2161 = vld [vmem:[#allocation3 + $0x4b0] sm:$0xff]
    %v2162 = vld [vmem:[#allocation3 + $0x4b8] sm:$0xff]
    %v2163 = vld [vmem:[#allocation3 + $0x4c0] sm:$0xff]
    %v2164 = vld [vmem:[#allocation3 + $0x4c8] sm:$0xff]
    %v2165 = vld [vmem:[#allocation3 + $0x4d0] sm:$0xff]
    %v2166 = vld [vmem:[#allocation3 + $0x4d8] sm:$0xff]
    %v2167 = vld [vmem:[#allocation3 + $0x4e0] sm:$0xff]
    %v2168 = vld [vmem:[#allocation3 + $0x4e8] sm:$0xff]
    %v2169 = vld [vmem:[#allocation3 + $0x4f0] sm:$0xff]
    %v2170 = vld [vmem:[#allocation3 + $0x4f8] sm:$0xff]
    %v2171 = vld [vmem:[#allocation3 + $0x500] sm:$0xff]
    %v2172 = vld [vmem:[#allocation3 + $0x508] sm:$0xff]
    %v2173 = vld [vmem:[#allocation3 + $0x510] sm:$0xff]
    %v2174 = vld [vmem:[#allocation3 + $0x518] sm:$0xff]
    %v2175 = vld [vmem:[#allocation3 + $0x520] sm:$0xff]
    %v2176 = vld [vmem:[#allocation3 + $0x528] sm:$0xff]
    %v2177 = vld [vmem:[#allocation3 + $0x530] sm:$0xff]
    %v2178 = vld [vmem:[#allocation3 + $0x538] sm:$0xff]
    %v2179 = vld [vmem:[#allocation3 + $0x540] sm:$0xff]
    %v2180 = vld [vmem:[#allocation3 + $0x548] sm:$0xff]
    %v2181 = vld [vmem:[#allocation3 + $0x550] sm:$0xff]
    %v2182 = vld [vmem:[#allocation3 + $0x558] sm:$0xff]
    %v2183 = vld [vmem:[#allocation3 + $0x560] sm:$0xff]
    %v2184 = vld [vmem:[#allocation3 + $0x568] sm:$0xff]
    %v2185 = vld [vmem:[#allocation3 + $0x570] sm:$0xff]
    %v2186 = vld [vmem:[#allocation3 + $0x578] sm:$0xff]
    %v2187 = vld [vmem:[#allocation3 + $0x580] sm:$0xff]
    %v2188 = vld [vmem:[#allocation3 + $0x588] sm:$0xff]
    %v2189 = vld [vmem:[#allocation3 + $0x590] sm:$0xff]
    %v2190 = vld [vmem:[#allocation3 + $0x598] sm:$0xff]
    %v2191 = vld [vmem:[#allocation3 + $0x5a0] sm:$0xff]
    %v2192 = vld [vmem:[#allocation3 + $0x5a8] sm:$0xff]
    %v2193 = vld [vmem:[#allocation3 + $0x5b0] sm:$0xff]
    %v2194 = vld [vmem:[#allocation3 + $0x5b8] sm:$0xff]
    %v2195 = vld [vmem:[#allocation3 + $0x5c0] sm:$0xff]
    %v2196 = vld [vmem:[#allocation3 + $0x5c8] sm:$0xff]
    %v2197 = vld [vmem:[#allocation3 + $0x5d0] sm:$0xff]
    %v2198 = vld [vmem:[#allocation3 + $0x5d8] sm:$0xff]
    %v2199 = vld [vmem:[#allocation3 + $0x5e0] sm:$0xff]
    %v2200 = vld [vmem:[#allocation3 + $0x5e8] sm:$0xff]
    %v2201 = vld [vmem:[#allocation3 + $0x5f0] sm:$0xff]
    %v2202 = vld [vmem:[#allocation3 + $0x5f8] sm:$0xff]
    %v2203 = vld [vmem:[#allocation3 + $0x600] sm:$0xff]
    %v2204 = vld [vmem:[#allocation3 + $0x608] sm:$0xff]
    %v2205 = vld [vmem:[#allocation3 + $0x610] sm:$0xff]
    %v2206 = vld [vmem:[#allocation3 + $0x618] sm:$0xff]
    %v2207 = vld [vmem:[#allocation3 + $0x620] sm:$0xff]
    %v2208 = vld [vmem:[#allocation3 + $0x628] sm:$0xff]
    %v2209 = vld [vmem:[#allocation3 + $0x630] sm:$0xff]
    %v2210 = vld [vmem:[#allocation3 + $0x638] sm:$0xff]
    %v2211 = vld [vmem:[#allocation3 + $0x640] sm:$0xff]
    %v2212 = vld [vmem:[#allocation3 + $0x648] sm:$0xff]
    %v2213 = vld [vmem:[#allocation3 + $0x650] sm:$0xff]
    %v2214 = vld [vmem:[#allocation3 + $0x658] sm:$0xff]
    %v2215 = vld [vmem:[#allocation3 + $0x660] sm:$0xff]
    %v2216 = vld [vmem:[#allocation3 + $0x668] sm:$0xff]
    %v2217 = vld [vmem:[#allocation3 + $0x670] sm:$0xff]
    %v2218 = vld [vmem:[#allocation3 + $0x678] sm:$0xff]
    %v2219 = vld [vmem:[#allocation3 + $0x680] sm:$0xff]
    %v2220 = vld [vmem:[#allocation3 + $0x688] sm:$0xff]
    %v2221 = vld [vmem:[#allocation3 + $0x690] sm:$0xff]
    %v2222 = vld [vmem:[#allocation3 + $0x698] sm:$0xff]
    %v2223 = vld [vmem:[#allocation3 + $0x6a0] sm:$0xff]
    %v2224 = vld [vmem:[#allocation3 + $0x6a8] sm:$0xff]
    %v2225 = vld [vmem:[#allocation3 + $0x6b0] sm:$0xff]
    %v2226 = vld [vmem:[#allocation3 + $0x6b8] sm:$0xff]
    %v2227 = vld [vmem:[#allocation3 + $0x6c0] sm:$0xff]
    %v2228 = vld [vmem:[#allocation3 + $0x6c8] sm:$0xff]
    %v2229 = vld [vmem:[#allocation3 + $0x6d0] sm:$0xff]
    %v2230 = vld [vmem:[#allocation3 + $0x6d8] sm:$0xff]
    %v2231 = vld [vmem:[#allocation3 + $0x6e0] sm:$0xff]
    %v2232 = vld [vmem:[#allocation3 + $0x6e8] sm:$0xff]
    %v2233 = vld [vmem:[#allocation3 + $0x6f0] sm:$0xff]
    %v2234 = vld [vmem:[#allocation3 + $0x6f8] sm:$0xff]
    %v2235 = vld [vmem:[#allocation3 + $0x700] sm:$0xff]
    %v2236 = vld [vmem:[#allocation3 + $0x708] sm:$0xff]
    %v2237 = vld [vmem:[#allocation3 + $0x710] sm:$0xff]
    %v2238 = vld [vmem:[#allocation3 + $0x718] sm:$0xff]
    %v2239 = vld [vmem:[#allocation3 + $0x720] sm:$0xff]
    %v2240 = vld [vmem:[#allocation3 + $0x728] sm:$0xff]
    %v2241 = vld [vmem:[#allocation3 + $0x730] sm:$0xff]
    %v2242 = vld [vmem:[#allocation3 + $0x738] sm:$0xff]
    %v2243 = vld [vmem:[#allocation3 + $0x740] sm:$0xff]
    %v2244 = vld [vmem:[#allocation3 + $0x748] sm:$0xff]
    %v2245 = vld [vmem:[#allocation3 + $0x750] sm:$0xff]
    %v2246 = vld [vmem:[#allocation3 + $0x758] sm:$0xff]
    %v2247 = vld [vmem:[#allocation3 + $0x760] sm:$0xff]
    %v2248 = vld [vmem:[#allocation3 + $0x768] sm:$0xff]
    %v2249 = vld [vmem:[#allocation3 + $0x770] sm:$0xff]
    %v2250 = vld [vmem:[#allocation3 + $0x778] sm:$0xff]
    %v2251 = vld [vmem:[#allocation3 + $0x780] sm:$0xff]
    %v2252 = vld [vmem:[#allocation3 + $0x788] sm:$0xff]
    %v2253 = vld [vmem:[#allocation3 + $0x790] sm:$0xff]
    %v2254 = vld [vmem:[#allocation3 + $0x798] sm:$0xff]
    %v2255 = vld [vmem:[#allocation3 + $0x7a0] sm:$0xff]
    %v2256 = vld [vmem:[#allocation3 + $0x7a8] sm:$0xff]
    %v2257 = vld [vmem:[#allocation3 + $0x7b0] sm:$0xff]
    %v2258 = vld [vmem:[#allocation3 + $0x7b8] sm:$0xff]
    %v2259 = vld [vmem:[#allocation3 + $0x7c0] sm:$0xff]
    %v2260 = vld [vmem:[#allocation3 + $0x7c8] sm:$0xff]
    %v2261 = vld [vmem:[#allocation3 + $0x7d0] sm:$0xff]
    %v2262 = vld [vmem:[#allocation3 + $0x7d8] sm:$0xff]
    %v2263 = vld [vmem:[#allocation3 + $0x7e0] sm:$0xff]
    %v2264 = vld [vmem:[#allocation3 + $0x7e8] sm:$0xff]
    %v2265 = vld [vmem:[#allocation3 + $0x7f0] sm:$0xff]
    %v2266 = vld [vmem:[#allocation3 + $0x7f8] sm:$0xff]
    %v2267 = vld [vmem:[#allocation3 + $0x800] sm:$0xff]
    %v2268 = vld [vmem:[#allocation3 + $0x808] sm:$0xff]
    %v2269 = vld [vmem:[#allocation3 + $0x810] sm:$0xff]
    %v2270 = vld [vmem:[#allocation3 + $0x818] sm:$0xff]
    %v2271 = vld [vmem:[#allocation3 + $0x820] sm:$0xff]
    %v2272 = vld [vmem:[#allocation3 + $0x828] sm:$0xff]
    %v2273 = vld [vmem:[#allocation3 + $0x830] sm:$0xff]
    %v2274 = vld [vmem:[#allocation3 + $0x838] sm:$0xff]
    %v2275 = vld [vmem:[#allocation3 + $0x840] sm:$0xff]
    %v2276 = vld [vmem:[#allocation3 + $0x848] sm:$0xff]
    %v2277 = vld [vmem:[#allocation3 + $0x850] sm:$0xff]
    %v2278 = vld [vmem:[#allocation3 + $0x858] sm:$0xff]
    %v2279 = vld [vmem:[#allocation3 + $0x860] sm:$0xff]
    %v2280 = vld [vmem:[#allocation3 + $0x868] sm:$0xff]
    %v2281 = vld [vmem:[#allocation3 + $0x870] sm:$0xff]
    %v2282 = vld [vmem:[#allocation3 + $0x878] sm:$0xff]
    %v2283 = vld [vmem:[#allocation3 + $0x880] sm:$0xff]
    %v2284 = vld [vmem:[#allocation3 + $0x888] sm:$0xff]
    %v2285 = vld [vmem:[#allocation3 + $0x890] sm:$0xff]
    %v2286 = vld [vmem:[#allocation3 + $0x898] sm:$0xff]
    %v2287 = vld [vmem:[#allocation3 + $0x8a0] sm:$0xff]
    %v2288 = vld [vmem:[#allocation3 + $0x8a8] sm:$0xff]
    %v2289 = vld [vmem:[#allocation3 + $0x8b0] sm:$0xff]
    %v2290 = vld [vmem:[#allocation3 + $0x8b8] sm:$0xff]
    %v2291 = vld [vmem:[#allocation3 + $0x8c0] sm:$0xff]
    %v2292 = vld [vmem:[#allocation3 + $0x8c8] sm:$0xff]
    %v2293 = vld [vmem:[#allocation3 + $0x8d0] sm:$0xff]
    %v2294 = vld [vmem:[#allocation3 + $0x8d8] sm:$0xff]
    %v2295 = vld [vmem:[#allocation3 + $0x8e0] sm:$0xff]
    %v2296 = vld [vmem:[#allocation3 + $0x8e8] sm:$0xff]
    %v2297 = vld [vmem:[#allocation3 + $0x8f0] sm:$0xff]
    %v2298 = vld [vmem:[#allocation3 + $0x8f8] sm:$0xff]
    %v2299 = vld [vmem:[#allocation3 + $0x900] sm:$0xff]
    %v2300 = vld [vmem:[#allocation3 + $0x908] sm:$0xff]
    %v2301 = vld [vmem:[#allocation3 + $0x910] sm:$0xff]
    %v2302 = vld [vmem:[#allocation3 + $0x918] sm:$0xff]
    %v2303 = vld [vmem:[#allocation3 + $0x920] sm:$0xff]
    %v2304 = vld [vmem:[#allocation3 + $0x928] sm:$0xff]
    %v2305 = vld [vmem:[#allocation3 + $0x930] sm:$0xff]
    %v2306 = vld [vmem:[#allocation3 + $0x938] sm:$0xff]
    %v2307 = vld [vmem:[#allocation3 + $0x940] sm:$0xff]
    %v2308 = vld [vmem:[#allocation3 + $0x948] sm:$0xff]
    %v2309 = vld [vmem:[#allocation3 + $0x950] sm:$0xff]
    %v2310 = vld [vmem:[#allocation3 + $0x958] sm:$0xff]
    %v2311 = vld [vmem:[#allocation3 + $0x960] sm:$0xff]
    %v2312 = vld [vmem:[#allocation3 + $0x968] sm:$0xff]
    %v2313 = vld [vmem:[#allocation3 + $0x970] sm:$0xff]
    %v2314 = vld [vmem:[#allocation3 + $0x978] sm:$0xff]
    %v2315 = vld [vmem:[#allocation3 + $0x980] sm:$0xff]
    %v2316 = vld [vmem:[#allocation3 + $0x988] sm:$0xff]
    %v2317 = vld [vmem:[#allocation3 + $0x990] sm:$0xff]
    %v2318 = vld [vmem:[#allocation3 + $0x998] sm:$0xff]
    %v2319 = vld [vmem:[#allocation3 + $0x9a0] sm:$0xff]
    %v2320 = vld [vmem:[#allocation3 + $0x9a8] sm:$0xff]
    %v2321 = vld [vmem:[#allocation3 + $0x9b0] sm:$0xff]
    %v2322 = vld [vmem:[#allocation3 + $0x9b8] sm:$0xff]
    %v2323 = vld [vmem:[#allocation3 + $0x9c0] sm:$0xff]
    %v2324 = vld [vmem:[#allocation3 + $0x9c8] sm:$0xff]
    %v2325 = vld [vmem:[#allocation3 + $0x9d0] sm:$0xff]
    %v2326 = vld [vmem:[#allocation3 + $0x9d8] sm:$0xff]
    %v2327 = vld [vmem:[#allocation3 + $0x9e0] sm:$0xff]
    %v2328 = vld [vmem:[#allocation3 + $0x9e8] sm:$0xff]
    %v2329 = vld [vmem:[#allocation3 + $0x9f0] sm:$0xff]
    %v2330 = vld [vmem:[#allocation3 + $0x9f8] sm:$0xff]
    %v2331 = vld [vmem:[#allocation3 + $0xa00] sm:$0xff]
    %v2332 = vld [vmem:[#allocation3 + $0xa08] sm:$0xff]
    %v2333 = vld [vmem:[#allocation3 + $0xa10] sm:$0xff]
    %v2334 = vld [vmem:[#allocation3 + $0xa18] sm:$0xff]
    %v2335 = vld [vmem:[#allocation3 + $0xa20] sm:$0xff]
    %v2336 = vld [vmem:[#allocation3 + $0xa28] sm:$0xff]
    %v2337 = vld [vmem:[#allocation3 + $0xa30] sm:$0xff]
    %v2338 = vld [vmem:[#allocation3 + $0xa38] sm:$0xff]
    %v2339 = vld [vmem:[#allocation3 + $0xa40] sm:$0xff]
    %v2340 = vld [vmem:[#allocation3 + $0xa48] sm:$0xff]
    %v2341 = vld [vmem:[#allocation3 + $0xa50] sm:$0xff]
    %v2342 = vld [vmem:[#allocation3 + $0xa58] sm:$0xff]
    %v2343 = vld [vmem:[#allocation3 + $0xa60] sm:$0xff]
    %v2344 = vld [vmem:[#allocation3 + $0xa68] sm:$0xff]
    %v2345 = vld [vmem:[#allocation3 + $0xa70] sm:$0xff]
    %v2346 = vld [vmem:[#allocation3 + $0xa78] sm:$0xff]
    %v2347 = vld [vmem:[#allocation3 + $0xa80] sm:$0xff]
    %v2348 = vld [vmem:[#allocation3 + $0xa88] sm:$0xff]
    %v2349 = vld [vmem:[#allocation3 + $0xa90] sm:$0xff]
    %v2350 = vld [vmem:[#allocation3 + $0xa98] sm:$0xff]
    %v2351 = vld [vmem:[#allocation3 + $0xaa0] sm:$0xff]
    %v2352 = vld [vmem:[#allocation3 + $0xaa8] sm:$0xff]
    %v2353 = vld [vmem:[#allocation3 + $0xab0] sm:$0xff]
    %v2354 = vld [vmem:[#allocation3 + $0xab8] sm:$0xff]
    %v2355 = vld [vmem:[#allocation3 + $0xac0] sm:$0xff]
    %v2356 = vld [vmem:[#allocation3 + $0xac8] sm:$0xff]
    %v2357 = vld [vmem:[#allocation3 + $0xad0] sm:$0xff]
    %v2358 = vld [vmem:[#allocation3 + $0xad8] sm:$0xff]
    %v2359 = vld [vmem:[#allocation3 + $0xae0] sm:$0xff]
    %v2360 = vld [vmem:[#allocation3 + $0xae8] sm:$0xff]
    %v2361 = vld [vmem:[#allocation3 + $0xaf0] sm:$0xff]
    %v2362 = vld [vmem:[#allocation3 + $0xaf8] sm:$0xff]
    %v2363 = vld [vmem:[#allocation3 + $0xb00] sm:$0xff]
    %v2364 = vld [vmem:[#allocation3 + $0xb08] sm:$0xff]
    %v2365 = vld [vmem:[#allocation3 + $0xb10] sm:$0xff]
    %v2366 = vld [vmem:[#allocation3 + $0xb18] sm:$0xff]
    %v2367 = vld [vmem:[#allocation3 + $0xb20] sm:$0xff]
    %v2368 = vld [vmem:[#allocation3 + $0xb28] sm:$0xff]
    %v2369 = vld [vmem:[#allocation3 + $0xb30] sm:$0xff]
    %v2370 = vld [vmem:[#allocation3 + $0xb38] sm:$0xff]
    %v2371 = vld [vmem:[#allocation3 + $0xb40] sm:$0xff]
    %v2372 = vld [vmem:[#allocation3 + $0xb48] sm:$0xff]
    %v2373 = vld [vmem:[#allocation3 + $0xb50] sm:$0xff]
    %v2374 = vld [vmem:[#allocation3 + $0xb58] sm:$0xff]
    %v2375 = vld [vmem:[#allocation3 + $0xb60] sm:$0xff]
    %v2376 = vld [vmem:[#allocation3 + $0xb68] sm:$0xff]
    %v2377 = vld [vmem:[#allocation3 + $0xb70] sm:$0xff]
    %v2378 = vld [vmem:[#allocation3 + $0xb78] sm:$0xff]
    %v2379 = vld [vmem:[#allocation3 + $0xb80] sm:$0xff]
    %v2380 = vld [vmem:[#allocation3 + $0xb88] sm:$0xff]
    %v2381 = vld [vmem:[#allocation3 + $0xb90] sm:$0xff]
    %v2382 = vld [vmem:[#allocation3 + $0xb98] sm:$0xff]
    %v2383 = vld [vmem:[#allocation3 + $0xba0] sm:$0xff]
    %v2384 = vld [vmem:[#allocation3 + $0xba8] sm:$0xff]
    %v2385 = vld [vmem:[#allocation3 + $0xbb0] sm:$0xff]
    %v2386 = vld [vmem:[#allocation3 + $0xbb8] sm:$0xff]
    %v2387 = vld [vmem:[#allocation3 + $0xbc0] sm:$0xff]
    %v2388 = vld [vmem:[#allocation3 + $0xbc8] sm:$0xff]
    %v2389 = vld [vmem:[#allocation3 + $0xbd0] sm:$0xff]
    %v2390 = vld [vmem:[#allocation3 + $0xbd8] sm:$0xff]
    %v2391 = vld [vmem:[#allocation3 + $0xbe0] sm:$0xff]
    %v2392 = vld [vmem:[#allocation3 + $0xbe8] sm:$0xff]
    %v2393 = vld [vmem:[#allocation3 + $0xbf0] sm:$0xff]
    %v2394 = vld [vmem:[#allocation3 + $0xbf8] sm:$0xff]
    %v2395 = vld [vmem:[#allocation3 + $0xc00] sm:$0xff]
    %v2396 = vld [vmem:[#allocation3 + $0xc08] sm:$0xff]
    %v2397 = vld [vmem:[#allocation3 + $0xc10] sm:$0xff]
    %v2398 = vld [vmem:[#allocation3 + $0xc18] sm:$0xff]
    %v2399 = vld [vmem:[#allocation3 + $0xc20] sm:$0xff]
    %v2400 = vld [vmem:[#allocation3 + $0xc28] sm:$0xff]
    %v2401 = vld [vmem:[#allocation3 + $0xc30] sm:$0xff]
    %v2402 = vld [vmem:[#allocation3 + $0xc38] sm:$0xff]
    %v2403 = vld [vmem:[#allocation3 + $0xc40] sm:$0xff]
    %v2404 = vld [vmem:[#allocation3 + $0xc48] sm:$0xff]
    %v2405 = vld [vmem:[#allocation3 + $0xc50] sm:$0xff]
    %v2406 = vld [vmem:[#allocation3 + $0xc58] sm:$0xff]
    %v2407 = vld [vmem:[#allocation3 + $0xc60] sm:$0xff]
    %v2408 = vld [vmem:[#allocation3 + $0xc68] sm:$0xff]
    %v2409 = vld [vmem:[#allocation3 + $0xc70] sm:$0xff]
    %v2410 = vld [vmem:[#allocation3 + $0xc78] sm:$0xff]
    %v2411 = vld [vmem:[#allocation3 + $0xc80] sm:$0xff]
    %v2412 = vld [vmem:[#allocation3 + $0xc88] sm:$0xff]
    %v2413 = vld [vmem:[#allocation3 + $0xc90] sm:$0xff]
    %v2414 = vld [vmem:[#allocation3 + $0xc98] sm:$0xff]
    %v2415 = vld [vmem:[#allocation3 + $0xca0] sm:$0xff]
    %v2416 = vld [vmem:[#allocation3 + $0xca8] sm:$0xff]
    %v2417 = vld [vmem:[#allocation3 + $0xcb0] sm:$0xff]
    %v2418 = vld [vmem:[#allocation3 + $0xcb8] sm:$0xff]
    %v2419 = vld [vmem:[#allocation3 + $0xcc0] sm:$0xff]
    %v2420 = vld [vmem:[#allocation3 + $0xcc8] sm:$0xff]
    %v2421 = vld [vmem:[#allocation3 + $0xcd0] sm:$0xff]
    %v2422 = vld [vmem:[#allocation3 + $0xcd8] sm:$0xff]
    %v2423 = vld [vmem:[#allocation3 + $0xce0] sm:$0xff]
    %v2424 = vld [vmem:[#allocation3 + $0xce8] sm:$0xff]
    %v2425 = vld [vmem:[#allocation3 + $0xcf0] sm:$0xff]
    %v2426 = vld [vmem:[#allocation3 + $0xcf8] sm:$0xff]
    %v2427 = vld [vmem:[#allocation3 + $0xd00] sm:$0xff]
    %v2428 = vld [vmem:[#allocation3 + $0xd08] sm:$0xff]
    %v2429 = vld [vmem:[#allocation3 + $0xd10] sm:$0xff]
    %v2430 = vld [vmem:[#allocation3 + $0xd18] sm:$0xff]
    %v2431 = vld [vmem:[#allocation3 + $0xd20] sm:$0xff]
    %v2432 = vld [vmem:[#allocation3 + $0xd28] sm:$0xff]
    %v2433 = vld [vmem:[#allocation3 + $0xd30] sm:$0xff]
    %v2434 = vld [vmem:[#allocation3 + $0xd38] sm:$0xff]
    %v2435 = vld [vmem:[#allocation3 + $0xd40] sm:$0xff]
    %v2436 = vld [vmem:[#allocation3 + $0xd48] sm:$0xff]
    %v2437 = vld [vmem:[#allocation3 + $0xd50] sm:$0xff]
    %v2438 = vld [vmem:[#allocation3 + $0xd58] sm:$0xff]
    %v2439 = vld [vmem:[#allocation3 + $0xd60] sm:$0xff]
    %v2440 = vld [vmem:[#allocation3 + $0xd68] sm:$0xff]
    %v2441 = vld [vmem:[#allocation3 + $0xd70] sm:$0xff]
    %v2442 = vld [vmem:[#allocation3 + $0xd78] sm:$0xff]
    %v2443 = vld [vmem:[#allocation3 + $0xd80] sm:$0xff]
    %v2444 = vld [vmem:[#allocation3 + $0xd88] sm:$0xff]
    %v2445 = vld [vmem:[#allocation3 + $0xd90] sm:$0xff]
    %v2446 = vld [vmem:[#allocation3 + $0xd98] sm:$0xff]
    %v2447 = vld [vmem:[#allocation3 + $0xda0] sm:$0xff]
    %v2448 = vld [vmem:[#allocation3 + $0xda8] sm:$0xff]
    %v2449 = vld [vmem:[#allocation3 + $0xdb0] sm:$0xff]
    %v2450 = vld [vmem:[#allocation3 + $0xdb8] sm:$0xff]
    %v2451 = vld [vmem:[#allocation3 + $0xdc0] sm:$0xff]
    %v2452 = vld [vmem:[#allocation3 + $0xdc8] sm:$0xff]
    %v2453 = vld [vmem:[#allocation3 + $0xdd0] sm:$0xff]
    %v2454 = vld [vmem:[#allocation3 + $0xdd8] sm:$0xff]
    %v2455 = vld [vmem:[#allocation3 + $0xde0] sm:$0xff]
    %v2456 = vld [vmem:[#allocation3 + $0xde8] sm:$0xff]
    %v2457 = vld [vmem:[#allocation3 + $0xdf0] sm:$0xff]
    %v2458 = vld [vmem:[#allocation3 + $0xdf8] sm:$0xff]
    %v2459 = vld [vmem:[#allocation3 + $0xe00] sm:$0xff]
    %v2460 = vld [vmem:[#allocation3 + $0xe08] sm:$0xff]
    %v2461 = vld [vmem:[#allocation3 + $0xe10] sm:$0xff]
    %v2462 = vld [vmem:[#allocation3 + $0xe18] sm:$0xff]
    %v2463 = vld [vmem:[#allocation3 + $0xe20] sm:$0xff]
    %v2464 = vld [vmem:[#allocation3 + $0xe28] sm:$0xff]
    %v2465 = vld [vmem:[#allocation3 + $0xe30] sm:$0xff]
    %v2466 = vld [vmem:[#allocation3 + $0xe38] sm:$0xff]
    %v2467 = vld [vmem:[#allocation3 + $0xe40] sm:$0xff]
    %v2468 = vld [vmem:[#allocation3 + $0xe48] sm:$0xff]
    %v2469 = vld [vmem:[#allocation3 + $0xe50] sm:$0xff]
    %v2470 = vld [vmem:[#allocation3 + $0xe58] sm:$0xff]
    %v2471 = vld [vmem:[#allocation3 + $0xe60] sm:$0xff]
    %v2472 = vld [vmem:[#allocation3 + $0xe68] sm:$0xff]
    %v2473 = vld [vmem:[#allocation3 + $0xe70] sm:$0xff]
    %v2474 = vld [vmem:[#allocation3 + $0xe78] sm:$0xff]
    %v2475 = vld [vmem:[#allocation3 + $0xe80] sm:$0xff]
    %v2476 = vld [vmem:[#allocation3 + $0xe88] sm:$0xff]
    %v2477 = vld [vmem:[#allocation3 + $0xe90] sm:$0xff]
    %v2478 = vld [vmem:[#allocation3 + $0xe98] sm:$0xff]
    %v2479 = vld [vmem:[#allocation3 + $0xea0] sm:$0xff]
    %v2480 = vld [vmem:[#allocation3 + $0xea8] sm:$0xff]
    %v2481 = vld [vmem:[#allocation3 + $0xeb0] sm:$0xff]
    %v2482 = vld [vmem:[#allocation3 + $0xeb8] sm:$0xff]
    %v2483 = vld [vmem:[#allocation3 + $0xec0] sm:$0xff]
    %v2484 = vld [vmem:[#allocation3 + $0xec8] sm:$0xff]
    %v2485 = vld [vmem:[#allocation3 + $0xed0] sm:$0xff]
    %v2486 = vld [vmem:[#allocation3 + $0xed8] sm:$0xff]
    %v2487 = vld [vmem:[#allocation3 + $0xee0] sm:$0xff]
    %v2488 = vld [vmem:[#allocation3 + $0xee8] sm:$0xff]
    %v2489 = vld [vmem:[#allocation3 + $0xef0] sm:$0xff]
    %v2490 = vld [vmem:[#allocation3 + $0xef8] sm:$0xff]
    %v2491 = vld [vmem:[#allocation3 + $0xf00] sm:$0xff]
    %v2492 = vld [vmem:[#allocation3 + $0xf08] sm:$0xff]
    %v2493 = vld [vmem:[#allocation3 + $0xf10] sm:$0xff]
    %v2494 = vld [vmem:[#allocation3 + $0xf18] sm:$0xff]
    %v2495 = vld [vmem:[#allocation3 + $0xf20] sm:$0xff]
    %v2496 = vld [vmem:[#allocation3 + $0xf28] sm:$0xff]
    %v2497 = vld [vmem:[#allocation3 + $0xf30] sm:$0xff]
    %v2498 = vld [vmem:[#allocation3 + $0xf38] sm:$0xff]
    %v2499 = vld [vmem:[#allocation3 + $0xf40] sm:$0xff]
    %v2500 = vld [vmem:[#allocation3 + $0xf48] sm:$0xff]
    %v2501 = vld [vmem:[#allocation3 + $0xf50] sm:$0xff]
    %v2502 = vld [vmem:[#allocation3 + $0xf58] sm:$0xff]
    %v2503 = vld [vmem:[#allocation3 + $0xf60] sm:$0xff]
    %v2504 = vld [vmem:[#allocation3 + $0xf68] sm:$0xff]
    %v2505 = vld [vmem:[#allocation3 + $0xf70] sm:$0xff]
    %v2506 = vld [vmem:[#allocation3 + $0xf78] sm:$0xff]
    %v2507 = vld [vmem:[#allocation3 + $0xf80] sm:$0xff]
    %v2508 = vld [vmem:[#allocation3 + $0xf88] sm:$0xff]
    %v2509 = vld [vmem:[#allocation3 + $0xf90] sm:$0xff]
    %v2510 = vld [vmem:[#allocation3 + $0xf98] sm:$0xff]
    %v2511 = vld [vmem:[#allocation3 + $0xfa0] sm:$0xff]
    %v2512 = vld [vmem:[#allocation3 + $0xfa8] sm:$0xff]
    %v2513 = vld [vmem:[#allocation3 + $0xfb0] sm:$0xff]
    %v2514 = vld [vmem:[#allocation3 + $0xfb8] sm:$0xff]
    %v2515 = vld [vmem:[#allocation3 + $0xfc0] sm:$0xff]
    %v2516 = vld [vmem:[#allocation3 + $0xfc8] sm:$0xff]
    %v2517 = vld [vmem:[#allocation3 + $0xfd0] sm:$0xff]
    %v2518 = vld [vmem:[#allocation3 + $0xfd8] sm:$0xff]
    %v2519 = vld [vmem:[#allocation3 + $0xfe0] sm:$0xff]
    %v2520 = vld [vmem:[#allocation3 + $0xfe8] sm:$0xff]
    %v2521 = vld [vmem:[#allocation3 + $0xff0] sm:$0xff]
    %v2522 = vld [vmem:[#allocation3 + $0xff8] sm:$0xff]
    %v2523 = vld [vmem:[#allocation3 + $0x1000] sm:$0xff]
    %v2524 = vld [vmem:[#allocation3 + $0x1008] sm:$0xff]
    %v2525 = vld [vmem:[#allocation3 + $0x1010] sm:$0xff]
    %v2526 = vld [vmem:[#allocation3 + $0x1018] sm:$0xff]
    %v2527 = vld [vmem:[#allocation3 + $0x1020] sm:$0xff]
    %v2528 = vld [vmem:[#allocation3 + $0x1028] sm:$0xff]
    %v2529 = vld [vmem:[#allocation3 + $0x1030] sm:$0xff]
    %v2530 = vld [vmem:[#allocation3 + $0x1038] sm:$0xff]
    %v2531 = vld [vmem:[#allocation3 + $0x1040] sm:$0xff]
    %v2532 = vld [vmem:[#allocation3 + $0x1048] sm:$0xff]
    %v2533 = vld [vmem:[#allocation3 + $0x1050] sm:$0xff]
    %v2534 = vld [vmem:[#allocation3 + $0x1058] sm:$0xff]
    %v2535 = vld [vmem:[#allocation3 + $0x1060] sm:$0xff]
    %v2536 = vld [vmem:[#allocation3 + $0x1068] sm:$0xff]
    %v2537 = vld [vmem:[#allocation3 + $0x1070] sm:$0xff]
    %v2538 = vld [vmem:[#allocation3 + $0x1078] sm:$0xff]
    %v2539 = vld [vmem:[#allocation3 + $0x1080] sm:$0xff]
    %v2540 = vld [vmem:[#allocation3 + $0x1088] sm:$0xff]
    %v2541 = vld [vmem:[#allocation3 + $0x1090] sm:$0xff]
    %v2542 = vld [vmem:[#allocation3 + $0x1098] sm:$0xff]
    %v2543 = vld [vmem:[#allocation3 + $0x10a0] sm:$0xff]
    %v2544 = vld [vmem:[#allocation3 + $0x10a8] sm:$0xff]
    %v2545 = vld [vmem:[#allocation3 + $0x10b0] sm:$0xff]
    %v2546 = vld [vmem:[#allocation3 + $0x10b8] sm:$0xff]
    %v2547 = vld [vmem:[#allocation3 + $0x10c0] sm:$0xff]
    %v2548 = vld [vmem:[#allocation3 + $0x10c8] sm:$0xff]
    %v2549 = vld [vmem:[#allocation3 + $0x10d0] sm:$0xff]
    %v2550 = vld [vmem:[#allocation3 + $0x10d8] sm:$0xff]
    %v2551 = vld [vmem:[#allocation3 + $0x10e0] sm:$0xff]
    %v2552 = vld [vmem:[#allocation3 + $0x10e8] sm:$0xff]
    %v2553 = vld [vmem:[#allocation3 + $0x10f0] sm:$0xff]
    %v2554 = vld [vmem:[#allocation3 + $0x10f8] sm:$0xff]
    %v2555 = vld [vmem:[#allocation3 + $0x1100] sm:$0xff]
    %v2556 = vld [vmem:[#allocation3 + $0x1108] sm:$0xff]
    %v2557 = vld [vmem:[#allocation3 + $0x1110] sm:$0xff]
    %v2558 = vld [vmem:[#allocation3 + $0x1118] sm:$0xff]
    %v2559 = vld [vmem:[#allocation3 + $0x1120] sm:$0xff]
    %v2560 = vld [vmem:[#allocation3 + $0x1128] sm:$0xff]
    %v2561 = vld [vmem:[#allocation3 + $0x1130] sm:$0xff]
    %v2562 = vld [vmem:[#allocation3 + $0x1138] sm:$0xff]
    %v2563 = vld [vmem:[#allocation3 + $0x1140] sm:$0xff]
    %v2564 = vld [vmem:[#allocation3 + $0x1148] sm:$0xff]
    %v2565 = vld [vmem:[#allocation3 + $0x1150] sm:$0xff]
    %v2566 = vld [vmem:[#allocation3 + $0x1158] sm:$0xff]
    %v2567 = vld [vmem:[#allocation3 + $0x1160] sm:$0xff]
    %v2568 = vld [vmem:[#allocation3 + $0x1168] sm:$0xff]
    %v2569 = vld [vmem:[#allocation3 + $0x1170] sm:$0xff]
    %v2570 = vld [vmem:[#allocation3 + $0x1178] sm:$0xff]
    %v2571 = vld [vmem:[#allocation3 + $0x1180] sm:$0xff]
    %v2572 = vld [vmem:[#allocation3 + $0x1188] sm:$0xff]
    %v2573 = vld [vmem:[#allocation3 + $0x1190] sm:$0xff]
    %v2574 = vld [vmem:[#allocation3 + $0x1198] sm:$0xff]
    %v2575 = vld [vmem:[#allocation3 + $0x11a0] sm:$0xff]
    %v2576 = vld [vmem:[#allocation3 + $0x11a8] sm:$0xff]
    %v2577 = vld [vmem:[#allocation3 + $0x11b0] sm:$0xff]
    %v2578 = vld [vmem:[#allocation3 + $0x11b8] sm:$0xff]
    %v2579 = vld [vmem:[#allocation3 + $0x11c0] sm:$0xff]
    %v2580 = vld [vmem:[#allocation3 + $0x11c8] sm:$0xff]
    %v2581 = vld [vmem:[#allocation3 + $0x11d0] sm:$0xff]
    %v2582 = vld [vmem:[#allocation3 + $0x11d8] sm:$0xff]
    %v2583 = vld [vmem:[#allocation3 + $0x11e0] sm:$0xff]
    %v2584 = vld [vmem:[#allocation3 + $0x11e8] sm:$0xff]
    %v2585 = vld [vmem:[#allocation3 + $0x11f0] sm:$0xff]
    %v2586 = vld [vmem:[#allocation3 + $0x11f8] sm:$0xff]
    %v2587 = vld [vmem:[#allocation4] sm:$0xff]
    %v2588 = vld [vmem:[#allocation4 + $0x8] sm:$0xff]
    %v2589 = vld [vmem:[#allocation4 + $0x10] sm:$0xff]
    %v2590 = vld [vmem:[#allocation4 + $0x18] sm:$0xff]
    %v2591 = vld [vmem:[#allocation4 + $0x20] sm:$0xff]
    %v2592 = vld [vmem:[#allocation4 + $0x28] sm:$0xff]
    %v2593 = vld [vmem:[#allocation4 + $0x30] sm:$0xff]
    %v2594 = vld [vmem:[#allocation4 + $0x38] sm:$0xff]
    %v2595 = vld [vmem:[#allocation4 + $0x40] sm:$0xff]
    %v2596 = vld [vmem:[#allocation4 + $0x48] sm:$0xff]
    %v2597 = vld [vmem:[#allocation4 + $0x50] sm:$0xff]
    %v2598 = vld [vmem:[#allocation4 + $0x58] sm:$0xff]
    %v2599 = vld [vmem:[#allocation4 + $0x60] sm:$0xff]
    %v2600 = vld [vmem:[#allocation4 + $0x68] sm:$0xff]
    %v2601 = vld [vmem:[#allocation4 + $0x70] sm:$0xff]
    %v2602 = vld [vmem:[#allocation4 + $0x78] sm:$0xff]
    %v2603 = vld [vmem:[#allocation4 + $0x80] sm:$0xff]
    %v2604 = vld [vmem:[#allocation4 + $0x88] sm:$0xff]
    %v2605 = vld [vmem:[#allocation4 + $0x90] sm:$0xff]
    %v2606 = vld [vmem:[#allocation4 + $0x98] sm:$0xff]
    %v2607 = vld [vmem:[#allocation4 + $0xa0] sm:$0xff]
    %v2608 = vld [vmem:[#allocation4 + $0xa8] sm:$0xff]
    %v2609 = vld [vmem:[#allocation4 + $0xb0] sm:$0xff]
    %v2610 = vld [vmem:[#allocation4 + $0xb8] sm:$0xff]
    %v2611 = vld [vmem:[#allocation4 + $0xc0] sm:$0xff]
    %v2612 = vld [vmem:[#allocation4 + $0xc8] sm:$0xff]
    %v2613 = vld [vmem:[#allocation4 + $0xd0] sm:$0xff]
    %v2614 = vld [vmem:[#allocation4 + $0xd8] sm:$0xff]
    %v2615 = vld [vmem:[#allocation4 + $0xe0] sm:$0xff]
    %v2616 = vld [vmem:[#allocation4 + $0xe8] sm:$0xff]
    %v2617 = vld [vmem:[#allocation4 + $0xf0] sm:$0xff]
    %v2618 = vld [vmem:[#allocation4 + $0xf8] sm:$0xff]
    %v2619 = vld [vmem:[#allocation4 + $0x100] sm:$0xff]
    %v2620 = vld [vmem:[#allocation4 + $0x108] sm:$0xff]
    %v2621 = vld [vmem:[#allocation4 + $0x110] sm:$0xff]
    %v2622 = vld [vmem:[#allocation4 + $0x118] sm:$0xff]
    %v2623 = vld [vmem:[#allocation4 + $0x120] sm:$0xff]
    %v2624 = vld [vmem:[#allocation4 + $0x128] sm:$0xff]
    %v2625 = vld [vmem:[#allocation4 + $0x130] sm:$0xff]
    %v2626 = vld [vmem:[#allocation4 + $0x138] sm:$0xff]
    %v2627 = vld [vmem:[#allocation4 + $0x140] sm:$0xff]
    %v2628 = vld [vmem:[#allocation4 + $0x148] sm:$0xff]
    %v2629 = vld [vmem:[#allocation4 + $0x150] sm:$0xff]
    %v2630 = vld [vmem:[#allocation4 + $0x158] sm:$0xff]
    %v2631 = vld [vmem:[#allocation4 + $0x160] sm:$0xff]
    %v2632 = vld [vmem:[#allocation4 + $0x168] sm:$0xff]
    %v2633 = vld [vmem:[#allocation4 + $0x170] sm:$0xff]
    %v2634 = vld [vmem:[#allocation4 + $0x178] sm:$0xff]
    %v2635 = vld [vmem:[#allocation4 + $0x180] sm:$0xff]
    %v2636 = vld [vmem:[#allocation4 + $0x188] sm:$0xff]
    %v2637 = vld [vmem:[#allocation4 + $0x190] sm:$0xff]
    %v2638 = vld [vmem:[#allocation4 + $0x198] sm:$0xff]
    %v2639 = vld [vmem:[#allocation4 + $0x1a0] sm:$0xff]
    %v2640 = vld [vmem:[#allocation4 + $0x1a8] sm:$0xff]
    %v2641 = vld [vmem:[#allocation4 + $0x1b0] sm:$0xff]
    %v2642 = vld [vmem:[#allocation4 + $0x1b8] sm:$0xff]
    %v2643 = vld [vmem:[#allocation4 + $0x1c0] sm:$0xff]
    %v2644 = vld [vmem:[#allocation4 + $0x1c8] sm:$0xff]
    %v2645 = vld [vmem:[#allocation4 + $0x1d0] sm:$0xff]
    %v2646 = vld [vmem:[#allocation4 + $0x1d8] sm:$0xff]
    %v2647 = vld [vmem:[#allocation4 + $0x1e0] sm:$0xff]
    %v2648 = vld [vmem:[#allocation4 + $0x1e8] sm:$0xff]
    %v2649 = vld [vmem:[#allocation4 + $0x1f0] sm:$0xff]
    %v2650 = vld [vmem:[#allocation4 + $0x1f8] sm:$0xff]
    %v2651 = vld [vmem:[#allocation4 + $0x200] sm:$0xff]
    %v2652 = vld [vmem:[#allocation4 + $0x208] sm:$0xff]
    %v2653 = vld [vmem:[#allocation4 + $0x210] sm:$0xff]
    %v2654 = vld [vmem:[#allocation4 + $0x218] sm:$0xff]
    %v2655 = vld [vmem:[#allocation4 + $0x220] sm:$0xff]
    %v2656 = vld [vmem:[#allocation4 + $0x228] sm:$0xff]
    %v2657 = vld [vmem:[#allocation4 + $0x230] sm:$0xff]
    %v2658 = vld [vmem:[#allocation4 + $0x238] sm:$0xff]
    %v2659 = vld [vmem:[#allocation4 + $0x240] sm:$0xff]
    %v2660 = vld [vmem:[#allocation4 + $0x248] sm:$0xff]
    %v2661 = vld [vmem:[#allocation4 + $0x250] sm:$0xff]
    %v2662 = vld [vmem:[#allocation4 + $0x258] sm:$0xff]
    %v2663 = vld [vmem:[#allocation4 + $0x260] sm:$0xff]
    %v2664 = vld [vmem:[#allocation4 + $0x268] sm:$0xff]
    %v2665 = vld [vmem:[#allocation4 + $0x270] sm:$0xff]
    %v2666 = vld [vmem:[#allocation4 + $0x278] sm:$0xff]
    %v2667 = vld [vmem:[#allocation4 + $0x280] sm:$0xff]
    %v2668 = vld [vmem:[#allocation4 + $0x288] sm:$0xff]
    %v2669 = vld [vmem:[#allocation4 + $0x290] sm:$0xff]
    %v2670 = vld [vmem:[#allocation4 + $0x298] sm:$0xff]
    %v2671 = vld [vmem:[#allocation4 + $0x2a0] sm:$0xff]
    %v2672 = vld [vmem:[#allocation4 + $0x2a8] sm:$0xff]
    %v2673 = vld [vmem:[#allocation4 + $0x2b0] sm:$0xff]
    %v2674 = vld [vmem:[#allocation4 + $0x2b8] sm:$0xff]
    %v2675 = vld [vmem:[#allocation4 + $0x2c0] sm:$0xff]
    %v2676 = vld [vmem:[#allocation4 + $0x2c8] sm:$0xff]
    %v2677 = vld [vmem:[#allocation4 + $0x2d0] sm:$0xff]
    %v2678 = vld [vmem:[#allocation4 + $0x2d8] sm:$0xff]
    %v2679 = vld [vmem:[#allocation4 + $0x2e0] sm:$0xff]
    %v2680 = vld [vmem:[#allocation4 + $0x2e8] sm:$0xff]
    %v2681 = vld [vmem:[#allocation4 + $0x2f0] sm:$0xff]
    %v2682 = vld [vmem:[#allocation4 + $0x2f8] sm:$0xff]
    %v2683 = vld [vmem:[#allocation4 + $0x300] sm:$0xff]
    %v2684 = vld [vmem:[#allocation4 + $0x308] sm:$0xff]
    %v2685 = vld [vmem:[#allocation4 + $0x310] sm:$0xff]
    %v2686 = vld [vmem:[#allocation4 + $0x318] sm:$0xff]
    %v2687 = vld [vmem:[#allocation4 + $0x320] sm:$0xff]
    %v2688 = vld [vmem:[#allocation4 + $0x328] sm:$0xff]
    %v2689 = vld [vmem:[#allocation4 + $0x330] sm:$0xff]
    %v2690 = vld [vmem:[#allocation4 + $0x338] sm:$0xff]
    %v2691 = vld [vmem:[#allocation4 + $0x340] sm:$0xff]
    %v2692 = vld [vmem:[#allocation4 + $0x348] sm:$0xff]
    %v2693 = vld [vmem:[#allocation4 + $0x350] sm:$0xff]
    %v2694 = vld [vmem:[#allocation4 + $0x358] sm:$0xff]
    %v2695 = vld [vmem:[#allocation4 + $0x360] sm:$0xff]
    %v2696 = vld [vmem:[#allocation4 + $0x368] sm:$0xff]
    %v2697 = vld [vmem:[#allocation4 + $0x370] sm:$0xff]
    %v2698 = vld [vmem:[#allocation4 + $0x378] sm:$0xff]
    %v2699 = vld [vmem:[#allocation4 + $0x380] sm:$0xff]
    %v2700 = vld [vmem:[#allocation4 + $0x388] sm:$0xff]
    %v2701 = vld [vmem:[#allocation4 + $0x390] sm:$0xff]
    %v2702 = vld [vmem:[#allocation4 + $0x398] sm:$0xff]
    %v2703 = vld [vmem:[#allocation4 + $0x3a0] sm:$0xff]
    %v2704 = vld [vmem:[#allocation4 + $0x3a8] sm:$0xff]
    %v2705 = vld [vmem:[#allocation4 + $0x3b0] sm:$0xff]
    %v2706 = vld [vmem:[#allocation4 + $0x3b8] sm:$0xff]
    %v2707 = vld [vmem:[#allocation4 + $0x3c0] sm:$0xff]
    %v2708 = vld [vmem:[#allocation4 + $0x3c8] sm:$0xff]
    %v2709 = vld [vmem:[#allocation4 + $0x3d0] sm:$0xff]
    %v2710 = vld [vmem:[#allocation4 + $0x3d8] sm:$0xff]
    %v2711 = vld [vmem:[#allocation4 + $0x3e0] sm:$0xff]
    %v2712 = vld [vmem:[#allocation4 + $0x3e8] sm:$0xff]
    %v2713 = vld [vmem:[#allocation4 + $0x3f0] sm:$0xff]
    %v2714 = vld [vmem:[#allocation4 + $0x3f8] sm:$0xff]
    %v2715 = vld [vmem:[#allocation4 + $0x400] sm:$0xff]
    %v2716 = vld [vmem:[#allocation4 + $0x408] sm:$0xff]
    %v2717 = vld [vmem:[#allocation4 + $0x410] sm:$0xff]
    %v2718 = vld [vmem:[#allocation4 + $0x418] sm:$0xff]
    %v2719 = vld [vmem:[#allocation4 + $0x420] sm:$0xff]
    %v2720 = vld [vmem:[#allocation4 + $0x428] sm:$0xff]
    %v2721 = vld [vmem:[#allocation4 + $0x430] sm:$0xff]
    %v2722 = vld [vmem:[#allocation4 + $0x438] sm:$0xff]
    %v2723 = vld [vmem:[#allocation4 + $0x440] sm:$0xff]
    %v2724 = vld [vmem:[#allocation4 + $0x448] sm:$0xff]
    %v2725 = vld [vmem:[#allocation4 + $0x450] sm:$0xff]
    %v2726 = vld [vmem:[#allocation4 + $0x458] sm:$0xff]
    %v2727 = vld [vmem:[#allocation4 + $0x460] sm:$0xff]
    %v2728 = vld [vmem:[#allocation4 + $0x468] sm:$0xff]
    %v2729 = vld [vmem:[#allocation4 + $0x470] sm:$0xff]
    %v2730 = vld [vmem:[#allocation4 + $0x478] sm:$0xff]
    %2731 = vmatprep.subr.mxu0 0.0
    %2732 = vmatpush1.msra.mxu0 %v2587
    %2733 = vmatprep.subr.mxu0 0.0
    %2734 = vmatpush1.msra.mxu0 %v2588
    %2735 = vmatprep.subr.mxu0 0.0
    %2736 = vmatpush1.msra.mxu0 %v2589
    %2737 = vmatprep.subr.mxu0 0.0
    %2738 = vmatpush1.msra.mxu0 %v2590
    %2739 = vmatprep.subr.mxu0 0.0
    %2740 = vmatpush1.msra.mxu0 %v2591
    %2741 = vmatprep.subr.mxu0 0.0
    %2742 = vmatpush1.msra.mxu0 %v2592
    %2743 = vmatprep.subr.mxu0 0.0
    %2744 = vmatpush1.msra.mxu0 %v2593
    %2745 = vmatprep.subr.mxu0 0.0
    %2746 = vmatpush1.msra.mxu0 %v2594
    %2747 = vmatprep.subr.mxu0 0.0
    %2748 = vmatpush1.msra.mxu0 %v2595
    %2749 = vmatprep.subr.mxu0 0.0
    %2750 = vmatpush1.msra.mxu0 %v2596
    %2751 = vmatprep.subr.mxu0 0.0
    %2752 = vmatpush1.msra.mxu0 %v2597
    %2753 = vmatprep.subr.mxu0 0.0
    %2754 = vmatpush1.msra.mxu0 %v2598
    %2755 = vmatprep.subr.mxu0 0.0
    %2756 = vmatpush1.msra.mxu0 %v2599
    %2757 = vmatprep.subr.mxu0 0.0
    %2758 = vmatpush1.msra.mxu0 %v2600
    %2759 = vmatprep.subr.mxu0 0.0
    %2760 = vmatpush1.msra.mxu0 %v2601
    %2761 = vmatprep.subr.mxu0 0.0
    %2762 = vmatpush1.msra.mxu0 %v2602
    %2763 = vmatprep.subr.mxu0 0.0
    %2764 = vmatpush1.msra.mxu0 %v2603
    %2765 = vmatprep.subr.mxu0 0.0
    %2766 = vmatpush1.msra.mxu0 %v2604
    %2767 = vmatprep.subr.mxu0 0.0
    %2768 = vmatpush1.msra.mxu0 %v2605
    %2769 = vmatprep.subr.mxu0 0.0
    %2770 = vmatpush1.msra.mxu0 %v2606
    %2771 = vmatprep.subr.mxu0 0.0
    %2772 = vmatpush1.msra.mxu0 %v2607
    %2773 = vmatprep.subr.mxu0 0.0
    %2774 = vmatpush1.msra.mxu0 %v2608
    %2775 = vmatprep.subr.mxu0 0.0
    %2776 = vmatpush1.msra.mxu0 %v2609
    %2777 = vmatprep.subr.mxu0 0.0
    %2778 = vmatpush1.msra.mxu0 %v2610
    %2779 = vmatprep.subr.mxu0 0.0
    %2780 = vmatpush1.msra.mxu0 %v2611
    %2781 = vmatprep.subr.mxu0 0.0
    %2782 = vmatpush1.msra.mxu0 %v2612
    %2783 = vmatprep.subr.mxu0 0.0
    %2784 = vmatpush1.msra.mxu0 %v2613
    %2785 = vmatprep.subr.mxu0 0.0
    %2786 = vmatpush1.msra.mxu0 %v2614
    %2787 = vmatprep.subr.mxu0 0.0
    %2788 = vmatpush1.msra.mxu0 %v2615
    %2789 = vmatprep.subr.mxu0 0.0
    %2790 = vmatpush1.msra.mxu0 %v2616
    %2791 = vmatprep.subr.mxu0 0.0
    %2792 = vmatpush1.msra.mxu0 %v2617
    %2793 = vmatprep.subr.mxu0 0.0
    %2794 = vmatpush1.msra.mxu0 %v2618
    %2795 = vmatprep.mubr.f32.mxu0 %v2012
    %2796 = vmatmul.mubr.f32.gmra.mrb[0].mxu0 %v2011
    %v2797 = vpop.f32.mrb[0].mxu0
    %v2798 = vadd.f32 0.0, %v2797
    %v2799 = vpop.f32.mrb[0].mxu0
    %2800 = vmatprep.mubr.f32.mxu0 %v2021
    %2801 = vmatmul.mubr.f32.gmra.mrb[0].mxu0 %v2020
    %v2802 = vpop.f32.mrb[0].mxu0
    %v2803 = vadd.f32 0.0, %v2802
    %v2804 = vpop.f32.mrb[0].mxu0
    %2805 = vmatprep.mubr.f32.mxu0 %v2030
    %2806 = vmatmul.mubr.f32.gmra.mrb[0].mxu0 %v2029
    %v2807 = vpop.f32.mrb[0].mxu0
    %v2808 = vadd.f32 0.0, %v2807
    %v2809 = vpop.f32.mrb[0].mxu0
    %2810 = vmatprep.mubr.f32.mxu0 %v2039
    %2811 = vmatmul.mubr.f32.gmra.mrb[0].mxu0 %v2038
    %v2812 = vpop.f32.mrb[0].mxu0
    %v2813 = vadd.f32 0.0, %v2812
    %v2814 = vpop.f32.mrb[0].mxu0
    %2815 = vmatprep.mubr.f32.mxu0 %v2048
    %2816 = vmatmul.mubr.f32.gmra.mrb[0].mxu0 %v2047
    %v2817 = vpop.f32.mrb[0].mxu0
    %v2818 = vadd.f32 0.0, %v2817
    %v2819 = vpop.f32.mrb[0].mxu0
    %2820 = vmatprep.mubr.f32.mxu0 %v2057
    %2821 = vmatmul.mubr.f32.gmra.mrb[0].mxu0 %v2056
    %v2822 = vpop.f32.mrb[0].mxu0
    %v2823 = vadd.f32 0.0, %v2822
    %v2824 = vpop.f32.mrb[0].mxu0
    %2825 = vmatprep.mubr.f32.mxu0 %v2066
    %2826 = vmatmul.mubr.f32.gmra.mrb[0].mxu0 %v2065
    %v2827 = vpop.f32.mrb[0].mxu0
    %v2828 = vadd.f32 0.0, %v2827
    %v2829 = vpop.f32.mrb[0].mxu0
    %2830 = vmatprep.mubr.f32.mxu0 %v2075
    %2831 = vmatmul.mubr.f32.gmra.mrb[0].mxu0 %v2074
    %v2832 = vpop.f32.mrb[0].mxu0
    %v2833 = vadd.f32 0.0, %v2832
    %v2834 = vpop.f32.mrb[0].mxu0
    %2835 = vmatprep.mubr.f32.mxu0 %v2084
    %2836 = vmatmul.mubr.f32.gmra.mrb[0].mxu0 %v2083
    %v2837 = vpop.f32.mrb[0].mxu0
    %v2838 = vadd.f32 0.0, %v2837
    %v2839 = vpop.f32.mrb[0].mxu0
    %2840 = vmatprep.mubr.f32.mxu0 %v2093
    %2841 = vmatmul.mubr.f32.gmra.mrb[0].mxu0 %v2092
    %v2842 = vpop.f32.mrb[0].mxu0
    %v2843 = vadd.f32 0.0, %v2842
    %v2844 = vpop.f32.mrb[0].mxu0
    %2845 = vmatprep.mubr.f32.mxu0 %v2102
    %2846 = vmatmul.mubr.f32.gmra.mrb[0].mxu0 %v2101
    %v2847 = vpop.f32.mrb[0].mxu0
    %v2848 = vadd.f32 0.0, %v2847
    %v2849 = vpop.f32.mrb[0].mxu0
    %2850 = vmatprep.mubr.f32.mxu0 %v2111
    %2851 = vmatmul.mubr.f32.gmra.mrb[0].mxu0 %v2110
    %v2852 = vpop.f32.mrb[0].mxu0
    %v2853 = vadd.f32 0.0, %v2852
    %v2854 = vpop.f32.mrb[0].mxu0
    %2855 = vmatprep.mubr.f32.mxu0 %v2120
    %2856 = vmatmul.mubr.f32.gmra.mrb[0].mxu0 %v2119
    %v2857 = vpop.f32.mrb[0].mxu0
    %v2858 = vadd.f32 0.0, %v2857
    %v2859 = vpop.f32.mrb[0].mxu0
    %2860 = vmatprep.mubr.f32.mxu0 %v2129
    %2861 = vmatmul.mubr.f32.gmra.mrb[0].mxu0 %v2128
    %v2862 = vpop.f32.mrb[0].mxu0
    %v2863 = vadd.f32 0.0, %v2862
    %v2864 = vpop.f32.mrb[0].mxu0
    %2865 = vmatprep.mubr.f32.mxu0 %v2138
    %2866 = vmatmul.mubr.f32.gmra.mrb[0].mxu0 %v2137
    %v2867 = vpop.f32.mrb[0].mxu0
    %v2868 = vadd.f32 0.0, %v2867
    %v2869 = vpop.f32.mrb[0].mxu0
    %2870 = vmatprep.mubr.f32.mxu0 %v2147
    %2871 = vmatmul.mubr.f32.gmra.mrb[0].mxu0 %v2146
    %v2872 = vpop.f32.mrb[0].mxu0
    %v2873 = vadd.f32 0.0, %v2872
    %v2874 = vpop.f32.mrb[0].mxu0
    %2875 = vmatprep.mubr.f32.mxu0 %v2156
    %2876 = vmatmul.mubr.f32.gmra.mrb[0].mxu0 %v2155
    %v2877 = vpop.f32.mrb[0].mxu0
    %v2878 = vadd.f32 0.0, %v2877
    %v2879 = vpop.f32.mrb[0].mxu0
    %2880 = vmatprep.mubr.f32.mxu0 %v2165
    %2881 = vmatmul.mubr.f32.gmra.mrb[0].mxu0 %v2164
    %v2882 = vpop.f32.mrb[0].mxu0
    %v2883 = vadd.f32 0.0, %v2882
    %v2884 = vpop.f32.mrb[0].mxu0
    %2885 = vmatprep.mubr.f32.mxu0 %v2174
    %2886 = vmatmul.mubr.f32.gmra.mrb[0].mxu0 %v2173
    %v2887 = vpop.f32.mrb[0].mxu0
    %v2888 = vadd.f32 0.0, %v2887
    %v2889 = vpop.f32.mrb[0].mxu0
    %2890 = vmatprep.mubr.f32.mxu0 %v2183
    %2891 = vmatmul.mubr.f32.gmra.mrb[0].mxu0 %v2182
    %v2892 = vpop.f32.mrb[0].mxu0
    %v2893 = vadd.f32 0.0, %v2892
    %v2894 = vpop.f32.mrb[0].mxu0
    %2895 = vmatprep.mubr.f32.mxu0 %v2192
    %2896 = vmatmul.mubr.f32.gmra.mrb[0].mxu0 %v2191
    %v2897 = vpop.f32.mrb[0].mxu0
    %v2898 = vadd.f32 0.0, %v2897
    %v2899 = vpop.f32.mrb[0].mxu0
    %2900 = vmatprep.mubr.f32.mxu0 %v2201
    %2901 = vmatmul.mubr.f32.gmra.mrb[0].mxu0 %v2200
    %v2902 = vpop.f32.mrb[0].mxu0
    %v2903 = vadd.f32 0.0, %v2902
    %v2904 = vpop.f32.mrb[0].mxu0
    %2905 = vmatprep.mubr.f32.mxu0 %v2210
    %2906 = vmatmul.mubr.f32.gmra.mrb[0].mxu0 %v2209
    %v2907 = vpop.f32.mrb[0].mxu0
    %v2908 = vadd.f32 0.0, %v2907
    %v2909 = vpop.f32.mrb[0].mxu0
    %2910 = vmatprep.mubr.f32.mxu0 %v2219
    %2911 = vmatmul.mubr.f32.gmra.mrb[0].mxu0 %v2218
    %v2912 = vpop.f32.mrb[0].mxu0
    %v2913 = vadd.f32 0.0, %v2912
    %v2914 = vpop.f32.mrb[0].mxu0
    %2915 = vmatprep.mubr.f32.mxu0 %v2228
    %2916 = vmatmul.mubr.f32.gmra.mrb[0].mxu0 %v2227
    %v2917 = vpop.f32.mrb[0].mxu0
    %v2918 = vadd.f32 0.0, %v2917
    %v2919 = vpop.f32.mrb[0].mxu0
    %2920 = vmatprep.mubr.f32.mxu0 %v2237
    %2921 = vmatmul.mubr.f32.gmra.mrb[0].mxu0 %v2236
    %v2922 = vpop.f32.mrb[0].mxu0
    %v2923 = vadd.f32 0.0, %v2922
    %v2924 = vpop.f32.mrb[0].mxu0
    %2925 = vmatprep.mubr.f32.mxu0 %v2246
    %2926 = vmatmul.mubr.f32.gmra.mrb[0].mxu0 %v2245
    %v2927 = vpop.f32.mrb[0].mxu0
    %v2928 = vadd.f32 0.0, %v2927
    %v2929 = vpop.f32.mrb[0].mxu0
    %2930 = vmatprep.mubr.f32.mxu0 %v2255
    %2931 = vmatmul.mubr.f32.gmra.mrb[0].mxu0 %v2254
    %v2932 = vpop.f32.mrb[0].mxu0
    %v2933 = vadd.f32 0.0, %v2932
    %v2934 = vpop.f32.mrb[0].mxu0
    %2935 = vmatprep.mubr.f32.mxu0 %v2264
    %2936 = vmatmul.mubr.f32.gmra.mrb[0].mxu0 %v2263
    %v2937 = vpop.f32.mrb[0].mxu0
    %v2938 = vadd.f32 0.0, %v2937
    %v2939 = vpop.f32.mrb[0].mxu0
    %2940 = vmatprep.mubr.f32.mxu0 %v2273
    %2941 = vmatmul.mubr.f32.gmra.mrb[0].mxu0 %v2272
    %v2942 = vpop.f32.mrb[0].mxu0
    %v2943 = vadd.f32 0.0, %v2942
    %v2944 = vpop.f32.mrb[0].mxu0
    %2945 = vmatprep.mubr.f32.mxu0 %v2282
    %2946 = vmatmul.mubr.f32.gmra.mrb[0].mxu0 %v2281
    %v2947 = vpop.f32.mrb[0].mxu0
    %v2948 = vadd.f32 0.0, %v2947
    %v2949 = vpop.f32.mrb[0].mxu0
    %2950 = vmatprep.mubr.f32.mxu0 %v2291
    %2951 = vmatmul.mubr.f32.gmra.mrb[0].mxu0 %v2290
    %v2952 = vpop.f32.mrb[0].mxu0
    %v2953 = vadd.f32 0.0, %v2952
    %v2954 = vpop.f32.mrb[0].mxu0
    %2955 = vmatprep.mubr.f32.mxu0 %v2300
    %2956 = vmatmul.mubr.f32.gmra.mrb[0].mxu0 %v2299
    %v2957 = vpop.f32.mrb[0].mxu0
    %v2958 = vadd.f32 0.0, %v2957
    %v2959 = vpop.f32.mrb[0].mxu0
    %2960 = vmatprep.mubr.f32.mxu0 %v2309
    %2961 = vmatmul.mubr.f32.gmra.mrb[0].mxu0 %v2308
    %v2962 = vpop.f32.mrb[0].mxu0
    %v2963 = vadd.f32 0.0, %v2962
    %v2964 = vpop.f32.mrb[0].mxu0
    %2965 = vmatprep.mubr.f32.mxu0 %v2318
    %2966 = vmatmul.mubr.f32.gmra.mrb[0].mxu0 %v2317
    %v2967 = vpop.f32.mrb[0].mxu0
    %v2968 = vadd.f32 0.0, %v2967
    %v2969 = vpop.f32.mrb[0].mxu0
    %2970 = vmatprep.mubr.f32.mxu0 %v2327
    %2971 = vmatmul.mubr.f32.gmra.mrb[0].mxu0 %v2326
    %v2972 = vpop.f32.mrb[0].mxu0
    %v2973 = vadd.f32 0.0, %v2972
    %v2974 = vpop.f32.mrb[0].mxu0
    %2975 = vmatprep.mubr.f32.mxu0 %v2336
    %2976 = vmatmul.mubr.f32.gmra.mrb[0].mxu0 %v2335
    %v2977 = vpop.f32.mrb[0].mxu0
    %v2978 = vadd.f32 0.0, %v2977
    %v2979 = vpop.f32.mrb[0].mxu0
    %2980 = vmatprep.mubr.f32.mxu0 %v2345
    %2981 = vmatmul.mubr.f32.gmra.mrb[0].mxu0 %v2344
    %v2982 = vpop.f32.mrb[0].mxu0
    %v2983 = vadd.f32 0.0, %v2982
    %v2984 = vpop.f32.mrb[0].mxu0
    %2985 = vmatprep.mubr.f32.mxu0 %v2354
    %2986 = vmatmul.mubr.f32.gmra.mrb[0].mxu0 %v2353
    %v2987 = vpop.f32.mrb[0].mxu0
    %v2988 = vadd.f32 0.0, %v2987
    %v2989 = vpop.f32.mrb[0].mxu0
    %2990 = vmatprep.mubr.f32.mxu0 %v2363
    %2991 = vmatmul.mubr.f32.gmra.mrb[0].mxu0 %v2362
    %v2992 = vpop.f32.mrb[0].mxu0
    %v2993 = vadd.f32 0.0, %v2992
    %v2994 = vpop.f32.mrb[0].mxu0
    %2995 = vmatprep.mubr.f32.mxu0 %v2372
    %2996 = vmatmul.mubr.f32.gmra.mrb[0].mxu0 %v2371
    %v2997 = vpop.f32.mrb[0].mxu0
    %v2998 = vadd.f32 0.0, %v2997
    %v2999 = vpop.f32.mrb[0].mxu0
    %3000 = vmatprep.mubr.f32.mxu0 %v2381
    %3001 = vmatmul.mubr.f32.gmra.mrb[0].mxu0 %v2380
    %v3002 = vpop.f32.mrb[0].mxu0
    %v3003 = vadd.f32 0.0, %v3002
    %v3004 = vpop.f32.mrb[0].mxu0
    %3005 = vmatprep.mubr.f32.mxu0 %v2390
    %3006 = vmatmul.mubr.f32.gmra.mrb[0].mxu0 %v2389
    %v3007 = vpop.f32.mrb[0].mxu0
    %v3008 = vadd.f32 0.0, %v3007
    %v3009 = vpop.f32.mrb[0].mxu0
    %3010 = vmatprep.mubr.f32.mxu0 %v2399
    %3011 = vmatmul.mubr.f32.gmra.mrb[0].mxu0 %v2398
    %v3012 = vpop.f32.mrb[0].mxu0
    %v3013 = vadd.f32 0.0, %v3012
    %v3014 = vpop.f32.mrb[0].mxu0
    %3015 = vmatprep.mubr.f32.mxu0 %v2408
    %3016 = vmatmul.mubr.f32.gmra.mrb[0].mxu0 %v2407
    %v3017 = vpop.f32.mrb[0].mxu0
    %v3018 = vadd.f32 0.0, %v3017
    %v3019 = vpop.f32.mrb[0].mxu0
    %3020 = vmatprep.mubr.f32.mxu0 %v2417
    %3021 = vmatmul.mubr.f32.gmra.mrb[0].mxu0 %v2416
    %v3022 = vpop.f32.mrb[0].mxu0
    %v3023 = vadd.f32 0.0, %v3022
    %v3024 = vpop.f32.mrb[0].mxu0
    %3025 = vmatprep.mubr.f32.mxu0 %v2426
    %3026 = vmatmul.mubr.f32.gmra.mrb[0].mxu0 %v2425
    %v3027 = vpop.f32.mrb[0].mxu0
    %v3028 = vadd.f32 0.0, %v3027
    %v3029 = vpop.f32.mrb[0].mxu0
    %3030 = vmatprep.mubr.f32.mxu0 %v2435
    %3031 = vmatmul.mubr.f32.gmra.mrb[0].mxu0 %v2434
    %v3032 = vpop.f32.mrb[0].mxu0
    %v3033 = vadd.f32 0.0, %v3032
    %v3034 = vpop.f32.mrb[0].mxu0
    %3035 = vmatprep.mubr.f32.mxu0 %v2444
    %3036 = vmatmul.mubr.f32.gmra.mrb[0].mxu0 %v2443
    %v3037 = vpop.f32.mrb[0].mxu0
    %v3038 = vadd.f32 0.0, %v3037
    %v3039 = vpop.f32.mrb[0].mxu0
    %3040 = vmatprep.mubr.f32.mxu0 %v2453
    %3041 = vmatmul.mubr.f32.gmra.mrb[0].mxu0 %v2452
    %v3042 = vpop.f32.mrb[0].mxu0
    %v3043 = vadd.f32 0.0, %v3042
    %v3044 = vpop.f32.mrb[0].mxu0
    %3045 = vmatprep.mubr.f32.mxu0 %v2462
    %3046 = vmatmul.mubr.f32.gmra.mrb[0].mxu0 %v2461
    %v3047 = vpop.f32.mrb[0].mxu0
    %v3048 = vadd.f32 0.0, %v3047
    %v3049 = vpop.f32.mrb[0].mxu0
    %3050 = vmatprep.mubr.f32.mxu0 %v2471
    %3051 = vmatmul.mubr.f32.gmra.mrb[0].mxu0 %v2470
    %v3052 = vpop.f32.mrb[0].mxu0
    %v3053 = vadd.f32 0.0, %v3052
    %v3054 = vpop.f32.mrb[0].mxu0
    %3055 = vmatprep.mubr.f32.mxu0 %v2480
    %3056 = vmatmul.mubr.f32.gmra.mrb[0].mxu0 %v2479
    %v3057 = vpop.f32.mrb[0].mxu0
    %v3058 = vadd.f32 0.0, %v3057
    %v3059 = vpop.f32.mrb[0].mxu0
    %3060 = vmatprep.mubr.f32.mxu0 %v2489
    %3061 = vmatmul.mubr.f32.gmra.mrb[0].mxu0 %v2488
    %v3062 = vpop.f32.mrb[0].mxu0
    %v3063 = vadd.f32 0.0, %v3062
    %v3064 = vpop.f32.mrb[0].mxu0
    %3065 = vmatprep.mubr.f32.mxu0 %v2498
    %3066 = vmatmul.mubr.f32.gmra.mrb[0].mxu0 %v2497
    %v3067 = vpop.f32.mrb[0].mxu0
    %v3068 = vadd.f32 0.0, %v3067
    %v3069 = vpop.f32.mrb[0].mxu0
    %3070 = vmatprep.mubr.f32.mxu0 %v2507
    %3071 = vmatmul.mubr.f32.gmra.mrb[0].mxu0 %v2506
    %v3072 = vpop.f32.mrb[0].mxu0
    %v3073 = vadd.f32 0.0, %v3072
    %v3074 = vpop.f32.mrb[0].mxu0
    %3075 = vmatprep.mubr.f32.mxu0 %v2516
    %3076 = vmatmul.mubr.f32.gmra.mrb[0].mxu0 %v2515
    %v3077 = vpop.f32.mrb[0].mxu0
    %v3078 = vadd.f32 0.0, %v3077
    %v3079 = vpop.f32.mrb[0].mxu0
    %3080 = vmatprep.mubr.f32.mxu0 %v2525
    %3081 = vmatmul.mubr.f32.gmra.mrb[0].mxu0 %v2524
    %v3082 = vpop.f32.mrb[0].mxu0
    %v3083 = vadd.f32 0.0, %v3082
    %v3084 = vpop.f32.mrb[0].mxu0
    %3085 = vmatprep.mubr.f32.mxu0 %v2534
    %3086 = vmatmul.mubr.f32.gmra.mrb[0].mxu0 %v2533
    %v3087 = vpop.f32.mrb[0].mxu0
    %v3088 = vadd.f32 0.0, %v3087
    %v3089 = vpop.f32.mrb[0].mxu0
    %3090 = vmatprep.mubr.f32.mxu0 %v2543
    %3091 = vmatmul.mubr.f32.gmra.mrb[0].mxu0 %v2542
    %v3092 = vpop.f32.mrb[0].mxu0
    %v3093 = vadd.f32 0.0, %v3092
    %v3094 = vpop.f32.mrb[0].mxu0
    %3095 = vmatprep.mubr.f32.mxu0 %v2552
    %3096 = vmatmul.mubr.f32.gmra.mrb[0].mxu0 %v2551
    %v3097 = vpop.f32.mrb[0].mxu0
    %v3098 = vadd.f32 0.0, %v3097
    %v3099 = vpop.f32.mrb[0].mxu0
    %3100 = vmatprep.mubr.f32.mxu0 %v2561
    %3101 = vmatmul.mubr.f32.gmra.mrb[0].mxu0 %v2560
    %v3102 = vpop.f32.mrb[0].mxu0
    %v3103 = vadd.f32 0.0, %v3102
    %v3104 = vpop.f32.mrb[0].mxu0
    %3105 = vmatprep.mubr.f32.mxu0 %v2570
    %3106 = vmatmul.mubr.f32.gmra.mrb[0].mxu0 %v2569
    %v3107 = vpop.f32.mrb[0].mxu0
    %v3108 = vadd.f32 0.0, %v3107
    %v3109 = vpop.f32.mrb[0].mxu0
    %3110 = vmatprep.mubr.f32.mxu0 %v2579
    %3111 = vmatmul.mubr.f32.gmra.mrb[0].mxu0 %v2578
    %v3112 = vpop.f32.mrb[0].mxu0
    %v3113 = vadd.f32 0.0, %v3112
    %v3114 = vpop.f32.mrb[0].mxu0
    %3115 = vdwg.mxu0
    %3116 = vmatprep.subr.mxu0 0.0
    %3117 = vmatpush1.msra.mxu0 %v2619
    %3118 = vmatprep.subr.mxu0 0.0
    %3119 = vmatpush1.msra.mxu0 %v2620
    %3120 = vmatprep.subr.mxu0 0.0
    %3121 = vmatpush1.msra.mxu0 %v2621
    %3122 = vmatprep.subr.mxu0 0.0
    %3123 = vmatpush1.msra.mxu0 %v2622
    %3124 = vmatprep.subr.mxu0 0.0
    %3125 = vmatpush1.msra.mxu0 %v2623
    %3126 = vmatprep.subr.mxu0 0.0
    %3127 = vmatpush1.msra.mxu0 %v2624
    %3128 = vmatprep.subr.mxu0 0.0
    %3129 = vmatpush1.msra.mxu0 %v2625
    %3130 = vmatprep.subr.mxu0 0.0
    %3131 = vmatpush1.msra.mxu0 %v2626
    %3132 = vmatprep.subr.mxu0 0.0
    %3133 = vmatpush1.msra.mxu0 %v2627
    %3134 = vmatprep.subr.mxu0 0.0
    %3135 = vmatpush1.msra.mxu0 %v2628
    %3136 = vmatprep.subr.mxu0 0.0
    %3137 = vmatpush1.msra.mxu0 %v2629
    %3138 = vmatprep.subr.mxu0 0.0
    %3139 = vmatpush1.msra.mxu0 %v2630
    %3140 = vmatprep.subr.mxu0 0.0
    %3141 = vmatpush1.msra.mxu0 %v2631
    %3142 = vmatprep.subr.mxu0 0.0
    %3143 = vmatpush1.msra.mxu0 %v2632
    %3144 = vmatprep.subr.mxu0 0.0
    %3145 = vmatpush1.msra.mxu0 %v2633
    %3146 = vmatprep.subr.mxu0 0.0
    %3147 = vmatpush1.msra.mxu0 %v2634
    %3148 = vmatprep.subr.mxu0 0.0
    %3149 = vmatpush1.msra.mxu0 %v2635
    %3150 = vmatprep.subr.mxu0 0.0
    %3151 = vmatpush1.msra.mxu0 %v2636
    %3152 = vmatprep.subr.mxu0 0.0
    %3153 = vmatpush1.msra.mxu0 %v2637
    %3154 = vmatprep.subr.mxu0 0.0
    %3155 = vmatpush1.msra.mxu0 %v2638
    %3156 = vmatprep.subr.mxu0 0.0
    %3157 = vmatpush1.msra.mxu0 %v2639
    %3158 = vmatprep.subr.mxu0 0.0
    %3159 = vmatpush1.msra.mxu0 %v2640
    %3160 = vmatprep.subr.mxu0 0.0
    %3161 = vmatpush1.msra.mxu0 %v2641
    %3162 = vmatprep.subr.mxu0 0.0
    %3163 = vmatpush1.msra.mxu0 %v2642
    %3164 = vmatprep.subr.mxu0 0.0
    %3165 = vmatpush1.msra.mxu0 %v2643
    %3166 = vmatprep.subr.mxu0 0.0
    %3167 = vmatpush1.msra.mxu0 %v2644
    %3168 = vmatprep.subr.mxu0 0.0
    %3169 = vmatpush1.msra.mxu0 %v2645
    %3170 = vmatprep.subr.mxu0 0.0
    %3171 = vmatpush1.msra.mxu0 %v2646
    %3172 = vmatprep.subr.mxu0 0.0
    %3173 = vmatpush1.msra.mxu0 %v2647
    %3174 = vmatprep.subr.mxu0 0.0
    %3175 = vmatpush1.msra.mxu0 %v2648
    %3176 = vmatprep.subr.mxu0 0.0
    %3177 = vmatpush1.msra.mxu0 %v2649
    %3178 = vmatprep.subr.mxu0 0.0
    %3179 = vmatpush1.msra.mxu0 %v2650
    %3180 = vmatprep.mubr.f32.mxu0 %v2014
    %3181 = vmatmul.mubr.f32.gmra.mrb[0].mxu0 %v2013
    %v3182 = vpop.f32.mrb[0].mxu0
    %v3183 = vadd.f32 %v2798, %v3182
    %v3184 = vpop.f32.mrb[0].mxu0
    %3185 = vmatprep.mubr.f32.mxu0 %v2023
    %3186 = vmatmul.mubr.f32.gmra.mrb[0].mxu0 %v2022
    %v3187 = vpop.f32.mrb[0].mxu0
    %v3188 = vadd.f32 %v2803, %v3187
    %v3189 = vpop.f32.mrb[0].mxu0
    %3190 = vmatprep.mubr.f32.mxu0 %v2032
    %3191 = vmatmul.mubr.f32.gmra.mrb[0].mxu0 %v2031
    %v3192 = vpop.f32.mrb[0].mxu0
    %v3193 = vadd.f32 %v2808, %v3192
    %v3194 = vpop.f32.mrb[0].mxu0
    %3195 = vmatprep.mubr.f32.mxu0 %v2041
    %3196 = vmatmul.mubr.f32.gmra.mrb[0].mxu0 %v2040
    %v3197 = vpop.f32.mrb[0].mxu0
    %v3198 = vadd.f32 %v2813, %v3197
    %v3199 = vpop.f32.mrb[0].mxu0
    %3200 = vmatprep.mubr.f32.mxu0 %v2050
    %3201 = vmatmul.mubr.f32.gmra.mrb[0].mxu0 %v2049
    %v3202 = vpop.f32.mrb[0].mxu0
    %v3203 = vadd.f32 %v2818, %v3202
    %v3204 = vpop.f32.mrb[0].mxu0
    %3205 = vmatprep.mubr.f32.mxu0 %v2059
    %3206 = vmatmul.mubr.f32.gmra.mrb[0].mxu0 %v2058
    %v3207 = vpop.f32.mrb[0].mxu0
    %v3208 = vadd.f32 %v2823, %v3207
    %v3209 = vpop.f32.mrb[0].mxu0
    %3210 = vmatprep.mubr.f32.mxu0 %v2068
    %3211 = vmatmul.mubr.f32.gmra.mrb[0].mxu0 %v2067
    %v3212 = vpop.f32.mrb[0].mxu0
    %v3213 = vadd.f32 %v2828, %v3212
    %v3214 = vpop.f32.mrb[0].mxu0
    %3215 = vmatprep.mubr.f32.mxu0 %v2077
    %3216 = vmatmul.mubr.f32.gmra.mrb[0].mxu0 %v2076
    %v3217 = vpop.f32.mrb[0].mxu0
    %v3218 = vadd.f32 %v2833, %v3217
    %v3219 = vpop.f32.mrb[0].mxu0
    %3220 = vmatprep.mubr.f32.mxu0 %v2086
    %3221 = vmatmul.mubr.f32.gmra.mrb[0].mxu0 %v2085
    %v3222 = vpop.f32.mrb[0].mxu0
    %v3223 = vadd.f32 %v2838, %v3222
    %v3224 = vpop.f32.mrb[0].mxu0
    %3225 = vmatprep.mubr.f32.mxu0 %v2095
    %3226 = vmatmul.mubr.f32.gmra.mrb[0].mxu0 %v2094
    %v3227 = vpop.f32.mrb[0].mxu0
    %v3228 = vadd.f32 %v2843, %v3227
    %v3229 = vpop.f32.mrb[0].mxu0
    %3230 = vmatprep.mubr.f32.mxu0 %v2104
    %3231 = vmatmul.mubr.f32.gmra.mrb[0].mxu0 %v2103
    %v3232 = vpop.f32.mrb[0].mxu0
    %v3233 = vadd.f32 %v2848, %v3232
    %v3234 = vpop.f32.mrb[0].mxu0
    %3235 = vmatprep.mubr.f32.mxu0 %v2113
    %3236 = vmatmul.mubr.f32.gmra.mrb[0].mxu0 %v2112
    %v3237 = vpop.f32.mrb[0].mxu0
    %v3238 = vadd.f32 %v2853, %v3237
    %v3239 = vpop.f32.mrb[0].mxu0
    %3240 = vmatprep.mubr.f32.mxu0 %v2122
    %3241 = vmatmul.mubr.f32.gmra.mrb[0].mxu0 %v2121
    %v3242 = vpop.f32.mrb[0].mxu0
    %v3243 = vadd.f32 %v2858, %v3242
    %v3244 = vpop.f32.mrb[0].mxu0
    %3245 = vmatprep.mubr.f32.mxu0 %v2131
    %3246 = vmatmul.mubr.f32.gmra.mrb[0].mxu0 %v2130
    %v3247 = vpop.f32.mrb[0].mxu0
    %v3248 = vadd.f32 %v2863, %v3247
    %v3249 = vpop.f32.mrb[0].mxu0
    %3250 = vmatprep.mubr.f32.mxu0 %v2140
    %3251 = vmatmul.mubr.f32.gmra.mrb[0].mxu0 %v2139
    %v3252 = vpop.f32.mrb[0].mxu0
    %v3253 = vadd.f32 %v2868, %v3252
    %v3254 = vpop.f32.mrb[0].mxu0
    %3255 = vmatprep.mubr.f32.mxu0 %v2149
    %3256 = vmatmul.mubr.f32.gmra.mrb[0].mxu0 %v2148
    %v3257 = vpop.f32.mrb[0].mxu0
    %v3258 = vadd.f32 %v2873, %v3257
    %v3259 = vpop.f32.mrb[0].mxu0
    %3260 = vmatprep.mubr.f32.mxu0 %v2158
    %3261 = vmatmul.mubr.f32.gmra.mrb[0].mxu0 %v2157
    %v3262 = vpop.f32.mrb[0].mxu0
    %v3263 = vadd.f32 %v2878, %v3262
    %v3264 = vpop.f32.mrb[0].mxu0
    %3265 = vmatprep.mubr.f32.mxu0 %v2167
    %3266 = vmatmul.mubr.f32.gmra.mrb[0].mxu0 %v2166
    %v3267 = vpop.f32.mrb[0].mxu0
    %v3268 = vadd.f32 %v2883, %v3267
    %v3269 = vpop.f32.mrb[0].mxu0
    %3270 = vmatprep.mubr.f32.mxu0 %v2176
    %3271 = vmatmul.mubr.f32.gmra.mrb[0].mxu0 %v2175
    %v3272 = vpop.f32.mrb[0].mxu0
    %v3273 = vadd.f32 %v2888, %v3272
    %v3274 = vpop.f32.mrb[0].mxu0
    %3275 = vmatprep.mubr.f32.mxu0 %v2185
    %3276 = vmatmul.mubr.f32.gmra.mrb[0].mxu0 %v2184
    %v3277 = vpop.f32.mrb[0].mxu0
    %v3278 = vadd.f32 %v2893, %v3277
    %v3279 = vpop.f32.mrb[0].mxu0
    %3280 = vmatprep.mubr.f32.mxu0 %v2194
    %3281 = vmatmul.mubr.f32.gmra.mrb[0].mxu0 %v2193
    %v3282 = vpop.f32.mrb[0].mxu0
    %v3283 = vadd.f32 %v2898, %v3282
    %v3284 = vpop.f32.mrb[0].mxu0
    %3285 = vmatprep.mubr.f32.mxu0 %v2203
    %3286 = vmatmul.mubr.f32.gmra.mrb[0].mxu0 %v2202
    %v3287 = vpop.f32.mrb[0].mxu0
    %v3288 = vadd.f32 %v2903, %v3287
    %v3289 = vpop.f32.mrb[0].mxu0
    %3290 = vmatprep.mubr.f32.mxu0 %v2212
    %3291 = vmatmul.mubr.f32.gmra.mrb[0].mxu0 %v2211
    %v3292 = vpop.f32.mrb[0].mxu0
    %v3293 = vadd.f32 %v2908, %v3292
    %v3294 = vpop.f32.mrb[0].mxu0
    %3295 = vmatprep.mubr.f32.mxu0 %v2221
    %3296 = vmatmul.mubr.f32.gmra.mrb[0].mxu0 %v2220
    %v3297 = vpop.f32.mrb[0].mxu0
    %v3298 = vadd.f32 %v2913, %v3297
    %v3299 = vpop.f32.mrb[0].mxu0
    %3300 = vmatprep.mubr.f32.mxu0 %v2230
    %3301 = vmatmul.mubr.f32.gmra.mrb[0].mxu0 %v2229
    %v3302 = vpop.f32.mrb[0].mxu0
    %v3303 = vadd.f32 %v2918, %v3302
    %v3304 = vpop.f32.mrb[0].mxu0
    %3305 = vmatprep.mubr.f32.mxu0 %v2239
    %3306 = vmatmul.mubr.f32.gmra.mrb[0].mxu0 %v2238
    %v3307 = vpop.f32.mrb[0].mxu0
    %v3308 = vadd.f32 %v2923, %v3307
    %v3309 = vpop.f32.mrb[0].mxu0
    %3310 = vmatprep.mubr.f32.mxu0 %v2248
    %3311 = vmatmul.mubr.f32.gmra.mrb[0].mxu0 %v2247
    %v3312 = vpop.f32.mrb[0].mxu0
    %v3313 = vadd.f32 %v2928, %v3312
    %v3314 = vpop.f32.mrb[0].mxu0
    %3315 = vmatprep.mubr.f32.mxu0 %v2257
    %3316 = vmatmul.mubr.f32.gmra.mrb[0].mxu0 %v2256
    %v3317 = vpop.f32.mrb[0].mxu0
    %v3318 = vadd.f32 %v2933, %v3317
    %v3319 = vpop.f32.mrb[0].mxu0
    %3320 = vmatprep.mubr.f32.mxu0 %v2266
    %3321 = vmatmul.mubr.f32.gmra.mrb[0].mxu0 %v2265
    %v3322 = vpop.f32.mrb[0].mxu0
    %v3323 = vadd.f32 %v2938, %v3322
    %v3324 = vpop.f32.mrb[0].mxu0
    %3325 = vmatprep.mubr.f32.mxu0 %v2275
    %3326 = vmatmul.mubr.f32.gmra.mrb[0].mxu0 %v2274
    %v3327 = vpop.f32.mrb[0].mxu0
    %v3328 = vadd.f32 %v2943, %v3327
    %v3329 = vpop.f32.mrb[0].mxu0
    %3330 = vmatprep.mubr.f32.mxu0 %v2284
    %3331 = vmatmul.mubr.f32.gmra.mrb[0].mxu0 %v2283
    %v3332 = vpop.f32.mrb[0].mxu0
    %v3333 = vadd.f32 %v2948, %v3332
    %v3334 = vpop.f32.mrb[0].mxu0
    %3335 = vmatprep.mubr.f32.mxu0 %v2293
    %3336 = vmatmul.mubr.f32.gmra.mrb[0].mxu0 %v2292
    %v3337 = vpop.f32.mrb[0].mxu0
    %v3338 = vadd.f32 %v2953, %v3337
    %v3339 = vpop.f32.mrb[0].mxu0
    %3340 = vmatprep.mubr.f32.mxu0 %v2302
    %3341 = vmatmul.mubr.f32.gmra.mrb[0].mxu0 %v2301
    %v3342 = vpop.f32.mrb[0].mxu0
    %v3343 = vadd.f32 %v2958, %v3342
    %v3344 = vpop.f32.mrb[0].mxu0
    %3345 = vmatprep.mubr.f32.mxu0 %v2311
    %3346 = vmatmul.mubr.f32.gmra.mrb[0].mxu0 %v2310
    %v3347 = vpop.f32.mrb[0].mxu0
    %v3348 = vadd.f32 %v2963, %v3347
    %v3349 = vpop.f32.mrb[0].mxu0
    %3350 = vmatprep.mubr.f32.mxu0 %v2320
    %3351 = vmatmul.mubr.f32.gmra.mrb[0].mxu0 %v2319
    %v3352 = vpop.f32.mrb[0].mxu0
    %v3353 = vadd.f32 %v2968, %v3352
    %v3354 = vpop.f32.mrb[0].mxu0
    %3355 = vmatprep.mubr.f32.mxu0 %v2329
    %3356 = vmatmul.mubr.f32.gmra.mrb[0].mxu0 %v2328
    %v3357 = vpop.f32.mrb[0].mxu0
    %v3358 = vadd.f32 %v2973, %v3357
    %v3359 = vpop.f32.mrb[0].mxu0
    %3360 = vmatprep.mubr.f32.mxu0 %v2338
    %3361 = vmatmul.mubr.f32.gmra.mrb[0].mxu0 %v2337
    %v3362 = vpop.f32.mrb[0].mxu0
    %v3363 = vadd.f32 %v2978, %v3362
    %v3364 = vpop.f32.mrb[0].mxu0
    %3365 = vmatprep.mubr.f32.mxu0 %v2347
    %3366 = vmatmul.mubr.f32.gmra.mrb[0].mxu0 %v2346
    %v3367 = vpop.f32.mrb[0].mxu0
    %v3368 = vadd.f32 %v2983, %v3367
    %v3369 = vpop.f32.mrb[0].mxu0
    %3370 = vmatprep.mubr.f32.mxu0 %v2356
    %3371 = vmatmul.mubr.f32.gmra.mrb[0].mxu0 %v2355
    %v3372 = vpop.f32.mrb[0].mxu0
    %v3373 = vadd.f32 %v2988, %v3372
    %v3374 = vpop.f32.mrb[0].mxu0
    %3375 = vmatprep.mubr.f32.mxu0 %v2365
    %3376 = vmatmul.mubr.f32.gmra.mrb[0].mxu0 %v2364
    %v3377 = vpop.f32.mrb[0].mxu0
    %v3378 = vadd.f32 %v2993, %v3377
    %v3379 = vpop.f32.mrb[0].mxu0
    %3380 = vmatprep.mubr.f32.mxu0 %v2374
    %3381 = vmatmul.mubr.f32.gmra.mrb[0].mxu0 %v2373
    %v3382 = vpop.f32.mrb[0].mxu0
    %v3383 = vadd.f32 %v2998, %v3382
    %v3384 = vpop.f32.mrb[0].mxu0
    %3385 = vmatprep.mubr.f32.mxu0 %v2383
    %3386 = vmatmul.mubr.f32.gmra.mrb[0].mxu0 %v2382
    %v3387 = vpop.f32.mrb[0].mxu0
    %v3388 = vadd.f32 %v3003, %v3387
    %v3389 = vpop.f32.mrb[0].mxu0
    %3390 = vmatprep.mubr.f32.mxu0 %v2392
    %3391 = vmatmul.mubr.f32.gmra.mrb[0].mxu0 %v2391
    %v3392 = vpop.f32.mrb[0].mxu0
    %v3393 = vadd.f32 %v3008, %v3392
    %v3394 = vpop.f32.mrb[0].mxu0
    %3395 = vmatprep.mubr.f32.mxu0 %v2401
    %3396 = vmatmul.mubr.f32.gmra.mrb[0].mxu0 %v2400
    %v3397 = vpop.f32.mrb[0].mxu0
    %v3398 = vadd.f32 %v3013, %v3397
    %v3399 = vpop.f32.mrb[0].mxu0
    %3400 = vmatprep.mubr.f32.mxu0 %v2410
    %3401 = vmatmul.mubr.f32.gmra.mrb[0].mxu0 %v2409
    %v3402 = vpop.f32.mrb[0].mxu0
    %v3403 = vadd.f32 %v3018, %v3402
    %v3404 = vpop.f32.mrb[0].mxu0
    %3405 = vmatprep.mubr.f32.mxu0 %v2419
    %3406 = vmatmul.mubr.f32.gmra.mrb[0].mxu0 %v2418
    %v3407 = vpop.f32.mrb[0].mxu0
    %v3408 = vadd.f32 %v3023, %v3407
    %v3409 = vpop.f32.mrb[0].mxu0
    %3410 = vmatprep.mubr.f32.mxu0 %v2428
    %3411 = vmatmul.mubr.f32.gmra.mrb[0].mxu0 %v2427
    %v3412 = vpop.f32.mrb[0].mxu0
    %v3413 = vadd.f32 %v3028, %v3412
    %v3414 = vpop.f32.mrb[0].mxu0
    %3415 = vmatprep.mubr.f32.mxu0 %v2437
    %3416 = vmatmul.mubr.f32.gmra.mrb[0].mxu0 %v2436
    %v3417 = vpop.f32.mrb[0].mxu0
    %v3418 = vadd.f32 %v3033, %v3417
    %v3419 = vpop.f32.mrb[0].mxu0
    %3420 = vmatprep.mubr.f32.mxu0 %v2446
    %3421 = vmatmul.mubr.f32.gmra.mrb[0].mxu0 %v2445
    %v3422 = vpop.f32.mrb[0].mxu0
    %v3423 = vadd.f32 %v3038, %v3422
    %v3424 = vpop.f32.mrb[0].mxu0
    %3425 = vmatprep.mubr.f32.mxu0 %v2455
    %3426 = vmatmul.mubr.f32.gmra.mrb[0].mxu0 %v2454
    %v3427 = vpop.f32.mrb[0].mxu0
    %v3428 = vadd.f32 %v3043, %v3427
    %v3429 = vpop.f32.mrb[0].mxu0
    %3430 = vmatprep.mubr.f32.mxu0 %v2464
    %3431 = vmatmul.mubr.f32.gmra.mrb[0].mxu0 %v2463
    %v3432 = vpop.f32.mrb[0].mxu0
    %v3433 = vadd.f32 %v3048, %v3432
    %v3434 = vpop.f32.mrb[0].mxu0
    %3435 = vmatprep.mubr.f32.mxu0 %v2473
    %3436 = vmatmul.mubr.f32.gmra.mrb[0].mxu0 %v2472
    %v3437 = vpop.f32.mrb[0].mxu0
    %v3438 = vadd.f32 %v3053, %v3437
    %v3439 = vpop.f32.mrb[0].mxu0
    %3440 = vmatprep.mubr.f32.mxu0 %v2482
    %3441 = vmatmul.mubr.f32.gmra.mrb[0].mxu0 %v2481
    %v3442 = vpop.f32.mrb[0].mxu0
    %v3443 = vadd.f32 %v3058, %v3442
    %v3444 = vpop.f32.mrb[0].mxu0
    %3445 = vmatprep.mubr.f32.mxu0 %v2491
    %3446 = vmatmul.mubr.f32.gmra.mrb[0].mxu0 %v2490
    %v3447 = vpop.f32.mrb[0].mxu0
    %v3448 = vadd.f32 %v3063, %v3447
    %v3449 = vpop.f32.mrb[0].mxu0
    %3450 = vmatprep.mubr.f32.mxu0 %v2500
    %3451 = vmatmul.mubr.f32.gmra.mrb[0].mxu0 %v2499
    %v3452 = vpop.f32.mrb[0].mxu0
    %v3453 = vadd.f32 %v3068, %v3452
    %v3454 = vpop.f32.mrb[0].mxu0
    %3455 = vmatprep.mubr.f32.mxu0 %v2509
    %3456 = vmatmul.mubr.f32.gmra.mrb[0].mxu0 %v2508
    %v3457 = vpop.f32.mrb[0].mxu0
    %v3458 = vadd.f32 %v3073, %v3457
    %v3459 = vpop.f32.mrb[0].mxu0
    %3460 = vmatprep.mubr.f32.mxu0 %v2518
    %3461 = vmatmul.mubr.f32.gmra.mrb[0].mxu0 %v2517
    %v3462 = vpop.f32.mrb[0].mxu0
    %v3463 = vadd.f32 %v3078, %v3462
    %v3464 = vpop.f32.mrb[0].mxu0
    %3465 = vmatprep.mubr.f32.mxu0 %v2527
    %3466 = vmatmul.mubr.f32.gmra.mrb[0].mxu0 %v2526
    %v3467 = vpop.f32.mrb[0].mxu0
    %v3468 = vadd.f32 %v3083, %v3467
    %v3469 = vpop.f32.mrb[0].mxu0
    %3470 = vmatprep.mubr.f32.mxu0 %v2536
    %3471 = vmatmul.mubr.f32.gmra.mrb[0].mxu0 %v2535
    %v3472 = vpop.f32.mrb[0].mxu0
    %v3473 = vadd.f32 %v3088, %v3472
    %v3474 = vpop.f32.mrb[0].mxu0
    %3475 = vmatprep.mubr.f32.mxu0 %v2545
    %3476 = vmatmul.mubr.f32.gmra.mrb[0].mxu0 %v2544
    %v3477 = vpop.f32.mrb[0].mxu0
    %v3478 = vadd.f32 %v3093, %v3477
    %v3479 = vpop.f32.mrb[0].mxu0
    %3480 = vmatprep.mubr.f32.mxu0 %v2554
    %3481 = vmatmul.mubr.f32.gmra.mrb[0].mxu0 %v2553
    %v3482 = vpop.f32.mrb[0].mxu0
    %v3483 = vadd.f32 %v3098, %v3482
    %v3484 = vpop.f32.mrb[0].mxu0
    %3485 = vmatprep.mubr.f32.mxu0 %v2563
    %3486 = vmatmul.mubr.f32.gmra.mrb[0].mxu0 %v2562
    %v3487 = vpop.f32.mrb[0].mxu0
    %v3488 = vadd.f32 %v3103, %v3487
    %v3489 = vpop.f32.mrb[0].mxu0
    %3490 = vmatprep.mubr.f32.mxu0 %v2572
    %3491 = vmatmul.mubr.f32.gmra.mrb[0].mxu0 %v2571
    %v3492 = vpop.f32.mrb[0].mxu0
    %v3493 = vadd.f32 %v3108, %v3492
    %v3494 = vpop.f32.mrb[0].mxu0
    %3495 = vmatprep.mubr.f32.mxu0 %v2581
    %3496 = vmatmul.mubr.f32.gmra.mrb[0].mxu0 %v2580
    %v3497 = vpop.f32.mrb[0].mxu0
    %v3498 = vadd.f32 %v3113, %v3497
    %v3499 = vpop.f32.mrb[0].mxu0
    %3500 = vdwg.mxu0
    %3501 = vmatprep.subr.mxu0 0.0
    %3502 = vmatpush1.msra.mxu0 %v2651
    %3503 = vmatprep.subr.mxu0 0.0
    %3504 = vmatpush1.msra.mxu0 %v2652
    %3505 = vmatprep.subr.mxu0 0.0
    %3506 = vmatpush1.msra.mxu0 %v2653
    %3507 = vmatprep.subr.mxu0 0.0
    %3508 = vmatpush1.msra.mxu0 %v2654
    %3509 = vmatprep.subr.mxu0 0.0
    %3510 = vmatpush1.msra.mxu0 %v2655
    %3511 = vmatprep.subr.mxu0 0.0
    %3512 = vmatpush1.msra.mxu0 %v2656
    %3513 = vmatprep.subr.mxu0 0.0
    %3514 = vmatpush1.msra.mxu0 %v2657
    %3515 = vmatprep.subr.mxu0 0.0
    %3516 = vmatpush1.msra.mxu0 %v2658
    %3517 = vmatprep.subr.mxu0 0.0
    %3518 = vmatpush1.msra.mxu0 %v2659
    %3519 = vmatprep.subr.mxu0 0.0
    %3520 = vmatpush1.msra.mxu0 %v2660
    %3521 = vmatprep.subr.mxu0 0.0
    %3522 = vmatpush1.msra.mxu0 %v2661
    %3523 = vmatprep.subr.mxu0 0.0
    %3524 = vmatpush1.msra.mxu0 %v2662
    %3525 = vmatprep.subr.mxu0 0.0
    %3526 = vmatpush1.msra.mxu0 %v2663
    %3527 = vmatprep.subr.mxu0 0.0
    %3528 = vmatpush1.msra.mxu0 %v2664
    %3529 = vmatprep.subr.mxu0 0.0
    %3530 = vmatpush1.msra.mxu0 %v2665
    %3531 = vmatprep.subr.mxu0 0.0
    %3532 = vmatpush1.msra.mxu0 %v2666
    %3533 = vmatprep.subr.mxu0 0.0
    %3534 = vmatpush1.msra.mxu0 %v2667
    %3535 = vmatprep.subr.mxu0 0.0
    %3536 = vmatpush1.msra.mxu0 %v2668
    %3537 = vmatprep.subr.mxu0 0.0
    %3538 = vmatpush1.msra.mxu0 %v2669
    %3539 = vmatprep.subr.mxu0 0.0
    %3540 = vmatpush1.msra.mxu0 %v2670
    %3541 = vmatprep.subr.mxu0 0.0
    %3542 = vmatpush1.msra.mxu0 %v2671
    %3543 = vmatprep.subr.mxu0 0.0
    %3544 = vmatpush1.msra.mxu0 %v2672
    %3545 = vmatprep.subr.mxu0 0.0
    %3546 = vmatpush1.msra.mxu0 %v2673
    %3547 = vmatprep.subr.mxu0 0.0
    %3548 = vmatpush1.msra.mxu0 %v2674
    %3549 = vmatprep.subr.mxu0 0.0
    %3550 = vmatpush1.msra.mxu0 %v2675
    %3551 = vmatprep.subr.mxu0 0.0
    %3552 = vmatpush1.msra.mxu0 %v2676
    %3553 = vmatprep.subr.mxu0 0.0
    %3554 = vmatpush1.msra.mxu0 %v2677
    %3555 = vmatprep.subr.mxu0 0.0
    %3556 = vmatpush1.msra.mxu0 %v2678
    %3557 = vmatprep.subr.mxu0 0.0
    %3558 = vmatpush1.msra.mxu0 %v2679
    %3559 = vmatprep.subr.mxu0 0.0
    %3560 = vmatpush1.msra.mxu0 %v2680
    %3561 = vmatprep.subr.mxu0 0.0
    %3562 = vmatpush1.msra.mxu0 %v2681
    %3563 = vmatprep.subr.mxu0 0.0
    %3564 = vmatpush1.msra.mxu0 %v2682
    %3565 = vmatprep.mubr.f32.mxu0 %v2016
    %3566 = vmatmul.mubr.f32.gmra.mrb[0].mxu0 %v2015
    %v3567 = vpop.f32.mrb[0].mxu0
    %v3568 = vadd.f32 %v3183, %v3567
    %v3569 = vpop.f32.mrb[0].mxu0
    %3570 = vmatprep.mubr.f32.mxu0 %v2025
    %3571 = vmatmul.mubr.f32.gmra.mrb[0].mxu0 %v2024
    %v3572 = vpop.f32.mrb[0].mxu0
    %v3573 = vadd.f32 %v3188, %v3572
    %v3574 = vpop.f32.mrb[0].mxu0
    %3575 = vmatprep.mubr.f32.mxu0 %v2034
    %3576 = vmatmul.mubr.f32.gmra.mrb[0].mxu0 %v2033
    %v3577 = vpop.f32.mrb[0].mxu0
    %v3578 = vadd.f32 %v3193, %v3577
    %v3579 = vpop.f32.mrb[0].mxu0
    %3580 = vmatprep.mubr.f32.mxu0 %v2043
    %3581 = vmatmul.mubr.f32.gmra.mrb[0].mxu0 %v2042
    %v3582 = vpop.f32.mrb[0].mxu0
    %v3583 = vadd.f32 %v3198, %v3582
    %v3584 = vpop.f32.mrb[0].mxu0
    %3585 = vmatprep.mubr.f32.mxu0 %v2052
    %3586 = vmatmul.mubr.f32.gmra.mrb[0].mxu0 %v2051
    %v3587 = vpop.f32.mrb[0].mxu0
    %v3588 = vadd.f32 %v3203, %v3587
    %v3589 = vpop.f32.mrb[0].mxu0
    %3590 = vmatprep.mubr.f32.mxu0 %v2061
    %3591 = vmatmul.mubr.f32.gmra.mrb[0].mxu0 %v2060
    %v3592 = vpop.f32.mrb[0].mxu0
    %v3593 = vadd.f32 %v3208, %v3592
    %v3594 = vpop.f32.mrb[0].mxu0
    %3595 = vmatprep.mubr.f32.mxu0 %v2070
    %3596 = vmatmul.mubr.f32.gmra.mrb[0].mxu0 %v2069
    %v3597 = vpop.f32.mrb[0].mxu0
    %v3598 = vadd.f32 %v3213, %v3597
    %v3599 = vpop.f32.mrb[0].mxu0
    %3600 = vmatprep.mubr.f32.mxu0 %v2079
    %3601 = vmatmul.mubr.f32.gmra.mrb[0].mxu0 %v2078
    %v3602 = vpop.f32.mrb[0].mxu0
    %v3603 = vadd.f32 %v3218, %v3602
    %v3604 = vpop.f32.mrb[0].mxu0
    %3605 = vmatprep.mubr.f32.mxu0 %v2088
    %3606 = vmatmul.mubr.f32.gmra.mrb[0].mxu0 %v2087
    %v3607 = vpop.f32.mrb[0].mxu0
    %v3608 = vadd.f32 %v3223, %v3607
    %v3609 = vpop.f32.mrb[0].mxu0
    %3610 = vmatprep.mubr.f32.mxu0 %v2097
    %3611 = vmatmul.mubr.f32.gmra.mrb[0].mxu0 %v2096
    %v3612 = vpop.f32.mrb[0].mxu0
    %v3613 = vadd.f32 %v3228, %v3612
    %v3614 = vpop.f32.mrb[0].mxu0
    %3615 = vmatprep.mubr.f32.mxu0 %v2106
    %3616 = vmatmul.mubr.f32.gmra.mrb[0].mxu0 %v2105
    %v3617 = vpop.f32.mrb[0].mxu0
    %v3618 = vadd.f32 %v3233, %v3617
    %v3619 = vpop.f32.mrb[0].mxu0
    %3620 = vmatprep.mubr.f32.mxu0 %v2115
    %3621 = vmatmul.mubr.f32.gmra.mrb[0].mxu0 %v2114
    %v3622 = vpop.f32.mrb[0].mxu0
    %v3623 = vadd.f32 %v3238, %v3622
    %v3624 = vpop.f32.mrb[0].mxu0
    %3625 = vmatprep.mubr.f32.mxu0 %v2124
    %3626 = vmatmul.mubr.f32.gmra.mrb[0].mxu0 %v2123
    %v3627 = vpop.f32.mrb[0].mxu0
    %v3628 = vadd.f32 %v3243, %v3627
    %v3629 = vpop.f32.mrb[0].mxu0
    %3630 = vmatprep.mubr.f32.mxu0 %v2133
    %3631 = vmatmul.mubr.f32.gmra.mrb[0].mxu0 %v2132
    %v3632 = vpop.f32.mrb[0].mxu0
    %v3633 = vadd.f32 %v3248, %v3632
    %v3634 = vpop.f32.mrb[0].mxu0
    %3635 = vmatprep.mubr.f32.mxu0 %v2142
    %3636 = vmatmul.mubr.f32.gmra.mrb[0].mxu0 %v2141
    %v3637 = vpop.f32.mrb[0].mxu0
    %v3638 = vadd.f32 %v3253, %v3637
    %v3639 = vpop.f32.mrb[0].mxu0
    %3640 = vmatprep.mubr.f32.mxu0 %v2151
    %3641 = vmatmul.mubr.f32.gmra.mrb[0].mxu0 %v2150
    %v3642 = vpop.f32.mrb[0].mxu0
    %v3643 = vadd.f32 %v3258, %v3642
    %v3644 = vpop.f32.mrb[0].mxu0
    %3645 = vmatprep.mubr.f32.mxu0 %v2160
    %3646 = vmatmul.mubr.f32.gmra.mrb[0].mxu0 %v2159
    %v3647 = vpop.f32.mrb[0].mxu0
    %v3648 = vadd.f32 %v3263, %v3647
    %v3649 = vpop.f32.mrb[0].mxu0
    %3650 = vmatprep.mubr.f32.mxu0 %v2169
    %3651 = vmatmul.mubr.f32.gmra.mrb[0].mxu0 %v2168
    %v3652 = vpop.f32.mrb[0].mxu0
    %v3653 = vadd.f32 %v3268, %v3652
    %v3654 = vpop.f32.mrb[0].mxu0
    %3655 = vmatprep.mubr.f32.mxu0 %v2178
    %3656 = vmatmul.mubr.f32.gmra.mrb[0].mxu0 %v2177
    %v3657 = vpop.f32.mrb[0].mxu0
    %v3658 = vadd.f32 %v3273, %v3657
    %v3659 = vpop.f32.mrb[0].mxu0
    %3660 = vmatprep.mubr.f32.mxu0 %v2187
    %3661 = vmatmul.mubr.f32.gmra.mrb[0].mxu0 %v2186
    %v3662 = vpop.f32.mrb[0].mxu0
    %v3663 = vadd.f32 %v3278, %v3662
    %v3664 = vpop.f32.mrb[0].mxu0
    %3665 = vmatprep.mubr.f32.mxu0 %v2196
    %3666 = vmatmul.mubr.f32.gmra.mrb[0].mxu0 %v2195
    %v3667 = vpop.f32.mrb[0].mxu0
    %v3668 = vadd.f32 %v3283, %v3667
    %v3669 = vpop.f32.mrb[0].mxu0
    %3670 = vmatprep.mubr.f32.mxu0 %v2205
    %3671 = vmatmul.mubr.f32.gmra.mrb[0].mxu0 %v2204
    %v3672 = vpop.f32.mrb[0].mxu0
    %v3673 = vadd.f32 %v3288, %v3672
    %v3674 = vpop.f32.mrb[0].mxu0
    %3675 = vmatprep.mubr.f32.mxu0 %v2214
    %3676 = vmatmul.mubr.f32.gmra.mrb[0].mxu0 %v2213
    %v3677 = vpop.f32.mrb[0].mxu0
    %v3678 = vadd.f32 %v3293, %v3677
    %v3679 = vpop.f32.mrb[0].mxu0
    %3680 = vmatprep.mubr.f32.mxu0 %v2223
    %3681 = vmatmul.mubr.f32.gmra.mrb[0].mxu0 %v2222
    %v3682 = vpop.f32.mrb[0].mxu0
    %v3683 = vadd.f32 %v3298, %v3682
    %v3684 = vpop.f32.mrb[0].mxu0
    %3685 = vmatprep.mubr.f32.mxu0 %v2232
    %3686 = vmatmul.mubr.f32.gmra.mrb[0].mxu0 %v2231
    %v3687 = vpop.f32.mrb[0].mxu0
    %v3688 = vadd.f32 %v3303, %v3687
    %v3689 = vpop.f32.mrb[0].mxu0
    %3690 = vmatprep.mubr.f32.mxu0 %v2241
    %3691 = vmatmul.mubr.f32.gmra.mrb[0].mxu0 %v2240
    %v3692 = vpop.f32.mrb[0].mxu0
    %v3693 = vadd.f32 %v3308, %v3692
    %v3694 = vpop.f32.mrb[0].mxu0
    %3695 = vmatprep.mubr.f32.mxu0 %v2250
    %3696 = vmatmul.mubr.f32.gmra.mrb[0].mxu0 %v2249
    %v3697 = vpop.f32.mrb[0].mxu0
    %v3698 = vadd.f32 %v3313, %v3697
    %v3699 = vpop.f32.mrb[0].mxu0
    %3700 = vmatprep.mubr.f32.mxu0 %v2259
    %3701 = vmatmul.mubr.f32.gmra.mrb[0].mxu0 %v2258
    %v3702 = vpop.f32.mrb[0].mxu0
    %v3703 = vadd.f32 %v3318, %v3702
    %v3704 = vpop.f32.mrb[0].mxu0
    %3705 = vmatprep.mubr.f32.mxu0 %v2268
    %3706 = vmatmul.mubr.f32.gmra.mrb[0].mxu0 %v2267
    %v3707 = vpop.f32.mrb[0].mxu0
    %v3708 = vadd.f32 %v3323, %v3707
    %v3709 = vpop.f32.mrb[0].mxu0
    %3710 = vmatprep.mubr.f32.mxu0 %v2277
    %3711 = vmatmul.mubr.f32.gmra.mrb[0].mxu0 %v2276
    %v3712 = vpop.f32.mrb[0].mxu0
    %v3713 = vadd.f32 %v3328, %v3712
    %v3714 = vpop.f32.mrb[0].mxu0
    %3715 = vmatprep.mubr.f32.mxu0 %v2286
    %3716 = vmatmul.mubr.f32.gmra.mrb[0].mxu0 %v2285
    %v3717 = vpop.f32.mrb[0].mxu0
    %v3718 = vadd.f32 %v3333, %v3717
    %v3719 = vpop.f32.mrb[0].mxu0
    %3720 = vmatprep.mubr.f32.mxu0 %v2295
    %3721 = vmatmul.mubr.f32.gmra.mrb[0].mxu0 %v2294
    %v3722 = vpop.f32.mrb[0].mxu0
    %v3723 = vadd.f32 %v3338, %v3722
    %v3724 = vpop.f32.mrb[0].mxu0
    %3725 = vmatprep.mubr.f32.mxu0 %v2304
    %3726 = vmatmul.mubr.f32.gmra.mrb[0].mxu0 %v2303
    %v3727 = vpop.f32.mrb[0].mxu0
    %v3728 = vadd.f32 %v3343, %v3727
    %v3729 = vpop.f32.mrb[0].mxu0
    %3730 = vmatprep.mubr.f32.mxu0 %v2313
    %3731 = vmatmul.mubr.f32.gmra.mrb[0].mxu0 %v2312
    %v3732 = vpop.f32.mrb[0].mxu0
    %v3733 = vadd.f32 %v3348, %v3732
    %v3734 = vpop.f32.mrb[0].mxu0
    %3735 = vmatprep.mubr.f32.mxu0 %v2322
    %3736 = vmatmul.mubr.f32.gmra.mrb[0].mxu0 %v2321
    %v3737 = vpop.f32.mrb[0].mxu0
    %v3738 = vadd.f32 %v3353, %v3737
    %v3739 = vpop.f32.mrb[0].mxu0
    %3740 = vmatprep.mubr.f32.mxu0 %v2331
    %3741 = vmatmul.mubr.f32.gmra.mrb[0].mxu0 %v2330
    %v3742 = vpop.f32.mrb[0].mxu0
    %v3743 = vadd.f32 %v3358, %v3742
    %v3744 = vpop.f32.mrb[0].mxu0
    %3745 = vmatprep.mubr.f32.mxu0 %v2340
    %3746 = vmatmul.mubr.f32.gmra.mrb[0].mxu0 %v2339
    %v3747 = vpop.f32.mrb[0].mxu0
    %v3748 = vadd.f32 %v3363, %v3747
    %v3749 = vpop.f32.mrb[0].mxu0
    %3750 = vmatprep.mubr.f32.mxu0 %v2349
    %3751 = vmatmul.mubr.f32.gmra.mrb[0].mxu0 %v2348
    %v3752 = vpop.f32.mrb[0].mxu0
    %v3753 = vadd.f32 %v3368, %v3752
    %v3754 = vpop.f32.mrb[0].mxu0
    %3755 = vmatprep.mubr.f32.mxu0 %v2358
    %3756 = vmatmul.mubr.f32.gmra.mrb[0].mxu0 %v2357
    %v3757 = vpop.f32.mrb[0].mxu0
    %v3758 = vadd.f32 %v3373, %v3757
    %v3759 = vpop.f32.mrb[0].mxu0
    %3760 = vmatprep.mubr.f32.mxu0 %v2367
    %3761 = vmatmul.mubr.f32.gmra.mrb[0].mxu0 %v2366
    %v3762 = vpop.f32.mrb[0].mxu0
    %v3763 = vadd.f32 %v3378, %v3762
    %v3764 = vpop.f32.mrb[0].mxu0
    %3765 = vmatprep.mubr.f32.mxu0 %v2376
    %3766 = vmatmul.mubr.f32.gmra.mrb[0].mxu0 %v2375
    %v3767 = vpop.f32.mrb[0].mxu0
    %v3768 = vadd.f32 %v3383, %v3767
    %v3769 = vpop.f32.mrb[0].mxu0
    %3770 = vmatprep.mubr.f32.mxu0 %v2385
    %3771 = vmatmul.mubr.f32.gmra.mrb[0].mxu0 %v2384
    %v3772 = vpop.f32.mrb[0].mxu0
    %v3773 = vadd.f32 %v3388, %v3772
    %v3774 = vpop.f32.mrb[0].mxu0
    %3775 = vmatprep.mubr.f32.mxu0 %v2394
    %3776 = vmatmul.mubr.f32.gmra.mrb[0].mxu0 %v2393
    %v3777 = vpop.f32.mrb[0].mxu0
    %v3778 = vadd.f32 %v3393, %v3777
    %v3779 = vpop.f32.mrb[0].mxu0
    %3780 = vmatprep.mubr.f32.mxu0 %v2403
    %3781 = vmatmul.mubr.f32.gmra.mrb[0].mxu0 %v2402
    %v3782 = vpop.f32.mrb[0].mxu0
    %v3783 = vadd.f32 %v3398, %v3782
    %v3784 = vpop.f32.mrb[0].mxu0
    %3785 = vmatprep.mubr.f32.mxu0 %v2412
    %3786 = vmatmul.mubr.f32.gmra.mrb[0].mxu0 %v2411
    %v3787 = vpop.f32.mrb[0].mxu0
    %v3788 = vadd.f32 %v3403, %v3787
    %v3789 = vpop.f32.mrb[0].mxu0
    %3790 = vmatprep.mubr.f32.mxu0 %v2421
    %3791 = vmatmul.mubr.f32.gmra.mrb[0].mxu0 %v2420
    %v3792 = vpop.f32.mrb[0].mxu0
    %v3793 = vadd.f32 %v3408, %v3792
    %v3794 = vpop.f32.mrb[0].mxu0
    %3795 = vmatprep.mubr.f32.mxu0 %v2430
    %3796 = vmatmul.mubr.f32.gmra.mrb[0].mxu0 %v2429
    %v3797 = vpop.f32.mrb[0].mxu0
    %v3798 = vadd.f32 %v3413, %v3797
    %v3799 = vpop.f32.mrb[0].mxu0
    %3800 = vmatprep.mubr.f32.mxu0 %v2439
    %3801 = vmatmul.mubr.f32.gmra.mrb[0].mxu0 %v2438
    %v3802 = vpop.f32.mrb[0].mxu0
    %v3803 = vadd.f32 %v3418, %v3802
    %v3804 = vpop.f32.mrb[0].mxu0
    %3805 = vmatprep.mubr.f32.mxu0 %v2448
    %3806 = vmatmul.mubr.f32.gmra.mrb[0].mxu0 %v2447
    %v3807 = vpop.f32.mrb[0].mxu0
    %v3808 = vadd.f32 %v3423, %v3807
    %v3809 = vpop.f32.mrb[0].mxu0
    %3810 = vmatprep.mubr.f32.mxu0 %v2457
    %3811 = vmatmul.mubr.f32.gmra.mrb[0].mxu0 %v2456
    %v3812 = vpop.f32.mrb[0].mxu0
    %v3813 = vadd.f32 %v3428, %v3812
    %v3814 = vpop.f32.mrb[0].mxu0
    %3815 = vmatprep.mubr.f32.mxu0 %v2466
    %3816 = vmatmul.mubr.f32.gmra.mrb[0].mxu0 %v2465
    %v3817 = vpop.f32.mrb[0].mxu0
    %v3818 = vadd.f32 %v3433, %v3817
    %v3819 = vpop.f32.mrb[0].mxu0
    %3820 = vmatprep.mubr.f32.mxu0 %v2475
    %3821 = vmatmul.mubr.f32.gmra.mrb[0].mxu0 %v2474
    %v3822 = vpop.f32.mrb[0].mxu0
    %v3823 = vadd.f32 %v3438, %v3822
    %v3824 = vpop.f32.mrb[0].mxu0
    %3825 = vmatprep.mubr.f32.mxu0 %v2484
    %3826 = vmatmul.mubr.f32.gmra.mrb[0].mxu0 %v2483
    %v3827 = vpop.f32.mrb[0].mxu0
    %v3828 = vadd.f32 %v3443, %v3827
    %v3829 = vpop.f32.mrb[0].mxu0
    %3830 = vmatprep.mubr.f32.mxu0 %v2493
    %3831 = vmatmul.mubr.f32.gmra.mrb[0].mxu0 %v2492
    %v3832 = vpop.f32.mrb[0].mxu0
    %v3833 = vadd.f32 %v3448, %v3832
    %v3834 = vpop.f32.mrb[0].mxu0
    %3835 = vmatprep.mubr.f32.mxu0 %v2502
    %3836 = vmatmul.mubr.f32.gmra.mrb[0].mxu0 %v2501
    %v3837 = vpop.f32.mrb[0].mxu0
    %v3838 = vadd.f32 %v3453, %v3837
    %v3839 = vpop.f32.mrb[0].mxu0
    %3840 = vmatprep.mubr.f32.mxu0 %v2511
    %3841 = vmatmul.mubr.f32.gmra.mrb[0].mxu0 %v2510
    %v3842 = vpop.f32.mrb[0].mxu0
    %v3843 = vadd.f32 %v3458, %v3842
    %v3844 = vpop.f32.mrb[0].mxu0
    %3845 = vmatprep.mubr.f32.mxu0 %v2520
    %3846 = vmatmul.mubr.f32.gmra.mrb[0].mxu0 %v2519
    %v3847 = vpop.f32.mrb[0].mxu0
    %v3848 = vadd.f32 %v3463, %v3847
    %v3849 = vpop.f32.mrb[0].mxu0
    %3850 = vmatprep.mubr.f32.mxu0 %v2529
    %3851 = vmatmul.mubr.f32.gmra.mrb[0].mxu0 %v2528
    %v3852 = vpop.f32.mrb[0].mxu0
    %v3853 = vadd.f32 %v3468, %v3852
    %v3854 = vpop.f32.mrb[0].mxu0
    %3855 = vmatprep.mubr.f32.mxu0 %v2538
    %3856 = vmatmul.mubr.f32.gmra.mrb[0].mxu0 %v2537
    %v3857 = vpop.f32.mrb[0].mxu0
    %v3858 = vadd.f32 %v3473, %v3857
    %v3859 = vpop.f32.mrb[0].mxu0
    %3860 = vmatprep.mubr.f32.mxu0 %v2547
    %3861 = vmatmul.mubr.f32.gmra.mrb[0].mxu0 %v2546
    %v3862 = vpop.f32.mrb[0].mxu0
    %v3863 = vadd.f32 %v3478, %v3862
    %v3864 = vpop.f32.mrb[0].mxu0
    %3865 = vmatprep.mubr.f32.mxu0 %v2556
    %3866 = vmatmul.mubr.f32.gmra.mrb[0].mxu0 %v2555
    %v3867 = vpop.f32.mrb[0].mxu0
    %v3868 = vadd.f32 %v3483, %v3867
    %v3869 = vpop.f32.mrb[0].mxu0
    %3870 = vmatprep.mubr.f32.mxu0 %v2565
    %3871 = vmatmul.mubr.f32.gmra.mrb[0].mxu0 %v2564
    %v3872 = vpop.f32.mrb[0].mxu0
    %v3873 = vadd.f32 %v3488, %v3872
    %v3874 = vpop.f32.mrb[0].mxu0
    %3875 = vmatprep.mubr.f32.mxu0 %v2574
    %3876 = vmatmul.mubr.f32.gmra.mrb[0].mxu0 %v2573
    %v3877 = vpop.f32.mrb[0].mxu0
    %v3878 = vadd.f32 %v3493, %v3877
    %v3879 = vpop.f32.mrb[0].mxu0
    %3880 = vmatprep.mubr.f32.mxu0 %v2583
    %3881 = vmatmul.mubr.f32.gmra.mrb[0].mxu0 %v2582
    %v3882 = vpop.f32.mrb[0].mxu0
    %v3883 = vadd.f32 %v3498, %v3882
    %v3884 = vpop.f32.mrb[0].mxu0
    %3885 = vdwg.mxu0
    %3886 = vmatprep.subr.mxu0 0.0
    %3887 = vmatpush1.msra.mxu0 %v2683
    %3888 = vmatprep.subr.mxu0 0.0
    %3889 = vmatpush1.msra.mxu0 %v2684
    %3890 = vmatprep.subr.mxu0 0.0
    %3891 = vmatpush1.msra.mxu0 %v2685
    %3892 = vmatprep.subr.mxu0 0.0
    %3893 = vmatpush1.msra.mxu0 %v2686
    %3894 = vmatprep.subr.mxu0 0.0
    %3895 = vmatpush1.msra.mxu0 %v2687
    %3896 = vmatprep.subr.mxu0 0.0
    %3897 = vmatpush1.msra.mxu0 %v2688
    %3898 = vmatprep.subr.mxu0 0.0
    %3899 = vmatpush1.msra.mxu0 %v2689
    %3900 = vmatprep.subr.mxu0 0.0
    %3901 = vmatpush1.msra.mxu0 %v2690
    %3902 = vmatprep.subr.mxu0 0.0
    %3903 = vmatpush1.msra.mxu0 %v2691
    %3904 = vmatprep.subr.mxu0 0.0
    %3905 = vmatpush1.msra.mxu0 %v2692
    %3906 = vmatprep.subr.mxu0 0.0
    %3907 = vmatpush1.msra.mxu0 %v2693
    %3908 = vmatprep.subr.mxu0 0.0
    %3909 = vmatpush1.msra.mxu0 %v2694
    %3910 = vmatprep.subr.mxu0 0.0
    %3911 = vmatpush1.msra.mxu0 %v2695
    %3912 = vmatprep.subr.mxu0 0.0
    %3913 = vmatpush1.msra.mxu0 %v2696
    %3914 = vmatprep.subr.mxu0 0.0
    %3915 = vmatpush1.msra.mxu0 %v2697
    %3916 = vmatprep.subr.mxu0 0.0
    %3917 = vmatpush1.msra.mxu0 %v2698
    %3918 = vmatprep.subr.mxu0 0.0
    %3919 = vmatpush1.msra.mxu0 %v2699
    %3920 = vmatprep.subr.mxu0 0.0
    %3921 = vmatpush1.msra.mxu0 %v2700
    %3922 = vmatprep.subr.mxu0 0.0
    %3923 = vmatpush1.msra.mxu0 %v2701
    %3924 = vmatprep.subr.mxu0 0.0
    %3925 = vmatpush1.msra.mxu0 %v2702
    %3926 = vmatprep.subr.mxu0 0.0
    %3927 = vmatpush1.msra.mxu0 %v2703
    %3928 = vmatprep.subr.mxu0 0.0
    %3929 = vmatpush1.msra.mxu0 %v2704
    %3930 = vmatprep.subr.mxu0 0.0
    %3931 = vmatpush1.msra.mxu0 %v2705
    %3932 = vmatprep.subr.mxu0 0.0
    %3933 = vmatpush1.msra.mxu0 %v2706
    %3934 = vmatprep.subr.mxu0 0.0
    %3935 = vmatpush1.msra.mxu0 %v2707
    %3936 = vmatprep.subr.mxu0 0.0
    %3937 = vmatpush1.msra.mxu0 %v2708
    %3938 = vmatprep.subr.mxu0 0.0
    %3939 = vmatpush1.msra.mxu0 %v2709
    %3940 = vmatprep.subr.mxu0 0.0
    %3941 = vmatpush1.msra.mxu0 %v2710
    %3942 = vmatprep.subr.mxu0 0.0
    %3943 = vmatpush1.msra.mxu0 %v2711
    %3944 = vmatprep.subr.mxu0 0.0
    %3945 = vmatpush1.msra.mxu0 %v2712
    %3946 = vmatprep.subr.mxu0 0.0
    %3947 = vmatpush1.msra.mxu0 %v2713
    %3948 = vmatprep.subr.mxu0 0.0
    %3949 = vmatpush1.msra.mxu0 %v2714
    %3950 = vmatprep.mubr.f32.mxu0 %v2018
    %3951 = vmatmul.mubr.f32.gmra.mrb[0].mxu0 %v2017
    %v3952 = vpop.f32.mrb[0].mxu0
    %v3953 = vadd.f32 %v3568, %v3952
    %v3954 = vpop.f32.mrb[0].mxu0
    %3955 = vmatprep.mubr.f32.mxu0 %v2027
    %3956 = vmatmul.mubr.f32.gmra.mrb[0].mxu0 %v2026
    %v3957 = vpop.f32.mrb[0].mxu0
    %v3958 = vadd.f32 %v3573, %v3957
    %v3959 = vpop.f32.mrb[0].mxu0
    %3960 = vmatprep.mubr.f32.mxu0 %v2036
    %3961 = vmatmul.mubr.f32.gmra.mrb[0].mxu0 %v2035
    %v3962 = vpop.f32.mrb[0].mxu0
    %v3963 = vadd.f32 %v3578, %v3962
    %v3964 = vpop.f32.mrb[0].mxu0
    %3965 = vmatprep.mubr.f32.mxu0 %v2045
    %3966 = vmatmul.mubr.f32.gmra.mrb[0].mxu0 %v2044
    %v3967 = vpop.f32.mrb[0].mxu0
    %v3968 = vadd.f32 %v3583, %v3967
    %v3969 = vpop.f32.mrb[0].mxu0
    %3970 = vmatprep.mubr.f32.mxu0 %v2054
    %3971 = vmatmul.mubr.f32.gmra.mrb[0].mxu0 %v2053
    %v3972 = vpop.f32.mrb[0].mxu0
    %v3973 = vadd.f32 %v3588, %v3972
    %v3974 = vpop.f32.mrb[0].mxu0
    %3975 = vmatprep.mubr.f32.mxu0 %v2063
    %3976 = vmatmul.mubr.f32.gmra.mrb[0].mxu0 %v2062
    %v3977 = vpop.f32.mrb[0].mxu0
    %v3978 = vadd.f32 %v3593, %v3977
    %v3979 = vpop.f32.mrb[0].mxu0
    %3980 = vmatprep.mubr.f32.mxu0 %v2072
    %3981 = vmatmul.mubr.f32.gmra.mrb[0].mxu0 %v2071
    %v3982 = vpop.f32.mrb[0].mxu0
    %v3983 = vadd.f32 %v3598, %v3982
    %v3984 = vpop.f32.mrb[0].mxu0
    %3985 = vmatprep.mubr.f32.mxu0 %v2081
    %3986 = vmatmul.mubr.f32.gmra.mrb[0].mxu0 %v2080
    %v3987 = vpop.f32.mrb[0].mxu0
    %v3988 = vadd.f32 %v3603, %v3987
    %v3989 = vpop.f32.mrb[0].mxu0
    %3990 = vmatprep.mubr.f32.mxu0 %v2090
    %3991 = vmatmul.mubr.f32.gmra.mrb[0].mxu0 %v2089
    %v3992 = vpop.f32.mrb[0].mxu0
    %v3993 = vadd.f32 %v3608, %v3992
    %v3994 = vpop.f32.mrb[0].mxu0
    %3995 = vmatprep.mubr.f32.mxu0 %v2099
    %3996 = vmatmul.mubr.f32.gmra.mrb[0].mxu0 %v2098
    %v3997 = vpop.f32.mrb[0].mxu0
    %v3998 = vadd.f32 %v3613, %v3997
    %v3999 = vpop.f32.mrb[0].mxu0
    %4000 = vmatprep.mubr.f32.mxu0 %v2108
    %4001 = vmatmul.mubr.f32.gmra.mrb[0].mxu0 %v2107
    %v4002 = vpop.f32.mrb[0].mxu0
    %v4003 = vadd.f32 %v3618, %v4002
    %v4004 = vpop.f32.mrb[0].mxu0
    %4005 = vmatprep.mubr.f32.mxu0 %v2117
    %4006 = vmatmul.mubr.f32.gmra.mrb[0].mxu0 %v2116
    %v4007 = vpop.f32.mrb[0].mxu0
    %v4008 = vadd.f32 %v3623, %v4007
    %v4009 = vpop.f32.mrb[0].mxu0
    %4010 = vmatprep.mubr.f32.mxu0 %v2126
    %4011 = vmatmul.mubr.f32.gmra.mrb[0].mxu0 %v2125
    %v4012 = vpop.f32.mrb[0].mxu0
    %v4013 = vadd.f32 %v3628, %v4012
    %v4014 = vpop.f32.mrb[0].mxu0
    %4015 = vmatprep.mubr.f32.mxu0 %v2135
    %4016 = vmatmul.mubr.f32.gmra.mrb[0].mxu0 %v2134
    %v4017 = vpop.f32.mrb[0].mxu0
    %v4018 = vadd.f32 %v3633, %v4017
    %v4019 = vpop.f32.mrb[0].mxu0
    %4020 = vmatprep.mubr.f32.mxu0 %v2144
    %4021 = vmatmul.mubr.f32.gmra.mrb[0].mxu0 %v2143
    %v4022 = vpop.f32.mrb[0].mxu0
    %v4023 = vadd.f32 %v3638, %v4022
    %v4024 = vpop.f32.mrb[0].mxu0
    %4025 = vmatprep.mubr.f32.mxu0 %v2153
    %4026 = vmatmul.mubr.f32.gmra.mrb[0].mxu0 %v2152
    %v4027 = vpop.f32.mrb[0].mxu0
    %v4028 = vadd.f32 %v3643, %v4027
    %v4029 = vpop.f32.mrb[0].mxu0
    %4030 = vmatprep.mubr.f32.mxu0 %v2162
    %4031 = vmatmul.mubr.f32.gmra.mrb[0].mxu0 %v2161
    %v4032 = vpop.f32.mrb[0].mxu0
    %v4033 = vadd.f32 %v3648, %v4032
    %v4034 = vpop.f32.mrb[0].mxu0
    %4035 = vmatprep.mubr.f32.mxu0 %v2171
    %4036 = vmatmul.mubr.f32.gmra.mrb[0].mxu0 %v2170
    %v4037 = vpop.f32.mrb[0].mxu0
    %v4038 = vadd.f32 %v3653, %v4037
    %v4039 = vpop.f32.mrb[0].mxu0
    %4040 = vmatprep.mubr.f32.mxu0 %v2180
    %4041 = vmatmul.mubr.f32.gmra.mrb[0].mxu0 %v2179
    %v4042 = vpop.f32.mrb[0].mxu0
    %v4043 = vadd.f32 %v3658, %v4042
    %v4044 = vpop.f32.mrb[0].mxu0
    %4045 = vmatprep.mubr.f32.mxu0 %v2189
    %4046 = vmatmul.mubr.f32.gmra.mrb[0].mxu0 %v2188
    %v4047 = vpop.f32.mrb[0].mxu0
    %v4048 = vadd.f32 %v3663, %v4047
    %v4049 = vpop.f32.mrb[0].mxu0
    %4050 = vmatprep.mubr.f32.mxu0 %v2198
    %4051 = vmatmul.mubr.f32.gmra.mrb[0].mxu0 %v2197
    %v4052 = vpop.f32.mrb[0].mxu0
    %v4053 = vadd.f32 %v3668, %v4052
    %v4054 = vpop.f32.mrb[0].mxu0
    %4055 = vmatprep.mubr.f32.mxu0 %v2207
    %4056 = vmatmul.mubr.f32.gmra.mrb[0].mxu0 %v2206
    %v4057 = vpop.f32.mrb[0].mxu0
    %v4058 = vadd.f32 %v3673, %v4057
    %v4059 = vpop.f32.mrb[0].mxu0
    %4060 = vmatprep.mubr.f32.mxu0 %v2216
    %4061 = vmatmul.mubr.f32.gmra.mrb[0].mxu0 %v2215
    %v4062 = vpop.f32.mrb[0].mxu0
    %v4063 = vadd.f32 %v3678, %v4062
    %v4064 = vpop.f32.mrb[0].mxu0
    %4065 = vmatprep.mubr.f32.mxu0 %v2225
    %4066 = vmatmul.mubr.f32.gmra.mrb[0].mxu0 %v2224
    %v4067 = vpop.f32.mrb[0].mxu0
    %v4068 = vadd.f32 %v3683, %v4067
    %v4069 = vpop.f32.mrb[0].mxu0
    %4070 = vmatprep.mubr.f32.mxu0 %v2234
    %4071 = vmatmul.mubr.f32.gmra.mrb[0].mxu0 %v2233
    %v4072 = vpop.f32.mrb[0].mxu0
    %v4073 = vadd.f32 %v3688, %v4072
    %v4074 = vpop.f32.mrb[0].mxu0
    %4075 = vmatprep.mubr.f32.mxu0 %v2243
    %4076 = vmatmul.mubr.f32.gmra.mrb[0].mxu0 %v2242
    %v4077 = vpop.f32.mrb[0].mxu0
    %v4078 = vadd.f32 %v3693, %v4077
    %v4079 = vpop.f32.mrb[0].mxu0
    %4080 = vmatprep.mubr.f32.mxu0 %v2252
    %4081 = vmatmul.mubr.f32.gmra.mrb[0].mxu0 %v2251
    %v4082 = vpop.f32.mrb[0].mxu0
    %v4083 = vadd.f32 %v3698, %v4082
    %v4084 = vpop.f32.mrb[0].mxu0
    %4085 = vmatprep.mubr.f32.mxu0 %v2261
    %4086 = vmatmul.mubr.f32.gmra.mrb[0].mxu0 %v2260
    %v4087 = vpop.f32.mrb[0].mxu0
    %v4088 = vadd.f32 %v3703, %v4087
    %v4089 = vpop.f32.mrb[0].mxu0
    %4090 = vmatprep.mubr.f32.mxu0 %v2270
    %4091 = vmatmul.mubr.f32.gmra.mrb[0].mxu0 %v2269
    %v4092 = vpop.f32.mrb[0].mxu0
    %v4093 = vadd.f32 %v3708, %v4092
    %v4094 = vpop.f32.mrb[0].mxu0
    %4095 = vmatprep.mubr.f32.mxu0 %v2279
    %4096 = vmatmul.mubr.f32.gmra.mrb[0].mxu0 %v2278
    %v4097 = vpop.f32.mrb[0].mxu0
    %v4098 = vadd.f32 %v3713, %v4097
    %v4099 = vpop.f32.mrb[0].mxu0
    %4100 = vmatprep.mubr.f32.mxu0 %v2288
    %4101 = vmatmul.mubr.f32.gmra.mrb[0].mxu0 %v2287
    %v4102 = vpop.f32.mrb[0].mxu0
    %v4103 = vadd.f32 %v3718, %v4102
    %v4104 = vpop.f32.mrb[0].mxu0
    %4105 = vmatprep.mubr.f32.mxu0 %v2297
    %4106 = vmatmul.mubr.f32.gmra.mrb[0].mxu0 %v2296
    %v4107 = vpop.f32.mrb[0].mxu0
    %v4108 = vadd.f32 %v3723, %v4107
    %v4109 = vpop.f32.mrb[0].mxu0
    %4110 = vmatprep.mubr.f32.mxu0 %v2306
    %4111 = vmatmul.mubr.f32.gmra.mrb[0].mxu0 %v2305
    %v4112 = vpop.f32.mrb[0].mxu0
    %v4113 = vadd.f32 %v3728, %v4112
    %v4114 = vpop.f32.mrb[0].mxu0
    %4115 = vmatprep.mubr.f32.mxu0 %v2315
    %4116 = vmatmul.mubr.f32.gmra.mrb[0].mxu0 %v2314
    %v4117 = vpop.f32.mrb[0].mxu0
    %v4118 = vadd.f32 %v3733, %v4117
    %v4119 = vpop.f32.mrb[0].mxu0
    %4120 = vmatprep.mubr.f32.mxu0 %v2324
    %4121 = vmatmul.mubr.f32.gmra.mrb[0].mxu0 %v2323
    %v4122 = vpop.f32.mrb[0].mxu0
    %v4123 = vadd.f32 %v3738, %v4122
    %v4124 = vpop.f32.mrb[0].mxu0
    %4125 = vmatprep.mubr.f32.mxu0 %v2333
    %4126 = vmatmul.mubr.f32.gmra.mrb[0].mxu0 %v2332
    %v4127 = vpop.f32.mrb[0].mxu0
    %v4128 = vadd.f32 %v3743, %v4127
    %v4129 = vpop.f32.mrb[0].mxu0
    %4130 = vmatprep.mubr.f32.mxu0 %v2342
    %4131 = vmatmul.mubr.f32.gmra.mrb[0].mxu0 %v2341
    %v4132 = vpop.f32.mrb[0].mxu0
    %v4133 = vadd.f32 %v3748, %v4132
    %v4134 = vpop.f32.mrb[0].mxu0
    %4135 = vmatprep.mubr.f32.mxu0 %v2351
    %4136 = vmatmul.mubr.f32.gmra.mrb[0].mxu0 %v2350
    %v4137 = vpop.f32.mrb[0].mxu0
    %v4138 = vadd.f32 %v3753, %v4137
    %v4139 = vpop.f32.mrb[0].mxu0
    %4140 = vmatprep.mubr.f32.mxu0 %v2360
    %4141 = vmatmul.mubr.f32.gmra.mrb[0].mxu0 %v2359
    %v4142 = vpop.f32.mrb[0].mxu0
    %v4143 = vadd.f32 %v3758, %v4142
    %v4144 = vpop.f32.mrb[0].mxu0
    %4145 = vmatprep.mubr.f32.mxu0 %v2369
    %4146 = vmatmul.mubr.f32.gmra.mrb[0].mxu0 %v2368
    %v4147 = vpop.f32.mrb[0].mxu0
    %v4148 = vadd.f32 %v3763, %v4147
    %v4149 = vpop.f32.mrb[0].mxu0
    %4150 = vmatprep.mubr.f32.mxu0 %v2378
    %4151 = vmatmul.mubr.f32.gmra.mrb[0].mxu0 %v2377
    %v4152 = vpop.f32.mrb[0].mxu0
    %v4153 = vadd.f32 %v3768, %v4152
    %v4154 = vpop.f32.mrb[0].mxu0
    %4155 = vmatprep.mubr.f32.mxu0 %v2387
    %4156 = vmatmul.mubr.f32.gmra.mrb[0].mxu0 %v2386
    %v4157 = vpop.f32.mrb[0].mxu0
    %v4158 = vadd.f32 %v3773, %v4157
    %v4159 = vpop.f32.mrb[0].mxu0
    %4160 = vmatprep.mubr.f32.mxu0 %v2396
    %4161 = vmatmul.mubr.f32.gmra.mrb[0].mxu0 %v2395
    %v4162 = vpop.f32.mrb[0].mxu0
    %v4163 = vadd.f32 %v3778, %v4162
    %v4164 = vpop.f32.mrb[0].mxu0
    %4165 = vmatprep.mubr.f32.mxu0 %v2405
    %4166 = vmatmul.mubr.f32.gmra.mrb[0].mxu0 %v2404
    %v4167 = vpop.f32.mrb[0].mxu0
    %v4168 = vadd.f32 %v3783, %v4167
    %v4169 = vpop.f32.mrb[0].mxu0
    %4170 = vmatprep.mubr.f32.mxu0 %v2414
    %4171 = vmatmul.mubr.f32.gmra.mrb[0].mxu0 %v2413
    %v4172 = vpop.f32.mrb[0].mxu0
    %v4173 = vadd.f32 %v3788, %v4172
    %v4174 = vpop.f32.mrb[0].mxu0
    %4175 = vmatprep.mubr.f32.mxu0 %v2423
    %4176 = vmatmul.mubr.f32.gmra.mrb[0].mxu0 %v2422
    %v4177 = vpop.f32.mrb[0].mxu0
    %v4178 = vadd.f32 %v3793, %v4177
    %v4179 = vpop.f32.mrb[0].mxu0
    %4180 = vmatprep.mubr.f32.mxu0 %v2432
    %4181 = vmatmul.mubr.f32.gmra.mrb[0].mxu0 %v2431
    %v4182 = vpop.f32.mrb[0].mxu0
    %v4183 = vadd.f32 %v3798, %v4182
    %v4184 = vpop.f32.mrb[0].mxu0
    %4185 = vmatprep.mubr.f32.mxu0 %v2441
    %4186 = vmatmul.mubr.f32.gmra.mrb[0].mxu0 %v2440
    %v4187 = vpop.f32.mrb[0].mxu0
    %v4188 = vadd.f32 %v3803, %v4187
    %v4189 = vpop.f32.mrb[0].mxu0
    %4190 = vmatprep.mubr.f32.mxu0 %v2450
    %4191 = vmatmul.mubr.f32.gmra.mrb[0].mxu0 %v2449
    %v4192 = vpop.f32.mrb[0].mxu0
    %v4193 = vadd.f32 %v3808, %v4192
    %v4194 = vpop.f32.mrb[0].mxu0
    %4195 = vmatprep.mubr.f32.mxu0 %v2459
    %4196 = vmatmul.mubr.f32.gmra.mrb[0].mxu0 %v2458
    %v4197 = vpop.f32.mrb[0].mxu0
    %v4198 = vadd.f32 %v3813, %v4197
    %v4199 = vpop.f32.mrb[0].mxu0
    %4200 = vmatprep.mubr.f32.mxu0 %v2468
    %4201 = vmatmul.mubr.f32.gmra.mrb[0].mxu0 %v2467
    %v4202 = vpop.f32.mrb[0].mxu0
    %v4203 = vadd.f32 %v3818, %v4202
    %v4204 = vpop.f32.mrb[0].mxu0
    %4205 = vmatprep.mubr.f32.mxu0 %v2477
    %4206 = vmatmul.mubr.f32.gmra.mrb[0].mxu0 %v2476
    %v4207 = vpop.f32.mrb[0].mxu0
    %v4208 = vadd.f32 %v3823, %v4207
    %v4209 = vpop.f32.mrb[0].mxu0
    %4210 = vmatprep.mubr.f32.mxu0 %v2486
    %4211 = vmatmul.mubr.f32.gmra.mrb[0].mxu0 %v2485
    %v4212 = vpop.f32.mrb[0].mxu0
    %v4213 = vadd.f32 %v3828, %v4212
    %v4214 = vpop.f32.mrb[0].mxu0
    %4215 = vmatprep.mubr.f32.mxu0 %v2495
    %4216 = vmatmul.mubr.f32.gmra.mrb[0].mxu0 %v2494
    %v4217 = vpop.f32.mrb[0].mxu0
    %v4218 = vadd.f32 %v3833, %v4217
    %v4219 = vpop.f32.mrb[0].mxu0
    %4220 = vmatprep.mubr.f32.mxu0 %v2504
    %4221 = vmatmul.mubr.f32.gmra.mrb[0].mxu0 %v2503
    %v4222 = vpop.f32.mrb[0].mxu0
    %v4223 = vadd.f32 %v3838, %v4222
    %v4224 = vpop.f32.mrb[0].mxu0
    %4225 = vmatprep.mubr.f32.mxu0 %v2513
    %4226 = vmatmul.mubr.f32.gmra.mrb[0].mxu0 %v2512
    %v4227 = vpop.f32.mrb[0].mxu0
    %v4228 = vadd.f32 %v3843, %v4227
    %v4229 = vpop.f32.mrb[0].mxu0
    %4230 = vmatprep.mubr.f32.mxu0 %v2522
    %4231 = vmatmul.mubr.f32.gmra.mrb[0].mxu0 %v2521
    %v4232 = vpop.f32.mrb[0].mxu0
    %v4233 = vadd.f32 %v3848, %v4232
    %v4234 = vpop.f32.mrb[0].mxu0
    %4235 = vmatprep.mubr.f32.mxu0 %v2531
    %4236 = vmatmul.mubr.f32.gmra.mrb[0].mxu0 %v2530
    %v4237 = vpop.f32.mrb[0].mxu0
    %v4238 = vadd.f32 %v3853, %v4237
    %v4239 = vpop.f32.mrb[0].mxu0
    %4240 = vmatprep.mubr.f32.mxu0 %v2540
    %4241 = vmatmul.mubr.f32.gmra.mrb[0].mxu0 %v2539
    %v4242 = vpop.f32.mrb[0].mxu0
    %v4243 = vadd.f32 %v3858, %v4242
    %v4244 = vpop.f32.mrb[0].mxu0
    %4245 = vmatprep.mubr.f32.mxu0 %v2549
    %4246 = vmatmul.mubr.f32.gmra.mrb[0].mxu0 %v2548
    %v4247 = vpop.f32.mrb[0].mxu0
    %v4248 = vadd.f32 %v3863, %v4247
    %v4249 = vpop.f32.mrb[0].mxu0
    %4250 = vmatprep.mubr.f32.mxu0 %v2558
    %4251 = vmatmul.mubr.f32.gmra.mrb[0].mxu0 %v2557
    %v4252 = vpop.f32.mrb[0].mxu0
    %v4253 = vadd.f32 %v3868, %v4252
    %v4254 = vpop.f32.mrb[0].mxu0
    %4255 = vmatprep.mubr.f32.mxu0 %v2567
    %4256 = vmatmul.mubr.f32.gmra.mrb[0].mxu0 %v2566
    %v4257 = vpop.f32.mrb[0].mxu0
    %v4258 = vadd.f32 %v3873, %v4257
    %v4259 = vpop.f32.mrb[0].mxu0
    %4260 = vmatprep.mubr.f32.mxu0 %v2576
    %4261 = vmatmul.mubr.f32.gmra.mrb[0].mxu0 %v2575
    %v4262 = vpop.f32.mrb[0].mxu0
    %v4263 = vadd.f32 %v3878, %v4262
    %v4264 = vpop.f32.mrb[0].mxu0
    %4265 = vmatprep.mubr.f32.mxu0 %v2585
    %4266 = vmatmul.mubr.f32.gmra.mrb[0].mxu0 %v2584
    %v4267 = vpop.f32.mrb[0].mxu0
    %v4268 = vadd.f32 %v3883, %v4267
    %v4269 = vpop.f32.mrb[0].mxu0
    %4270 = vdwg.mxu0
    %4271 = vmatprep.subr.mxu0 0.0
    %4272 = vmatpush1.msra.mxu0 %v2715
    %4273 = vmatprep.subr.mxu0 0.0
    %4274 = vmatpush1.msra.mxu0 %v2716
    %4275 = vmatprep.subr.mxu0 0.0
    %4276 = vmatpush1.msra.mxu0 %v2717
    %4277 = vmatprep.subr.mxu0 0.0
    %4278 = vmatpush1.msra.mxu0 %v2718
    %4279 = vmatprep.subr.mxu0 0.0
    %4280 = vmatpush1.msra.mxu0 %v2719
    %4281 = vmatprep.subr.mxu0 0.0
    %4282 = vmatpush1.msra.mxu0 %v2720
    %4283 = vmatprep.subr.mxu0 0.0
    %4284 = vmatpush1.msra.mxu0 %v2721
    %4285 = vmatprep.subr.mxu0 0.0
    %4286 = vmatpush1.msra.mxu0 %v2722
    %4287 = vmatprep.subr.mxu0 0.0
    %4288 = vmatpush1.msra.mxu0 %v2723
    %4289 = vmatprep.subr.mxu0 0.0
    %4290 = vmatpush1.msra.mxu0 %v2724
    %4291 = vmatprep.subr.mxu0 0.0
    %4292 = vmatpush1.msra.mxu0 %v2725
    %4293 = vmatprep.subr.mxu0 0.0
    %4294 = vmatpush1.msra.mxu0 %v2726
    %4295 = vmatprep.subr.mxu0 0.0
    %4296 = vmatpush1.msra.mxu0 %v2727
    %4297 = vmatprep.subr.mxu0 0.0
    %4298 = vmatpush1.msra.mxu0 %v2728
    %4299 = vmatprep.subr.mxu0 0.0
    %4300 = vmatpush1.msra.mxu0 %v2729
    %4301 = vmatprep.subr.mxu0 0.0
    %4302 = vmatpush1.msra.mxu0 %v2730
    %4303 = vmatprep.subr.mxu0 0.0
    %4304 = vmatpush1.msra.mxu0 0.0
    %4305 = vmatprep.subr.mxu0 0.0
    %4306 = vmatpush1.msra.mxu0 0.0
    %4307 = vmatprep.subr.mxu0 0.0
    %4308 = vmatpush1.msra.mxu0 0.0
    %4309 = vmatprep.subr.mxu0 0.0
    %4310 = vmatpush1.msra.mxu0 0.0
    %4311 = vmatprep.subr.mxu0 0.0
    %4312 = vmatpush1.msra.mxu0 0.0
    %4313 = vmatprep.subr.mxu0 0.0
    %4314 = vmatpush1.msra.mxu0 0.0
    %4315 = vmatprep.subr.mxu0 0.0
    %4316 = vmatpush1.msra.mxu0 0.0
    %4317 = vmatprep.subr.mxu0 0.0
    %4318 = vmatpush1.msra.mxu0 0.0
    %4319 = vmatprep.subr.mxu0 0.0
    %4320 = vmatpush1.msra.mxu0 0.0
    %4321 = vmatprep.subr.mxu0 0.0
    %4322 = vmatpush1.msra.mxu0 0.0
    %4323 = vmatprep.subr.mxu0 0.0
    %4324 = vmatpush1.msra.mxu0 0.0
    %4325 = vmatprep.subr.mxu0 0.0
    %4326 = vmatpush1.msra.mxu0 0.0
    %4327 = vmatprep.subr.mxu0 0.0
    %4328 = vmatpush1.msra.mxu0 0.0
    %4329 = vmatprep.subr.mxu0 0.0
    %4330 = vmatpush1.msra.mxu0 0.0
    %4331 = vmatprep.subr.mxu0 0.0
    %4332 = vmatpush1.msra.mxu0 0.0
    %4333 = vmatprep.subr.mxu0 0.0
    %4334 = vmatpush1.msra.mxu0 0.0
    %4335 = vmatprep.mubr.f32.mxu0 0.0
    %4336 = vmatmul.mubr.f32.gmra.mrb[0].mxu0 %v2019
    %v4337 = vpop.f32.mrb[0].mxu0
    %v4338 = vadd.f32 %v3953, %v4337
    %v4339 = vpop.f32.mrb[0].mxu0
    %4340 = vmatprep.mubr.f32.mxu0 0.0
    %4341 = vmatmul.mubr.f32.gmra.mrb[0].mxu0 %v2028
    %v4342 = vpop.f32.mrb[0].mxu0
    %v4343 = vadd.f32 %v3958, %v4342
    %v4344 = vpop.f32.mrb[0].mxu0
    %4345 = vmatprep.mubr.f32.mxu0 0.0
    %4346 = vmatmul.mubr.f32.gmra.mrb[0].mxu0 %v2037
    %v4347 = vpop.f32.mrb[0].mxu0
    %v4348 = vadd.f32 %v3963, %v4347
    %v4349 = vpop.f32.mrb[0].mxu0
    %4350 = vmatprep.mubr.f32.mxu0 0.0
    %4351 = vmatmul.mubr.f32.gmra.mrb[0].mxu0 %v2046
    %v4352 = vpop.f32.mrb[0].mxu0
    %v4353 = vadd.f32 %v3968, %v4352
    %v4354 = vpop.f32.mrb[0].mxu0
    %4355 = vmatprep.mubr.f32.mxu0 0.0
    %4356 = vmatmul.mubr.f32.gmra.mrb[0].mxu0 %v2055
    %v4357 = vpop.f32.mrb[0].mxu0
    %v4358 = vadd.f32 %v3973, %v4357
    %v4359 = vpop.f32.mrb[0].mxu0
    %4360 = vmatprep.mubr.f32.mxu0 0.0
    %4361 = vmatmul.mubr.f32.gmra.mrb[0].mxu0 %v2064
    %v4362 = vpop.f32.mrb[0].mxu0
    %v4363 = vadd.f32 %v3978, %v4362
    %v4364 = vpop.f32.mrb[0].mxu0
    %4365 = vmatprep.mubr.f32.mxu0 0.0
    %4366 = vmatmul.mubr.f32.gmra.mrb[0].mxu0 %v2073
    %v4367 = vpop.f32.mrb[0].mxu0
    %v4368 = vadd.f32 %v3983, %v4367
    %v4369 = vpop.f32.mrb[0].mxu0
    %4370 = vmatprep.mubr.f32.mxu0 0.0
    %4371 = vmatmul.mubr.f32.gmra.mrb[0].mxu0 %v2082
    %v4372 = vpop.f32.mrb[0].mxu0
    %v4373 = vadd.f32 %v3988, %v4372
    %v4374 = vpop.f32.mrb[0].mxu0
    %4375 = vmatprep.mubr.f32.mxu0 0.0
    %4376 = vmatmul.mubr.f32.gmra.mrb[0].mxu0 %v2091
    %v4377 = vpop.f32.mrb[0].mxu0
    %v4378 = vadd.f32 %v3993, %v4377
    %v4379 = vpop.f32.mrb[0].mxu0
    %4380 = vmatprep.mubr.f32.mxu0 0.0
    %4381 = vmatmul.mubr.f32.gmra.mrb[0].mxu0 %v2100
    %v4382 = vpop.f32.mrb[0].mxu0
    %v4383 = vadd.f32 %v3998, %v4382
    %v4384 = vpop.f32.mrb[0].mxu0
    %4385 = vmatprep.mubr.f32.mxu0 0.0
    %4386 = vmatmul.mubr.f32.gmra.mrb[0].mxu0 %v2109
    %v4387 = vpop.f32.mrb[0].mxu0
    %v4388 = vadd.f32 %v4003, %v4387
    %v4389 = vpop.f32.mrb[0].mxu0
    %4390 = vmatprep.mubr.f32.mxu0 0.0
    %4391 = vmatmul.mubr.f32.gmra.mrb[0].mxu0 %v2118
    %v4392 = vpop.f32.mrb[0].mxu0
    %v4393 = vadd.f32 %v4008, %v4392
    %v4394 = vpop.f32.mrb[0].mxu0
    %4395 = vmatprep.mubr.f32.mxu0 0.0
    %4396 = vmatmul.mubr.f32.gmra.mrb[0].mxu0 %v2127
    %v4397 = vpop.f32.mrb[0].mxu0
    %v4398 = vadd.f32 %v4013, %v4397
    %v4399 = vpop.f32.mrb[0].mxu0
    %4400 = vmatprep.mubr.f32.mxu0 0.0
    %4401 = vmatmul.mubr.f32.gmra.mrb[0].mxu0 %v2136
    %v4402 = vpop.f32.mrb[0].mxu0
    %v4403 = vadd.f32 %v4018, %v4402
    %v4404 = vpop.f32.mrb[0].mxu0
    %4405 = vmatprep.mubr.f32.mxu0 0.0
    %4406 = vmatmul.mubr.f32.gmra.mrb[0].mxu0 %v2145
    %v4407 = vpop.f32.mrb[0].mxu0
    %v4408 = vadd.f32 %v4023, %v4407
    %v4409 = vpop.f32.mrb[0].mxu0
    %4410 = vmatprep.mubr.f32.mxu0 0.0
    %4411 = vmatmul.mubr.f32.gmra.mrb[0].mxu0 %v2154
    %v4412 = vpop.f32.mrb[0].mxu0
    %v4413 = vadd.f32 %v4028, %v4412
    %v4414 = vpop.f32.mrb[0].mxu0
    %4415 = vmatprep.mubr.f32.mxu0 0.0
    %4416 = vmatmul.mubr.f32.gmra.mrb[0].mxu0 %v2163
    %v4417 = vpop.f32.mrb[0].mxu0
    %v4418 = vadd.f32 %v4033, %v4417
    %v4419 = vpop.f32.mrb[0].mxu0
    %4420 = vmatprep.mubr.f32.mxu0 0.0
    %4421 = vmatmul.mubr.f32.gmra.mrb[0].mxu0 %v2172
    %v4422 = vpop.f32.mrb[0].mxu0
    %v4423 = vadd.f32 %v4038, %v4422
    %v4424 = vpop.f32.mrb[0].mxu0
    %4425 = vmatprep.mubr.f32.mxu0 0.0
    %4426 = vmatmul.mubr.f32.gmra.mrb[0].mxu0 %v2181
    %v4427 = vpop.f32.mrb[0].mxu0
    %v4428 = vadd.f32 %v4043, %v4427
    %v4429 = vpop.f32.mrb[0].mxu0
    %4430 = vmatprep.mubr.f32.mxu0 0.0
    %4431 = vmatmul.mubr.f32.gmra.mrb[0].mxu0 %v2190
    %v4432 = vpop.f32.mrb[0].mxu0
    %v4433 = vadd.f32 %v4048, %v4432
    %v4434 = vpop.f32.mrb[0].mxu0
    %4435 = vmatprep.mubr.f32.mxu0 0.0
    %4436 = vmatmul.mubr.f32.gmra.mrb[0].mxu0 %v2199
    %v4437 = vpop.f32.mrb[0].mxu0
    %v4438 = vadd.f32 %v4053, %v4437
    %v4439 = vpop.f32.mrb[0].mxu0
    %4440 = vmatprep.mubr.f32.mxu0 0.0
    %4441 = vmatmul.mubr.f32.gmra.mrb[0].mxu0 %v2208
    %v4442 = vpop.f32.mrb[0].mxu0
    %v4443 = vadd.f32 %v4058, %v4442
    %v4444 = vpop.f32.mrb[0].mxu0
    %4445 = vmatprep.mubr.f32.mxu0 0.0
    %4446 = vmatmul.mubr.f32.gmra.mrb[0].mxu0 %v2217
    %v4447 = vpop.f32.mrb[0].mxu0
    %v4448 = vadd.f32 %v4063, %v4447
    %v4449 = vpop.f32.mrb[0].mxu0
    %4450 = vmatprep.mubr.f32.mxu0 0.0
    %4451 = vmatmul.mubr.f32.gmra.mrb[0].mxu0 %v2226
    %v4452 = vpop.f32.mrb[0].mxu0
    %v4453 = vadd.f32 %v4068, %v4452
    %v4454 = vpop.f32.mrb[0].mxu0
    %4455 = vmatprep.mubr.f32.mxu0 0.0
    %4456 = vmatmul.mubr.f32.gmra.mrb[0].mxu0 %v2235
    %v4457 = vpop.f32.mrb[0].mxu0
    %v4458 = vadd.f32 %v4073, %v4457
    %v4459 = vpop.f32.mrb[0].mxu0
    %4460 = vmatprep.mubr.f32.mxu0 0.0
    %4461 = vmatmul.mubr.f32.gmra.mrb[0].mxu0 %v2244
    %v4462 = vpop.f32.mrb[0].mxu0
    %v4463 = vadd.f32 %v4078, %v4462
    %v4464 = vpop.f32.mrb[0].mxu0
    %4465 = vmatprep.mubr.f32.mxu0 0.0
    %4466 = vmatmul.mubr.f32.gmra.mrb[0].mxu0 %v2253
    %v4467 = vpop.f32.mrb[0].mxu0
    %v4468 = vadd.f32 %v4083, %v4467
    %v4469 = vpop.f32.mrb[0].mxu0
    %4470 = vmatprep.mubr.f32.mxu0 0.0
    %4471 = vmatmul.mubr.f32.gmra.mrb[0].mxu0 %v2262
    %v4472 = vpop.f32.mrb[0].mxu0
    %v4473 = vadd.f32 %v4088, %v4472
    %v4474 = vpop.f32.mrb[0].mxu0
    %4475 = vmatprep.mubr.f32.mxu0 0.0
    %4476 = vmatmul.mubr.f32.gmra.mrb[0].mxu0 %v2271
    %v4477 = vpop.f32.mrb[0].mxu0
    %v4478 = vadd.f32 %v4093, %v4477
    %v4479 = vpop.f32.mrb[0].mxu0
    %4480 = vmatprep.mubr.f32.mxu0 0.0
    %4481 = vmatmul.mubr.f32.gmra.mrb[0].mxu0 %v2280
    %v4482 = vpop.f32.mrb[0].mxu0
    %v4483 = vadd.f32 %v4098, %v4482
    %v4484 = vpop.f32.mrb[0].mxu0
    %4485 = vmatprep.mubr.f32.mxu0 0.0
    %4486 = vmatmul.mubr.f32.gmra.mrb[0].mxu0 %v2289
    %v4487 = vpop.f32.mrb[0].mxu0
    %v4488 = vadd.f32 %v4103, %v4487
    %v4489 = vpop.f32.mrb[0].mxu0
    %4490 = vmatprep.mubr.f32.mxu0 0.0
    %4491 = vmatmul.mubr.f32.gmra.mrb[0].mxu0 %v2298
    %v4492 = vpop.f32.mrb[0].mxu0
    %v4493 = vadd.f32 %v4108, %v4492
    %v4494 = vpop.f32.mrb[0].mxu0
    %4495 = vmatprep.mubr.f32.mxu0 0.0
    %4496 = vmatmul.mubr.f32.gmra.mrb[0].mxu0 %v2307
    %v4497 = vpop.f32.mrb[0].mxu0
    %v4498 = vadd.f32 %v4113, %v4497
    %v4499 = vpop.f32.mrb[0].mxu0
    %4500 = vmatprep.mubr.f32.mxu0 0.0
    %4501 = vmatmul.mubr.f32.gmra.mrb[0].mxu0 %v2316
    %v4502 = vpop.f32.mrb[0].mxu0
    %v4503 = vadd.f32 %v4118, %v4502
    %v4504 = vpop.f32.mrb[0].mxu0
    %4505 = vmatprep.mubr.f32.mxu0 0.0
    %4506 = vmatmul.mubr.f32.gmra.mrb[0].mxu0 %v2325
    %v4507 = vpop.f32.mrb[0].mxu0
    %v4508 = vadd.f32 %v4123, %v4507
    %v4509 = vpop.f32.mrb[0].mxu0
    %4510 = vmatprep.mubr.f32.mxu0 0.0
    %4511 = vmatmul.mubr.f32.gmra.mrb[0].mxu0 %v2334
    %v4512 = vpop.f32.mrb[0].mxu0
    %v4513 = vadd.f32 %v4128, %v4512
    %v4514 = vpop.f32.mrb[0].mxu0
    %4515 = vmatprep.mubr.f32.mxu0 0.0
    %4516 = vmatmul.mubr.f32.gmra.mrb[0].mxu0 %v2343
    %v4517 = vpop.f32.mrb[0].mxu0
    %v4518 = vadd.f32 %v4133, %v4517
    %v4519 = vpop.f32.mrb[0].mxu0
    %4520 = vmatprep.mubr.f32.mxu0 0.0
    %4521 = vmatmul.mubr.f32.gmra.mrb[0].mxu0 %v2352
    %v4522 = vpop.f32.mrb[0].mxu0
    %v4523 = vadd.f32 %v4138, %v4522
    %v4524 = vpop.f32.mrb[0].mxu0
    %4525 = vmatprep.mubr.f32.mxu0 0.0
    %4526 = vmatmul.mubr.f32.gmra.mrb[0].mxu0 %v2361
    %v4527 = vpop.f32.mrb[0].mxu0
    %v4528 = vadd.f32 %v4143, %v4527
    %v4529 = vpop.f32.mrb[0].mxu0
    %4530 = vmatprep.mubr.f32.mxu0 0.0
    %4531 = vmatmul.mubr.f32.gmra.mrb[0].mxu0 %v2370
    %v4532 = vpop.f32.mrb[0].mxu0
    %v4533 = vadd.f32 %v4148, %v4532
    %v4534 = vpop.f32.mrb[0].mxu0
    %4535 = vmatprep.mubr.f32.mxu0 0.0
    %4536 = vmatmul.mubr.f32.gmra.mrb[0].mxu0 %v2379
    %v4537 = vpop.f32.mrb[0].mxu0
    %v4538 = vadd.f32 %v4153, %v4537
    %v4539 = vpop.f32.mrb[0].mxu0
    %4540 = vmatprep.mubr.f32.mxu0 0.0
    %4541 = vmatmul.mubr.f32.gmra.mrb[0].mxu0 %v2388
    %v4542 = vpop.f32.mrb[0].mxu0
    %v4543 = vadd.f32 %v4158, %v4542
    %v4544 = vpop.f32.mrb[0].mxu0
    %4545 = vmatprep.mubr.f32.mxu0 0.0
    %4546 = vmatmul.mubr.f32.gmra.mrb[0].mxu0 %v2397
    %v4547 = vpop.f32.mrb[0].mxu0
    %v4548 = vadd.f32 %v4163, %v4547
    %v4549 = vpop.f32.mrb[0].mxu0
    %4550 = vmatprep.mubr.f32.mxu0 0.0
    %4551 = vmatmul.mubr.f32.gmra.mrb[0].mxu0 %v2406
    %v4552 = vpop.f32.mrb[0].mxu0
    %v4553 = vadd.f32 %v4168, %v4552
    %v4554 = vpop.f32.mrb[0].mxu0
    %4555 = vmatprep.mubr.f32.mxu0 0.0
    %4556 = vmatmul.mubr.f32.gmra.mrb[0].mxu0 %v2415
    %v4557 = vpop.f32.mrb[0].mxu0
    %v4558 = vadd.f32 %v4173, %v4557
    %v4559 = vpop.f32.mrb[0].mxu0
    %4560 = vmatprep.mubr.f32.mxu0 0.0
    %4561 = vmatmul.mubr.f32.gmra.mrb[0].mxu0 %v2424
    %v4562 = vpop.f32.mrb[0].mxu0
    %v4563 = vadd.f32 %v4178, %v4562
    %v4564 = vpop.f32.mrb[0].mxu0
    %4565 = vmatprep.mubr.f32.mxu0 0.0
    %4566 = vmatmul.mubr.f32.gmra.mrb[0].mxu0 %v2433
    %v4567 = vpop.f32.mrb[0].mxu0
    %v4568 = vadd.f32 %v4183, %v4567
    %v4569 = vpop.f32.mrb[0].mxu0
    %4570 = vmatprep.mubr.f32.mxu0 0.0
    %4571 = vmatmul.mubr.f32.gmra.mrb[0].mxu0 %v2442
    %v4572 = vpop.f32.mrb[0].mxu0
    %v4573 = vadd.f32 %v4188, %v4572
    %v4574 = vpop.f32.mrb[0].mxu0
    %4575 = vmatprep.mubr.f32.mxu0 0.0
    %4576 = vmatmul.mubr.f32.gmra.mrb[0].mxu0 %v2451
    %v4577 = vpop.f32.mrb[0].mxu0
    %v4578 = vadd.f32 %v4193, %v4577
    %v4579 = vpop.f32.mrb[0].mxu0
    %4580 = vmatprep.mubr.f32.mxu0 0.0
    %4581 = vmatmul.mubr.f32.gmra.mrb[0].mxu0 %v2460
    %v4582 = vpop.f32.mrb[0].mxu0
    %v4583 = vadd.f32 %v4198, %v4582
    %v4584 = vpop.f32.mrb[0].mxu0
    %4585 = vmatprep.mubr.f32.mxu0 0.0
    %4586 = vmatmul.mubr.f32.gmra.mrb[0].mxu0 %v2469
    %v4587 = vpop.f32.mrb[0].mxu0
    %v4588 = vadd.f32 %v4203, %v4587
    %v4589 = vpop.f32.mrb[0].mxu0
    %4590 = vmatprep.mubr.f32.mxu0 0.0
    %4591 = vmatmul.mubr.f32.gmra.mrb[0].mxu0 %v2478
    %v4592 = vpop.f32.mrb[0].mxu0
    %v4593 = vadd.f32 %v4208, %v4592
    %v4594 = vpop.f32.mrb[0].mxu0
    %4595 = vmatprep.mubr.f32.mxu0 0.0
    %4596 = vmatmul.mubr.f32.gmra.mrb[0].mxu0 %v2487
    %v4597 = vpop.f32.mrb[0].mxu0
    %v4598 = vadd.f32 %v4213, %v4597
    %v4599 = vpop.f32.mrb[0].mxu0
    %4600 = vmatprep.mubr.f32.mxu0 0.0
    %4601 = vmatmul.mubr.f32.gmra.mrb[0].mxu0 %v2496
    %v4602 = vpop.f32.mrb[0].mxu0
    %v4603 = vadd.f32 %v4218, %v4602
    %v4604 = vpop.f32.mrb[0].mxu0
    %4605 = vmatprep.mubr.f32.mxu0 0.0
    %4606 = vmatmul.mubr.f32.gmra.mrb[0].mxu0 %v2505
    %v4607 = vpop.f32.mrb[0].mxu0
    %v4608 = vadd.f32 %v4223, %v4607
    %v4609 = vpop.f32.mrb[0].mxu0
    %4610 = vmatprep.mubr.f32.mxu0 0.0
    %4611 = vmatmul.mubr.f32.gmra.mrb[0].mxu0 %v2514
    %v4612 = vpop.f32.mrb[0].mxu0
    %v4613 = vadd.f32 %v4228, %v4612
    %v4614 = vpop.f32.mrb[0].mxu0
    %4615 = vmatprep.mubr.f32.mxu0 0.0
    %4616 = vmatmul.mubr.f32.gmra.mrb[0].mxu0 %v2523
    %v4617 = vpop.f32.mrb[0].mxu0
    %v4618 = vadd.f32 %v4233, %v4617
    %v4619 = vpop.f32.mrb[0].mxu0
    %4620 = vmatprep.mubr.f32.mxu0 0.0
    %4621 = vmatmul.mubr.f32.gmra.mrb[0].mxu0 %v2532
    %v4622 = vpop.f32.mrb[0].mxu0
    %v4623 = vadd.f32 %v4238, %v4622
    %v4624 = vpop.f32.mrb[0].mxu0
    %4625 = vmatprep.mubr.f32.mxu0 0.0
    %4626 = vmatmul.mubr.f32.gmra.mrb[0].mxu0 %v2541
    %v4627 = vpop.f32.mrb[0].mxu0
    %v4628 = vadd.f32 %v4243, %v4627
    %v4629 = vpop.f32.mrb[0].mxu0
    %4630 = vmatprep.mubr.f32.mxu0 0.0
    %4631 = vmatmul.mubr.f32.gmra.mrb[0].mxu0 %v2550
    %v4632 = vpop.f32.mrb[0].mxu0
    %v4633 = vadd.f32 %v4248, %v4632
    %v4634 = vpop.f32.mrb[0].mxu0
    %4635 = vmatprep.mubr.f32.mxu0 0.0
    %4636 = vmatmul.mubr.f32.gmra.mrb[0].mxu0 %v2559
    %v4637 = vpop.f32.mrb[0].mxu0
    %v4638 = vadd.f32 %v4253, %v4637
    %v4639 = vpop.f32.mrb[0].mxu0
    %4640 = vmatprep.mubr.f32.mxu0 0.0
    %4641 = vmatmul.mubr.f32.gmra.mrb[0].mxu0 %v2568
    %v4642 = vpop.f32.mrb[0].mxu0
    %v4643 = vadd.f32 %v4258, %v4642
    %v4644 = vpop.f32.mrb[0].mxu0
    %4645 = vmatprep.mubr.f32.mxu0 0.0
    %4646 = vmatmul.mubr.f32.gmra.mrb[0].mxu0 %v2577
    %v4647 = vpop.f32.mrb[0].mxu0
    %v4648 = vadd.f32 %v4263, %v4647
    %v4649 = vpop.f32.mrb[0].mxu0
    %4650 = vmatprep.mubr.f32.mxu0 0.0
    %4651 = vmatmul.mubr.f32.gmra.mrb[0].mxu0 %v2586
    %v4652 = vpop.f32.mrb[0].mxu0
    %v4653 = vadd.f32 %v4268, %v4652
    %v4654 = vpop.f32.mrb[0].mxu0
    %4655 = vdwg.mxu0
    %v4656 = vadd.f32 %v4338, %v4343
    %v4657 = vadd.f32 %v4656, %v4348
    %v4658 = vadd.f32 %v4657, %v4353
    %v4659 = vadd.f32 %v4658, %v4358
    %v4660 = vadd.f32 %v4659, %v4363
    %v4661 = vadd.f32 %v4660, %v4368
    %v4662 = vadd.f32 %v4661, %v4373
    %v4663 = vadd.f32 %v4662, %v4378
    %v4664 = vadd.f32 %v4663, %v4383
    %v4665 = vadd.f32 %v4664, %v4388
    %v4666 = vadd.f32 %v4665, %v4393
    %v4667 = vadd.f32 %v4666, %v4398
    %v4668 = vadd.f32 %v4667, %v4403
    %v4669 = vadd.f32 %v4668, %v4408
    %v4670 = vadd.f32 %v4669, %v4413
    %v4671 = vadd.f32 %v4670, %v4418
    %v4672 = vadd.f32 %v4671, %v4423
    %v4673 = vadd.f32 %v4672, %v4428
    %v4674 = vadd.f32 %v4673, %v4433
    %v4675 = vadd.f32 %v4674, %v4438
    %v4676 = vadd.f32 %v4675, %v4443
    %v4677 = vadd.f32 %v4676, %v4448
    %v4678 = vadd.f32 %v4677, %v4453
    %v4679 = vadd.f32 %v4678, %v4458
    %v4680 = vadd.f32 %v4679, %v4463
    %v4681 = vadd.f32 %v4680, %v4468
    %v4682 = vadd.f32 %v4681, %v4473
    %v4683 = vadd.f32 %v4682, %v4478
    %v4684 = vadd.f32 %v4683, %v4483
    %v4685 = vadd.f32 %v4684, %v4488
    %v4686 = vadd.f32 %v4685, %v4493
    %v4687 = vadd.f32 %v4686, %v4498
    %v4688 = vadd.f32 %v4687, %v4503
    %v4689 = vadd.f32 %v4688, %v4508
    %v4690 = vadd.f32 %v4689, %v4513
    %v4691 = vadd.f32 %v4690, %v4518
    %v4692 = vadd.f32 %v4691, %v4523
    %v4693 = vadd.f32 %v4692, %v4528
    %v4694 = vadd.f32 %v4693, %v4533
    %v4695 = vadd.f32 %v4694, %v4538
    %v4696 = vadd.f32 %v4695, %v4543
    %v4697 = vadd.f32 %v4696, %v4548
    %v4698 = vadd.f32 %v4697, %v4553
    %v4699 = vadd.f32 %v4698, %v4558
    %v4700 = vadd.f32 %v4699, %v4563
    %v4701 = vadd.f32 %v4700, %v4568
    %v4702 = vadd.f32 %v4701, %v4573
    %v4703 = vadd.f32 %v4702, %v4578
    %v4704 = vadd.f32 %v4703, %v4583
    %v4705 = vadd.f32 %v4704, %v4588
    %v4706 = vadd.f32 %v4705, %v4593
    %v4707 = vadd.f32 %v4706, %v4598
    %v4708 = vadd.f32 %v4707, %v4603
    %v4709 = vadd.f32 %v4708, %v4608
    %v4710 = vadd.f32 %v4709, %v4613
    %v4711 = vadd.f32 %v4710, %v4618
    %v4712 = vadd.f32 %v4711, %v4623
    %v4713 = vadd.f32 %v4712, %v4628
    %v4714 = vadd.f32 %v4713, %v4633
    %v4715 = vadd.f32 %v4714, %v4638
    %v4716 = vadd.f32 %v4715, %v4643
    %v4717 = vadd.f32 %v4716, %v4648
    %v4718 = vadd.f32 %v4717, %v4653
    %v4719 = vrot.slane %v4718, 4
    %v4720 = vadd.f32 %v4718, %v4719
    %v4721 = vrot.slane %v4720, 2
    %v4722 = vadd.f32 %v4720, %v4721
    %v4723 = vrot.slane %v4722, 1
    %v4724 = vadd.f32 %v4722, %v4723
    %v4725 = vmul.f32 %v4338, %v4338
    %v4726 = vmul.f32 %v4343, %v4343
    %v4727 = vmul.f32 %v4348, %v4348
    %v4728 = vmul.f32 %v4353, %v4353
    %v4729 = vmul.f32 %v4358, %v4358
    %v4730 = vmul.f32 %v4363, %v4363
    %v4731 = vmul.f32 %v4368, %v4368
    %v4732 = vmul.f32 %v4373, %v4373
    %v4733 = vmul.f32 %v4378, %v4378
    %v4734 = vmul.f32 %v4383, %v4383
    %v4735 = vmul.f32 %v4388, %v4388
    %v4736 = vmul.f32 %v4393, %v4393
    %v4737 = vmul.f32 %v4398, %v4398
    %v4738 = vmul.f32 %v4403, %v4403
    %v4739 = vmul.f32 %v4408, %v4408
    %v4740 = vmul.f32 %v4413, %v4413
    %v4741 = vmul.f32 %v4418, %v4418
    %v4742 = vmul.f32 %v4423, %v4423
    %v4743 = vmul.f32 %v4428, %v4428
    %v4744 = vmul.f32 %v4433, %v4433
    %v4745 = vmul.f32 %v4438, %v4438
    %v4746 = vmul.f32 %v4443, %v4443
    %v4747 = vmul.f32 %v4448, %v4448
    %v4748 = vmul.f32 %v4453, %v4453
    %v4749 = vmul.f32 %v4458, %v4458
    %v4750 = vmul.f32 %v4463, %v4463
    %v4751 = vmul.f32 %v4468, %v4468
    %v4752 = vmul.f32 %v4473, %v4473
    %v4753 = vmul.f32 %v4478, %v4478
    %v4754 = vmul.f32 %v4483, %v4483
    %v4755 = vmul.f32 %v4488, %v4488
    %v4756 = vmul.f32 %v4493, %v4493
    %v4757 = vmul.f32 %v4498, %v4498
    %v4758 = vmul.f32 %v4503, %v4503
    %v4759 = vmul.f32 %v4508, %v4508
    %v4760 = vmul.f32 %v4513, %v4513
    %v4761 = vmul.f32 %v4518, %v4518
    %v4762 = vmul.f32 %v4523, %v4523
    %v4763 = vmul.f32 %v4528, %v4528
    %v4764 = vmul.f32 %v4533, %v4533
    %v4765 = vmul.f32 %v4538, %v4538
    %v4766 = vmul.f32 %v4543, %v4543
    %v4767 = vmul.f32 %v4548, %v4548
    %v4768 = vmul.f32 %v4553, %v4553
    %v4769 = vmul.f32 %v4558, %v4558
    %v4770 = vmul.f32 %v4563, %v4563
    %v4771 = vmul.f32 %v4568, %v4568
    %v4772 = vmul.f32 %v4573, %v4573
    %v4773 = vmul.f32 %v4578, %v4578
    %v4774 = vmul.f32 %v4583, %v4583
    %v4775 = vmul.f32 %v4588, %v4588
    %v4776 = vmul.f32 %v4593, %v4593
    %v4777 = vmul.f32 %v4598, %v4598
    %v4778 = vmul.f32 %v4603, %v4603
    %v4779 = vmul.f32 %v4608, %v4608
    %v4780 = vmul.f32 %v4613, %v4613
    %v4781 = vmul.f32 %v4618, %v4618
    %v4782 = vmul.f32 %v4623, %v4623
    %v4783 = vmul.f32 %v4628, %v4628
    %v4784 = vmul.f32 %v4633, %v4633
    %v4785 = vmul.f32 %v4638, %v4638
    %v4786 = vmul.f32 %v4643, %v4643
    %v4787 = vmul.f32 %v4648, %v4648
    %v4788 = vmul.f32 %v4653, %v4653
    %v4789 = vadd.f32 %v4725, %v4726
    %v4790 = vadd.f32 %v4789, %v4727
    %v4791 = vadd.f32 %v4790, %v4728
    %v4792 = vadd.f32 %v4791, %v4729
    %v4793 = vadd.f32 %v4792, %v4730
    %v4794 = vadd.f32 %v4793, %v4731
    %v4795 = vadd.f32 %v4794, %v4732
    %v4796 = vadd.f32 %v4795, %v4733
    %v4797 = vadd.f32 %v4796, %v4734
    %v4798 = vadd.f32 %v4797, %v4735
    %v4799 = vadd.f32 %v4798, %v4736
    %v4800 = vadd.f32 %v4799, %v4737
    %v4801 = vadd.f32 %v4800, %v4738
    %v4802 = vadd.f32 %v4801, %v4739
    %v4803 = vadd.f32 %v4802, %v4740
    %v4804 = vadd.f32 %v4803, %v4741
    %v4805 = vadd.f32 %v4804, %v4742
    %v4806 = vadd.f32 %v4805, %v4743
    %v4807 = vadd.f32 %v4806, %v4744
    %v4808 = vadd.f32 %v4807, %v4745
    %v4809 = vadd.f32 %v4808, %v4746
    %v4810 = vadd.f32 %v4809, %v4747
    %v4811 = vadd.f32 %v4810, %v4748
    %v4812 = vadd.f32 %v4811, %v4749
    %v4813 = vadd.f32 %v4812, %v4750
    %v4814 = vadd.f32 %v4813, %v4751
    %v4815 = vadd.f32 %v4814, %v4752
    %v4816 = vadd.f32 %v4815, %v4753
    %v4817 = vadd.f32 %v4816, %v4754
    %v4818 = vadd.f32 %v4817, %v4755
    %v4819 = vadd.f32 %v4818, %v4756
    %v4820 = vadd.f32 %v4819, %v4757
    %v4821 = vadd.f32 %v4820, %v4758
    %v4822 = vadd.f32 %v4821, %v4759
    %v4823 = vadd.f32 %v4822, %v4760
    %v4824 = vadd.f32 %v4823, %v4761
    %v4825 = vadd.f32 %v4824, %v4762
    %v4826 = vadd.f32 %v4825, %v4763
    %v4827 = vadd.f32 %v4826, %v4764
    %v4828 = vadd.f32 %v4827, %v4765
    %v4829 = vadd.f32 %v4828, %v4766
    %v4830 = vadd.f32 %v4829, %v4767
    %v4831 = vadd.f32 %v4830, %v4768
    %v4832 = vadd.f32 %v4831, %v4769
    %v4833 = vadd.f32 %v4832, %v4770
    %v4834 = vadd.f32 %v4833, %v4771
    %v4835 = vadd.f32 %v4834, %v4772
    %v4836 = vadd.f32 %v4835, %v4773
    %v4837 = vadd.f32 %v4836, %v4774
    %v4838 = vadd.f32 %v4837, %v4775
    %v4839 = vadd.f32 %v4838, %v4776
    %v4840 = vadd.f32 %v4839, %v4777
    %v4841 = vadd.f32 %v4840, %v4778
    %v4842 = vadd.f32 %v4841, %v4779
    %v4843 = vadd.f32 %v4842, %v4780
    %v4844 = vadd.f32 %v4843, %v4781
    %v4845 = vadd.f32 %v4844, %v4782
    %v4846 = vadd.f32 %v4845, %v4783
    %v4847 = vadd.f32 %v4846, %v4784
    %v4848 = vadd.f32 %v4847, %v4785
    %v4849 = vadd.f32 %v4848, %v4786
    %v4850 = vadd.f32 %v4849, %v4787
    %v4851 = vadd.f32 %v4850, %v4788
    %v4852 = vrot.slane %v4851, 4
    %v4853 = vadd.f32 %v4851, %v4852
    %v4854 = vrot.slane %v4853, 2
    %v4855 = vadd.f32 %v4853, %v4854
    %v4856 = vrot.slane %v4855, 1
    %v4857 = vadd.f32 %v4855, %v4856
    %v4858 = vmul.f32 %v4724, 0.001953125
    %v4859 = vmul.f32 %v4857, 0.001953125
    %v4860 = vmul.f32 %v4858, %v4858
    %v4861 = vsub.f32 %v4859, %v4860
    %v4862 = vmax.f32 %v4861, 0.0
    %v4863 = vld [vmem:[%s3] sm:$0x1]
    %v4864 = vadd.f32 %v4862, 1e-05
    %v4865 = vrsqrt.pop %v4864
    %v4866 = vmul.f32 %v4863, %v4865
    %v4867 = vld [vmem:[%s4] sm:$0x1]
    %v4868 = vmul.f32 %v4858, %v4866
    %v4869 = vsub.f32 %v4867, %v4868
    %v4871 = vlaneseq
    %v4872 = vshrl.u32 %v4871, 7
    %v4873 = vsub.s32 0, %v4872
    %v4874 = vrot.slane %v4866, %v4873
    %v4876 = vmul.f32 %v4338, %v4874
    %v4877 = vmul.f32 %v4343, %v4874
    %v4878 = vmul.f32 %v4348, %v4874
    %v4879 = vmul.f32 %v4353, %v4874
    %v4880 = vmul.f32 %v4358, %v4874
    %v4881 = vmul.f32 %v4363, %v4874
    %v4882 = vmul.f32 %v4368, %v4874
    %v4883 = vmul.f32 %v4373, %v4874
    %v4884 = vmul.f32 %v4378, %v4874
    %v4885 = vmul.f32 %v4383, %v4874
    %v4886 = vmul.f32 %v4388, %v4874
    %v4887 = vmul.f32 %v4393, %v4874
    %v4888 = vmul.f32 %v4398, %v4874
    %v4889 = vmul.f32 %v4403, %v4874
    %v4890 = vmul.f32 %v4408, %v4874
    %v4891 = vmul.f32 %v4413, %v4874
    %v4892 = vmul.f32 %v4418, %v4874
    %v4893 = vmul.f32 %v4423, %v4874
    %v4894 = vmul.f32 %v4428, %v4874
    %v4895 = vmul.f32 %v4433, %v4874
    %v4896 = vmul.f32 %v4438, %v4874
    %v4897 = vmul.f32 %v4443, %v4874
    %v4898 = vmul.f32 %v4448, %v4874
    %v4899 = vmul.f32 %v4453, %v4874
    %v4900 = vmul.f32 %v4458, %v4874
    %v4901 = vmul.f32 %v4463, %v4874
    %v4902 = vmul.f32 %v4468, %v4874
    %v4903 = vmul.f32 %v4473, %v4874
    %v4904 = vmul.f32 %v4478, %v4874
    %v4905 = vmul.f32 %v4483, %v4874
    %v4906 = vmul.f32 %v4488, %v4874
    %v4907 = vmul.f32 %v4493, %v4874
    %v4908 = vmul.f32 %v4498, %v4874
    %v4909 = vmul.f32 %v4503, %v4874
    %v4910 = vmul.f32 %v4508, %v4874
    %v4911 = vmul.f32 %v4513, %v4874
    %v4912 = vmul.f32 %v4518, %v4874
    %v4913 = vmul.f32 %v4523, %v4874
    %v4914 = vmul.f32 %v4528, %v4874
    %v4915 = vmul.f32 %v4533, %v4874
    %v4916 = vmul.f32 %v4538, %v4874
    %v4917 = vmul.f32 %v4543, %v4874
    %v4918 = vmul.f32 %v4548, %v4874
    %v4919 = vmul.f32 %v4553, %v4874
    %v4920 = vmul.f32 %v4558, %v4874
    %v4921 = vmul.f32 %v4563, %v4874
    %v4922 = vmul.f32 %v4568, %v4874
    %v4923 = vmul.f32 %v4573, %v4874
    %v4924 = vmul.f32 %v4578, %v4874
    %v4925 = vmul.f32 %v4583, %v4874
    %v4926 = vmul.f32 %v4588, %v4874
    %v4927 = vmul.f32 %v4593, %v4874
    %v4928 = vmul.f32 %v4598, %v4874
    %v4929 = vmul.f32 %v4603, %v4874
    %v4930 = vmul.f32 %v4608, %v4874
    %v4931 = vmul.f32 %v4613, %v4874
    %v4932 = vmul.f32 %v4618, %v4874
    %v4933 = vmul.f32 %v4623, %v4874
    %v4934 = vmul.f32 %v4628, %v4874
    %v4935 = vmul.f32 %v4633, %v4874
    %v4936 = vmul.f32 %v4638, %v4874
    %v4937 = vmul.f32 %v4643, %v4874
    %v4938 = vmul.f32 %v4648, %v4874
    %v4939 = vmul.f32 %v4653, %v4874
    %v4941 = vlaneseq
    %v4942 = vshrl.u32 %v4941, 7
    %v4943 = vsub.s32 0, %v4942
    %v4944 = vrot.slane %v4869, %v4943
    %v4946 = vadd.f32 %v4876, %v4944
    %v4947 = vadd.f32 %v4877, %v4944
    %v4948 = vadd.f32 %v4878, %v4944
    %v4949 = vadd.f32 %v4879, %v4944
    %v4950 = vadd.f32 %v4880, %v4944
    %v4951 = vadd.f32 %v4881, %v4944
    %v4952 = vadd.f32 %v4882, %v4944
    %v4953 = vadd.f32 %v4883, %v4944
    %v4954 = vadd.f32 %v4884, %v4944
    %v4955 = vadd.f32 %v4885, %v4944
    %v4956 = vadd.f32 %v4886, %v4944
    %v4957 = vadd.f32 %v4887, %v4944
    %v4958 = vadd.f32 %v4888, %v4944
    %v4959 = vadd.f32 %v4889, %v4944
    %v4960 = vadd.f32 %v4890, %v4944
    %v4961 = vadd.f32 %v4891, %v4944
    %v4962 = vadd.f32 %v4892, %v4944
    %v4963 = vadd.f32 %v4893, %v4944
    %v4964 = vadd.f32 %v4894, %v4944
    %v4965 = vadd.f32 %v4895, %v4944
    %v4966 = vadd.f32 %v4896, %v4944
    %v4967 = vadd.f32 %v4897, %v4944
    %v4968 = vadd.f32 %v4898, %v4944
    %v4969 = vadd.f32 %v4899, %v4944
    %v4970 = vadd.f32 %v4900, %v4944
    %v4971 = vadd.f32 %v4901, %v4944
    %v4972 = vadd.f32 %v4902, %v4944
    %v4973 = vadd.f32 %v4903, %v4944
    %v4974 = vadd.f32 %v4904, %v4944
    %v4975 = vadd.f32 %v4905, %v4944
    %v4976 = vadd.f32 %v4906, %v4944
    %v4977 = vadd.f32 %v4907, %v4944
    %v4978 = vadd.f32 %v4908, %v4944
    %v4979 = vadd.f32 %v4909, %v4944
    %v4980 = vadd.f32 %v4910, %v4944
    %v4981 = vadd.f32 %v4911, %v4944
    %v4982 = vadd.f32 %v4912, %v4944
    %v4983 = vadd.f32 %v4913, %v4944
    %v4984 = vadd.f32 %v4914, %v4944
    %v4985 = vadd.f32 %v4915, %v4944
    %v4986 = vadd.f32 %v4916, %v4944
    %v4987 = vadd.f32 %v4917, %v4944
    %v4988 = vadd.f32 %v4918, %v4944
    %v4989 = vadd.f32 %v4919, %v4944
    %v4990 = vadd.f32 %v4920, %v4944
    %v4991 = vadd.f32 %v4921, %v4944
    %v4992 = vadd.f32 %v4922, %v4944
    %v4993 = vadd.f32 %v4923, %v4944
    %v4994 = vadd.f32 %v4924, %v4944
    %v4995 = vadd.f32 %v4925, %v4944
    %v4996 = vadd.f32 %v4926, %v4944
    %v4997 = vadd.f32 %v4927, %v4944
    %v4998 = vadd.f32 %v4928, %v4944
    %v4999 = vadd.f32 %v4929, %v4944
    %v5000 = vadd.f32 %v4930, %v4944
    %v5001 = vadd.f32 %v4931, %v4944
    %v5002 = vadd.f32 %v4932, %v4944
    %v5003 = vadd.f32 %v4933, %v4944
    %v5004 = vadd.f32 %v4934, %v4944
    %v5005 = vadd.f32 %v4935, %v4944
    %v5006 = vadd.f32 %v4936, %v4944
    %v5007 = vadd.f32 %v4937, %v4944
    %v5008 = vadd.f32 %v4938, %v4944
    %v5009 = vadd.f32 %v4939, %v4944
    %v5010 = vmax.f32 %v4946, 0.0
    %v5011 = vmax.f32 %v4947, 0.0
    %v5012 = vmax.f32 %v4948, 0.0
    %v5013 = vmax.f32 %v4949, 0.0
    %v5014 = vmax.f32 %v4950, 0.0
    %v5015 = vmax.f32 %v4951, 0.0
    %v5016 = vmax.f32 %v4952, 0.0
    %v5017 = vmax.f32 %v4953, 0.0
    %v5018 = vmax.f32 %v4954, 0.0
    %v5019 = vmax.f32 %v4955, 0.0
    %v5020 = vmax.f32 %v4956, 0.0
    %v5021 = vmax.f32 %v4957, 0.0
    %v5022 = vmax.f32 %v4958, 0.0
    %v5023 = vmax.f32 %v4959, 0.0
    %v5024 = vmax.f32 %v4960, 0.0
    %v5025 = vmax.f32 %v4961, 0.0
    %v5026 = vmax.f32 %v4962, 0.0
    %v5027 = vmax.f32 %v4963, 0.0
    %v5028 = vmax.f32 %v4964, 0.0
    %v5029 = vmax.f32 %v4965, 0.0
    %v5030 = vmax.f32 %v4966, 0.0
    %v5031 = vmax.f32 %v4967, 0.0
    %v5032 = vmax.f32 %v4968, 0.0
    %v5033 = vmax.f32 %v4969, 0.0
    %v5034 = vmax.f32 %v4970, 0.0
    %v5035 = vmax.f32 %v4971, 0.0
    %v5036 = vmax.f32 %v4972, 0.0
    %v5037 = vmax.f32 %v4973, 0.0
    %v5038 = vmax.f32 %v4974, 0.0
    %v5039 = vmax.f32 %v4975, 0.0
    %v5040 = vmax.f32 %v4976, 0.0
    %v5041 = vmax.f32 %v4977, 0.0
    %v5042 = vmax.f32 %v4978, 0.0
    %v5043 = vmax.f32 %v4979, 0.0
    %v5044 = vmax.f32 %v4980, 0.0
    %v5045 = vmax.f32 %v4981, 0.0
    %v5046 = vmax.f32 %v4982, 0.0
    %v5047 = vmax.f32 %v4983, 0.0
    %v5048 = vmax.f32 %v4984, 0.0
    %v5049 = vmax.f32 %v4985, 0.0
    %v5050 = vmax.f32 %v4986, 0.0
    %v5051 = vmax.f32 %v4987, 0.0
    %v5052 = vmax.f32 %v4988, 0.0
    %v5053 = vmax.f32 %v4989, 0.0
    %v5054 = vmax.f32 %v4990, 0.0
    %v5055 = vmax.f32 %v4991, 0.0
    %v5056 = vmax.f32 %v4992, 0.0
    %v5057 = vmax.f32 %v4993, 0.0
    %v5058 = vmax.f32 %v4994, 0.0
    %v5059 = vmax.f32 %v4995, 0.0
    %v5060 = vmax.f32 %v4996, 0.0
    %v5061 = vmax.f32 %v4997, 0.0
    %v5062 = vmax.f32 %v4998, 0.0
    %v5063 = vmax.f32 %v4999, 0.0
    %v5064 = vmax.f32 %v5000, 0.0
    %v5065 = vmax.f32 %v5001, 0.0
    %v5066 = vmax.f32 %v5002, 0.0
    %v5067 = vmax.f32 %v5003, 0.0
    %v5068 = vmax.f32 %v5004, 0.0
    %v5069 = vmax.f32 %v5005, 0.0
    %v5070 = vmax.f32 %v5006, 0.0
    %v5071 = vmax.f32 %v5007, 0.0
    %v5072 = vmax.f32 %v5008, 0.0
    %v5073 = vmax.f32 %v5009, 0.0
    %5074 = vst [vmem:[%s793 + $0x1] sm:$0xff] %v5010
    %5075 = vst [vmem:[%s793 + $0x9] sm:$0xff] %v5011
    %5076 = vst [vmem:[%s793 + $0x19] sm:$0xff] %v5012
    %5077 = vst [vmem:[%s793 + $0x21] sm:$0xff] %v5013
    %5078 = vst [vmem:[%s793 + $0x31] sm:$0xff] %v5014
    %5079 = vst [vmem:[%s793 + $0x39] sm:$0xff] %v5015
    %5080 = vst [vmem:[%s793 + $0x49] sm:$0xff] %v5016
    %5081 = vst [vmem:[%s793 + $0x51] sm:$0xff] %v5017
    %5082 = vst [vmem:[%s793 + $0x61] sm:$0xff] %v5018
    %5083 = vst [vmem:[%s793 + $0x69] sm:$0xff] %v5019
    %5084 = vst [vmem:[%s793 + $0x79] sm:$0xff] %v5020
    %5085 = vst [vmem:[%s793 + $0x81] sm:$0xff] %v5021
    %5086 = vst [vmem:[%s793 + $0x91] sm:$0xff] %v5022
    %5087 = vst [vmem:[%s793 + $0x99] sm:$0xff] %v5023
    %5088 = vst [vmem:[%s793 + $0xa9] sm:$0xff] %v5024
    %5089 = vst [vmem:[%s793 + $0xb1] sm:$0xff] %v5025
    %5090 = vst [vmem:[%s793 + $0xc1] sm:$0xff] %v5026
    %5091 = vst [vmem:[%s793 + $0xc9] sm:$0xff] %v5027
    %5092 = vst [vmem:[%s793 + $0xd9] sm:$0xff] %v5028
    %5093 = vst [vmem:[%s793 + $0xe1] sm:$0xff] %v5029
    %5094 = vst [vmem:[%s793 + $0xf1] sm:$0xff] %v5030
    %5095 = vst [vmem:[%s793 + $0xf9] sm:$0xff] %v5031
    %5096 = vst [vmem:[%s793 + $0x109] sm:$0xff] %v5032
    %5097 = vst [vmem:[%s793 + $0x111] sm:$0xff] %v5033
    %5098 = vst [vmem:[%s793 + $0x121] sm:$0xff] %v5034
    %5099 = vst [vmem:[%s793 + $0x129] sm:$0xff] %v5035
    %5100 = vst [vmem:[%s793 + $0x139] sm:$0xff] %v5036
    %5101 = vst [vmem:[%s793 + $0x141] sm:$0xff] %v5037
    %5102 = vst [vmem:[%s793 + $0x151] sm:$0xff] %v5038
    %5103 = vst [vmem:[%s793 + $0x159] sm:$0xff] %v5039
    %5104 = vst [vmem:[%s793 + $0x169] sm:$0xff] %v5040
    %5105 = vst [vmem:[%s793 + $0x171] sm:$0xff] %v5041
    %5106 = vst [vmem:[%s793 + $0x1b1] sm:$0xff] %v5042
    %5107 = vst [vmem:[%s793 + $0x1b9] sm:$0xff] %v5043
    %5108 = vst [vmem:[%s793 + $0x1c9] sm:$0xff] %v5044
    %5109 = vst [vmem:[%s793 + $0x1d1] sm:$0xff] %v5045
    %5110 = vst [vmem:[%s793 + $0x1e1] sm:$0xff] %v5046
    %5111 = vst [vmem:[%s793 + $0x1e9] sm:$0xff] %v5047
    %5112 = vst [vmem:[%s793 + $0x1f9] sm:$0xff] %v5048
    %5113 = vst [vmem:[%s793 + $0x201] sm:$0xff] %v5049
    %5114 = vst [vmem:[%s793 + $0x211] sm:$0xff] %v5050
    %5115 = vst [vmem:[%s793 + $0x219] sm:$0xff] %v5051
    %5116 = vst [vmem:[%s793 + $0x229] sm:$0xff] %v5052
    %5117 = vst [vmem:[%s793 + $0x231] sm:$0xff] %v5053
    %5118 = vst [vmem:[%s793 + $0x241] sm:$0xff] %v5054
    %5119 = vst [vmem:[%s793 + $0x249] sm:$0xff] %v5055
    %5120 = vst [vmem:[%s793 + $0x259] sm:$0xff] %v5056
    %5121 = vst [vmem:[%s793 + $0x261] sm:$0xff] %v5057
    %5122 = vst [vmem:[%s793 + $0x271] sm:$0xff] %v5058
    %5123 = vst [vmem:[%s793 + $0x279] sm:$0xff] %v5059
    %5124 = vst [vmem:[%s793 + $0x289] sm:$0xff] %v5060
    %5125 = vst [vmem:[%s793 + $0x291] sm:$0xff] %v5061
    %5126 = vst [vmem:[%s793 + $0x2a1] sm:$0xff] %v5062
    %5127 = vst [vmem:[%s793 + $0x2a9] sm:$0xff] %v5063
    %5128 = vst [vmem:[%s793 + $0x2b9] sm:$0xff] %v5064
    %5129 = vst [vmem:[%s793 + $0x2c1] sm:$0xff] %v5065
    %5130 = vst [vmem:[%s793 + $0x2d1] sm:$0xff] %v5066
    %5131 = vst [vmem:[%s793 + $0x2d9] sm:$0xff] %v5067
    %5132 = vst [vmem:[%s793 + $0x2e9] sm:$0xff] %v5068
    %5133 = vst [vmem:[%s793 + $0x2f1] sm:$0xff] %v5069
    %5134 = vst [vmem:[%s793 + $0x301] sm:$0xff] %v5070
    %5135 = vst [vmem:[%s793 + $0x309] sm:$0xff] %v5071
    %5136 = vst [vmem:[%s793 + $0x319] sm:$0xff] %v5072
    %5137 = vst [vmem:[%s793 + $0x321] sm:$0xff] %v5073
    %v5138 = vld [vmem:[#allocation2] sm:$0xff]
    %v5139 = vld [vmem:[#allocation2 + $0x8] sm:$0xff]
    %v5140 = vld [vmem:[#allocation2 + $0x18] sm:$0xff]
    %v5141 = vld [vmem:[#allocation2 + $0x20] sm:$0xff]
    %v5142 = vld [vmem:[#allocation2 + $0x30] sm:$0xff]
    %v5143 = vld [vmem:[#allocation2 + $0x38] sm:$0xff]
    %v5144 = vld [vmem:[#allocation2 + $0x48] sm:$0xff]
    %v5145 = vld [vmem:[#allocation2 + $0x50] sm:$0xff]
    %v5146 = vld [vmem:[#allocation2 + $0x60] sm:$0xff]
    %v5147 = vld [vmem:[#allocation2 + $0x68] sm:$0xff]
    %v5148 = vld [vmem:[#allocation2 + $0x78] sm:$0xff]
    %v5149 = vld [vmem:[#allocation2 + $0x80] sm:$0xff]
    %v5150 = vld [vmem:[#allocation2 + $0x90] sm:$0xff]
    %v5151 = vld [vmem:[#allocation2 + $0x98] sm:$0xff]
    %v5152 = vld [vmem:[#allocation2 + $0xa8] sm:$0xff]
    %v5153 = vld [vmem:[#allocation2 + $0xb0] sm:$0xff]
    %v5154 = vld [vmem:[#allocation2 + $0xc0] sm:$0xff]
    %v5155 = vld [vmem:[#allocation2 + $0xc8] sm:$0xff]
    %v5156 = vld [vmem:[#allocation2 + $0xd8] sm:$0xff]
    %v5157 = vld [vmem:[#allocation2 + $0xe0] sm:$0xff]
    %v5158 = vld [vmem:[#allocation2 + $0xf0] sm:$0xff]
    %v5159 = vld [vmem:[#allocation2 + $0xf8] sm:$0xff]
    %v5160 = vld [vmem:[#allocation2 + $0x108] sm:$0xff]
    %v5161 = vld [vmem:[#allocation2 + $0x110] sm:$0xff]
    %v5162 = vld [vmem:[#allocation2 + $0x120] sm:$0xff]
    %v5163 = vld [vmem:[#allocation2 + $0x128] sm:$0xff]
    %v5164 = vld [vmem:[#allocation2 + $0x138] sm:$0xff]
    %v5165 = vld [vmem:[#allocation2 + $0x140] sm:$0xff]
    %v5166 = vld [vmem:[#allocation2 + $0x150] sm:$0xff]
    %v5167 = vld [vmem:[#allocation2 + $0x158] sm:$0xff]
    %v5168 = vld [vmem:[#allocation2 + $0x168] sm:$0xff]
    %v5169 = vld [vmem:[#allocation2 + $0x170] sm:$0xff]
    %v5170 = vld [vmem:[#allocation2 + $0x1b0] sm:$0xff]
    %v5171 = vld [vmem:[#allocation2 + $0x1b8] sm:$0xff]
    %v5172 = vld [vmem:[#allocation2 + $0x1c8] sm:$0xff]
    %v5173 = vld [vmem:[#allocation2 + $0x1d0] sm:$0xff]
    %v5174 = vld [vmem:[#allocation2 + $0x1e0] sm:$0xff]
    %v5175 = vld [vmem:[#allocation2 + $0x1e8] sm:$0xff]
    %v5176 = vld [vmem:[#allocation2 + $0x1f8] sm:$0xff]
    %v5177 = vld [vmem:[#allocation2 + $0x200] sm:$0xff]
    %v5178 = vld [vmem:[#allocation2 + $0x210] sm:$0xff]
    %v5179 = vld [vmem:[#allocation2 + $0x218] sm:$0xff]
    %v5180 = vld [vmem:[#allocation2 + $0x228] sm:$0xff]
    %v5181 = vld [vmem:[#allocation2 + $0x230] sm:$0xff]
    %v5182 = vld [vmem:[#allocation2 + $0x240] sm:$0xff]
    %v5183 = vld [vmem:[#allocation2 + $0x248] sm:$0xff]
    %v5184 = vld [vmem:[#allocation2 + $0x258] sm:$0xff]
    %v5185 = vld [vmem:[#allocation2 + $0x260] sm:$0xff]
    %v5186 = vld [vmem:[#allocation2 + $0x270] sm:$0xff]
    %v5187 = vld [vmem:[#allocation2 + $0x278] sm:$0xff]
    %v5188 = vld [vmem:[#allocation2 + $0x288] sm:$0xff]
    %v5189 = vld [vmem:[#allocation2 + $0x290] sm:$0xff]
    %v5190 = vld [vmem:[#allocation2 + $0x2a0] sm:$0xff]
    %v5191 = vld [vmem:[#allocation2 + $0x2a8] sm:$0xff]
    %v5192 = vld [vmem:[#allocation2 + $0x2b8] sm:$0xff]
    %v5193 = vld [vmem:[#allocation2 + $0x2c0] sm:$0xff]
    %v5194 = vld [vmem:[#allocation2 + $0x2d0] sm:$0xff]
    %v5195 = vld [vmem:[#allocation2 + $0x2d8] sm:$0xff]
    %v5196 = vld [vmem:[#allocation2 + $0x2e8] sm:$0xff]
    %v5197 = vld [vmem:[#allocation2 + $0x2f0] sm:$0xff]
    %v5198 = vld [vmem:[#allocation2 + $0x300] sm:$0xff]
    %v5199 = vld [vmem:[#allocation2 + $0x308] sm:$0xff]
    %v5200 = vld [vmem:[#allocation2 + $0x318] sm:$0xff]
    %v5201 = vld [vmem:[#allocation2 + $0x320] sm:$0xff]
    %5202 = vst [vmem:[#allocation3] sm:$0xff] %v5138
    %5203 = vst [vmem:[#allocation3 + $0x48] sm:$0xff] %v5139
    %5204 = vst [vmem:[#allocation3 + $0x90] sm:$0xff] %v5140
    %5205 = vst [vmem:[#allocation3 + $0xd8] sm:$0xff] %v5141
    %5206 = vst [vmem:[#allocation3 + $0x120] sm:$0xff] %v5142
    %5207 = vst [vmem:[#allocation3 + $0x168] sm:$0xff] %v5143
    %5208 = vst [vmem:[#allocation3 + $0x1b0] sm:$0xff] %v5144
    %5209 = vst [vmem:[#allocation3 + $0x1f8] sm:$0xff] %v5145
    %5210 = vst [vmem:[#allocation3 + $0x240] sm:$0xff] %v5146
    %5211 = vst [vmem:[#allocation3 + $0x288] sm:$0xff] %v5147
    %5212 = vst [vmem:[#allocation3 + $0x2d0] sm:$0xff] %v5148
    %5213 = vst [vmem:[#allocation3 + $0x318] sm:$0xff] %v5149
    %5214 = vst [vmem:[#allocation3 + $0x360] sm:$0xff] %v5150
    %5215 = vst [vmem:[#allocation3 + $0x3a8] sm:$0xff] %v5151
    %5216 = vst [vmem:[#allocation3 + $0x3f0] sm:$0xff] %v5152
    %5217 = vst [vmem:[#allocation3 + $0x438] sm:$0xff] %v5153
    %5218 = vst [vmem:[#allocation3 + $0x480] sm:$0xff] %v5154
    %5219 = vst [vmem:[#allocation3 + $0x4c8] sm:$0xff] %v5155
    %5220 = vst [vmem:[#allocation3 + $0x510] sm:$0xff] %v5156
    %5221 = vst [vmem:[#allocation3 + $0x558] sm:$0xff] %v5157
    %5222 = vst [vmem:[#allocation3 + $0x5a0] sm:$0xff] %v5158
    %5223 = vst [vmem:[#allocation3 + $0x5e8] sm:$0xff] %v5159
    %5224 = vst [vmem:[#allocation3 + $0x630] sm:$0xff] %v5160
    %5225 = vst [vmem:[#allocation3 + $0x678] sm:$0xff] %v5161
    %5226 = vst [vmem:[#allocation3 + $0x6c0] sm:$0xff] %v5162
    %5227 = vst [vmem:[#allocation3 + $0x708] sm:$0xff] %v5163
    %5228 = vst [vmem:[#allocation3 + $0x750] sm:$0xff] %v5164
    %5229 = vst [vmem:[#allocation3 + $0x798] sm:$0xff] %v5165
    %5230 = vst [vmem:[#allocation3 + $0x7e0] sm:$0xff] %v5166
    %5231 = vst [vmem:[#allocation3 + $0x828] sm:$0xff] %v5167
    %5232 = vst [vmem:[#allocation3 + $0x870] sm:$0xff] %v5168
    %5233 = vst [vmem:[#allocation3 + $0x8b8] sm:$0xff] %v5169
    %5234 = vst [vmem:[#allocation3 + $0x900] sm:$0xff] %v5170
    %5235 = vst [vmem:[#allocation3 + $0x948] sm:$0xff] %v5171
    %5236 = vst [vmem:[#allocation3 + $0x990] sm:$0xff] %v5172
    %5237 = vst [vmem:[#allocation3 + $0x9d8] sm:$0xff] %v5173
    %5238 = vst [vmem:[#allocation3 + $0xa20] sm:$0xff] %v5174
    %5239 = vst [vmem:[#allocation3 + $0xa68] sm:$0xff] %v5175
    %5240 = vst [vmem:[#allocation3 + $0xab0] sm:$0xff] %v5176
    %5241 = vst [vmem:[#allocation3 + $0xaf8] sm:$0xff] %v5177
    %5242 = vst [vmem:[#allocation3 + $0xb40] sm:$0xff] %v5178
    %5243 = vst [vmem:[#allocation3 + $0xb88] sm:$0xff] %v5179
    %5244 = vst [vmem:[#allocation3 + $0xbd0] sm:$0xff] %v5180
    %5245 = vst [vmem:[#allocation3 + $0xc18] sm:$0xff] %v5181
    %5246 = vst [vmem:[#allocation3 + $0xc60] sm:$0xff] %v5182
    %5247 = vst [vmem:[#allocation3 + $0xca8] sm:$0xff] %v5183
    %5248 = vst [vmem:[#allocation3 + $0xcf0] sm:$0xff] %v5184
    %5249 = vst [vmem:[#allocation3 + $0xd38] sm:$0xff] %v5185
    %5250 = vst [vmem:[#allocation3 + $0xd80] sm:$0xff] %v5186
    %5251 = vst [vmem:[#allocation3 + $0xdc8] sm:$0xff] %v5187
    %5252 = vst [vmem:[#allocation3 + $0xe10] sm:$0xff] %v5188
    %5253 = vst [vmem:[#allocation3 + $0xe58] sm:$0xff] %v5189
    %5254 = vst [vmem:[#allocation3 + $0xea0] sm:$0xff] %v5190
    %5255 = vst [vmem:[#allocation3 + $0xee8] sm:$0xff] %v5191
    %5256 = vst [vmem:[#allocation3 + $0xf30] sm:$0xff] %v5192
    %5257 = vst [vmem:[#allocation3 + $0xf78] sm:$0xff] %v5193
    %5258 = vst [vmem:[#allocation3 + $0xfc0] sm:$0xff] %v5194
    %5259 = vst [vmem:[#allocation3 + $0x1008] sm:$0xff] %v5195
    %5260 = vst [vmem:[#allocation3 + $0x1050] sm:$0xff] %v5196
    %5261 = vst [vmem:[#allocation3 + $0x1098] sm:$0xff] %v5197
    %5262 = vst [vmem:[#allocation3 + $0x10e0] sm:$0xff] %v5198
    %5263 = vst [vmem:[#allocation3 + $0x1128] sm:$0xff] %v5199
    %5264 = vst [vmem:[#allocation3 + $0x1170] sm:$0xff] %v5200
    %5265 = vst [vmem:[#allocation3 + $0x11b8] sm:$0xff] %v5201
    %v5266 = vld [vmem:[#allocation2 + $0x1] sm:$0xff]
    %v5267 = vld [vmem:[#allocation2 + $0x9] sm:$0xff]
    %v5268 = vld [vmem:[#allocation2 + $0x19] sm:$0xff]
    %v5269 = vld [vmem:[#allocation2 + $0x21] sm:$0xff]
    %v5270 = vld [vmem:[#allocation2 + $0x31] sm:$0xff]
    %v5271 = vld [vmem:[#allocation2 + $0x39] sm:$0xff]
    %v5272 = vld [vmem:[#allocation2 + $0x49] sm:$0xff]
    %v5273 = vld [vmem:[#allocation2 + $0x51] sm:$0xff]
    %v5274 = vld [vmem:[#allocation2 + $0x61] sm:$0xff]
    %v5275 = vld [vmem:[#allocation2 + $0x69] sm:$0xff]
    %v5276 = vld [vmem:[#allocation2 + $0x79] sm:$0xff]
    %v5277 = vld [vmem:[#allocation2 + $0x81] sm:$0xff]
    %v5278 = vld [vmem:[#allocation2 + $0x91] sm:$0xff]
    %v5279 = vld [vmem:[#allocation2 + $0x99] sm:$0xff]
    %v5280 = vld [vmem:[#allocation2 + $0xa9] sm:$0xff]
    %v5281 = vld [vmem:[#allocation2 + $0xb1] sm:$0xff]
    %v5282 = vld [vmem:[#allocation2 + $0xc1] sm:$0xff]
    %v5283 = vld [vmem:[#allocation2 + $0xc9] sm:$0xff]
    %v5284 = vld [vmem:[#allocation2 + $0xd9] sm:$0xff]
    %v5285 = vld [vmem:[#allocation2 + $0xe1] sm:$0xff]
    %v5286 = vld [vmem:[#allocation2 + $0xf1] sm:$0xff]
    %v5287 = vld [vmem:[#allocation2 + $0xf9] sm:$0xff]
    %v5288 = vld [vmem:[#allocation2 + $0x109] sm:$0xff]
    %v5289 = vld [vmem:[#allocation2 + $0x111] sm:$0xff]
    %v5290 = vld [vmem:[#allocation2 + $0x121] sm:$0xff]
    %v5291 = vld [vmem:[#allocation2 + $0x129] sm:$0xff]
    %v5292 = vld [vmem:[#allocation2 + $0x139] sm:$0xff]
    %v5293 = vld [vmem:[#allocation2 + $0x141] sm:$0xff]
    %v5294 = vld [vmem:[#allocation2 + $0x151] sm:$0xff]
    %v5295 = vld [vmem:[#allocation2 + $0x159] sm:$0xff]
    %v5296 = vld [vmem:[#allocation2 + $0x169] sm:$0xff]
    %v5297 = vld [vmem:[#allocation2 + $0x171] sm:$0xff]
    %v5298 = vld [vmem:[#allocation2 + $0x1b1] sm:$0xff]
    %v5299 = vld [vmem:[#allocation2 + $0x1b9] sm:$0xff]
    %v5300 = vld [vmem:[#allocation2 + $0x1c9] sm:$0xff]
    %v5301 = vld [vmem:[#allocation2 + $0x1d1] sm:$0xff]
    %v5302 = vld [vmem:[#allocation2 + $0x1e1] sm:$0xff]
    %v5303 = vld [vmem:[#allocation2 + $0x1e9] sm:$0xff]
    %v5304 = vld [vmem:[#allocation2 + $0x1f9] sm:$0xff]
    %v5305 = vld [vmem:[#allocation2 + $0x201] sm:$0xff]
    %v5306 = vld [vmem:[#allocation2 + $0x211] sm:$0xff]
    %v5307 = vld [vmem:[#allocation2 + $0x219] sm:$0xff]
    %v5308 = vld [vmem:[#allocation2 + $0x229] sm:$0xff]
    %v5309 = vld [vmem:[#allocation2 + $0x231] sm:$0xff]
    %v5310 = vld [vmem:[#allocation2 + $0x241] sm:$0xff]
    %v5311 = vld [vmem:[#allocation2 + $0x249] sm:$0xff]
    %v5312 = vld [vmem:[#allocation2 + $0x259] sm:$0xff]
    %v5313 = vld [vmem:[#allocation2 + $0x261] sm:$0xff]
    %v5314 = vld [vmem:[#allocation2 + $0x271] sm:$0xff]
    %v5315 = vld [vmem:[#allocation2 + $0x279] sm:$0xff]
    %v5316 = vld [vmem:[#allocation2 + $0x289] sm:$0xff]
    %v5317 = vld [vmem:[#allocation2 + $0x291] sm:$0xff]
    %v5318 = vld [vmem:[#allocation2 + $0x2a1] sm:$0xff]
    %v5319 = vld [vmem:[#allocation2 + $0x2a9] sm:$0xff]
    %v5320 = vld [vmem:[#allocation2 + $0x2b9] sm:$0xff]
    %v5321 = vld [vmem:[#allocation2 + $0x2c1] sm:$0xff]
    %v5322 = vld [vmem:[#allocation2 + $0x2d1] sm:$0xff]
    %v5323 = vld [vmem:[#allocation2 + $0x2d9] sm:$0xff]
    %v5324 = vld [vmem:[#allocation2 + $0x2e9] sm:$0xff]
    %v5325 = vld [vmem:[#allocation2 + $0x2f1] sm:$0xff]
    %v5326 = vld [vmem:[#allocation2 + $0x301] sm:$0xff]
    %v5327 = vld [vmem:[#allocation2 + $0x309] sm:$0xff]
    %v5328 = vld [vmem:[#allocation2 + $0x319] sm:$0xff]
    %v5329 = vld [vmem:[#allocation2 + $0x321] sm:$0xff]
    %5330 = vst [vmem:[#allocation3 + $0x8] sm:$0xff] %v5266
    %5331 = vst [vmem:[#allocation3 + $0x50] sm:$0xff] %v5267
    %5332 = vst [vmem:[#allocation3 + $0x98] sm:$0xff] %v5268
    %5333 = vst [vmem:[#allocation3 + $0xe0] sm:$0xff] %v5269
    %5334 = vst [vmem:[#allocation3 + $0x128] sm:$0xff] %v5270
    %5335 = vst [vmem:[#allocation3 + $0x170] sm:$0xff] %v5271
    %5336 = vst [vmem:[#allocation3 + $0x1b8] sm:$0xff] %v5272
    %5337 = vst [vmem:[#allocation3 + $0x200] sm:$0xff] %v5273
    %5338 = vst [vmem:[#allocation3 + $0x248] sm:$0xff] %v5274
    %5339 = vst [vmem:[#allocation3 + $0x290] sm:$0xff] %v5275
    %5340 = vst [vmem:[#allocation3 + $0x2d8] sm:$0xff] %v5276
    %5341 = vst [vmem:[#allocation3 + $0x320] sm:$0xff] %v5277
    %5342 = vst [vmem:[#allocation3 + $0x368] sm:$0xff] %v5278
    %5343 = vst [vmem:[#allocation3 + $0x3b0] sm:$0xff] %v5279
    %5344 = vst [vmem:[#allocation3 + $0x3f8] sm:$0xff] %v5280
    %5345 = vst [vmem:[#allocation3 + $0x440] sm:$0xff] %v5281
    %5346 = vst [vmem:[#allocation3 + $0x488] sm:$0xff] %v5282
    %5347 = vst [vmem:[#allocation3 + $0x4d0] sm:$0xff] %v5283
    %5348 = vst [vmem:[#allocation3 + $0x518] sm:$0xff] %v5284
    %5349 = vst [vmem:[#allocation3 + $0x560] sm:$0xff] %v5285
    %5350 = vst [vmem:[#allocation3 + $0x5a8] sm:$0xff] %v5286
    %5351 = vst [vmem:[#allocation3 + $0x5f0] sm:$0xff] %v5287
    %5352 = vst [vmem:[#allocation3 + $0x638] sm:$0xff] %v5288
    %5353 = vst [vmem:[#allocation3 + $0x680] sm:$0xff] %v5289
    %5354 = vst [vmem:[#allocation3 + $0x6c8] sm:$0xff] %v5290
    %5355 = vst [vmem:[#allocation3 + $0x710] sm:$0xff] %v5291
    %5356 = vst [vmem:[#allocation3 + $0x758] sm:$0xff] %v5292
    %5357 = vst [vmem:[#allocation3 + $0x7a0] sm:$0xff] %v5293
    %5358 = vst [vmem:[#allocation3 + $0x7e8] sm:$0xff] %v5294
    %5359 = vst [vmem:[#allocation3 + $0x830] sm:$0xff] %v5295
    %5360 = vst [vmem:[#allocation3 + $0x878] sm:$0xff] %v5296
    %5361 = vst [vmem:[#allocation3 + $0x8c0] sm:$0xff] %v5297
    %5362 = vst [vmem:[#allocation3 + $0x908] sm:$0xff] %v5298
    %5363 = vst [vmem:[#allocation3 + $0x950] sm:$0xff] %v5299
    %5364 = vst [vmem:[#allocation3 + $0x998] sm:$0xff] %v5300
    %5365 = vst [vmem:[#allocation3 + $0x9e0] sm:$0xff] %v5301
    %5366 = vst [vmem:[#allocation3 + $0xa28] sm:$0xff] %v5302
    %5367 = vst [vmem:[#allocation3 + $0xa70] sm:$0xff] %v5303
    %5368 = vst [vmem:[#allocation3 + $0xab8] sm:$0xff] %v5304
    %5369 = vst [vmem:[#allocation3 + $0xb00] sm:$0xff] %v5305
    %5370 = vst [vmem:[#allocation3 + $0xb48] sm:$0xff] %v5306
    %5371 = vst [vmem:[#allocation3 + $0xb90] sm:$0xff] %v5307
    %5372 = vst [vmem:[#allocation3 + $0xbd8] sm:$0xff] %v5308
    %5373 = vst [vmem:[#allocation3 + $0xc20] sm:$0xff] %v5309
    %5374 = vst [vmem:[#allocation3 + $0xc68] sm:$0xff] %v5310
    %5375 = vst [vmem:[#allocation3 + $0xcb0] sm:$0xff] %v5311
    %5376 = vst [vmem:[#allocation3 + $0xcf8] sm:$0xff] %v5312
    %5377 = vst [vmem:[#allocation3 + $0xd40] sm:$0xff] %v5313
    %5378 = vst [vmem:[#allocation3 + $0xd88] sm:$0xff] %v5314
    %5379 = vst [vmem:[#allocation3 + $0xdd0] sm:$0xff] %v5315
    %5380 = vst [vmem:[#allocation3 + $0xe18] sm:$0xff] %v5316
    %5381 = vst [vmem:[#allocation3 + $0xe60] sm:$0xff] %v5317
    %5382 = vst [vmem:[#allocation3 + $0xea8] sm:$0xff] %v5318
    %5383 = vst [vmem:[#allocation3 + $0xef0] sm:$0xff] %v5319
    %5384 = vst [vmem:[#allocation3 + $0xf38] sm:$0xff] %v5320
    %5385 = vst [vmem:[#allocation3 + $0xf80] sm:$0xff] %v5321
    %5386 = vst [vmem:[#allocation3 + $0xfc8] sm:$0xff] %v5322
    %5387 = vst [vmem:[#allocation3 + $0x1010] sm:$0xff] %v5323
    %5388 = vst [vmem:[#allocation3 + $0x1058] sm:$0xff] %v5324
    %5389 = vst [vmem:[#allocation3 + $0x10a0] sm:$0xff] %v5325
    %5390 = vst [vmem:[#allocation3 + $0x10e8] sm:$0xff] %v5326
    %5391 = vst [vmem:[#allocation3 + $0x1130] sm:$0xff] %v5327
    %5392 = vst [vmem:[#allocation3 + $0x1178] sm:$0xff] %v5328
    %5393 = vst [vmem:[#allocation3 + $0x11c0] sm:$0xff] %v5329
    %v5394 = vld [vmem:[#allocation2 + $0x2] sm:$0xff]
    %v5395 = vld [vmem:[#allocation2 + $0xa] sm:$0xff]
    %v5396 = vld [vmem:[#allocation2 + $0x1a] sm:$0xff]
    %v5397 = vld [vmem:[#allocation2 + $0x22] sm:$0xff]
    %v5398 = vld [vmem:[#allocation2 + $0x32] sm:$0xff]
    %v5399 = vld [vmem:[#allocation2 + $0x3a] sm:$0xff]
    %v5400 = vld [vmem:[#allocation2 + $0x4a] sm:$0xff]
    %v5401 = vld [vmem:[#allocation2 + $0x52] sm:$0xff]
    %v5402 = vld [vmem:[#allocation2 + $0x62] sm:$0xff]
    %v5403 = vld [vmem:[#allocation2 + $0x6a] sm:$0xff]
    %v5404 = vld [vmem:[#allocation2 + $0x7a] sm:$0xff]
    %v5405 = vld [vmem:[#allocation2 + $0x82] sm:$0xff]
    %v5406 = vld [vmem:[#allocation2 + $0x92] sm:$0xff]
    %v5407 = vld [vmem:[#allocation2 + $0x9a] sm:$0xff]
    %v5408 = vld [vmem:[#allocation2 + $0xaa] sm:$0xff]
    %v5409 = vld [vmem:[#allocation2 + $0xb2] sm:$0xff]
    %v5410 = vld [vmem:[#allocation2 + $0xc2] sm:$0xff]
    %v5411 = vld [vmem:[#allocation2 + $0xca] sm:$0xff]
    %v5412 = vld [vmem:[#allocation2 + $0xda] sm:$0xff]
    %v5413 = vld [vmem:[#allocation2 + $0xe2] sm:$0xff]
    %v5414 = vld [vmem:[#allocation2 + $0xf2] sm:$0xff]
    %v5415 = vld [vmem:[#allocation2 + $0xfa] sm:$0xff]
    %v5416 = vld [vmem:[#allocation2 + $0x10a] sm:$0xff]
    %v5417 = vld [vmem:[#allocation2 + $0x112] sm:$0xff]
    %v5418 = vld [vmem:[#allocation2 + $0x122] sm:$0xff]
    %v5419 = vld [vmem:[#allocation2 + $0x12a] sm:$0xff]
    %v5420 = vld [vmem:[#allocation2 + $0x13a] sm:$0xff]
    %v5421 = vld [vmem:[#allocation2 + $0x142] sm:$0xff]
    %v5422 = vld [vmem:[#allocation2 + $0x152] sm:$0xff]
    %v5423 = vld [vmem:[#allocation2 + $0x15a] sm:$0xff]
    %v5424 = vld [vmem:[#allocation2 + $0x16a] sm:$0xff]
    %v5425 = vld [vmem:[#allocation2 + $0x172] sm:$0xff]
    %v5426 = vld [vmem:[#allocation2 + $0x1b2] sm:$0xff]
    %v5427 = vld [vmem:[#allocation2 + $0x1ba] sm:$0xff]
    %v5428 = vld [vmem:[#allocation2 + $0x1ca] sm:$0xff]
    %v5429 = vld [vmem:[#allocation2 + $0x1d2] sm:$0xff]
    %v5430 = vld [vmem:[#allocation2 + $0x1e2] sm:$0xff]
    %v5431 = vld [vmem:[#allocation2 + $0x1ea] sm:$0xff]
    %v5432 = vld [vmem:[#allocation2 + $0x1fa] sm:$0xff]
    %v5433 = vld [vmem:[#allocation2 + $0x202] sm:$0xff]
    %v5434 = vld [vmem:[#allocation2 + $0x212] sm:$0xff]
    %v5435 = vld [vmem:[#allocation2 + $0x21a] sm:$0xff]
    %v5436 = vld [vmem:[#allocation2 + $0x22a] sm:$0xff]
    %v5437 = vld [vmem:[#allocation2 + $0x232] sm:$0xff]
    %v5438 = vld [vmem:[#allocation2 + $0x242] sm:$0xff]
    %v5439 = vld [vmem:[#allocation2 + $0x24a] sm:$0xff]
    %v5440 = vld [vmem:[#allocation2 + $0x25a] sm:$0xff]
    %v5441 = vld [vmem:[#allocation2 + $0x262] sm:$0xff]
    %v5442 = vld [vmem:[#allocation2 + $0x272] sm:$0xff]
    %v5443 = vld [vmem:[#allocation2 + $0x27a] sm:$0xff]
    %v5444 = vld [vmem:[#allocation2 + $0x28a] sm:$0xff]
    %v5445 = vld [vmem:[#allocation2 + $0x292] sm:$0xff]
    %v5446 = vld [vmem:[#allocation2 + $0x2a2] sm:$0xff]
    %v5447 = vld [vmem:[#allocation2 + $0x2aa] sm:$0xff]
    %v5448 = vld [vmem:[#allocation2 + $0x2ba] sm:$0xff]
    %v5449 = vld [vmem:[#allocation2 + $0x2c2] sm:$0xff]
    %v5450 = vld [vmem:[#allocation2 + $0x2d2] sm:$0xff]
    %v5451 = vld [vmem:[#allocation2 + $0x2da] sm:$0xff]
    %v5452 = vld [vmem:[#allocation2 + $0x2ea] sm:$0xff]
    %v5453 = vld [vmem:[#allocation2 + $0x2f2] sm:$0xff]
    %v5454 = vld [vmem:[#allocation2 + $0x302] sm:$0xff]
    %v5455 = vld [vmem:[#allocation2 + $0x30a] sm:$0xff]
    %v5456 = vld [vmem:[#allocation2 + $0x31a] sm:$0xff]
    %v5457 = vld [vmem:[#allocation2 + $0x322] sm:$0xff]
    %5458 = vst [vmem:[#allocation3 + $0x10] sm:$0xff] %v5394
    %5459 = vst [vmem:[#allocation3 + $0x58] sm:$0xff] %v5395
    %5460 = vst [vmem:[#allocation3 + $0xa0] sm:$0xff] %v5396
    %5461 = vst [vmem:[#allocation3 + $0xe8] sm:$0xff] %v5397
    %5462 = vst [vmem:[#allocation3 + $0x130] sm:$0xff] %v5398
    %5463 = vst [vmem:[#allocation3 + $0x178] sm:$0xff] %v5399
    %5464 = vst [vmem:[#allocation3 + $0x1c0] sm:$0xff] %v5400
    %5465 = vst [vmem:[#allocation3 + $0x208] sm:$0xff] %v5401
    %5466 = vst [vmem:[#allocation3 + $0x250] sm:$0xff] %v5402
    %5467 = vst [vmem:[#allocation3 + $0x298] sm:$0xff] %v5403
    %5468 = vst [vmem:[#allocation3 + $0x2e0] sm:$0xff] %v5404
    %5469 = vst [vmem:[#allocation3 + $0x328] sm:$0xff] %v5405
    %5470 = vst [vmem:[#allocation3 + $0x370] sm:$0xff] %v5406
    %5471 = vst [vmem:[#allocation3 + $0x3b8] sm:$0xff] %v5407
    %5472 = vst [vmem:[#allocation3 + $0x400] sm:$0xff] %v5408
    %5473 = vst [vmem:[#allocation3 + $0x448] sm:$0xff] %v5409
    %5474 = vst [vmem:[#allocation3 + $0x490] sm:$0xff] %v5410
    %5475 = vst [vmem:[#allocation3 + $0x4d8] sm:$0xff] %v5411
    %5476 = vst [vmem:[#allocation3 + $0x520] sm:$0xff] %v5412
    %5477 = vst [vmem:[#allocation3 + $0x568] sm:$0xff] %v5413
    %5478 = vst [vmem:[#allocation3 + $0x5b0] sm:$0xff] %v5414
    %5479 = vst [vmem:[#allocation3 + $0x5f8] sm:$0xff] %v5415
    %5480 = vst [vmem:[#allocation3 + $0x640] sm:$0xff] %v5416
    %5481 = vst [vmem:[#allocation3 + $0x688] sm:$0xff] %v5417
    %5482 = vst [vmem:[#allocation3 + $0x6d0] sm:$0xff] %v5418
    %5483 = vst [vmem:[#allocation3 + $0x718] sm:$0xff] %v5419
    %5484 = vst [vmem:[#allocation3 + $0x760] sm:$0xff] %v5420
    %5485 = vst [vmem:[#allocation3 + $0x7a8] sm:$0xff] %v5421
    %5486 = vst [vmem:[#allocation3 + $0x7f0] sm:$0xff] %v5422
    %5487 = vst [vmem:[#allocation3 + $0x838] sm:$0xff] %v5423
    %5488 = vst [vmem:[#allocation3 + $0x880] sm:$0xff] %v5424
    %5489 = vst [vmem:[#allocation3 + $0x8c8] sm:$0xff] %v5425
    %5490 = vst [vmem:[#allocation3 + $0x910] sm:$0xff] %v5426
    %5491 = vst [vmem:[#allocation3 + $0x958] sm:$0xff] %v5427
    %5492 = vst [vmem:[#allocation3 + $0x9a0] sm:$0xff] %v5428
    %5493 = vst [vmem:[#allocation3 + $0x9e8] sm:$0xff] %v5429
    %5494 = vst [vmem:[#allocation3 + $0xa30] sm:$0xff] %v5430
    %5495 = vst [vmem:[#allocation3 + $0xa78] sm:$0xff] %v5431
    %5496 = vst [vmem:[#allocation3 + $0xac0] sm:$0xff] %v5432
    %5497 = vst [vmem:[#allocation3 + $0xb08] sm:$0xff] %v5433
    %5498 = vst [vmem:[#allocation3 + $0xb50] sm:$0xff] %v5434
    %5499 = vst [vmem:[#allocation3 + $0xb98] sm:$0xff] %v5435
    %5500 = vst [vmem:[#allocation3 + $0xbe0] sm:$0xff] %v5436
    %5501 = vst [vmem:[#allocation3 + $0xc28] sm:$0xff] %v5437
    %5502 = vst [vmem:[#allocation3 + $0xc70] sm:$0xff] %v5438
    %5503 = vst [vmem:[#allocation3 + $0xcb8] sm:$0xff] %v5439
    %5504 = vst [vmem:[#allocation3 + $0xd00] sm:$0xff] %v5440
    %5505 = vst [vmem:[#allocation3 + $0xd48] sm:$0xff] %v5441
    %5506 = vst [vmem:[#allocation3 + $0xd90] sm:$0xff] %v5442
    %5507 = vst [vmem:[#allocation3 + $0xdd8] sm:$0xff] %v5443
    %5508 = vst [vmem:[#allocation3 + $0xe20] sm:$0xff] %v5444
    %5509 = vst [vmem:[#allocation3 + $0xe68] sm:$0xff] %v5445
    %5510 = vst [vmem:[#allocation3 + $0xeb0] sm:$0xff] %v5446
    %5511 = vst [vmem:[#allocation3 + $0xef8] sm:$0xff] %v5447
    %5512 = vst [vmem:[#allocation3 + $0xf40] sm:$0xff] %v5448
    %5513 = vst [vmem:[#allocation3 + $0xf88] sm:$0xff] %v5449
    %5514 = vst [vmem:[#allocation3 + $0xfd0] sm:$0xff] %v5450
    %5515 = vst [vmem:[#allocation3 + $0x1018] sm:$0xff] %v5451
    %5516 = vst [vmem:[#allocation3 + $0x1060] sm:$0xff] %v5452
    %5517 = vst [vmem:[#allocation3 + $0x10a8] sm:$0xff] %v5453
    %5518 = vst [vmem:[#allocation3 + $0x10f0] sm:$0xff] %v5454
    %5519 = vst [vmem:[#allocation3 + $0x1138] sm:$0xff] %v5455
    %5520 = vst [vmem:[#allocation3 + $0x1180] sm:$0xff] %v5456
    %5521 = vst [vmem:[#allocation3 + $0x11c8] sm:$0xff] %v5457
    %v5522 = vld [vmem:[%s793] sm:$0xff]
    %v5523 = vld [vmem:[%s793 + $0x8] sm:$0xff]
    %v5524 = vld [vmem:[%s793 + $0x18] sm:$0xff]
    %v5525 = vld [vmem:[%s793 + $0x20] sm:$0xff]
    %v5526 = vld [vmem:[%s793 + $0x30] sm:$0xff]
    %v5527 = vld [vmem:[%s793 + $0x38] sm:$0xff]
    %v5528 = vld [vmem:[%s793 + $0x48] sm:$0xff]
    %v5529 = vld [vmem:[%s793 + $0x50] sm:$0xff]
    %v5530 = vld [vmem:[%s793 + $0x60] sm:$0xff]
    %v5531 = vld [vmem:[%s793 + $0x68] sm:$0xff]
    %v5532 = vld [vmem:[%s793 + $0x78] sm:$0xff]
    %v5533 = vld [vmem:[%s793 + $0x80] sm:$0xff]
    %v5534 = vld [vmem:[%s793 + $0x90] sm:$0xff]
    %v5535 = vld [vmem:[%s793 + $0x98] sm:$0xff]
    %v5536 = vld [vmem:[%s793 + $0xa8] sm:$0xff]
    %v5537 = vld [vmem:[%s793 + $0xb0] sm:$0xff]
    %v5538 = vld [vmem:[%s793 + $0xc0] sm:$0xff]
    %v5539 = vld [vmem:[%s793 + $0xc8] sm:$0xff]
    %v5540 = vld [vmem:[%s793 + $0xd8] sm:$0xff]
    %v5541 = vld [vmem:[%s793 + $0xe0] sm:$0xff]
    %v5542 = vld [vmem:[%s793 + $0xf0] sm:$0xff]
    %v5543 = vld [vmem:[%s793 + $0xf8] sm:$0xff]
    %v5544 = vld [vmem:[%s793 + $0x108] sm:$0xff]
    %v5545 = vld [vmem:[%s793 + $0x110] sm:$0xff]
    %v5546 = vld [vmem:[%s793 + $0x120] sm:$0xff]
    %v5547 = vld [vmem:[%s793 + $0x128] sm:$0xff]
    %v5548 = vld [vmem:[%s793 + $0x138] sm:$0xff]
    %v5549 = vld [vmem:[%s793 + $0x140] sm:$0xff]
    %v5550 = vld [vmem:[%s793 + $0x150] sm:$0xff]
    %v5551 = vld [vmem:[%s793 + $0x158] sm:$0xff]
    %v5552 = vld [vmem:[%s793 + $0x168] sm:$0xff]
    %v5553 = vld [vmem:[%s793 + $0x170] sm:$0xff]
    %v5554 = vld [vmem:[%s793 + $0x1b0] sm:$0xff]
    %v5555 = vld [vmem:[%s793 + $0x1b8] sm:$0xff]
    %v5556 = vld [vmem:[%s793 + $0x1c8] sm:$0xff]
    %v5557 = vld [vmem:[%s793 + $0x1d0] sm:$0xff]
    %v5558 = vld [vmem:[%s793 + $0x1e0] sm:$0xff]
    %v5559 = vld [vmem:[%s793 + $0x1e8] sm:$0xff]
    %v5560 = vld [vmem:[%s793 + $0x1f8] sm:$0xff]
    %v5561 = vld [vmem:[%s793 + $0x200] sm:$0xff]
    %v5562 = vld [vmem:[%s793 + $0x210] sm:$0xff]
    %v5563 = vld [vmem:[%s793 + $0x218] sm:$0xff]
    %v5564 = vld [vmem:[%s793 + $0x228] sm:$0xff]
    %v5565 = vld [vmem:[%s793 + $0x230] sm:$0xff]
    %v5566 = vld [vmem:[%s793 + $0x240] sm:$0xff]
    %v5567 = vld [vmem:[%s793 + $0x248] sm:$0xff]
    %v5568 = vld [vmem:[%s793 + $0x258] sm:$0xff]
    %v5569 = vld [vmem:[%s793 + $0x260] sm:$0xff]
    %v5570 = vld [vmem:[%s793 + $0x270] sm:$0xff]
    %v5571 = vld [vmem:[%s793 + $0x278] sm:$0xff]
    %v5572 = vld [vmem:[%s793 + $0x288] sm:$0xff]
    %v5573 = vld [vmem:[%s793 + $0x290] sm:$0xff]
    %v5574 = vld [vmem:[%s793 + $0x2a0] sm:$0xff]
    %v5575 = vld [vmem:[%s793 + $0x2a8] sm:$0xff]
    %v5576 = vld [vmem:[%s793 + $0x2b8] sm:$0xff]
    %v5577 = vld [vmem:[%s793 + $0x2c0] sm:$0xff]
    %v5578 = vld [vmem:[%s793 + $0x2d0] sm:$0xff]
    %v5579 = vld [vmem:[%s793 + $0x2d8] sm:$0xff]
    %v5580 = vld [vmem:[%s793 + $0x2e8] sm:$0xff]
    %v5581 = vld [vmem:[%s793 + $0x2f0] sm:$0xff]
    %v5582 = vld [vmem:[%s793 + $0x300] sm:$0xff]
    %v5583 = vld [vmem:[%s793 + $0x308] sm:$0xff]
    %v5584 = vld [vmem:[%s793 + $0x318] sm:$0xff]
    %v5585 = vld [vmem:[%s793 + $0x320] sm:$0xff]
    %5586 = vst [vmem:[#allocation3 + $0x18] sm:$0xff] %v5522
    %5587 = vst [vmem:[#allocation3 + $0x60] sm:$0xff] %v5523
    %5588 = vst [vmem:[#allocation3 + $0xa8] sm:$0xff] %v5524
    %5589 = vst [vmem:[#allocation3 + $0xf0] sm:$0xff] %v5525
    %5590 = vst [vmem:[#allocation3 + $0x138] sm:$0xff] %v5526
    %5591 = vst [vmem:[#allocation3 + $0x180] sm:$0xff] %v5527
    %5592 = vst [vmem:[#allocation3 + $0x1c8] sm:$0xff] %v5528
    %5593 = vst [vmem:[#allocation3 + $0x210] sm:$0xff] %v5529
    %5594 = vst [vmem:[#allocation3 + $0x258] sm:$0xff] %v5530
    %5595 = vst [vmem:[#allocation3 + $0x2a0] sm:$0xff] %v5531
    %5596 = vst [vmem:[#allocation3 + $0x2e8] sm:$0xff] %v5532
    %5597 = vst [vmem:[#allocation3 + $0x330] sm:$0xff] %v5533
    %5598 = vst [vmem:[#allocation3 + $0x378] sm:$0xff] %v5534
    %5599 = vst [vmem:[#allocation3 + $0x3c0] sm:$0xff] %v5535
    %5600 = vst [vmem:[#allocation3 + $0x408] sm:$0xff] %v5536
    %5601 = vst [vmem:[#allocation3 + $0x450] sm:$0xff] %v5537
    %5602 = vst [vmem:[#allocation3 + $0x498] sm:$0xff] %v5538
    %5603 = vst [vmem:[#allocation3 + $0x4e0] sm:$0xff] %v5539
    %5604 = vst [vmem:[#allocation3 + $0x528] sm:$0xff] %v5540
    %5605 = vst [vmem:[#allocation3 + $0x570] sm:$0xff] %v5541
    %5606 = vst [vmem:[#allocation3 + $0x5b8] sm:$0xff] %v5542
    %5607 = vst [vmem:[#allocation3 + $0x600] sm:$0xff] %v5543
    %5608 = vst [vmem:[#allocation3 + $0x648] sm:$0xff] %v5544
    %5609 = vst [vmem:[#allocation3 + $0x690] sm:$0xff] %v5545
    %5610 = vst [vmem:[#allocation3 + $0x6d8] sm:$0xff] %v5546
    %5611 = vst [vmem:[#allocation3 + $0x720] sm:$0xff] %v5547
    %5612 = vst [vmem:[#allocation3 + $0x768] sm:$0xff] %v5548
    %5613 = vst [vmem:[#allocation3 + $0x7b0] sm:$0xff] %v5549
    %5614 = vst [vmem:[#allocation3 + $0x7f8] sm:$0xff] %v5550
    %5615 = vst [vmem:[#allocation3 + $0x840] sm:$0xff] %v5551
    %5616 = vst [vmem:[#allocation3 + $0x888] sm:$0xff] %v5552
    %5617 = vst [vmem:[#allocation3 + $0x8d0] sm:$0xff] %v5553
    %5618 = vst [vmem:[#allocation3 + $0x918] sm:$0xff] %v5554
    %5619 = vst [vmem:[#allocation3 + $0x960] sm:$0xff] %v5555
    %5620 = vst [vmem:[#allocation3 + $0x9a8] sm:$0xff] %v5556
    %5621 = vst [vmem:[#allocation3 + $0x9f0] sm:$0xff] %v5557
    %5622 = vst [vmem:[#allocation3 + $0xa38] sm:$0xff] %v5558
    %5623 = vst [vmem:[#allocation3 + $0xa80] sm:$0xff] %v5559
    %5624 = vst [vmem:[#allocation3 + $0xac8] sm:$0xff] %v5560
    %5625 = vst [vmem:[#allocation3 + $0xb10] sm:$0xff] %v5561
    %5626 = vst [vmem:[#allocation3 + $0xb58] sm:$0xff] %v5562
    %5627 = vst [vmem:[#allocation3 + $0xba0] sm:$0xff] %v5563
    %5628 = vst [vmem:[#allocation3 + $0xbe8] sm:$0xff] %v5564
    %5629 = vst [vmem:[#allocation3 + $0xc30] sm:$0xff] %v5565
    %5630 = vst [vmem:[#allocation3 + $0xc78] sm:$0xff] %v5566
    %5631 = vst [vmem:[#allocation3 + $0xcc0] sm:$0xff] %v5567
    %5632 = vst [vmem:[#allocation3 + $0xd08] sm:$0xff] %v5568
    %5633 = vst [vmem:[#allocation3 + $0xd50] sm:$0xff] %v5569
    %5634 = vst [vmem:[#allocation3 + $0xd98] sm:$0xff] %v5570
    %5635 = vst [vmem:[#allocation3 + $0xde0] sm:$0xff] %v5571
    %5636 = vst [vmem:[#allocation3 + $0xe28] sm:$0xff] %v5572
    %5637 = vst [vmem:[#allocation3 + $0xe70] sm:$0xff] %v5573
    %5638 = vst [vmem:[#allocation3 + $0xeb8] sm:$0xff] %v5574
    %5639 = vst [vmem:[#allocation3 + $0xf00] sm:$0xff] %v5575
    %5640 = vst [vmem:[#allocation3 + $0xf48] sm:$0xff] %v5576
    %5641 = vst [vmem:[#allocation3 + $0xf90] sm:$0xff] %v5577
    %5642 = vst [vmem:[#allocation3 + $0xfd8] sm:$0xff] %v5578
    %5643 = vst [vmem:[#allocation3 + $0x1020] sm:$0xff] %v5579
    %5644 = vst [vmem:[#allocation3 + $0x1068] sm:$0xff] %v5580
    %5645 = vst [vmem:[#allocation3 + $0x10b0] sm:$0xff] %v5581
    %5646 = vst [vmem:[#allocation3 + $0x10f8] sm:$0xff] %v5582
    %5647 = vst [vmem:[#allocation3 + $0x1140] sm:$0xff] %v5583
    %5648 = vst [vmem:[#allocation3 + $0x1188] sm:$0xff] %v5584
    %5649 = vst [vmem:[#allocation3 + $0x11d0] sm:$0xff] %v5585
    %v5650 = vld [vmem:[%s793 + $0x1] sm:$0xff]
    %v5651 = vld [vmem:[%s793 + $0x9] sm:$0xff]
    %v5652 = vld [vmem:[%s793 + $0x19] sm:$0xff]
    %v5653 = vld [vmem:[%s793 + $0x21] sm:$0xff]
    %v5654 = vld [vmem:[%s793 + $0x31] sm:$0xff]
    %v5655 = vld [vmem:[%s793 + $0x39] sm:$0xff]
    %v5656 = vld [vmem:[%s793 + $0x49] sm:$0xff]
    %v5657 = vld [vmem:[%s793 + $0x51] sm:$0xff]
    %v5658 = vld [vmem:[%s793 + $0x61] sm:$0xff]
    %v5659 = vld [vmem:[%s793 + $0x69] sm:$0xff]
    %v5660 = vld [vmem:[%s793 + $0x79] sm:$0xff]
    %v5661 = vld [vmem:[%s793 + $0x81] sm:$0xff]
    %v5662 = vld [vmem:[%s793 + $0x91] sm:$0xff]
    %v5663 = vld [vmem:[%s793 + $0x99] sm:$0xff]
    %v5664 = vld [vmem:[%s793 + $0xa9] sm:$0xff]
    %v5665 = vld [vmem:[%s793 + $0xb1] sm:$0xff]
    %v5666 = vld [vmem:[%s793 + $0xc1] sm:$0xff]
    %v5667 = vld [vmem:[%s793 + $0xc9] sm:$0xff]
    %v5668 = vld [vmem:[%s793 + $0xd9] sm:$0xff]
    %v5669 = vld [vmem:[%s793 + $0xe1] sm:$0xff]
    %v5670 = vld [vmem:[%s793 + $0xf1] sm:$0xff]
    %v5671 = vld [vmem:[%s793 + $0xf9] sm:$0xff]
    %v5672 = vld [vmem:[%s793 + $0x109] sm:$0xff]
    %v5673 = vld [vmem:[%s793 + $0x111] sm:$0xff]
    %v5674 = vld [vmem:[%s793 + $0x121] sm:$0xff]
    %v5675 = vld [vmem:[%s793 + $0x129] sm:$0xff]
    %v5676 = vld [vmem:[%s793 + $0x139] sm:$0xff]
    %v5677 = vld [vmem:[%s793 + $0x141] sm:$0xff]
    %v5678 = vld [vmem:[%s793 + $0x151] sm:$0xff]
    %v5679 = vld [vmem:[%s793 + $0x159] sm:$0xff]
    %v5680 = vld [vmem:[%s793 + $0x169] sm:$0xff]
    %v5681 = vld [vmem:[%s793 + $0x171] sm:$0xff]
    %v5682 = vld [vmem:[%s793 + $0x1b1] sm:$0xff]
    %v5683 = vld [vmem:[%s793 + $0x1b9] sm:$0xff]
    %v5684 = vld [vmem:[%s793 + $0x1c9] sm:$0xff]
    %v5685 = vld [vmem:[%s793 + $0x1d1] sm:$0xff]
    %v5686 = vld [vmem:[%s793 + $0x1e1] sm:$0xff]
    %v5687 = vld [vmem:[%s793 + $0x1e9] sm:$0xff]
    %v5688 = vld [vmem:[%s793 + $0x1f9] sm:$0xff]
    %v5689 = vld [vmem:[%s793 + $0x201] sm:$0xff]
    %v5690 = vld [vmem:[%s793 + $0x211] sm:$0xff]
    %v5691 = vld [vmem:[%s793 + $0x219] sm:$0xff]
    %v5692 = vld [vmem:[%s793 + $0x229] sm:$0xff]
    %v5693 = vld [vmem:[%s793 + $0x231] sm:$0xff]
    %v5694 = vld [vmem:[%s793 + $0x241] sm:$0xff]
    %v5695 = vld [vmem:[%s793 + $0x249] sm:$0xff]
    %v5696 = vld [vmem:[%s793 + $0x259] sm:$0xff]
    %v5697 = vld [vmem:[%s793 + $0x261] sm:$0xff]
    %v5698 = vld [vmem:[%s793 + $0x271] sm:$0xff]
    %v5699 = vld [vmem:[%s793 + $0x279] sm:$0xff]
    %v5700 = vld [vmem:[%s793 + $0x289] sm:$0xff]
    %v5701 = vld [vmem:[%s793 + $0x291] sm:$0xff]
    %v5702 = vld [vmem:[%s793 + $0x2a1] sm:$0xff]
    %v5703 = vld [vmem:[%s793 + $0x2a9] sm:$0xff]
    %v5704 = vld [vmem:[%s793 + $0x2b9] sm:$0xff]
    %v5705 = vld [vmem:[%s793 + $0x2c1] sm:$0xff]
    %v5706 = vld [vmem:[%s793 + $0x2d1] sm:$0xff]
    %v5707 = vld [vmem:[%s793 + $0x2d9] sm:$0xff]
    %v5708 = vld [vmem:[%s793 + $0x2e9] sm:$0xff]
    %v5709 = vld [vmem:[%s793 + $0x2f1] sm:$0xff]
    %v5710 = vld [vmem:[%s793 + $0x301] sm:$0xff]
    %v5711 = vld [vmem:[%s793 + $0x309] sm:$0xff]
    %v5712 = vld [vmem:[%s793 + $0x319] sm:$0xff]
    %v5713 = vld [vmem:[%s793 + $0x321] sm:$0xff]
    %5714 = vst [vmem:[#allocation3 + $0x20] sm:$0xff] %v5650
    %5715 = vst [vmem:[#allocation3 + $0x68] sm:$0xff] %v5651
    %5716 = vst [vmem:[#allocation3 + $0xb0] sm:$0xff] %v5652
    %5717 = vst [vmem:[#allocation3 + $0xf8] sm:$0xff] %v5653
    %5718 = vst [vmem:[#allocation3 + $0x140] sm:$0xff] %v5654
    %5719 = vst [vmem:[#allocation3 + $0x188] sm:$0xff] %v5655
    %5720 = vst [vmem:[#allocation3 + $0x1d0] sm:$0xff] %v5656
    %5721 = vst [vmem:[#allocation3 + $0x218] sm:$0xff] %v5657
    %5722 = vst [vmem:[#allocation3 + $0x260] sm:$0xff] %v5658
    %5723 = vst [vmem:[#allocation3 + $0x2a8] sm:$0xff] %v5659
    %5724 = vst [vmem:[#allocation3 + $0x2f0] sm:$0xff] %v5660
    %5725 = vst [vmem:[#allocation3 + $0x338] sm:$0xff] %v5661
    %5726 = vst [vmem:[#allocation3 + $0x380] sm:$0xff] %v5662
    %5727 = vst [vmem:[#allocation3 + $0x3c8] sm:$0xff] %v5663
    %5728 = vst [vmem:[#allocation3 + $0x410] sm:$0xff] %v5664
    %5729 = vst [vmem:[#allocation3 + $0x458] sm:$0xff] %v5665
    %5730 = vst [vmem:[#allocation3 + $0x4a0] sm:$0xff] %v5666
    %5731 = vst [vmem:[#allocation3 + $0x4e8] sm:$0xff] %v5667
    %5732 = vst [vmem:[#allocation3 + $0x530] sm:$0xff] %v5668
    %5733 = vst [vmem:[#allocation3 + $0x578] sm:$0xff] %v5669
    %5734 = vst [vmem:[#allocation3 + $0x5c0] sm:$0xff] %v5670
    %5735 = vst [vmem:[#allocation3 + $0x608] sm:$0xff] %v5671
    %5736 = vst [vmem:[#allocation3 + $0x650] sm:$0xff] %v5672
    %5737 = vst [vmem:[#allocation3 + $0x698] sm:$0xff] %v5673
    %5738 = vst [vmem:[#allocation3 + $0x6e0] sm:$0xff] %v5674
    %5739 = vst [vmem:[#allocation3 + $0x728] sm:$0xff] %v5675
    %5740 = vst [vmem:[#allocation3 + $0x770] sm:$0xff] %v5676
    %5741 = vst [vmem:[#allocation3 + $0x7b8] sm:$0xff] %v5677
    %5742 = vst [vmem:[#allocation3 + $0x800] sm:$0xff] %v5678
    %5743 = vst [vmem:[#allocation3 + $0x848] sm:$0xff] %v5679
    %5744 = vst [vmem:[#allocation3 + $0x890] sm:$0xff] %v5680
    %5745 = vst [vmem:[#allocation3 + $0x8d8] sm:$0xff] %v5681
    %5746 = vst [vmem:[#allocation3 + $0x920] sm:$0xff] %v5682
    %5747 = vst [vmem:[#allocation3 + $0x968] sm:$0xff] %v5683
    %5748 = vst [vmem:[#allocation3 + $0x9b0] sm:$0xff] %v5684
    %5749 = vst [vmem:[#allocation3 + $0x9f8] sm:$0xff] %v5685
    %5750 = vst [vmem:[#allocation3 + $0xa40] sm:$0xff] %v5686
    %5751 = vst [vmem:[#allocation3 + $0xa88] sm:$0xff] %v5687
    %5752 = vst [vmem:[#allocation3 + $0xad0] sm:$0xff] %v5688
    %5753 = vst [vmem:[#allocation3 + $0xb18] sm:$0xff] %v5689
    %5754 = vst [vmem:[#allocation3 + $0xb60] sm:$0xff] %v5690
    %5755 = vst [vmem:[#allocation3 + $0xba8] sm:$0xff] %v5691
    %5756 = vst [vmem:[#allocation3 + $0xbf0] sm:$0xff] %v5692
    %5757 = vst [vmem:[#allocation3 + $0xc38] sm:$0xff] %v5693
    %5758 = vst [vmem:[#allocation3 + $0xc80] sm:$0xff] %v5694
    %5759 = vst [vmem:[#allocation3 + $0xcc8] sm:$0xff] %v5695
    %5760 = vst [vmem:[#allocation3 + $0xd10] sm:$0xff] %v5696
    %5761 = vst [vmem:[#allocation3 + $0xd58] sm:$0xff] %v5697
    %5762 = vst [vmem:[#allocation3 + $0xda0] sm:$0xff] %v5698
    %5763 = vst [vmem:[#allocation3 + $0xde8] sm:$0xff] %v5699
    %5764 = vst [vmem:[#allocation3 + $0xe30] sm:$0xff] %v5700
    %5765 = vst [vmem:[#allocation3 + $0xe78] sm:$0xff] %v5701
    %5766 = vst [vmem:[#allocation3 + $0xec0] sm:$0xff] %v5702
    %5767 = vst [vmem:[#allocation3 + $0xf08] sm:$0xff] %v5703
    %5768 = vst [vmem:[#allocation3 + $0xf50] sm:$0xff] %v5704
    %5769 = vst [vmem:[#allocation3 + $0xf98] sm:$0xff] %v5705
    %5770 = vst [vmem:[#allocation3 + $0xfe0] sm:$0xff] %v5706
    %5771 = vst [vmem:[#allocation3 + $0x1028] sm:$0xff] %v5707
    %5772 = vst [vmem:[#allocation3 + $0x1070] sm:$0xff] %v5708
    %5773 = vst [vmem:[#allocation3 + $0x10b8] sm:$0xff] %v5709
    %5774 = vst [vmem:[#allocation3 + $0x1100] sm:$0xff] %v5710
    %5775 = vst [vmem:[#allocation3 + $0x1148] sm:$0xff] %v5711
    %5776 = vst [vmem:[#allocation3 + $0x1190] sm:$0xff] %v5712
    %5777 = vst [vmem:[#allocation3 + $0x11d8] sm:$0xff] %v5713
    %v5778 = vld [vmem:[%s793 + $0x2] sm:$0xff]
    %v5779 = vld [vmem:[%s793 + $0xa] sm:$0xff]
    %v5780 = vld [vmem:[%s793 + $0x1a] sm:$0xff]
    %v5781 = vld [vmem:[%s793 + $0x22] sm:$0xff]
    %v5782 = vld [vmem:[%s793 + $0x32] sm:$0xff]
    %v5783 = vld [vmem:[%s793 + $0x3a] sm:$0xff]
    %v5784 = vld [vmem:[%s793 + $0x4a] sm:$0xff]
    %v5785 = vld [vmem:[%s793 + $0x52] sm:$0xff]
    %v5786 = vld [vmem:[%s793 + $0x62] sm:$0xff]
    %v5787 = vld [vmem:[%s793 + $0x6a] sm:$0xff]
    %v5788 = vld [vmem:[%s793 + $0x7a] sm:$0xff]
    %v5789 = vld [vmem:[%s793 + $0x82] sm:$0xff]
    %v5790 = vld [vmem:[%s793 + $0x92] sm:$0xff]
    %v5791 = vld [vmem:[%s793 + $0x9a] sm:$0xff]
    %v5792 = vld [vmem:[%s793 + $0xaa] sm:$0xff]
    %v5793 = vld [vmem:[%s793 + $0xb2] sm:$0xff]
    %v5794 = vld [vmem:[%s793 + $0xc2] sm:$0xff]
    %v5795 = vld [vmem:[%s793 + $0xca] sm:$0xff]
    %v5796 = vld [vmem:[%s793 + $0xda] sm:$0xff]
    %v5797 = vld [vmem:[%s793 + $0xe2] sm:$0xff]
    %v5798 = vld [vmem:[%s793 + $0xf2] sm:$0xff]
    %v5799 = vld [vmem:[%s793 + $0xfa] sm:$0xff]
    %v5800 = vld [vmem:[%s793 + $0x10a] sm:$0xff]
    %v5801 = vld [vmem:[%s793 + $0x112] sm:$0xff]
    %v5802 = vld [vmem:[%s793 + $0x122] sm:$0xff]
    %v5803 = vld [vmem:[%s793 + $0x12a] sm:$0xff]
    %v5804 = vld [vmem:[%s793 + $0x13a] sm:$0xff]
    %v5805 = vld [vmem:[%s793 + $0x142] sm:$0xff]
    %v5806 = vld [vmem:[%s793 + $0x152] sm:$0xff]
    %v5807 = vld [vmem:[%s793 + $0x15a] sm:$0xff]
    %v5808 = vld [vmem:[%s793 + $0x16a] sm:$0xff]
    %v5809 = vld [vmem:[%s793 + $0x172] sm:$0xff]
    %v5810 = vld [vmem:[%s793 + $0x1b2] sm:$0xff]
    %v5811 = vld [vmem:[%s793 + $0x1ba] sm:$0xff]
    %v5812 = vld [vmem:[%s793 + $0x1ca] sm:$0xff]
    %v5813 = vld [vmem:[%s793 + $0x1d2] sm:$0xff]
    %v5814 = vld [vmem:[%s793 + $0x1e2] sm:$0xff]
    %v5815 = vld [vmem:[%s793 + $0x1ea] sm:$0xff]
    %v5816 = vld [vmem:[%s793 + $0x1fa] sm:$0xff]
    %v5817 = vld [vmem:[%s793 + $0x202] sm:$0xff]
    %v5818 = vld [vmem:[%s793 + $0x212] sm:$0xff]
    %v5819 = vld [vmem:[%s793 + $0x21a] sm:$0xff]
    %v5820 = vld [vmem:[%s793 + $0x22a] sm:$0xff]
    %v5821 = vld [vmem:[%s793 + $0x232] sm:$0xff]
    %v5822 = vld [vmem:[%s793 + $0x242] sm:$0xff]
    %v5823 = vld [vmem:[%s793 + $0x24a] sm:$0xff]
    %v5824 = vld [vmem:[%s793 + $0x25a] sm:$0xff]
    %v5825 = vld [vmem:[%s793 + $0x262] sm:$0xff]
    %v5826 = vld [vmem:[%s793 + $0x272] sm:$0xff]
    %v5827 = vld [vmem:[%s793 + $0x27a] sm:$0xff]
    %v5828 = vld [vmem:[%s793 + $0x28a] sm:$0xff]
    %v5829 = vld [vmem:[%s793 + $0x292] sm:$0xff]
    %v5830 = vld [vmem:[%s793 + $0x2a2] sm:$0xff]
    %v5831 = vld [vmem:[%s793 + $0x2aa] sm:$0xff]
    %v5832 = vld [vmem:[%s793 + $0x2ba] sm:$0xff]
    %v5833 = vld [vmem:[%s793 + $0x2c2] sm:$0xff]
    %v5834 = vld [vmem:[%s793 + $0x2d2] sm:$0xff]
    %v5835 = vld [vmem:[%s793 + $0x2da] sm:$0xff]
    %v5836 = vld [vmem:[%s793 + $0x2ea] sm:$0xff]
    %v5837 = vld [vmem:[%s793 + $0x2f2] sm:$0xff]
    %v5838 = vld [vmem:[%s793 + $0x302] sm:$0xff]
    %v5839 = vld [vmem:[%s793 + $0x30a] sm:$0xff]
    %v5840 = vld [vmem:[%s793 + $0x31a] sm:$0xff]
    %v5841 = vld [vmem:[%s793 + $0x322] sm:$0xff]
    %5842 = vst [vmem:[#allocation3 + $0x28] sm:$0xff] %v5778
    %5843 = vst [vmem:[#allocation3 + $0x70] sm:$0xff] %v5779
    %5844 = vst [vmem:[#allocation3 + $0xb8] sm:$0xff] %v5780
    %5845 = vst [vmem:[#allocation3 + $0x100] sm:$0xff] %v5781
    %5846 = vst [vmem:[#allocation3 + $0x148] sm:$0xff] %v5782
    %5847 = vst [vmem:[#allocation3 + $0x190] sm:$0xff] %v5783
    %5848 = vst [vmem:[#allocation3 + $0x1d8] sm:$0xff] %v5784
    %5849 = vst [vmem:[#allocation3 + $0x220] sm:$0xff] %v5785
    %5850 = vst [vmem:[#allocation3 + $0x268] sm:$0xff] %v5786
    %5851 = vst [vmem:[#allocation3 + $0x2b0] sm:$0xff] %v5787
    %5852 = vst [vmem:[#allocation3 + $0x2f8] sm:$0xff] %v5788
    %5853 = vst [vmem:[#allocation3 + $0x340] sm:$0xff] %v5789
    %5854 = vst [vmem:[#allocation3 + $0x388] sm:$0xff] %v5790
    %5855 = vst [vmem:[#allocation3 + $0x3d0] sm:$0xff] %v5791
    %5856 = vst [vmem:[#allocation3 + $0x418] sm:$0xff] %v5792
    %5857 = vst [vmem:[#allocation3 + $0x460] sm:$0xff] %v5793
    %5858 = vst [vmem:[#allocation3 + $0x4a8] sm:$0xff] %v5794
    %5859 = vst [vmem:[#allocation3 + $0x4f0] sm:$0xff] %v5795
    %5860 = vst [vmem:[#allocation3 + $0x538] sm:$0xff] %v5796
    %5861 = vst [vmem:[#allocation3 + $0x580] sm:$0xff] %v5797
    %5862 = vst [vmem:[#allocation3 + $0x5c8] sm:$0xff] %v5798
    %5863 = vst [vmem:[#allocation3 + $0x610] sm:$0xff] %v5799
    %5864 = vst [vmem:[#allocation3 + $0x658] sm:$0xff] %v5800
    %5865 = vst [vmem:[#allocation3 + $0x6a0] sm:$0xff] %v5801
    %5866 = vst [vmem:[#allocation3 + $0x6e8] sm:$0xff] %v5802
    %5867 = vst [vmem:[#allocation3 + $0x730] sm:$0xff] %v5803
    %5868 = vst [vmem:[#allocation3 + $0x778] sm:$0xff] %v5804
    %5869 = vst [vmem:[#allocation3 + $0x7c0] sm:$0xff] %v5805
    %5870 = vst [vmem:[#allocation3 + $0x808] sm:$0xff] %v5806
    %5871 = vst [vmem:[#allocation3 + $0x850] sm:$0xff] %v5807
    %5872 = vst [vmem:[#allocation3 + $0x898] sm:$0xff] %v5808
    %5873 = vst [vmem:[#allocation3 + $0x8e0] sm:$0xff] %v5809
    %5874 = vst [vmem:[#allocation3 + $0x928] sm:$0xff] %v5810
    %5875 = vst [vmem:[#allocation3 + $0x970] sm:$0xff] %v5811
    %5876 = vst [vmem:[#allocation3 + $0x9b8] sm:$0xff] %v5812
    %5877 = vst [vmem:[#allocation3 + $0xa00] sm:$0xff] %v5813
    %5878 = vst [vmem:[#allocation3 + $0xa48] sm:$0xff] %v5814
    %5879 = vst [vmem:[#allocation3 + $0xa90] sm:$0xff] %v5815
    %5880 = vst [vmem:[#allocation3 + $0xad8] sm:$0xff] %v5816
    %5881 = vst [vmem:[#allocation3 + $0xb20] sm:$0xff] %v5817
    %5882 = vst [vmem:[#allocation3 + $0xb68] sm:$0xff] %v5818
    %5883 = vst [vmem:[#allocation3 + $0xbb0] sm:$0xff] %v5819
    %5884 = vst [vmem:[#allocation3 + $0xbf8] sm:$0xff] %v5820
    %5885 = vst [vmem:[#allocation3 + $0xc40] sm:$0xff] %v5821
    %5886 = vst [vmem:[#allocation3 + $0xc88] sm:$0xff] %v5822
    %5887 = vst [vmem:[#allocation3 + $0xcd0] sm:$0xff] %v5823
    %5888 = vst [vmem:[#allocation3 + $0xd18] sm:$0xff] %v5824
    %5889 = vst [vmem:[#allocation3 + $0xd60] sm:$0xff] %v5825
    %5890 = vst [vmem:[#allocation3 + $0xda8] sm:$0xff] %v5826
    %5891 = vst [vmem:[#allocation3 + $0xdf0] sm:$0xff] %v5827
    %5892 = vst [vmem:[#allocation3 + $0xe38] sm:$0xff] %v5828
    %5893 = vst [vmem:[#allocation3 + $0xe80] sm:$0xff] %v5829
    %5894 = vst [vmem:[#allocation3 + $0xec8] sm:$0xff] %v5830
    %5895 = vst [vmem:[#allocation3 + $0xf10] sm:$0xff] %v5831
    %5896 = vst [vmem:[#allocation3 + $0xf58] sm:$0xff] %v5832
    %5897 = vst [vmem:[#allocation3 + $0xfa0] sm:$0xff] %v5833
    %5898 = vst [vmem:[#allocation3 + $0xfe8] sm:$0xff] %v5834
    %5899 = vst [vmem:[#allocation3 + $0x1030] sm:$0xff] %v5835
    %5900 = vst [vmem:[#allocation3 + $0x1078] sm:$0xff] %v5836
    %5901 = vst [vmem:[#allocation3 + $0x10c0] sm:$0xff] %v5837
    %5902 = vst [vmem:[#allocation3 + $0x1108] sm:$0xff] %v5838
    %5903 = vst [vmem:[#allocation3 + $0x1150] sm:$0xff] %v5839
    %5904 = vst [vmem:[#allocation3 + $0x1198] sm:$0xff] %v5840
    %5905 = vst [vmem:[#allocation3 + $0x11e0] sm:$0xff] %v5841
    %v5906 = vld [vmem:[%s1626] sm:$0xff]
    %v5907 = vld [vmem:[%s1626 + $0x8] sm:$0xff]
    %v5908 = vld [vmem:[%s1626 + $0x18] sm:$0xff]
    %v5909 = vld [vmem:[%s1626 + $0x20] sm:$0xff]
    %v5910 = vld [vmem:[%s1626 + $0x30] sm:$0xff]
    %v5911 = vld [vmem:[%s1626 + $0x38] sm:$0xff]
    %v5912 = vld [vmem:[%s1626 + $0x48] sm:$0xff]
    %v5913 = vld [vmem:[%s1626 + $0x50] sm:$0xff]
    %v5914 = vld [vmem:[%s1626 + $0x60] sm:$0xff]
    %v5915 = vld [vmem:[%s1626 + $0x68] sm:$0xff]
    %v5916 = vld [vmem:[%s1626 + $0x78] sm:$0xff]
    %v5917 = vld [vmem:[%s1626 + $0x80] sm:$0xff]
    %v5918 = vld [vmem:[%s1626 + $0x90] sm:$0xff]
    %v5919 = vld [vmem:[%s1626 + $0x98] sm:$0xff]
    %v5920 = vld [vmem:[%s1626 + $0xa8] sm:$0xff]
    %v5921 = vld [vmem:[%s1626 + $0xb0] sm:$0xff]
    %v5922 = vld [vmem:[%s1626 + $0xc0] sm:$0xff]
    %v5923 = vld [vmem:[%s1626 + $0xc8] sm:$0xff]
    %v5924 = vld [vmem:[%s1626 + $0xd8] sm:$0xff]
    %v5925 = vld [vmem:[%s1626 + $0xe0] sm:$0xff]
    %v5926 = vld [vmem:[%s1626 + $0xf0] sm:$0xff]
    %v5927 = vld [vmem:[%s1626 + $0xf8] sm:$0xff]
    %v5928 = vld [vmem:[%s1626 + $0x108] sm:$0xff]
    %v5929 = vld [vmem:[%s1626 + $0x110] sm:$0xff]
    %v5930 = vld [vmem:[%s1626 + $0x120] sm:$0xff]
    %v5931 = vld [vmem:[%s1626 + $0x128] sm:$0xff]
    %v5932 = vld [vmem:[%s1626 + $0x138] sm:$0xff]
    %v5933 = vld [vmem:[%s1626 + $0x140] sm:$0xff]
    %v5934 = vld [vmem:[%s1626 + $0x150] sm:$0xff]
    %v5935 = vld [vmem:[%s1626 + $0x158] sm:$0xff]
    %v5936 = vld [vmem:[%s1626 + $0x168] sm:$0xff]
    %v5937 = vld [vmem:[%s1626 + $0x170] sm:$0xff]
    %v5938 = vld [vmem:[%s1626 + $0x1b0] sm:$0xff]
    %v5939 = vld [vmem:[%s1626 + $0x1b8] sm:$0xff]
    %v5940 = vld [vmem:[%s1626 + $0x1c8] sm:$0xff]
    %v5941 = vld [vmem:[%s1626 + $0x1d0] sm:$0xff]
    %v5942 = vld [vmem:[%s1626 + $0x1e0] sm:$0xff]
    %v5943 = vld [vmem:[%s1626 + $0x1e8] sm:$0xff]
    %v5944 = vld [vmem:[%s1626 + $0x1f8] sm:$0xff]
    %v5945 = vld [vmem:[%s1626 + $0x200] sm:$0xff]
    %v5946 = vld [vmem:[%s1626 + $0x210] sm:$0xff]
    %v5947 = vld [vmem:[%s1626 + $0x218] sm:$0xff]
    %v5948 = vld [vmem:[%s1626 + $0x228] sm:$0xff]
    %v5949 = vld [vmem:[%s1626 + $0x230] sm:$0xff]
    %v5950 = vld [vmem:[%s1626 + $0x240] sm:$0xff]
    %v5951 = vld [vmem:[%s1626 + $0x248] sm:$0xff]
    %v5952 = vld [vmem:[%s1626 + $0x258] sm:$0xff]
    %v5953 = vld [vmem:[%s1626 + $0x260] sm:$0xff]
    %v5954 = vld [vmem:[%s1626 + $0x270] sm:$0xff]
    %v5955 = vld [vmem:[%s1626 + $0x278] sm:$0xff]
    %v5956 = vld [vmem:[%s1626 + $0x288] sm:$0xff]
    %v5957 = vld [vmem:[%s1626 + $0x290] sm:$0xff]
    %v5958 = vld [vmem:[%s1626 + $0x2a0] sm:$0xff]
    %v5959 = vld [vmem:[%s1626 + $0x2a8] sm:$0xff]
    %v5960 = vld [vmem:[%s1626 + $0x2b8] sm:$0xff]
    %v5961 = vld [vmem:[%s1626 + $0x2c0] sm:$0xff]
    %v5962 = vld [vmem:[%s1626 + $0x2d0] sm:$0xff]
    %v5963 = vld [vmem:[%s1626 + $0x2d8] sm:$0xff]
    %v5964 = vld [vmem:[%s1626 + $0x2e8] sm:$0xff]
    %v5965 = vld [vmem:[%s1626 + $0x2f0] sm:$0xff]
    %v5966 = vld [vmem:[%s1626 + $0x300] sm:$0xff]
    %v5967 = vld [vmem:[%s1626 + $0x308] sm:$0xff]
    %v5968 = vld [vmem:[%s1626 + $0x318] sm:$0xff]
    %v5969 = vld [vmem:[%s1626 + $0x320] sm:$0xff]
    %5970 = vst [vmem:[#allocation3 + $0x30] sm:$0xff] %v5906
    %5971 = vst [vmem:[#allocation3 + $0x78] sm:$0xff] %v5907
    %5972 = vst [vmem:[#allocation3 + $0xc0] sm:$0xff] %v5908
    %5973 = vst [vmem:[#allocation3 + $0x108] sm:$0xff] %v5909
    %5974 = vst [vmem:[#allocation3 + $0x150] sm:$0xff] %v5910
    %5975 = vst [vmem:[#allocation3 + $0x198] sm:$0xff] %v5911
    %5976 = vst [vmem:[#allocation3 + $0x1e0] sm:$0xff] %v5912
    %5977 = vst [vmem:[#allocation3 + $0x228] sm:$0xff] %v5913
    %5978 = vst [vmem:[#allocation3 + $0x270] sm:$0xff] %v5914
    %5979 = vst [vmem:[#allocation3 + $0x2b8] sm:$0xff] %v5915
    %5980 = vst [vmem:[#allocation3 + $0x300] sm:$0xff] %v5916
    %5981 = vst [vmem:[#allocation3 + $0x348] sm:$0xff] %v5917
    %5982 = vst [vmem:[#allocation3 + $0x390] sm:$0xff] %v5918
    %5983 = vst [vmem:[#allocation3 + $0x3d8] sm:$0xff] %v5919
    %5984 = vst [vmem:[#allocation3 + $0x420] sm:$0xff] %v5920
    %5985 = vst [vmem:[#allocation3 + $0x468] sm:$0xff] %v5921
    %5986 = vst [vmem:[#allocation3 + $0x4b0] sm:$0xff] %v5922
    %5987 = vst [vmem:[#allocation3 + $0x4f8] sm:$0xff] %v5923
    %5988 = vst [vmem:[#allocation3 + $0x540] sm:$0xff] %v5924
    %5989 = vst [vmem:[#allocation3 + $0x588] sm:$0xff] %v5925
    %5990 = vst [vmem:[#allocation3 + $0x5d0] sm:$0xff] %v5926
    %5991 = vst [vmem:[#allocation3 + $0x618] sm:$0xff] %v5927
    %5992 = vst [vmem:[#allocation3 + $0x660] sm:$0xff] %v5928
    %5993 = vst [vmem:[#allocation3 + $0x6a8] sm:$0xff] %v5929
    %5994 = vst [vmem:[#allocation3 + $0x6f0] sm:$0xff] %v5930
    %5995 = vst [vmem:[#allocation3 + $0x738] sm:$0xff] %v5931
    %5996 = vst [vmem:[#allocation3 + $0x780] sm:$0xff] %v5932
    %5997 = vst [vmem:[#allocation3 + $0x7c8] sm:$0xff] %v5933
    %5998 = vst [vmem:[#allocation3 + $0x810] sm:$0xff] %v5934
    %5999 = vst [vmem:[#allocation3 + $0x858] sm:$0xff] %v5935
    %6000 = vst [vmem:[#allocation3 + $0x8a0] sm:$0xff] %v5936
    %6001 = vst [vmem:[#allocation3 + $0x8e8] sm:$0xff] %v5937
    %6002 = vst [vmem:[#allocation3 + $0x930] sm:$0xff] %v5938
    %6003 = vst [vmem:[#allocation3 + $0x978] sm:$0xff] %v5939
    %6004 = vst [vmem:[#allocation3 + $0x9c0] sm:$0xff] %v5940
    %6005 = vst [vmem:[#allocation3 + $0xa08] sm:$0xff] %v5941
    %6006 = vst [vmem:[#allocation3 + $0xa50] sm:$0xff] %v5942
    %6007 = vst [vmem:[#allocation3 + $0xa98] sm:$0xff] %v5943
    %6008 = vst [vmem:[#allocation3 + $0xae0] sm:$0xff] %v5944
    %6009 = vst [vmem:[#allocation3 + $0xb28] sm:$0xff] %v5945
    %6010 = vst [vmem:[#allocation3 + $0xb70] sm:$0xff] %v5946
    %6011 = vst [vmem:[#allocation3 + $0xbb8] sm:$0xff] %v5947
    %6012 = vst [vmem:[#allocation3 + $0xc00] sm:$0xff] %v5948
    %6013 = vst [vmem:[#allocation3 + $0xc48] sm:$0xff] %v5949
    %6014 = vst [vmem:[#allocation3 + $0xc90] sm:$0xff] %v5950
    %6015 = vst [vmem:[#allocation3 + $0xcd8] sm:$0xff] %v5951
    %6016 = vst [vmem:[#allocation3 + $0xd20] sm:$0xff] %v5952
    %6017 = vst [vmem:[#allocation3 + $0xd68] sm:$0xff] %v5953
    %6018 = vst [vmem:[#allocation3 + $0xdb0] sm:$0xff] %v5954
    %6019 = vst [vmem:[#allocation3 + $0xdf8] sm:$0xff] %v5955
    %6020 = vst [vmem:[#allocation3 + $0xe40] sm:$0xff] %v5956
    %6021 = vst [vmem:[#allocation3 + $0xe88] sm:$0xff] %v5957
    %6022 = vst [vmem:[#allocation3 + $0xed0] sm:$0xff] %v5958
    %6023 = vst [vmem:[#allocation3 + $0xf18] sm:$0xff] %v5959
    %6024 = vst [vmem:[#allocation3 + $0xf60] sm:$0xff] %v5960
    %6025 = vst [vmem:[#allocation3 + $0xfa8] sm:$0xff] %v5961
    %6026 = vst [vmem:[#allocation3 + $0xff0] sm:$0xff] %v5962
    %6027 = vst [vmem:[#allocation3 + $0x1038] sm:$0xff] %v5963
    %6028 = vst [vmem:[#allocation3 + $0x1080] sm:$0xff] %v5964
    %6029 = vst [vmem:[#allocation3 + $0x10c8] sm:$0xff] %v5965
    %6030 = vst [vmem:[#allocation3 + $0x1110] sm:$0xff] %v5966
    %6031 = vst [vmem:[#allocation3 + $0x1158] sm:$0xff] %v5967
    %6032 = vst [vmem:[#allocation3 + $0x11a0] sm:$0xff] %v5968
    %6033 = vst [vmem:[#allocation3 + $0x11e8] sm:$0xff] %v5969
    %v6034 = vld [vmem:[%s1626 + $0x1] sm:$0xff]
    %v6035 = vld [vmem:[%s1626 + $0x9] sm:$0xff]
    %v6036 = vld [vmem:[%s1626 + $0x19] sm:$0xff]
    %v6037 = vld [vmem:[%s1626 + $0x21] sm:$0xff]
    %v6038 = vld [vmem:[%s1626 + $0x31] sm:$0xff]
    %v6039 = vld [vmem:[%s1626 + $0x39] sm:$0xff]
    %v6040 = vld [vmem:[%s1626 + $0x49] sm:$0xff]
    %v6041 = vld [vmem:[%s1626 + $0x51] sm:$0xff]
    %v6042 = vld [vmem:[%s1626 + $0x61] sm:$0xff]
    %v6043 = vld [vmem:[%s1626 + $0x69] sm:$0xff]
    %v6044 = vld [vmem:[%s1626 + $0x79] sm:$0xff]
    %v6045 = vld [vmem:[%s1626 + $0x81] sm:$0xff]
    %v6046 = vld [vmem:[%s1626 + $0x91] sm:$0xff]
    %v6047 = vld [vmem:[%s1626 + $0x99] sm:$0xff]
    %v6048 = vld [vmem:[%s1626 + $0xa9] sm:$0xff]
    %v6049 = vld [vmem:[%s1626 + $0xb1] sm:$0xff]
    %v6050 = vld [vmem:[%s1626 + $0xc1] sm:$0xff]
    %v6051 = vld [vmem:[%s1626 + $0xc9] sm:$0xff]
    %v6052 = vld [vmem:[%s1626 + $0xd9] sm:$0xff]
    %v6053 = vld [vmem:[%s1626 + $0xe1] sm:$0xff]
    %v6054 = vld [vmem:[%s1626 + $0xf1] sm:$0xff]
    %v6055 = vld [vmem:[%s1626 + $0xf9] sm:$0xff]
    %v6056 = vld [vmem:[%s1626 + $0x109] sm:$0xff]
    %v6057 = vld [vmem:[%s1626 + $0x111] sm:$0xff]
    %v6058 = vld [vmem:[%s1626 + $0x121] sm:$0xff]
    %v6059 = vld [vmem:[%s1626 + $0x129] sm:$0xff]
    %v6060 = vld [vmem:[%s1626 + $0x139] sm:$0xff]
    %v6061 = vld [vmem:[%s1626 + $0x141] sm:$0xff]
    %v6062 = vld [vmem:[%s1626 + $0x151] sm:$0xff]
    %v6063 = vld [vmem:[%s1626 + $0x159] sm:$0xff]
    %v6064 = vld [vmem:[%s1626 + $0x169] sm:$0xff]
    %v6065 = vld [vmem:[%s1626 + $0x171] sm:$0xff]
    %v6066 = vld [vmem:[%s1626 + $0x1b1] sm:$0xff]
    %v6067 = vld [vmem:[%s1626 + $0x1b9] sm:$0xff]
    %v6068 = vld [vmem:[%s1626 + $0x1c9] sm:$0xff]
    %v6069 = vld [vmem:[%s1626 + $0x1d1] sm:$0xff]
    %v6070 = vld [vmem:[%s1626 + $0x1e1] sm:$0xff]
    %v6071 = vld [vmem:[%s1626 + $0x1e9] sm:$0xff]
    %v6072 = vld [vmem:[%s1626 + $0x1f9] sm:$0xff]
    %v6073 = vld [vmem:[%s1626 + $0x201] sm:$0xff]
    %v6074 = vld [vmem:[%s1626 + $0x211] sm:$0xff]
    %v6075 = vld [vmem:[%s1626 + $0x219] sm:$0xff]
    %v6076 = vld [vmem:[%s1626 + $0x229] sm:$0xff]
    %v6077 = vld [vmem:[%s1626 + $0x231] sm:$0xff]
    %v6078 = vld [vmem:[%s1626 + $0x241] sm:$0xff]
    %v6079 = vld [vmem:[%s1626 + $0x249] sm:$0xff]
    %v6080 = vld [vmem:[%s1626 + $0x259] sm:$0xff]
    %v6081 = vld [vmem:[%s1626 + $0x261] sm:$0xff]
    %v6082 = vld [vmem:[%s1626 + $0x271] sm:$0xff]
    %v6083 = vld [vmem:[%s1626 + $0x279] sm:$0xff]
    %v6084 = vld [vmem:[%s1626 + $0x289] sm:$0xff]
    %v6085 = vld [vmem:[%s1626 + $0x291] sm:$0xff]
    %v6086 = vld [vmem:[%s1626 + $0x2a1] sm:$0xff]
    %v6087 = vld [vmem:[%s1626 + $0x2a9] sm:$0xff]
    %v6088 = vld [vmem:[%s1626 + $0x2b9] sm:$0xff]
    %v6089 = vld [vmem:[%s1626 + $0x2c1] sm:$0xff]
    %v6090 = vld [vmem:[%s1626 + $0x2d1] sm:$0xff]
    %v6091 = vld [vmem:[%s1626 + $0x2d9] sm:$0xff]
    %v6092 = vld [vmem:[%s1626 + $0x2e9] sm:$0xff]
    %v6093 = vld [vmem:[%s1626 + $0x2f1] sm:$0xff]
    %v6094 = vld [vmem:[%s1626 + $0x301] sm:$0xff]
    %v6095 = vld [vmem:[%s1626 + $0x309] sm:$0xff]
    %v6096 = vld [vmem:[%s1626 + $0x319] sm:$0xff]
    %v6097 = vld [vmem:[%s1626 + $0x321] sm:$0xff]
    %6098 = vst [vmem:[#allocation3 + $0x38] sm:$0xff] %v6034
    %6099 = vst [vmem:[#allocation3 + $0x80] sm:$0xff] %v6035
    %6100 = vst [vmem:[#allocation3 + $0xc8] sm:$0xff] %v6036
    %6101 = vst [vmem:[#allocation3 + $0x110] sm:$0xff] %v6037
    %6102 = vst [vmem:[#allocation3 + $0x158] sm:$0xff] %v6038
    %6103 = vst [vmem:[#allocation3 + $0x1a0] sm:$0xff] %v6039
    %6104 = vst [vmem:[#allocation3 + $0x1e8] sm:$0xff] %v6040
    %6105 = vst [vmem:[#allocation3 + $0x230] sm:$0xff] %v6041
    %6106 = vst [vmem:[#allocation3 + $0x278] sm:$0xff] %v6042
    %6107 = vst [vmem:[#allocation3 + $0x2c0] sm:$0xff] %v6043
    %6108 = vst [vmem:[#allocation3 + $0x308] sm:$0xff] %v6044
    %6109 = vst [vmem:[#allocation3 + $0x350] sm:$0xff] %v6045
    %6110 = vst [vmem:[#allocation3 + $0x398] sm:$0xff] %v6046
    %6111 = vst [vmem:[#allocation3 + $0x3e0] sm:$0xff] %v6047
    %6112 = vst [vmem:[#allocation3 + $0x428] sm:$0xff] %v6048
    %6113 = vst [vmem:[#allocation3 + $0x470] sm:$0xff] %v6049
    %6114 = vst [vmem:[#allocation3 + $0x4b8] sm:$0xff] %v6050
    %6115 = vst [vmem:[#allocation3 + $0x500] sm:$0xff] %v6051
    %6116 = vst [vmem:[#allocation3 + $0x548] sm:$0xff] %v6052
    %6117 = vst [vmem:[#allocation3 + $0x590] sm:$0xff] %v6053
    %6118 = vst [vmem:[#allocation3 + $0x5d8] sm:$0xff] %v6054
    %6119 = vst [vmem:[#allocation3 + $0x620] sm:$0xff] %v6055
    %6120 = vst [vmem:[#allocation3 + $0x668] sm:$0xff] %v6056
    %6121 = vst [vmem:[#allocation3 + $0x6b0] sm:$0xff] %v6057
    %6122 = vst [vmem:[#allocation3 + $0x6f8] sm:$0xff] %v6058
    %6123 = vst [vmem:[#allocation3 + $0x740] sm:$0xff] %v6059
    %6124 = vst [vmem:[#allocation3 + $0x788] sm:$0xff] %v6060
    %6125 = vst [vmem:[#allocation3 + $0x7d0] sm:$0xff] %v6061
    %6126 = vst [vmem:[#allocation3 + $0x818] sm:$0xff] %v6062
    %6127 = vst [vmem:[#allocation3 + $0x860] sm:$0xff] %v6063
    %6128 = vst [vmem:[#allocation3 + $0x8a8] sm:$0xff] %v6064
    %6129 = vst [vmem:[#allocation3 + $0x8f0] sm:$0xff] %v6065
    %6130 = vst [vmem:[#allocation3 + $0x938] sm:$0xff] %v6066
    %6131 = vst [vmem:[#allocation3 + $0x980] sm:$0xff] %v6067
    %6132 = vst [vmem:[#allocation3 + $0x9c8] sm:$0xff] %v6068
    %6133 = vst [vmem:[#allocation3 + $0xa10] sm:$0xff] %v6069
    %6134 = vst [vmem:[#allocation3 + $0xa58] sm:$0xff] %v6070
    %6135 = vst [vmem:[#allocation3 + $0xaa0] sm:$0xff] %v6071
    %6136 = vst [vmem:[#allocation3 + $0xae8] sm:$0xff] %v6072
    %6137 = vst [vmem:[#allocation3 + $0xb30] sm:$0xff] %v6073
    %6138 = vst [vmem:[#allocation3 + $0xb78] sm:$0xff] %v6074
    %6139 = vst [vmem:[#allocation3 + $0xbc0] sm:$0xff] %v6075
    %6140 = vst [vmem:[#allocation3 + $0xc08] sm:$0xff] %v6076
    %6141 = vst [vmem:[#allocation3 + $0xc50] sm:$0xff] %v6077
    %6142 = vst [vmem:[#allocation3 + $0xc98] sm:$0xff] %v6078
    %6143 = vst [vmem:[#allocation3 + $0xce0] sm:$0xff] %v6079
    %6144 = vst [vmem:[#allocation3 + $0xd28] sm:$0xff] %v6080
    %6145 = vst [vmem:[#allocation3 + $0xd70] sm:$0xff] %v6081
    %6146 = vst [vmem:[#allocation3 + $0xdb8] sm:$0xff] %v6082
    %6147 = vst [vmem:[#allocation3 + $0xe00] sm:$0xff] %v6083
    %6148 = vst [vmem:[#allocation3 + $0xe48] sm:$0xff] %v6084
    %6149 = vst [vmem:[#allocation3 + $0xe90] sm:$0xff] %v6085
    %6150 = vst [vmem:[#allocation3 + $0xed8] sm:$0xff] %v6086
    %6151 = vst [vmem:[#allocation3 + $0xf20] sm:$0xff] %v6087
    %6152 = vst [vmem:[#allocation3 + $0xf68] sm:$0xff] %v6088
    %6153 = vst [vmem:[#allocation3 + $0xfb0] sm:$0xff] %v6089
    %6154 = vst [vmem:[#allocation3 + $0xff8] sm:$0xff] %v6090
    %6155 = vst [vmem:[#allocation3 + $0x1040] sm:$0xff] %v6091
    %6156 = vst [vmem:[#allocation3 + $0x1088] sm:$0xff] %v6092
    %6157 = vst [vmem:[#allocation3 + $0x10d0] sm:$0xff] %v6093
    %6158 = vst [vmem:[#allocation3 + $0x1118] sm:$0xff] %v6094
    %6159 = vst [vmem:[#allocation3 + $0x1160] sm:$0xff] %v6095
    %6160 = vst [vmem:[#allocation3 + $0x11a8] sm:$0xff] %v6096
    %6161 = vst [vmem:[#allocation3 + $0x11f0] sm:$0xff] %v6097
    %v6162 = vld [vmem:[%s1626 + $0x2] sm:$0xff]
    %v6163 = vld [vmem:[%s1626 + $0xa] sm:$0xff]
    %v6164 = vld [vmem:[%s1626 + $0x1a] sm:$0xff]
    %v6165 = vld [vmem:[%s1626 + $0x22] sm:$0xff]
    %v6166 = vld [vmem:[%s1626 + $0x32] sm:$0xff]
    %v6167 = vld [vmem:[%s1626 + $0x3a] sm:$0xff]
    %v6168 = vld [vmem:[%s1626 + $0x4a] sm:$0xff]
    %v6169 = vld [vmem:[%s1626 + $0x52] sm:$0xff]
    %v6170 = vld [vmem:[%s1626 + $0x62] sm:$0xff]
    %v6171 = vld [vmem:[%s1626 + $0x6a] sm:$0xff]
    %v6172 = vld [vmem:[%s1626 + $0x7a] sm:$0xff]
    %v6173 = vld [vmem:[%s1626 + $0x82] sm:$0xff]
    %v6174 = vld [vmem:[%s1626 + $0x92] sm:$0xff]
    %v6175 = vld [vmem:[%s1626 + $0x9a] sm:$0xff]
    %v6176 = vld [vmem:[%s1626 + $0xaa] sm:$0xff]
    %v6177 = vld [vmem:[%s1626 + $0xb2] sm:$0xff]
    %v6178 = vld [vmem:[%s1626 + $0xc2] sm:$0xff]
    %v6179 = vld [vmem:[%s1626 + $0xca] sm:$0xff]
    %v6180 = vld [vmem:[%s1626 + $0xda] sm:$0xff]
    %v6181 = vld [vmem:[%s1626 + $0xe2] sm:$0xff]
    %v6182 = vld [vmem:[%s1626 + $0xf2] sm:$0xff]
    %v6183 = vld [vmem:[%s1626 + $0xfa] sm:$0xff]
    %v6184 = vld [vmem:[%s1626 + $0x10a] sm:$0xff]
    %v6185 = vld [vmem:[%s1626 + $0x112] sm:$0xff]
    %v6186 = vld [vmem:[%s1626 + $0x122] sm:$0xff]
    %v6187 = vld [vmem:[%s1626 + $0x12a] sm:$0xff]
    %v6188 = vld [vmem:[%s1626 + $0x13a] sm:$0xff]
    %v6189 = vld [vmem:[%s1626 + $0x142] sm:$0xff]
    %v6190 = vld [vmem:[%s1626 + $0x152] sm:$0xff]
    %v6191 = vld [vmem:[%s1626 + $0x15a] sm:$0xff]
    %v6192 = vld [vmem:[%s1626 + $0x16a] sm:$0xff]
    %v6193 = vld [vmem:[%s1626 + $0x172] sm:$0xff]
    %v6194 = vld [vmem:[%s1626 + $0x1b2] sm:$0xff]
    %v6195 = vld [vmem:[%s1626 + $0x1ba] sm:$0xff]
    %v6196 = vld [vmem:[%s1626 + $0x1ca] sm:$0xff]
    %v6197 = vld [vmem:[%s1626 + $0x1d2] sm:$0xff]
    %v6198 = vld [vmem:[%s1626 + $0x1e2] sm:$0xff]
    %v6199 = vld [vmem:[%s1626 + $0x1ea] sm:$0xff]
    %v6200 = vld [vmem:[%s1626 + $0x1fa] sm:$0xff]
    %v6201 = vld [vmem:[%s1626 + $0x202] sm:$0xff]
    %v6202 = vld [vmem:[%s1626 + $0x212] sm:$0xff]
    %v6203 = vld [vmem:[%s1626 + $0x21a] sm:$0xff]
    %v6204 = vld [vmem:[%s1626 + $0x22a] sm:$0xff]
    %v6205 = vld [vmem:[%s1626 + $0x232] sm:$0xff]
    %v6206 = vld [vmem:[%s1626 + $0x242] sm:$0xff]
    %v6207 = vld [vmem:[%s1626 + $0x24a] sm:$0xff]
    %v6208 = vld [vmem:[%s1626 + $0x25a] sm:$0xff]
    %v6209 = vld [vmem:[%s1626 + $0x262] sm:$0xff]
    %v6210 = vld [vmem:[%s1626 + $0x272] sm:$0xff]
    %v6211 = vld [vmem:[%s1626 + $0x27a] sm:$0xff]
    %v6212 = vld [vmem:[%s1626 + $0x28a] sm:$0xff]
    %v6213 = vld [vmem:[%s1626 + $0x292] sm:$0xff]
    %v6214 = vld [vmem:[%s1626 + $0x2a2] sm:$0xff]
    %v6215 = vld [vmem:[%s1626 + $0x2aa] sm:$0xff]
    %v6216 = vld [vmem:[%s1626 + $0x2ba] sm:$0xff]
    %v6217 = vld [vmem:[%s1626 + $0x2c2] sm:$0xff]
    %v6218 = vld [vmem:[%s1626 + $0x2d2] sm:$0xff]
    %v6219 = vld [vmem:[%s1626 + $0x2da] sm:$0xff]
    %v6220 = vld [vmem:[%s1626 + $0x2ea] sm:$0xff]
    %v6221 = vld [vmem:[%s1626 + $0x2f2] sm:$0xff]
    %v6222 = vld [vmem:[%s1626 + $0x302] sm:$0xff]
    %v6223 = vld [vmem:[%s1626 + $0x30a] sm:$0xff]
    %v6224 = vld [vmem:[%s1626 + $0x31a] sm:$0xff]
    %v6225 = vld [vmem:[%s1626 + $0x322] sm:$0xff]
    %6226 = vst [vmem:[#allocation3 + $0x40] sm:$0xff] %v6162
    %6227 = vst [vmem:[#allocation3 + $0x88] sm:$0xff] %v6163
    %6228 = vst [vmem:[#allocation3 + $0xd0] sm:$0xff] %v6164
    %6229 = vst [vmem:[#allocation3 + $0x118] sm:$0xff] %v6165
    %6230 = vst [vmem:[#allocation3 + $0x160] sm:$0xff] %v6166
    %6231 = vst [vmem:[#allocation3 + $0x1a8] sm:$0xff] %v6167
    %6232 = vst [vmem:[#allocation3 + $0x1f0] sm:$0xff] %v6168
    %6233 = vst [vmem:[#allocation3 + $0x238] sm:$0xff] %v6169
    %6234 = vst [vmem:[#allocation3 + $0x280] sm:$0xff] %v6170
    %6235 = vst [vmem:[#allocation3 + $0x2c8] sm:$0xff] %v6171
    %6236 = vst [vmem:[#allocation3 + $0x310] sm:$0xff] %v6172
    %6237 = vst [vmem:[#allocation3 + $0x358] sm:$0xff] %v6173
    %6238 = vst [vmem:[#allocation3 + $0x3a0] sm:$0xff] %v6174
    %6239 = vst [vmem:[#allocation3 + $0x3e8] sm:$0xff] %v6175
    %6240 = vst [vmem:[#allocation3 + $0x430] sm:$0xff] %v6176
    %6241 = vst [vmem:[#allocation3 + $0x478] sm:$0xff] %v6177
    %6242 = vst [vmem:[#allocation3 + $0x4c0] sm:$0xff] %v6178
    %6243 = vst [vmem:[#allocation3 + $0x508] sm:$0xff] %v6179
    %6244 = vst [vmem:[#allocation3 + $0x550] sm:$0xff] %v6180
    %6245 = vst [vmem:[#allocation3 + $0x598] sm:$0xff] %v6181
    %6246 = vst [vmem:[#allocation3 + $0x5e0] sm:$0xff] %v6182
    %6247 = vst [vmem:[#allocation3 + $0x628] sm:$0xff] %v6183
    %6248 = vst [vmem:[#allocation3 + $0x670] sm:$0xff] %v6184
    %6249 = vst [vmem:[#allocation3 + $0x6b8] sm:$0xff] %v6185
    %6250 = vst [vmem:[#allocation3 + $0x700] sm:$0xff] %v6186
    %6251 = vst [vmem:[#allocation3 + $0x748] sm:$0xff] %v6187
    %6252 = vst [vmem:[#allocation3 + $0x790] sm:$0xff] %v6188
    %6253 = vst [vmem:[#allocation3 + $0x7d8] sm:$0xff] %v6189
    %6254 = vst [vmem:[#allocation3 + $0x820] sm:$0xff] %v6190
    %6255 = vst [vmem:[#allocation3 + $0x868] sm:$0xff] %v6191
    %6256 = vst [vmem:[#allocation3 + $0x8b0] sm:$0xff] %v6192
    %6257 = vst [vmem:[#allocation3 + $0x8f8] sm:$0xff] %v6193
    %6258 = vst [vmem:[#allocation3 + $0x940] sm:$0xff] %v6194
    %6259 = vst [vmem:[#allocation3 + $0x988] sm:$0xff] %v6195
    %6260 = vst [vmem:[#allocation3 + $0x9d0] sm:$0xff] %v6196
    %6261 = vst [vmem:[#allocation3 + $0xa18] sm:$0xff] %v6197
    %6262 = vst [vmem:[#allocation3 + $0xa60] sm:$0xff] %v6198
    %6263 = vst [vmem:[#allocation3 + $0xaa8] sm:$0xff] %v6199
    %6264 = vst [vmem:[#allocation3 + $0xaf0] sm:$0xff] %v6200
    %6265 = vst [vmem:[#allocation3 + $0xb38] sm:$0xff] %v6201
    %6266 = vst [vmem:[#allocation3 + $0xb80] sm:$0xff] %v6202
    %6267 = vst [vmem:[#allocation3 + $0xbc8] sm:$0xff] %v6203
    %6268 = vst [vmem:[#allocation3 + $0xc10] sm:$0xff] %v6204
    %6269 = vst [vmem:[#allocation3 + $0xc58] sm:$0xff] %v6205
    %6270 = vst [vmem:[#allocation3 + $0xca0] sm:$0xff] %v6206
    %6271 = vst [vmem:[#allocation3 + $0xce8] sm:$0xff] %v6207
    %6272 = vst [vmem:[#allocation3 + $0xd30] sm:$0xff] %v6208
    %6273 = vst [vmem:[#allocation3 + $0xd78] sm:$0xff] %v6209
    %6274 = vst [vmem:[#allocation3 + $0xdc0] sm:$0xff] %v6210
    %6275 = vst [vmem:[#allocation3 + $0xe08] sm:$0xff] %v6211
    %6276 = vst [vmem:[#allocation3 + $0xe50] sm:$0xff] %v6212
    %6277 = vst [vmem:[#allocation3 + $0xe98] sm:$0xff] %v6213
    %6278 = vst [vmem:[#allocation3 + $0xee0] sm:$0xff] %v6214
    %6279 = vst [vmem:[#allocation3 + $0xf28] sm:$0xff] %v6215
    %6280 = vst [vmem:[#allocation3 + $0xf70] sm:$0xff] %v6216
    %6281 = vst [vmem:[#allocation3 + $0xfb8] sm:$0xff] %v6217
    %6282 = vst [vmem:[#allocation3 + $0x1000] sm:$0xff] %v6218
    %6283 = vst [vmem:[#allocation3 + $0x1048] sm:$0xff] %v6219
    %6284 = vst [vmem:[#allocation3 + $0x1090] sm:$0xff] %v6220
    %6285 = vst [vmem:[#allocation3 + $0x10d8] sm:$0xff] %v6221
    %6286 = vst [vmem:[#allocation3 + $0x1120] sm:$0xff] %v6222
    %6287 = vst [vmem:[#allocation3 + $0x1168] sm:$0xff] %v6223
    %6288 = vst [vmem:[#allocation3 + $0x11b0] sm:$0xff] %v6224
    %6289 = vst [vmem:[#allocation3 + $0x11f8] sm:$0xff] %v6225
    %v6290 = vld [vmem:[#allocation3] sm:$0xff]
    %v6291 = vld [vmem:[#allocation3 + $0x8] sm:$0xff]
    %v6292 = vld [vmem:[#allocation3 + $0x10] sm:$0xff]
    %v6293 = vld [vmem:[#allocation3 + $0x18] sm:$0xff]
    %v6294 = vld [vmem:[#allocation3 + $0x20] sm:$0xff]
    %v6295 = vld [vmem:[#allocation3 + $0x28] sm:$0xff]
    %v6296 = vld [vmem:[#allocation3 + $0x30] sm:$0xff]
    %v6297 = vld [vmem:[#allocation3 + $0x38] sm:$0xff]
    %v6298 = vld [vmem:[#allocation3 + $0x40] sm:$0xff]
    %v6299 = vld [vmem:[#allocation3 + $0x48] sm:$0xff]
    %v6300 = vld [vmem:[#allocation3 + $0x50] sm:$0xff]
    %v6301 = vld [vmem:[#allocation3 + $0x58] sm:$0xff]
    %v6302 = vld [vmem:[#allocation3 + $0x60] sm:$0xff]
    %v6303 = vld [vmem:[#allocation3 + $0x68] sm:$0xff]
    %v6304 = vld [vmem:[#allocation3 + $0x70] sm:$0xff]
    %v6305 = vld [vmem:[#allocation3 + $0x78] sm:$0xff]
    %v6306 = vld [vmem:[#allocation3 + $0x80] sm:$0xff]
    %v6307 = vld [vmem:[#allocation3 + $0x88] sm:$0xff]
    %v6308 = vld [vmem:[#allocation3 + $0x90] sm:$0xff]
    %v6309 = vld [vmem:[#allocation3 + $0x98] sm:$0xff]
    %v6310 = vld [vmem:[#allocation3 + $0xa0] sm:$0xff]
    %v6311 = vld [vmem:[#allocation3 + $0xa8] sm:$0xff]
    %v6312 = vld [vmem:[#allocation3 + $0xb0] sm:$0xff]
    %v6313 = vld [vmem:[#allocation3 + $0xb8] sm:$0xff]
    %v6314 = vld [vmem:[#allocation3 + $0xc0] sm:$0xff]
    %v6315 = vld [vmem:[#allocation3 + $0xc8] sm:$0xff]
    %v6316 = vld [vmem:[#allocation3 + $0xd0] sm:$0xff]
    %v6317 = vld [vmem:[#allocation3 + $0xd8] sm:$0xff]
    %v6318 = vld [vmem:[#allocation3 + $0xe0] sm:$0xff]
    %v6319 = vld [vmem:[#allocation3 + $0xe8] sm:$0xff]
    %v6320 = vld [vmem:[#allocation3 + $0xf0] sm:$0xff]
    %v6321 = vld [vmem:[#allocation3 + $0xf8] sm:$0xff]
    %v6322 = vld [vmem:[#allocation3 + $0x100] sm:$0xff]
    %v6323 = vld [vmem:[#allocation3 + $0x108] sm:$0xff]
    %v6324 = vld [vmem:[#allocation3 + $0x110] sm:$0xff]
    %v6325 = vld [vmem:[#allocation3 + $0x118] sm:$0xff]
    %v6326 = vld [vmem:[#allocation3 + $0x120] sm:$0xff]
    %v6327 = vld [vmem:[#allocation3 + $0x128] sm:$0xff]
    %v6328 = vld [vmem:[#allocation3 + $0x130] sm:$0xff]
    %v6329 = vld [vmem:[#allocation3 + $0x138] sm:$0xff]
    %v6330 = vld [vmem:[#allocation3 + $0x140] sm:$0xff]
    %v6331 = vld [vmem:[#allocation3 + $0x148] sm:$0xff]
    %v6332 = vld [vmem:[#allocation3 + $0x150] sm:$0xff]
    %v6333 = vld [vmem:[#allocation3 + $0x158] sm:$0xff]
    %v6334 = vld [vmem:[#allocation3 + $0x160] sm:$0xff]
    %v6335 = vld [vmem:[#allocation3 + $0x168] sm:$0xff]
    %v6336 = vld [vmem:[#allocation3 + $0x170] sm:$0xff]
    %v6337 = vld [vmem:[#allocation3 + $0x178] sm:$0xff]
    %v6338 = vld [vmem:[#allocation3 + $0x180] sm:$0xff]
    %v6339 = vld [vmem:[#allocation3 + $0x188] sm:$0xff]
    %v6340 = vld [vmem:[#allocation3 + $0x190] sm:$0xff]
    %v6341 = vld [vmem:[#allocation3 + $0x198] sm:$0xff]
    %v6342 = vld [vmem:[#allocation3 + $0x1a0] sm:$0xff]
    %v6343 = vld [vmem:[#allocation3 + $0x1a8] sm:$0xff]
    %v6344 = vld [vmem:[#allocation3 + $0x1b0] sm:$0xff]
    %v6345 = vld [vmem:[#allocation3 + $0x1b8] sm:$0xff]
    %v6346 = vld [vmem:[#allocation3 + $0x1c0] sm:$0xff]
    %v6347 = vld [vmem:[#allocation3 + $0x1c8] sm:$0xff]
    %v6348 = vld [vmem:[#allocation3 + $0x1d0] sm:$0xff]
    %v6349 = vld [vmem:[#allocation3 + $0x1d8] sm:$0xff]
    %v6350 = vld [vmem:[#allocation3 + $0x1e0] sm:$0xff]
    %v6351 = vld [vmem:[#allocation3 + $0x1e8] sm:$0xff]
    %v6352 = vld [vmem:[#allocation3 + $0x1f0] sm:$0xff]
    %v6353 = vld [vmem:[#allocation3 + $0x1f8] sm:$0xff]
    %v6354 = vld [vmem:[#allocation3 + $0x200] sm:$0xff]
    %v6355 = vld [vmem:[#allocation3 + $0x208] sm:$0xff]
    %v6356 = vld [vmem:[#allocation3 + $0x210] sm:$0xff]
    %v6357 = vld [vmem:[#allocation3 + $0x218] sm:$0xff]
    %v6358 = vld [vmem:[#allocation3 + $0x220] sm:$0xff]
    %v6359 = vld [vmem:[#allocation3 + $0x228] sm:$0xff]
    %v6360 = vld [vmem:[#allocation3 + $0x230] sm:$0xff]
    %v6361 = vld [vmem:[#allocation3 + $0x238] sm:$0xff]
    %v6362 = vld [vmem:[#allocation3 + $0x240] sm:$0xff]
    %v6363 = vld [vmem:[#allocation3 + $0x248] sm:$0xff]
    %v6364 = vld [vmem:[#allocation3 + $0x250] sm:$0xff]
    %v6365 = vld [vmem:[#allocation3 + $0x258] sm:$0xff]
    %v6366 = vld [vmem:[#allocation3 + $0x260] sm:$0xff]
    %v6367 = vld [vmem:[#allocation3 + $0x268] sm:$0xff]
    %v6368 = vld [vmem:[#allocation3 + $0x270] sm:$0xff]
    %v6369 = vld [vmem:[#allocation3 + $0x278] sm:$0xff]
    %v6370 = vld [vmem:[#allocation3 + $0x280] sm:$0xff]
    %v6371 = vld [vmem:[#allocation3 + $0x288] sm:$0xff]
    %v6372 = vld [vmem:[#allocation3 + $0x290] sm:$0xff]
    %v6373 = vld [vmem:[#allocation3 + $0x298] sm:$0xff]
    %v6374 = vld [vmem:[#allocation3 + $0x2a0] sm:$0xff]
    %v6375 = vld [vmem:[#allocation3 + $0x2a8] sm:$0xff]
    %v6376 = vld [vmem:[#allocation3 + $0x2b0] sm:$0xff]
    %v6377 = vld [vmem:[#allocation3 + $0x2b8] sm:$0xff]
    %v6378 = vld [vmem:[#allocation3 + $0x2c0] sm:$0xff]
    %v6379 = vld [vmem:[#allocation3 + $0x2c8] sm:$0xff]
    %v6380 = vld [vmem:[#allocation3 + $0x2d0] sm:$0xff]
    %v6381 = vld [vmem:[#allocation3 + $0x2d8] sm:$0xff]
    %v6382 = vld [vmem:[#allocation3 + $0x2e0] sm:$0xff]
    %v6383 = vld [vmem:[#allocation3 + $0x2e8] sm:$0xff]
    %v6384 = vld [vmem:[#allocation3 + $0x2f0] sm:$0xff]
    %v6385 = vld [vmem:[#allocation3 + $0x2f8] sm:$0xff]
    %v6386 = vld [vmem:[#allocation3 + $0x300] sm:$0xff]
    %v6387 = vld [vmem:[#allocation3 + $0x308] sm:$0xff]
    %v6388 = vld [vmem:[#allocation3 + $0x310] sm:$0xff]
    %v6389 = vld [vmem:[#allocation3 + $0x318] sm:$0xff]
    %v6390 = vld [vmem:[#allocation3 + $0x320] sm:$0xff]
    %v6391 = vld [vmem:[#allocation3 + $0x328] sm:$0xff]
    %v6392 = vld [vmem:[#allocation3 + $0x330] sm:$0xff]
    %v6393 = vld [vmem:[#allocation3 + $0x338] sm:$0xff]
    %v6394 = vld [vmem:[#allocation3 + $0x340] sm:$0xff]
    %v6395 = vld [vmem:[#allocation3 + $0x348] sm:$0xff]
    %v6396 = vld [vmem:[#allocation3 + $0x350] sm:$0xff]
    %v6397 = vld [vmem:[#allocation3 + $0x358] sm:$0xff]
    %v6398 = vld [vmem:[#allocation3 + $0x360] sm:$0xff]
    %v6399 = vld [vmem:[#allocation3 + $0x368] sm:$0xff]
    %v6400 = vld [vmem:[#allocation3 + $0x370] sm:$0xff]
    %v6401 = vld [vmem:[#allocation3 + $0x378] sm:$0xff]
    %v6402 = vld [vmem:[#allocation3 + $0x380] sm:$0xff]
    %v6403 = vld [vmem:[#allocation3 + $0x388] sm:$0xff]
    %v6404 = vld [vmem:[#allocation3 + $0x390] sm:$0xff]
    %v6405 = vld [vmem:[#allocation3 + $0x398] sm:$0xff]
    %v6406 = vld [vmem:[#allocation3 + $0x3a0] sm:$0xff]
    %v6407 = vld [vmem:[#allocation3 + $0x3a8] sm:$0xff]
    %v6408 = vld [vmem:[#allocation3 + $0x3b0] sm:$0xff]
    %v6409 = vld [vmem:[#allocation3 + $0x3b8] sm:$0xff]
    %v6410 = vld [vmem:[#allocation3 + $0x3c0] sm:$0xff]
    %v6411 = vld [vmem:[#allocation3 + $0x3c8] sm:$0xff]
    %v6412 = vld [vmem:[#allocation3 + $0x3d0] sm:$0xff]
    %v6413 = vld [vmem:[#allocation3 + $0x3d8] sm:$0xff]
    %v6414 = vld [vmem:[#allocation3 + $0x3e0] sm:$0xff]
    %v6415 = vld [vmem:[#allocation3 + $0x3e8] sm:$0xff]
    %v6416 = vld [vmem:[#allocation3 + $0x3f0] sm:$0xff]
    %v6417 = vld [vmem:[#allocation3 + $0x3f8] sm:$0xff]
    %v6418 = vld [vmem:[#allocation3 + $0x400] sm:$0xff]
    %v6419 = vld [vmem:[#allocation3 + $0x408] sm:$0xff]
    %v6420 = vld [vmem:[#allocation3 + $0x410] sm:$0xff]
    %v6421 = vld [vmem:[#allocation3 + $0x418] sm:$0xff]
    %v6422 = vld [vmem:[#allocation3 + $0x420] sm:$0xff]
    %v6423 = vld [vmem:[#allocation3 + $0x428] sm:$0xff]
    %v6424 = vld [vmem:[#allocation3 + $0x430] sm:$0xff]
    %v6425 = vld [vmem:[#allocation3 + $0x438] sm:$0xff]
    %v6426 = vld [vmem:[#allocation3 + $0x440] sm:$0xff]
    %v6427 = vld [vmem:[#allocation3 + $0x448] sm:$0xff]
    %v6428 = vld [vmem:[#allocation3 + $0x450] sm:$0xff]
    %v6429 = vld [vmem:[#allocation3 + $0x458] sm:$0xff]
    %v6430 = vld [vmem:[#allocation3 + $0x460] sm:$0xff]
    %v6431 = vld [vmem:[#allocation3 + $0x468] sm:$0xff]
    %v6432 = vld [vmem:[#allocation3 + $0x470] sm:$0xff]
    %v6433 = vld [vmem:[#allocation3 + $0x478] sm:$0xff]
    %v6434 = vld [vmem:[#allocation3 + $0x480] sm:$0xff]
    %v6435 = vld [vmem:[#allocation3 + $0x488] sm:$0xff]
    %v6436 = vld [vmem:[#allocation3 + $0x490] sm:$0xff]
    %v6437 = vld [vmem:[#allocation3 + $0x498] sm:$0xff]
    %v6438 = vld [vmem:[#allocation3 + $0x4a0] sm:$0xff]
    %v6439 = vld [vmem:[#allocation3 + $0x4a8] sm:$0xff]
    %v6440 = vld [vmem:[#allocation3 + $0x4b0] sm:$0xff]
    %v6441 = vld [vmem:[#allocation3 + $0x4b8] sm:$0xff]
    %v6442 = vld [vmem:[#allocation3 + $0x4c0] sm:$0xff]
    %v6443 = vld [vmem:[#allocation3 + $0x4c8] sm:$0xff]
    %v6444 = vld [vmem:[#allocation3 + $0x4d0] sm:$0xff]
    %v6445 = vld [vmem:[#allocation3 + $0x4d8] sm:$0xff]
    %v6446 = vld [vmem:[#allocation3 + $0x4e0] sm:$0xff]
    %v6447 = vld [vmem:[#allocation3 + $0x4e8] sm:$0xff]
    %v6448 = vld [vmem:[#allocation3 + $0x4f0] sm:$0xff]
    %v6449 = vld [vmem:[#allocation3 + $0x4f8] sm:$0xff]
    %v6450 = vld [vmem:[#allocation3 + $0x500] sm:$0xff]
    %v6451 = vld [vmem:[#allocation3 + $0x508] sm:$0xff]
    %v6452 = vld [vmem:[#allocation3 + $0x510] sm:$0xff]
    %v6453 = vld [vmem:[#allocation3 + $0x518] sm:$0xff]
    %v6454 = vld [vmem:[#allocation3 + $0x520] sm:$0xff]
    %v6455 = vld [vmem:[#allocation3 + $0x528] sm:$0xff]
    %v6456 = vld [vmem:[#allocation3 + $0x530] sm:$0xff]
    %v6457 = vld [vmem:[#allocation3 + $0x538] sm:$0xff]
    %v6458 = vld [vmem:[#allocation3 + $0x540] sm:$0xff]
    %v6459 = vld [vmem:[#allocation3 + $0x548] sm:$0xff]
    %v6460 = vld [vmem:[#allocation3 + $0x550] sm:$0xff]
    %v6461 = vld [vmem:[#allocation3 + $0x558] sm:$0xff]
    %v6462 = vld [vmem:[#allocation3 + $0x560] sm:$0xff]
    %v6463 = vld [vmem:[#allocation3 + $0x568] sm:$0xff]
    %v6464 = vld [vmem:[#allocation3 + $0x570] sm:$0xff]
    %v6465 = vld [vmem:[#allocation3 + $0x578] sm:$0xff]
    %v6466 = vld [vmem:[#allocation3 + $0x580] sm:$0xff]
    %v6467 = vld [vmem:[#allocation3 + $0x588] sm:$0xff]
    %v6468 = vld [vmem:[#allocation3 + $0x590] sm:$0xff]
    %v6469 = vld [vmem:[#allocation3 + $0x598] sm:$0xff]
    %v6470 = vld [vmem:[#allocation3 + $0x5a0] sm:$0xff]
    %v6471 = vld [vmem:[#allocation3 + $0x5a8] sm:$0xff]
    %v6472 = vld [vmem:[#allocation3 + $0x5b0] sm:$0xff]
    %v6473 = vld [vmem:[#allocation3 + $0x5b8] sm:$0xff]
    %v6474 = vld [vmem:[#allocation3 + $0x5c0] sm:$0xff]
    %v6475 = vld [vmem:[#allocation3 + $0x5c8] sm:$0xff]
    %v6476 = vld [vmem:[#allocation3 + $0x5d0] sm:$0xff]
    %v6477 = vld [vmem:[#allocation3 + $0x5d8] sm:$0xff]
    %v6478 = vld [vmem:[#allocation3 + $0x5e0] sm:$0xff]
    %v6479 = vld [vmem:[#allocation3 + $0x5e8] sm:$0xff]
    %v6480 = vld [vmem:[#allocation3 + $0x5f0] sm:$0xff]
    %v6481 = vld [vmem:[#allocation3 + $0x5f8] sm:$0xff]
    %v6482 = vld [vmem:[#allocation3 + $0x600] sm:$0xff]
    %v6483 = vld [vmem:[#allocation3 + $0x608] sm:$0xff]
    %v6484 = vld [vmem:[#allocation3 + $0x610] sm:$0xff]
    %v6485 = vld [vmem:[#allocation3 + $0x618] sm:$0xff]
    %v6486 = vld [vmem:[#allocation3 + $0x620] sm:$0xff]
    %v6487 = vld [vmem:[#allocation3 + $0x628] sm:$0xff]
    %v6488 = vld [vmem:[#allocation3 + $0x630] sm:$0xff]
    %v6489 = vld [vmem:[#allocation3 + $0x638] sm:$0xff]
    %v6490 = vld [vmem:[#allocation3 + $0x640] sm:$0xff]
    %v6491 = vld [vmem:[#allocation3 + $0x648] sm:$0xff]
    %v6492 = vld [vmem:[#allocation3 + $0x650] sm:$0xff]
    %v6493 = vld [vmem:[#allocation3 + $0x658] sm:$0xff]
    %v6494 = vld [vmem:[#allocation3 + $0x660] sm:$0xff]
    %v6495 = vld [vmem:[#allocation3 + $0x668] sm:$0xff]
    %v6496 = vld [vmem:[#allocation3 + $0x670] sm:$0xff]
    %v6497 = vld [vmem:[#allocation3 + $0x678] sm:$0xff]
    %v6498 = vld [vmem:[#allocation3 + $0x680] sm:$0xff]
    %v6499 = vld [vmem:[#allocation3 + $0x688] sm:$0xff]
    %v6500 = vld [vmem:[#allocation3 + $0x690] sm:$0xff]
    %v6501 = vld [vmem:[#allocation3 + $0x698] sm:$0xff]
    %v6502 = vld [vmem:[#allocation3 + $0x6a0] sm:$0xff]
    %v6503 = vld [vmem:[#allocation3 + $0x6a8] sm:$0xff]
    %v6504 = vld [vmem:[#allocation3 + $0x6b0] sm:$0xff]
    %v6505 = vld [vmem:[#allocation3 + $0x6b8] sm:$0xff]
    %v6506 = vld [vmem:[#allocation3 + $0x6c0] sm:$0xff]
    %v6507 = vld [vmem:[#allocation3 + $0x6c8] sm:$0xff]
    %v6508 = vld [vmem:[#allocation3 + $0x6d0] sm:$0xff]
    %v6509 = vld [vmem:[#allocation3 + $0x6d8] sm:$0xff]
    %v6510 = vld [vmem:[#allocation3 + $0x6e0] sm:$0xff]
    %v6511 = vld [vmem:[#allocation3 + $0x6e8] sm:$0xff]
    %v6512 = vld [vmem:[#allocation3 + $0x6f0] sm:$0xff]
    %v6513 = vld [vmem:[#allocation3 + $0x6f8] sm:$0xff]
    %v6514 = vld [vmem:[#allocation3 + $0x700] sm:$0xff]
    %v6515 = vld [vmem:[#allocation3 + $0x708] sm:$0xff]
    %v6516 = vld [vmem:[#allocation3 + $0x710] sm:$0xff]
    %v6517 = vld [vmem:[#allocation3 + $0x718] sm:$0xff]
    %v6518 = vld [vmem:[#allocation3 + $0x720] sm:$0xff]
    %v6519 = vld [vmem:[#allocation3 + $0x728] sm:$0xff]
    %v6520 = vld [vmem:[#allocation3 + $0x730] sm:$0xff]
    %v6521 = vld [vmem:[#allocation3 + $0x738] sm:$0xff]
    %v6522 = vld [vmem:[#allocation3 + $0x740] sm:$0xff]
    %v6523 = vld [vmem:[#allocation3 + $0x748] sm:$0xff]
    %v6524 = vld [vmem:[#allocation3 + $0x750] sm:$0xff]
    %v6525 = vld [vmem:[#allocation3 + $0x758] sm:$0xff]
    %v6526 = vld [vmem:[#allocation3 + $0x760] sm:$0xff]
    %v6527 = vld [vmem:[#allocation3 + $0x768] sm:$0xff]
    %v6528 = vld [vmem:[#allocation3 + $0x770] sm:$0xff]
    %v6529 = vld [vmem:[#allocation3 + $0x778] sm:$0xff]
    %v6530 = vld [vmem:[#allocation3 + $0x780] sm:$0xff]
    %v6531 = vld [vmem:[#allocation3 + $0x788] sm:$0xff]
    %v6532 = vld [vmem:[#allocation3 + $0x790] sm:$0xff]
    %v6533 = vld [vmem:[#allocation3 + $0x798] sm:$0xff]
    %v6534 = vld [vmem:[#allocation3 + $0x7a0] sm:$0xff]
    %v6535 = vld [vmem:[#allocation3 + $0x7a8] sm:$0xff]
    %v6536 = vld [vmem:[#allocation3 + $0x7b0] sm:$0xff]
    %v6537 = vld [vmem:[#allocation3 + $0x7b8] sm:$0xff]
    %v6538 = vld [vmem:[#allocation3 + $0x7c0] sm:$0xff]
    %v6539 = vld [vmem:[#allocation3 + $0x7c8] sm:$0xff]
    %v6540 = vld [vmem:[#allocation3 + $0x7d0] sm:$0xff]
    %v6541 = vld [vmem:[#allocation3 + $0x7d8] sm:$0xff]
    %v6542 = vld [vmem:[#allocation3 + $0x7e0] sm:$0xff]
    %v6543 = vld [vmem:[#allocation3 + $0x7e8] sm:$0xff]
    %v6544 = vld [vmem:[#allocation3 + $0x7f0] sm:$0xff]
    %v6545 = vld [vmem:[#allocation3 + $0x7f8] sm:$0xff]
    %v6546 = vld [vmem:[#allocation3 + $0x800] sm:$0xff]
    %v6547 = vld [vmem:[#allocation3 + $0x808] sm:$0xff]
    %v6548 = vld [vmem:[#allocation3 + $0x810] sm:$0xff]
    %v6549 = vld [vmem:[#allocation3 + $0x818] sm:$0xff]
    %v6550 = vld [vmem:[#allocation3 + $0x820] sm:$0xff]
    %v6551 = vld [vmem:[#allocation3 + $0x828] sm:$0xff]
    %v6552 = vld [vmem:[#allocation3 + $0x830] sm:$0xff]
    %v6553 = vld [vmem:[#allocation3 + $0x838] sm:$0xff]
    %v6554 = vld [vmem:[#allocation3 + $0x840] sm:$0xff]
    %v6555 = vld [vmem:[#allocation3 + $0x848] sm:$0xff]
    %v6556 = vld [vmem:[#allocation3 + $0x850] sm:$0xff]
    %v6557 = vld [vmem:[#allocation3 + $0x858] sm:$0xff]
    %v6558 = vld [vmem:[#allocation3 + $0x860] sm:$0xff]
    %v6559 = vld [vmem:[#allocation3 + $0x868] sm:$0xff]
    %v6560 = vld [vmem:[#allocation3 + $0x870] sm:$0xff]
    %v6561 = vld [vmem:[#allocation3 + $0x878] sm:$0xff]
    %v6562 = vld [vmem:[#allocation3 + $0x880] sm:$0xff]
    %v6563 = vld [vmem:[#allocation3 + $0x888] sm:$0xff]
    %v6564 = vld [vmem:[#allocation3 + $0x890] sm:$0xff]
    %v6565 = vld [vmem:[#allocation3 + $0x898] sm:$0xff]
    %v6566 = vld [vmem:[#allocation3 + $0x8a0] sm:$0xff]
    %v6567 = vld [vmem:[#allocation3 + $0x8a8] sm:$0xff]
    %v6568 = vld [vmem:[#allocation3 + $0x8b0] sm:$0xff]
    %v6569 = vld [vmem:[#allocation3 + $0x8b8] sm:$0xff]
    %v6570 = vld [vmem:[#allocation3 + $0x8c0] sm:$0xff]
    %v6571 = vld [vmem:[#allocation3 + $0x8c8] sm:$0xff]
    %v6572 = vld [vmem:[#allocation3 + $0x8d0] sm:$0xff]
    %v6573 = vld [vmem:[#allocation3 + $0x8d8] sm:$0xff]
    %v6574 = vld [vmem:[#allocation3 + $0x8e0] sm:$0xff]
    %v6575 = vld [vmem:[#allocation3 + $0x8e8] sm:$0xff]
    %v6576 = vld [vmem:[#allocation3 + $0x8f0] sm:$0xff]
    %v6577 = vld [vmem:[#allocation3 + $0x8f8] sm:$0xff]
    %v6578 = vld [vmem:[#allocation3 + $0x900] sm:$0xff]
    %v6579 = vld [vmem:[#allocation3 + $0x908] sm:$0xff]
    %v6580 = vld [vmem:[#allocation3 + $0x910] sm:$0xff]
    %v6581 = vld [vmem:[#allocation3 + $0x918] sm:$0xff]
    %v6582 = vld [vmem:[#allocation3 + $0x920] sm:$0xff]
    %v6583 = vld [vmem:[#allocation3 + $0x928] sm:$0xff]
    %v6584 = vld [vmem:[#allocation3 + $0x930] sm:$0xff]
    %v6585 = vld [vmem:[#allocation3 + $0x938] sm:$0xff]
    %v6586 = vld [vmem:[#allocation3 + $0x940] sm:$0xff]
    %v6587 = vld [vmem:[#allocation3 + $0x948] sm:$0xff]
    %v6588 = vld [vmem:[#allocation3 + $0x950] sm:$0xff]
    %v6589 = vld [vmem:[#allocation3 + $0x958] sm:$0xff]
    %v6590 = vld [vmem:[#allocation3 + $0x960] sm:$0xff]
    %v6591 = vld [vmem:[#allocation3 + $0x968] sm:$0xff]
    %v6592 = vld [vmem:[#allocation3 + $0x970] sm:$0xff]
    %v6593 = vld [vmem:[#allocation3 + $0x978] sm:$0xff]
    %v6594 = vld [vmem:[#allocation3 + $0x980] sm:$0xff]
    %v6595 = vld [vmem:[#allocation3 + $0x988] sm:$0xff]
    %v6596 = vld [vmem:[#allocation3 + $0x990] sm:$0xff]
    %v6597 = vld [vmem:[#allocation3 + $0x998] sm:$0xff]
    %v6598 = vld [vmem:[#allocation3 + $0x9a0] sm:$0xff]
    %v6599 = vld [vmem:[#allocation3 + $0x9a8] sm:$0xff]
    %v6600 = vld [vmem:[#allocation3 + $0x9b0] sm:$0xff]
    %v6601 = vld [vmem:[#allocation3 + $0x9b8] sm:$0xff]
    %v6602 = vld [vmem:[#allocation3 + $0x9c0] sm:$0xff]
    %v6603 = vld [vmem:[#allocation3 + $0x9c8] sm:$0xff]
    %v6604 = vld [vmem:[#allocation3 + $0x9d0] sm:$0xff]
    %v6605 = vld [vmem:[#allocation3 + $0x9d8] sm:$0xff]
    %v6606 = vld [vmem:[#allocation3 + $0x9e0] sm:$0xff]
    %v6607 = vld [vmem:[#allocation3 + $0x9e8] sm:$0xff]
    %v6608 = vld [vmem:[#allocation3 + $0x9f0] sm:$0xff]
    %v6609 = vld [vmem:[#allocation3 + $0x9f8] sm:$0xff]
    %v6610 = vld [vmem:[#allocation3 + $0xa00] sm:$0xff]
    %v6611 = vld [vmem:[#allocation3 + $0xa08] sm:$0xff]
    %v6612 = vld [vmem:[#allocation3 + $0xa10] sm:$0xff]
    %v6613 = vld [vmem:[#allocation3 + $0xa18] sm:$0xff]
    %v6614 = vld [vmem:[#allocation3 + $0xa20] sm:$0xff]
    %v6615 = vld [vmem:[#allocation3 + $0xa28] sm:$0xff]
    %v6616 = vld [vmem:[#allocation3 + $0xa30] sm:$0xff]
    %v6617 = vld [vmem:[#allocation3 + $0xa38] sm:$0xff]
    %v6618 = vld [vmem:[#allocation3 + $0xa40] sm:$0xff]
    %v6619 = vld [vmem:[#allocation3 + $0xa48] sm:$0xff]
    %v6620 = vld [vmem:[#allocation3 + $0xa50] sm:$0xff]
    %v6621 = vld [vmem:[#allocation3 + $0xa58] sm:$0xff]
    %v6622 = vld [vmem:[#allocation3 + $0xa60] sm:$0xff]
    %v6623 = vld [vmem:[#allocation3 + $0xa68] sm:$0xff]
    %v6624 = vld [vmem:[#allocation3 + $0xa70] sm:$0xff]
    %v6625 = vld [vmem:[#allocation3 + $0xa78] sm:$0xff]
    %v6626 = vld [vmem:[#allocation3 + $0xa80] sm:$0xff]
    %v6627 = vld [vmem:[#allocation3 + $0xa88] sm:$0xff]
    %v6628 = vld [vmem:[#allocation3 + $0xa90] sm:$0xff]
    %v6629 = vld [vmem:[#allocation3 + $0xa98] sm:$0xff]
    %v6630 = vld [vmem:[#allocation3 + $0xaa0] sm:$0xff]
    %v6631 = vld [vmem:[#allocation3 + $0xaa8] sm:$0xff]
    %v6632 = vld [vmem:[#allocation3 + $0xab0] sm:$0xff]
    %v6633 = vld [vmem:[#allocation3 + $0xab8] sm:$0xff]
    %v6634 = vld [vmem:[#allocation3 + $0xac0] sm:$0xff]
    %v6635 = vld [vmem:[#allocation3 + $0xac8] sm:$0xff]
    %v6636 = vld [vmem:[#allocation3 + $0xad0] sm:$0xff]
    %v6637 = vld [vmem:[#allocation3 + $0xad8] sm:$0xff]
    %v6638 = vld [vmem:[#allocation3 + $0xae0] sm:$0xff]
    %v6639 = vld [vmem:[#allocation3 + $0xae8] sm:$0xff]
    %v6640 = vld [vmem:[#allocation3 + $0xaf0] sm:$0xff]
    %v6641 = vld [vmem:[#allocation3 + $0xaf8] sm:$0xff]
    %v6642 = vld [vmem:[#allocation3 + $0xb00] sm:$0xff]
    %v6643 = vld [vmem:[#allocation3 + $0xb08] sm:$0xff]
    %v6644 = vld [vmem:[#allocation3 + $0xb10] sm:$0xff]
    %v6645 = vld [vmem:[#allocation3 + $0xb18] sm:$0xff]
    %v6646 = vld [vmem:[#allocation3 + $0xb20] sm:$0xff]
    %v6647 = vld [vmem:[#allocation3 + $0xb28] sm:$0xff]
    %v6648 = vld [vmem:[#allocation3 + $0xb30] sm:$0xff]
    %v6649 = vld [vmem:[#allocation3 + $0xb38] sm:$0xff]
    %v6650 = vld [vmem:[#allocation3 + $0xb40] sm:$0xff]
    %v6651 = vld [vmem:[#allocation3 + $0xb48] sm:$0xff]
    %v6652 = vld [vmem:[#allocation3 + $0xb50] sm:$0xff]
    %v6653 = vld [vmem:[#allocation3 + $0xb58] sm:$0xff]
    %v6654 = vld [vmem:[#allocation3 + $0xb60] sm:$0xff]
    %v6655 = vld [vmem:[#allocation3 + $0xb68] sm:$0xff]
    %v6656 = vld [vmem:[#allocation3 + $0xb70] sm:$0xff]
    %v6657 = vld [vmem:[#allocation3 + $0xb78] sm:$0xff]
    %v6658 = vld [vmem:[#allocation3 + $0xb80] sm:$0xff]
    %v6659 = vld [vmem:[#allocation3 + $0xb88] sm:$0xff]
    %v6660 = vld [vmem:[#allocation3 + $0xb90] sm:$0xff]
    %v6661 = vld [vmem:[#allocation3 + $0xb98] sm:$0xff]
    %v6662 = vld [vmem:[#allocation3 + $0xba0] sm:$0xff]
    %v6663 = vld [vmem:[#allocation3 + $0xba8] sm:$0xff]
    %v6664 = vld [vmem:[#allocation3 + $0xbb0] sm:$0xff]
    %v6665 = vld [vmem:[#allocation3 + $0xbb8] sm:$0xff]
    %v6666 = vld [vmem:[#allocation3 + $0xbc0] sm:$0xff]
    %v6667 = vld [vmem:[#allocation3 + $0xbc8] sm:$0xff]
    %v6668 = vld [vmem:[#allocation3 + $0xbd0] sm:$0xff]
    %v6669 = vld [vmem:[#allocation3 + $0xbd8] sm:$0xff]
    %v6670 = vld [vmem:[#allocation3 + $0xbe0] sm:$0xff]
    %v6671 = vld [vmem:[#allocation3 + $0xbe8] sm:$0xff]
    %v6672 = vld [vmem:[#allocation3 + $0xbf0] sm:$0xff]
    %v6673 = vld [vmem:[#allocation3 + $0xbf8] sm:$0xff]
    %v6674 = vld [vmem:[#allocation3 + $0xc00] sm:$0xff]
    %v6675 = vld [vmem:[#allocation3 + $0xc08] sm:$0xff]
    %v6676 = vld [vmem:[#allocation3 + $0xc10] sm:$0xff]
    %v6677 = vld [vmem:[#allocation3 + $0xc18] sm:$0xff]
    %v6678 = vld [vmem:[#allocation3 + $0xc20] sm:$0xff]
    %v6679 = vld [vmem:[#allocation3 + $0xc28] sm:$0xff]
    %v6680 = vld [vmem:[#allocation3 + $0xc30] sm:$0xff]
    %v6681 = vld [vmem:[#allocation3 + $0xc38] sm:$0xff]
    %v6682 = vld [vmem:[#allocation3 + $0xc40] sm:$0xff]
    %v6683 = vld [vmem:[#allocation3 + $0xc48] sm:$0xff]
    %v6684 = vld [vmem:[#allocation3 + $0xc50] sm:$0xff]
    %v6685 = vld [vmem:[#allocation3 + $0xc58] sm:$0xff]
    %v6686 = vld [vmem:[#allocation3 + $0xc60] sm:$0xff]
    %v6687 = vld [vmem:[#allocation3 + $0xc68] sm:$0xff]
    %v6688 = vld [vmem:[#allocation3 + $0xc70] sm:$0xff]
    %v6689 = vld [vmem:[#allocation3 + $0xc78] sm:$0xff]
    %v6690 = vld [vmem:[#allocation3 + $0xc80] sm:$0xff]
    %v6691 = vld [vmem:[#allocation3 + $0xc88] sm:$0xff]
    %v6692 = vld [vmem:[#allocation3 + $0xc90] sm:$0xff]
    %v6693 = vld [vmem:[#allocation3 + $0xc98] sm:$0xff]
    %v6694 = vld [vmem:[#allocation3 + $0xca0] sm:$0xff]
    %v6695 = vld [vmem:[#allocation3 + $0xca8] sm:$0xff]
    %v6696 = vld [vmem:[#allocation3 + $0xcb0] sm:$0xff]
    %v6697 = vld [vmem:[#allocation3 + $0xcb8] sm:$0xff]
    %v6698 = vld [vmem:[#allocation3 + $0xcc0] sm:$0xff]
    %v6699 = vld [vmem:[#allocation3 + $0xcc8] sm:$0xff]
    %v6700 = vld [vmem:[#allocation3 + $0xcd0] sm:$0xff]
    %v6701 = vld [vmem:[#allocation3 + $0xcd8] sm:$0xff]
    %v6702 = vld [vmem:[#allocation3 + $0xce0] sm:$0xff]
    %v6703 = vld [vmem:[#allocation3 + $0xce8] sm:$0xff]
    %v6704 = vld [vmem:[#allocation3 + $0xcf0] sm:$0xff]
    %v6705 = vld [vmem:[#allocation3 + $0xcf8] sm:$0xff]
    %v6706 = vld [vmem:[#allocation3 + $0xd00] sm:$0xff]
    %v6707 = vld [vmem:[#allocation3 + $0xd08] sm:$0xff]
    %v6708 = vld [vmem:[#allocation3 + $0xd10] sm:$0xff]
    %v6709 = vld [vmem:[#allocation3 + $0xd18] sm:$0xff]
    %v6710 = vld [vmem:[#allocation3 + $0xd20] sm:$0xff]
    %v6711 = vld [vmem:[#allocation3 + $0xd28] sm:$0xff]
    %v6712 = vld [vmem:[#allocation3 + $0xd30] sm:$0xff]
    %v6713 = vld [vmem:[#allocation3 + $0xd38] sm:$0xff]
    %v6714 = vld [vmem:[#allocation3 + $0xd40] sm:$0xff]
    %v6715 = vld [vmem:[#allocation3 + $0xd48] sm:$0xff]
    %v6716 = vld [vmem:[#allocation3 + $0xd50] sm:$0xff]
    %v6717 = vld [vmem:[#allocation3 + $0xd58] sm:$0xff]
    %v6718 = vld [vmem:[#allocation3 + $0xd60] sm:$0xff]
    %v6719 = vld [vmem:[#allocation3 + $0xd68] sm:$0xff]
    %v6720 = vld [vmem:[#allocation3 + $0xd70] sm:$0xff]
    %v6721 = vld [vmem:[#allocation3 + $0xd78] sm:$0xff]
    %v6722 = vld [vmem:[#allocation3 + $0xd80] sm:$0xff]
    %v6723 = vld [vmem:[#allocation3 + $0xd88] sm:$0xff]
    %v6724 = vld [vmem:[#allocation3 + $0xd90] sm:$0xff]
    %v6725 = vld [vmem:[#allocation3 + $0xd98] sm:$0xff]
    %v6726 = vld [vmem:[#allocation3 + $0xda0] sm:$0xff]
    %v6727 = vld [vmem:[#allocation3 + $0xda8] sm:$0xff]
    %v6728 = vld [vmem:[#allocation3 + $0xdb0] sm:$0xff]
    %v6729 = vld [vmem:[#allocation3 + $0xdb8] sm:$0xff]
    %v6730 = vld [vmem:[#allocation3 + $0xdc0] sm:$0xff]
    %v6731 = vld [vmem:[#allocation3 + $0xdc8] sm:$0xff]
    %v6732 = vld [vmem:[#allocation3 + $0xdd0] sm:$0xff]
    %v6733 = vld [vmem:[#allocation3 + $0xdd8] sm:$0xff]
    %v6734 = vld [vmem:[#allocation3 + $0xde0] sm:$0xff]
    %v6735 = vld [vmem:[#allocation3 + $0xde8] sm:$0xff]
    %v6736 = vld [vmem:[#allocation3 + $0xdf0] sm:$0xff]
    %v6737 = vld [vmem:[#allocation3 + $0xdf8] sm:$0xff]
    %v6738 = vld [vmem:[#allocation3 + $0xe00] sm:$0xff]
    %v6739 = vld [vmem:[#allocation3 + $0xe08] sm:$0xff]
    %v6740 = vld [vmem:[#allocation3 + $0xe10] sm:$0xff]
    %v6741 = vld [vmem:[#allocation3 + $0xe18] sm:$0xff]
    %v6742 = vld [vmem:[#allocation3 + $0xe20] sm:$0xff]
    %v6743 = vld [vmem:[#allocation3 + $0xe28] sm:$0xff]
    %v6744 = vld [vmem:[#allocation3 + $0xe30] sm:$0xff]
    %v6745 = vld [vmem:[#allocation3 + $0xe38] sm:$0xff]
    %v6746 = vld [vmem:[#allocation3 + $0xe40] sm:$0xff]
    %v6747 = vld [vmem:[#allocation3 + $0xe48] sm:$0xff]
    %v6748 = vld [vmem:[#allocation3 + $0xe50] sm:$0xff]
    %v6749 = vld [vmem:[#allocation3 + $0xe58] sm:$0xff]
    %v6750 = vld [vmem:[#allocation3 + $0xe60] sm:$0xff]
    %v6751 = vld [vmem:[#allocation3 + $0xe68] sm:$0xff]
    %v6752 = vld [vmem:[#allocation3 + $0xe70] sm:$0xff]
    %v6753 = vld [vmem:[#allocation3 + $0xe78] sm:$0xff]
    %v6754 = vld [vmem:[#allocation3 + $0xe80] sm:$0xff]
    %v6755 = vld [vmem:[#allocation3 + $0xe88] sm:$0xff]
    %v6756 = vld [vmem:[#allocation3 + $0xe90] sm:$0xff]
    %v6757 = vld [vmem:[#allocation3 + $0xe98] sm:$0xff]
    %v6758 = vld [vmem:[#allocation3 + $0xea0] sm:$0xff]
    %v6759 = vld [vmem:[#allocation3 + $0xea8] sm:$0xff]
    %v6760 = vld [vmem:[#allocation3 + $0xeb0] sm:$0xff]
    %v6761 = vld [vmem:[#allocation3 + $0xeb8] sm:$0xff]
    %v6762 = vld [vmem:[#allocation3 + $0xec0] sm:$0xff]
    %v6763 = vld [vmem:[#allocation3 + $0xec8] sm:$0xff]
    %v6764 = vld [vmem:[#allocation3 + $0xed0] sm:$0xff]
    %v6765 = vld [vmem:[#allocation3 + $0xed8] sm:$0xff]
    %v6766 = vld [vmem:[#allocation3 + $0xee0] sm:$0xff]
    %v6767 = vld [vmem:[#allocation3 + $0xee8] sm:$0xff]
    %v6768 = vld [vmem:[#allocation3 + $0xef0] sm:$0xff]
    %v6769 = vld [vmem:[#allocation3 + $0xef8] sm:$0xff]
    %v6770 = vld [vmem:[#allocation3 + $0xf00] sm:$0xff]
    %v6771 = vld [vmem:[#allocation3 + $0xf08] sm:$0xff]
    %v6772 = vld [vmem:[#allocation3 + $0xf10] sm:$0xff]
    %v6773 = vld [vmem:[#allocation3 + $0xf18] sm:$0xff]
    %v6774 = vld [vmem:[#allocation3 + $0xf20] sm:$0xff]
    %v6775 = vld [vmem:[#allocation3 + $0xf28] sm:$0xff]
    %v6776 = vld [vmem:[#allocation3 + $0xf30] sm:$0xff]
    %v6777 = vld [vmem:[#allocation3 + $0xf38] sm:$0xff]
    %v6778 = vld [vmem:[#allocation3 + $0xf40] sm:$0xff]
    %v6779 = vld [vmem:[#allocation3 + $0xf48] sm:$0xff]
    %v6780 = vld [vmem:[#allocation3 + $0xf50] sm:$0xff]
    %v6781 = vld [vmem:[#allocation3 + $0xf58] sm:$0xff]
    %v6782 = vld [vmem:[#allocation3 + $0xf60] sm:$0xff]
    %v6783 = vld [vmem:[#allocation3 + $0xf68] sm:$0xff]
    %v6784 = vld [vmem:[#allocation3 + $0xf70] sm:$0xff]
    %v6785 = vld [vmem:[#allocation3 + $0xf78] sm:$0xff]
    %v6786 = vld [vmem:[#allocation3 + $0xf80] sm:$0xff]
    %v6787 = vld [vmem:[#allocation3 + $0xf88] sm:$0xff]
    %v6788 = vld [vmem:[#allocation3 + $0xf90] sm:$0xff]
    %v6789 = vld [vmem:[#allocation3 + $0xf98] sm:$0xff]
    %v6790 = vld [vmem:[#allocation3 + $0xfa0] sm:$0xff]
    %v6791 = vld [vmem:[#allocation3 + $0xfa8] sm:$0xff]
    %v6792 = vld [vmem:[#allocation3 + $0xfb0] sm:$0xff]
    %v6793 = vld [vmem:[#allocation3 + $0xfb8] sm:$0xff]
    %v6794 = vld [vmem:[#allocation3 + $0xfc0] sm:$0xff]
    %v6795 = vld [vmem:[#allocation3 + $0xfc8] sm:$0xff]
    %v6796 = vld [vmem:[#allocation3 + $0xfd0] sm:$0xff]
    %v6797 = vld [vmem:[#allocation3 + $0xfd8] sm:$0xff]
    %v6798 = vld [vmem:[#allocation3 + $0xfe0] sm:$0xff]
    %v6799 = vld [vmem:[#allocation3 + $0xfe8] sm:$0xff]
    %v6800 = vld [vmem:[#allocation3 + $0xff0] sm:$0xff]
    %v6801 = vld [vmem:[#allocation3 + $0xff8] sm:$0xff]
    %v6802 = vld [vmem:[#allocation3 + $0x1000] sm:$0xff]
    %v6803 = vld [vmem:[#allocation3 + $0x1008] sm:$0xff]
    %v6804 = vld [vmem:[#allocation3 + $0x1010] sm:$0xff]
    %v6805 = vld [vmem:[#allocation3 + $0x1018] sm:$0xff]
    %v6806 = vld [vmem:[#allocation3 + $0x1020] sm:$0xff]
    %v6807 = vld [vmem:[#allocation3 + $0x1028] sm:$0xff]
    %v6808 = vld [vmem:[#allocation3 + $0x1030] sm:$0xff]
    %v6809 = vld [vmem:[#allocation3 + $0x1038] sm:$0xff]
    %v6810 = vld [vmem:[#allocation3 + $0x1040] sm:$0xff]
    %v6811 = vld [vmem:[#allocation3 + $0x1048] sm:$0xff]
    %v6812 = vld [vmem:[#allocation3 + $0x1050] sm:$0xff]
    %v6813 = vld [vmem:[#allocation3 + $0x1058] sm:$0xff]
    %v6814 = vld [vmem:[#allocation3 + $0x1060] sm:$0xff]
    %v6815 = vld [vmem:[#allocation3 + $0x1068] sm:$0xff]
    %v6816 = vld [vmem:[#allocation3 + $0x1070] sm:$0xff]
    %v6817 = vld [vmem:[#allocation3 + $0x1078] sm:$0xff]
    %v6818 = vld [vmem:[#allocation3 + $0x1080] sm:$0xff]
    %v6819 = vld [vmem:[#allocation3 + $0x1088] sm:$0xff]
    %v6820 = vld [vmem:[#allocation3 + $0x1090] sm:$0xff]
    %v6821 = vld [vmem:[#allocation3 + $0x1098] sm:$0xff]
    %v6822 = vld [vmem:[#allocation3 + $0x10a0] sm:$0xff]
    %v6823 = vld [vmem:[#allocation3 + $0x10a8] sm:$0xff]
    %v6824 = vld [vmem:[#allocation3 + $0x10b0] sm:$0xff]
    %v6825 = vld [vmem:[#allocation3 + $0x10b8] sm:$0xff]
    %v6826 = vld [vmem:[#allocation3 + $0x10c0] sm:$0xff]
    %v6827 = vld [vmem:[#allocation3 + $0x10c8] sm:$0xff]
    %v6828 = vld [vmem:[#allocation3 + $0x10d0] sm:$0xff]
    %v6829 = vld [vmem:[#allocation3 + $0x10d8] sm:$0xff]
    %v6830 = vld [vmem:[#allocation3 + $0x10e0] sm:$0xff]
    %v6831 = vld [vmem:[#allocation3 + $0x10e8] sm:$0xff]
    %v6832 = vld [vmem:[#allocation3 + $0x10f0] sm:$0xff]
    %v6833 = vld [vmem:[#allocation3 + $0x10f8] sm:$0xff]
    %v6834 = vld [vmem:[#allocation3 + $0x1100] sm:$0xff]
    %v6835 = vld [vmem:[#allocation3 + $0x1108] sm:$0xff]
    %v6836 = vld [vmem:[#allocation3 + $0x1110] sm:$0xff]
    %v6837 = vld [vmem:[#allocation3 + $0x1118] sm:$0xff]
    %v6838 = vld [vmem:[#allocation3 + $0x1120] sm:$0xff]
    %v6839 = vld [vmem:[#allocation3 + $0x1128] sm:$0xff]
    %v6840 = vld [vmem:[#allocation3 + $0x1130] sm:$0xff]
    %v6841 = vld [vmem:[#allocation3 + $0x1138] sm:$0xff]
    %v6842 = vld [vmem:[#allocation3 + $0x1140] sm:$0xff]
    %v6843 = vld [vmem:[#allocation3 + $0x1148] sm:$0xff]
    %v6844 = vld [vmem:[#allocation3 + $0x1150] sm:$0xff]
    %v6845 = vld [vmem:[#allocation3 + $0x1158] sm:$0xff]
    %v6846 = vld [vmem:[#allocation3 + $0x1160] sm:$0xff]
    %v6847 = vld [vmem:[#allocation3 + $0x1168] sm:$0xff]
    %v6848 = vld [vmem:[#allocation3 + $0x1170] sm:$0xff]
    %v6849 = vld [vmem:[#allocation3 + $0x1178] sm:$0xff]
    %v6850 = vld [vmem:[#allocation3 + $0x1180] sm:$0xff]
    %v6851 = vld [vmem:[#allocation3 + $0x1188] sm:$0xff]
    %v6852 = vld [vmem:[#allocation3 + $0x1190] sm:$0xff]
    %v6853 = vld [vmem:[#allocation3 + $0x1198] sm:$0xff]
    %v6854 = vld [vmem:[#allocation3 + $0x11a0] sm:$0xff]
    %v6855 = vld [vmem:[#allocation3 + $0x11a8] sm:$0xff]
    %v6856 = vld [vmem:[#allocation3 + $0x11b0] sm:$0xff]
    %v6857 = vld [vmem:[#allocation3 + $0x11b8] sm:$0xff]
    %v6858 = vld [vmem:[#allocation3 + $0x11c0] sm:$0xff]
    %v6859 = vld [vmem:[#allocation3 + $0x11c8] sm:$0xff]
    %v6860 = vld [vmem:[#allocation3 + $0x11d0] sm:$0xff]
    %v6861 = vld [vmem:[#allocation3 + $0x11d8] sm:$0xff]
    %v6862 = vld [vmem:[#allocation3 + $0x11e0] sm:$0xff]
    %v6863 = vld [vmem:[#allocation3 + $0x11e8] sm:$0xff]
    %v6864 = vld [vmem:[#allocation3 + $0x11f0] sm:$0xff]
    %v6865 = vld [vmem:[#allocation3 + $0x11f8] sm:$0xff]
    %v6866 = vld [vmem:[#allocation7] sm:$0xff]
    %v6867 = vld [vmem:[#allocation7 + $0x8] sm:$0xff]
    %v6868 = vld [vmem:[#allocation7 + $0x10] sm:$0xff]
    %v6869 = vld [vmem:[#allocation7 + $0x18] sm:$0xff]
    %v6870 = vld [vmem:[#allocation7 + $0x20] sm:$0xff]
    %v6871 = vld [vmem:[#allocation7 + $0x28] sm:$0xff]
    %v6872 = vld [vmem:[#allocation7 + $0x30] sm:$0xff]
    %v6873 = vld [vmem:[#allocation7 + $0x38] sm:$0xff]
    %v6874 = vld [vmem:[#allocation7 + $0x40] sm:$0xff]
    %v6875 = vld [vmem:[#allocation7 + $0x48] sm:$0xff]
    %v6876 = vld [vmem:[#allocation7 + $0x50] sm:$0xff]
    %v6877 = vld [vmem:[#allocation7 + $0x58] sm:$0xff]
    %v6878 = vld [vmem:[#allocation7 + $0x60] sm:$0xff]
    %v6879 = vld [vmem:[#allocation7 + $0x68] sm:$0xff]
    %v6880 = vld [vmem:[#allocation7 + $0x70] sm:$0xff]
    %v6881 = vld [vmem:[#allocation7 + $0x78] sm:$0xff]
    %v6882 = vld [vmem:[#allocation7 + $0x80] sm:$0xff]
    %v6883 = vld [vmem:[#allocation7 + $0x88] sm:$0xff]
    %v6884 = vld [vmem:[#allocation7 + $0x90] sm:$0xff]
    %v6885 = vld [vmem:[#allocation7 + $0x98] sm:$0xff]
    %v6886 = vld [vmem:[#allocation7 + $0xa0] sm:$0xff]
    %v6887 = vld [vmem:[#allocation7 + $0xa8] sm:$0xff]
    %v6888 = vld [vmem:[#allocation7 + $0xb0] sm:$0xff]
    %v6889 = vld [vmem:[#allocation7 + $0xb8] sm:$0xff]
    %v6890 = vld [vmem:[#allocation7 + $0xc0] sm:$0xff]
    %v6891 = vld [vmem:[#allocation7 + $0xc8] sm:$0xff]
    %v6892 = vld [vmem:[#allocation7 + $0xd0] sm:$0xff]
    %v6893 = vld [vmem:[#allocation7 + $0xd8] sm:$0xff]
    %v6894 = vld [vmem:[#allocation7 + $0xe0] sm:$0xff]
    %v6895 = vld [vmem:[#allocation7 + $0xe8] sm:$0xff]
    %v6896 = vld [vmem:[#allocation7 + $0xf0] sm:$0xff]
    %v6897 = vld [vmem:[#allocation7 + $0xf8] sm:$0xff]
    %v6898 = vld [vmem:[#allocation7 + $0x100] sm:$0xff]
    %v6899 = vld [vmem:[#allocation7 + $0x108] sm:$0xff]
    %v6900 = vld [vmem:[#allocation7 + $0x110] sm:$0xff]
    %v6901 = vld [vmem:[#allocation7 + $0x118] sm:$0xff]
    %v6902 = vld [vmem:[#allocation7 + $0x120] sm:$0xff]
    %v6903 = vld [vmem:[#allocation7 + $0x128] sm:$0xff]
    %v6904 = vld [vmem:[#allocation7 + $0x130] sm:$0xff]
    %v6905 = vld [vmem:[#allocation7 + $0x138] sm:$0xff]
    %v6906 = vld [vmem:[#allocation7 + $0x140] sm:$0xff]
    %v6907 = vld [vmem:[#allocation7 + $0x148] sm:$0xff]
    %v6908 = vld [vmem:[#allocation7 + $0x150] sm:$0xff]
    %v6909 = vld [vmem:[#allocation7 + $0x158] sm:$0xff]
    %v6910 = vld [vmem:[#allocation7 + $0x160] sm:$0xff]
    %v6911 = vld [vmem:[#allocation7 + $0x168] sm:$0xff]
    %v6912 = vld [vmem:[#allocation7 + $0x170] sm:$0xff]
    %v6913 = vld [vmem:[#allocation7 + $0x178] sm:$0xff]
    %v6914 = vld [vmem:[#allocation7 + $0x180] sm:$0xff]
    %v6915 = vld [vmem:[#allocation7 + $0x188] sm:$0xff]
    %v6916 = vld [vmem:[#allocation7 + $0x190] sm:$0xff]
    %v6917 = vld [vmem:[#allocation7 + $0x198] sm:$0xff]
    %v6918 = vld [vmem:[#allocation7 + $0x1a0] sm:$0xff]
    %v6919 = vld [vmem:[#allocation7 + $0x1a8] sm:$0xff]
    %v6920 = vld [vmem:[#allocation7 + $0x1b0] sm:$0xff]
    %v6921 = vld [vmem:[#allocation7 + $0x1b8] sm:$0xff]
    %v6922 = vld [vmem:[#allocation7 + $0x1c0] sm:$0xff]
    %v6923 = vld [vmem:[#allocation7 + $0x1c8] sm:$0xff]
    %v6924 = vld [vmem:[#allocation7 + $0x1d0] sm:$0xff]
    %v6925 = vld [vmem:[#allocation7 + $0x1d8] sm:$0xff]
    %v6926 = vld [vmem:[#allocation7 + $0x1e0] sm:$0xff]
    %v6927 = vld [vmem:[#allocation7 + $0x1e8] sm:$0xff]
    %v6928 = vld [vmem:[#allocation7 + $0x1f0] sm:$0xff]
    %v6929 = vld [vmem:[#allocation7 + $0x1f8] sm:$0xff]
    %v6930 = vld [vmem:[#allocation7 + $0x200] sm:$0xff]
    %v6931 = vld [vmem:[#allocation7 + $0x208] sm:$0xff]
    %v6932 = vld [vmem:[#allocation7 + $0x210] sm:$0xff]
    %v6933 = vld [vmem:[#allocation7 + $0x218] sm:$0xff]
    %v6934 = vld [vmem:[#allocation7 + $0x220] sm:$0xff]
    %v6935 = vld [vmem:[#allocation7 + $0x228] sm:$0xff]
    %v6936 = vld [vmem:[#allocation7 + $0x230] sm:$0xff]
    %v6937 = vld [vmem:[#allocation7 + $0x238] sm:$0xff]
    %v6938 = vld [vmem:[#allocation7 + $0x240] sm:$0xff]
    %v6939 = vld [vmem:[#allocation7 + $0x248] sm:$0xff]
    %v6940 = vld [vmem:[#allocation7 + $0x250] sm:$0xff]
    %v6941 = vld [vmem:[#allocation7 + $0x258] sm:$0xff]
    %v6942 = vld [vmem:[#allocation7 + $0x260] sm:$0xff]
    %v6943 = vld [vmem:[#allocation7 + $0x268] sm:$0xff]
    %v6944 = vld [vmem:[#allocation7 + $0x270] sm:$0xff]
    %v6945 = vld [vmem:[#allocation7 + $0x278] sm:$0xff]
    %v6946 = vld [vmem:[#allocation7 + $0x280] sm:$0xff]
    %v6947 = vld [vmem:[#allocation7 + $0x288] sm:$0xff]
    %v6948 = vld [vmem:[#allocation7 + $0x290] sm:$0xff]
    %v6949 = vld [vmem:[#allocation7 + $0x298] sm:$0xff]
    %v6950 = vld [vmem:[#allocation7 + $0x2a0] sm:$0xff]
    %v6951 = vld [vmem:[#allocation7 + $0x2a8] sm:$0xff]
    %v6952 = vld [vmem:[#allocation7 + $0x2b0] sm:$0xff]
    %v6953 = vld [vmem:[#allocation7 + $0x2b8] sm:$0xff]
    %v6954 = vld [vmem:[#allocation7 + $0x2c0] sm:$0xff]
    %v6955 = vld [vmem:[#allocation7 + $0x2c8] sm:$0xff]
    %v6956 = vld [vmem:[#allocation7 + $0x2d0] sm:$0xff]
    %v6957 = vld [vmem:[#allocation7 + $0x2d8] sm:$0xff]
    %v6958 = vld [vmem:[#allocation7 + $0x2e0] sm:$0xff]
    %v6959 = vld [vmem:[#allocation7 + $0x2e8] sm:$0xff]
    %v6960 = vld [vmem:[#allocation7 + $0x2f0] sm:$0xff]
    %v6961 = vld [vmem:[#allocation7 + $0x2f8] sm:$0xff]
    %v6962 = vld [vmem:[#allocation7 + $0x300] sm:$0xff]
    %v6963 = vld [vmem:[#allocation7 + $0x308] sm:$0xff]
    %v6964 = vld [vmem:[#allocation7 + $0x310] sm:$0xff]
    %v6965 = vld [vmem:[#allocation7 + $0x318] sm:$0xff]
    %v6966 = vld [vmem:[#allocation7 + $0x320] sm:$0xff]
    %v6967 = vld [vmem:[#allocation7 + $0x328] sm:$0xff]
    %v6968 = vld [vmem:[#allocation7 + $0x330] sm:$0xff]
    %v6969 = vld [vmem:[#allocation7 + $0x338] sm:$0xff]
    %v6970 = vld [vmem:[#allocation7 + $0x340] sm:$0xff]
    %v6971 = vld [vmem:[#allocation7 + $0x348] sm:$0xff]
    %v6972 = vld [vmem:[#allocation7 + $0x350] sm:$0xff]
    %v6973 = vld [vmem:[#allocation7 + $0x358] sm:$0xff]
    %v6974 = vld [vmem:[#allocation7 + $0x360] sm:$0xff]
    %v6975 = vld [vmem:[#allocation7 + $0x368] sm:$0xff]
    %v6976 = vld [vmem:[#allocation7 + $0x370] sm:$0xff]
    %v6977 = vld [vmem:[#allocation7 + $0x378] sm:$0xff]
    %v6978 = vld [vmem:[#allocation7 + $0x380] sm:$0xff]
    %v6979 = vld [vmem:[#allocation7 + $0x388] sm:$0xff]
    %v6980 = vld [vmem:[#allocation7 + $0x390] sm:$0xff]
    %v6981 = vld [vmem:[#allocation7 + $0x398] sm:$0xff]
    %v6982 = vld [vmem:[#allocation7 + $0x3a0] sm:$0xff]
    %v6983 = vld [vmem:[#allocation7 + $0x3a8] sm:$0xff]
    %v6984 = vld [vmem:[#allocation7 + $0x3b0] sm:$0xff]
    %v6985 = vld [vmem:[#allocation7 + $0x3b8] sm:$0xff]
    %v6986 = vld [vmem:[#allocation7 + $0x3c0] sm:$0xff]
    %v6987 = vld [vmem:[#allocation7 + $0x3c8] sm:$0xff]
    %v6988 = vld [vmem:[#allocation7 + $0x3d0] sm:$0xff]
    %v6989 = vld [vmem:[#allocation7 + $0x3d8] sm:$0xff]
    %v6990 = vld [vmem:[#allocation7 + $0x3e0] sm:$0xff]
    %v6991 = vld [vmem:[#allocation7 + $0x3e8] sm:$0xff]
    %v6992 = vld [vmem:[#allocation7 + $0x3f0] sm:$0xff]
    %v6993 = vld [vmem:[#allocation7 + $0x3f8] sm:$0xff]
    %v6994 = vld [vmem:[#allocation7 + $0x400] sm:$0xff]
    %v6995 = vld [vmem:[#allocation7 + $0x408] sm:$0xff]
    %v6996 = vld [vmem:[#allocation7 + $0x410] sm:$0xff]
    %v6997 = vld [vmem:[#allocation7 + $0x418] sm:$0xff]
    %v6998 = vld [vmem:[#allocation7 + $0x420] sm:$0xff]
    %v6999 = vld [vmem:[#allocation7 + $0x428] sm:$0xff]
    %v7000 = vld [vmem:[#allocation7 + $0x430] sm:$0xff]
    %v7001 = vld [vmem:[#allocation7 + $0x438] sm:$0xff]
    %v7002 = vld [vmem:[#allocation7 + $0x440] sm:$0xff]
    %v7003 = vld [vmem:[#allocation7 + $0x448] sm:$0xff]
    %v7004 = vld [vmem:[#allocation7 + $0x450] sm:$0xff]
    %v7005 = vld [vmem:[#allocation7 + $0x458] sm:$0xff]
    %v7006 = vld [vmem:[#allocation7 + $0x460] sm:$0xff]
    %v7007 = vld [vmem:[#allocation7 + $0x468] sm:$0xff]
    %v7008 = vld [vmem:[#allocation7 + $0x470] sm:$0xff]
    %v7009 = vld [vmem:[#allocation7 + $0x478] sm:$0xff]
    %7010 = vmatprep.subr.mxu0 0.0
    %7011 = vmatpush1.msra.mxu0 %v6866
    %7012 = vmatprep.subr.mxu0 0.0
    %7013 = vmatpush1.msra.mxu0 %v6867
    %7014 = vmatprep.subr.mxu0 0.0
    %7015 = vmatpush1.msra.mxu0 %v6868
    %7016 = vmatprep.subr.mxu0 0.0
    %7017 = vmatpush1.msra.mxu0 %v6869
    %7018 = vmatprep.subr.mxu0 0.0
    %7019 = vmatpush1.msra.mxu0 %v6870
    %7020 = vmatprep.subr.mxu0 0.0
    %7021 = vmatpush1.msra.mxu0 %v6871
    %7022 = vmatprep.subr.mxu0 0.0
    %7023 = vmatpush1.msra.mxu0 %v6872
    %7024 = vmatprep.subr.mxu0 0.0
    %7025 = vmatpush1.msra.mxu0 %v6873
    %7026 = vmatprep.subr.mxu0 0.0
    %7027 = vmatpush1.msra.mxu0 %v6874
    %7028 = vmatprep.subr.mxu0 0.0
    %7029 = vmatpush1.msra.mxu0 %v6875
    %7030 = vmatprep.subr.mxu0 0.0
    %7031 = vmatpush1.msra.mxu0 %v6876
    %7032 = vmatprep.subr.mxu0 0.0
    %7033 = vmatpush1.msra.mxu0 %v6877
    %7034 = vmatprep.subr.mxu0 0.0
    %7035 = vmatpush1.msra.mxu0 %v6878
    %7036 = vmatprep.subr.mxu0 0.0
    %7037 = vmatpush1.msra.mxu0 %v6879
    %7038 = vmatprep.subr.mxu0 0.0
    %7039 = vmatpush1.msra.mxu0 %v6880
    %7040 = vmatprep.subr.mxu0 0.0
    %7041 = vmatpush1.msra.mxu0 %v6881
    %7042 = vmatprep.subr.mxu0 0.0
    %7043 = vmatpush1.msra.mxu0 %v6882
    %7044 = vmatprep.subr.mxu0 0.0
    %7045 = vmatpush1.msra.mxu0 %v6883
    %7046 = vmatprep.subr.mxu0 0.0
    %7047 = vmatpush1.msra.mxu0 %v6884
    %7048 = vmatprep.subr.mxu0 0.0
    %7049 = vmatpush1.msra.mxu0 %v6885
    %7050 = vmatprep.subr.mxu0 0.0
    %7051 = vmatpush1.msra.mxu0 %v6886
    %7052 = vmatprep.subr.mxu0 0.0
    %7053 = vmatpush1.msra.mxu0 %v6887
    %7054 = vmatprep.subr.mxu0 0.0
    %7055 = vmatpush1.msra.mxu0 %v6888
    %7056 = vmatprep.subr.mxu0 0.0
    %7057 = vmatpush1.msra.mxu0 %v6889
    %7058 = vmatprep.subr.mxu0 0.0
    %7059 = vmatpush1.msra.mxu0 %v6890
    %7060 = vmatprep.subr.mxu0 0.0
    %7061 = vmatpush1.msra.mxu0 %v6891
    %7062 = vmatprep.subr.mxu0 0.0
    %7063 = vmatpush1.msra.mxu0 %v6892
    %7064 = vmatprep.subr.mxu0 0.0
    %7065 = vmatpush1.msra.mxu0 %v6893
    %7066 = vmatprep.subr.mxu0 0.0
    %7067 = vmatpush1.msra.mxu0 %v6894
    %7068 = vmatprep.subr.mxu0 0.0
    %7069 = vmatpush1.msra.mxu0 %v6895
    %7070 = vmatprep.subr.mxu0 0.0
    %7071 = vmatpush1.msra.mxu0 %v6896
    %7072 = vmatprep.subr.mxu0 0.0
    %7073 = vmatpush1.msra.mxu0 %v6897
    %7074 = vmatprep.mubr.f32.mxu0 %v6291
    %7075 = vmatmul.mubr.f32.gmra.mrb[0].mxu0 %v6290
    %v7076 = vpop.f32.mrb[0].mxu0
    %v7077 = vadd.f32 0.0, %v7076
    %v7078 = vpop.f32.mrb[0].mxu0
    %7079 = vmatprep.mubr.f32.mxu0 %v6300
    %7080 = vmatmul.mubr.f32.gmra.mrb[0].mxu0 %v6299
    %v7081 = vpop.f32.mrb[0].mxu0
    %v7082 = vadd.f32 0.0, %v7081
    %v7083 = vpop.f32.mrb[0].mxu0
    %7084 = vmatprep.mubr.f32.mxu0 %v6309
    %7085 = vmatmul.mubr.f32.gmra.mrb[0].mxu0 %v6308
    %v7086 = vpop.f32.mrb[0].mxu0
    %v7087 = vadd.f32 0.0, %v7086
    %v7088 = vpop.f32.mrb[0].mxu0
    %7089 = vmatprep.mubr.f32.mxu0 %v6318
    %7090 = vmatmul.mubr.f32.gmra.mrb[0].mxu0 %v6317
    %v7091 = vpop.f32.mrb[0].mxu0
    %v7092 = vadd.f32 0.0, %v7091
    %v7093 = vpop.f32.mrb[0].mxu0
    %7094 = vmatprep.mubr.f32.mxu0 %v6327
    %7095 = vmatmul.mubr.f32.gmra.mrb[0].mxu0 %v6326
    %v7096 = vpop.f32.mrb[0].mxu0
    %v7097 = vadd.f32 0.0, %v7096
    %v7098 = vpop.f32.mrb[0].mxu0
    %7099 = vmatprep.mubr.f32.mxu0 %v6336
    %7100 = vmatmul.mubr.f32.gmra.mrb[0].mxu0 %v6335
    %v7101 = vpop.f32.mrb[0].mxu0
    %v7102 = vadd.f32 0.0, %v7101
    %v7103 = vpop.f32.mrb[0].mxu0
    %7104 = vmatprep.mubr.f32.mxu0 %v6345
    %7105 = vmatmul.mubr.f32.gmra.mrb[0].mxu0 %v6344
    %v7106 = vpop.f32.mrb[0].mxu0
    %v7107 = vadd.f32 0.0, %v7106
    %v7108 = vpop.f32.mrb[0].mxu0
    %7109 = vmatprep.mubr.f32.mxu0 %v6354
    %7110 = vmatmul.mubr.f32.gmra.mrb[0].mxu0 %v6353
    %v7111 = vpop.f32.mrb[0].mxu0
    %v7112 = vadd.f32 0.0, %v7111
    %v7113 = vpop.f32.mrb[0].mxu0
    %7114 = vmatprep.mubr.f32.mxu0 %v6363
    %7115 = vmatmul.mubr.f32.gmra.mrb[0].mxu0 %v6362
    %v7116 = vpop.f32.mrb[0].mxu0
    %v7117 = vadd.f32 0.0, %v7116
    %v7118 = vpop.f32.mrb[0].mxu0
    %7119 = vmatprep.mubr.f32.mxu0 %v6372
    %7120 = vmatmul.mubr.f32.gmra.mrb[0].mxu0 %v6371
    %v7121 = vpop.f32.mrb[0].mxu0
    %v7122 = vadd.f32 0.0, %v7121
    %v7123 = vpop.f32.mrb[0].mxu0
    %7124 = vmatprep.mubr.f32.mxu0 %v6381
    %7125 = vmatmul.mubr.f32.gmra.mrb[0].mxu0 %v6380
    %v7126 = vpop.f32.mrb[0].mxu0
    %v7127 = vadd.f32 0.0, %v7126
    %v7128 = vpop.f32.mrb[0].mxu0
    %7129 = vmatprep.mubr.f32.mxu0 %v6390
    %7130 = vmatmul.mubr.f32.gmra.mrb[0].mxu0 %v6389
    %v7131 = vpop.f32.mrb[0].mxu0
    %v7132 = vadd.f32 0.0, %v7131
    %v7133 = vpop.f32.mrb[0].mxu0
    %7134 = vmatprep.mubr.f32.mxu0 %v6399
    %7135 = vmatmul.mubr.f32.gmra.mrb[0].mxu0 %v6398
    %v7136 = vpop.f32.mrb[0].mxu0
    %v7137 = vadd.f32 0.0, %v7136
    %v7138 = vpop.f32.mrb[0].mxu0
    %7139 = vmatprep.mubr.f32.mxu0 %v6408
    %7140 = vmatmul.mubr.f32.gmra.mrb[0].mxu0 %v6407
    %v7141 = vpop.f32.mrb[0].mxu0
    %v7142 = vadd.f32 0.0, %v7141
    %v7143 = vpop.f32.mrb[0].mxu0
    %7144 = vmatprep.mubr.f32.mxu0 %v6417
    %7145 = vmatmul.mubr.f32.gmra.mrb[0].mxu0 %v6416
    %v7146 = vpop.f32.mrb[0].mxu0
    %v7147 = vadd.f32 0.0, %v7146
    %v7148 = vpop.f32.mrb[0].mxu0
    %7149 = vmatprep.mubr.f32.mxu0 %v6426
    %7150 = vmatmul.mubr.f32.gmra.mrb[0].mxu0 %v6425
    %v7151 = vpop.f32.mrb[0].mxu0
    %v7152 = vadd.f32 0.0, %v7151
    %v7153 = vpop.f32.mrb[0].mxu0
    %7154 = vmatprep.mubr.f32.mxu0 %v6435
    %7155 = vmatmul.mubr.f32.gmra.mrb[0].mxu0 %v6434
    %v7156 = vpop.f32.mrb[0].mxu0
    %v7157 = vadd.f32 0.0, %v7156
    %v7158 = vpop.f32.mrb[0].mxu0
    %7159 = vmatprep.mubr.f32.mxu0 %v6444
    %7160 = vmatmul.mubr.f32.gmra.mrb[0].mxu0 %v6443
    %v7161 = vpop.f32.mrb[0].mxu0
    %v7162 = vadd.f32 0.0, %v7161
    %v7163 = vpop.f32.mrb[0].mxu0
    %7164 = vmatprep.mubr.f32.mxu0 %v6453
    %7165 = vmatmul.mubr.f32.gmra.mrb[0].mxu0 %v6452
    %v7166 = vpop.f32.mrb[0].mxu0
    %v7167 = vadd.f32 0.0, %v7166
    %v7168 = vpop.f32.mrb[0].mxu0
    %7169 = vmatprep.mubr.f32.mxu0 %v6462
    %7170 = vmatmul.mubr.f32.gmra.mrb[0].mxu0 %v6461
    %v7171 = vpop.f32.mrb[0].mxu0
    %v7172 = vadd.f32 0.0, %v7171
    %v7173 = vpop.f32.mrb[0].mxu0
    %7174 = vmatprep.mubr.f32.mxu0 %v6471
    %7175 = vmatmul.mubr.f32.gmra.mrb[0].mxu0 %v6470
    %v7176 = vpop.f32.mrb[0].mxu0
    %v7177 = vadd.f32 0.0, %v7176
    %v7178 = vpop.f32.mrb[0].mxu0
    %7179 = vmatprep.mubr.f32.mxu0 %v6480
    %7180 = vmatmul.mubr.f32.gmra.mrb[0].mxu0 %v6479
    %v7181 = vpop.f32.mrb[0].mxu0
    %v7182 = vadd.f32 0.0, %v7181
    %v7183 = vpop.f32.mrb[0].mxu0
    %7184 = vmatprep.mubr.f32.mxu0 %v6489
    %7185 = vmatmul.mubr.f32.gmra.mrb[0].mxu0 %v6488
    %v7186 = vpop.f32.mrb[0].mxu0
    %v7187 = vadd.f32 0.0, %v7186
    %v7188 = vpop.f32.mrb[0].mxu0
    %7189 = vmatprep.mubr.f32.mxu0 %v6498
    %7190 = vmatmul.mubr.f32.gmra.mrb[0].mxu0 %v6497
    %v7191 = vpop.f32.mrb[0].mxu0
    %v7192 = vadd.f32 0.0, %v7191
    %v7193 = vpop.f32.mrb[0].mxu0
    %7194 = vmatprep.mubr.f32.mxu0 %v6507
    %7195 = vmatmul.mubr.f32.gmra.mrb[0].mxu0 %v6506
    %v7196 = vpop.f32.mrb[0].mxu0
    %v7197 = vadd.f32 0.0, %v7196
    %v7198 = vpop.f32.mrb[0].mxu0
    %7199 = vmatprep.mubr.f32.mxu0 %v6516
    %7200 = vmatmul.mubr.f32.gmra.mrb[0].mxu0 %v6515
    %v7201 = vpop.f32.mrb[0].mxu0
    %v7202 = vadd.f32 0.0, %v7201
    %v7203 = vpop.f32.mrb[0].mxu0
    %7204 = vmatprep.mubr.f32.mxu0 %v6525
    %7205 = vmatmul.mubr.f32.gmra.mrb[0].mxu0 %v6524
    %v7206 = vpop.f32.mrb[0].mxu0
    %v7207 = vadd.f32 0.0, %v7206
    %v7208 = vpop.f32.mrb[0].mxu0
    %7209 = vmatprep.mubr.f32.mxu0 %v6534
    %7210 = vmatmul.mubr.f32.gmra.mrb[0].mxu0 %v6533
    %v7211 = vpop.f32.mrb[0].mxu0
    %v7212 = vadd.f32 0.0, %v7211
    %v7213 = vpop.f32.mrb[0].mxu0
    %7214 = vmatprep.mubr.f32.mxu0 %v6543
    %7215 = vmatmul.mubr.f32.gmra.mrb[0].mxu0 %v6542
    %v7216 = vpop.f32.mrb[0].mxu0
    %v7217 = vadd.f32 0.0, %v7216
    %v7218 = vpop.f32.mrb[0].mxu0
    %7219 = vmatprep.mubr.f32.mxu0 %v6552
    %7220 = vmatmul.mubr.f32.gmra.mrb[0].mxu0 %v6551
    %v7221 = vpop.f32.mrb[0].mxu0
    %v7222 = vadd.f32 0.0, %v7221
    %v7223 = vpop.f32.mrb[0].mxu0
    %7224 = vmatprep.mubr.f32.mxu0 %v6561
    %7225 = vmatmul.mubr.f32.gmra.mrb[0].mxu0 %v6560
    %v7226 = vpop.f32.mrb[0].mxu0
    %v7227 = vadd.f32 0.0, %v7226
    %v7228 = vpop.f32.mrb[0].mxu0
    %7229 = vmatprep.mubr.f32.mxu0 %v6570
    %7230 = vmatmul.mubr.f32.gmra.mrb[0].mxu0 %v6569
    %v7231 = vpop.f32.mrb[0].mxu0
    %v7232 = vadd.f32 0.0, %v7231
    %v7233 = vpop.f32.mrb[0].mxu0
    %7234 = vmatprep.mubr.f32.mxu0 %v6579
    %7235 = vmatmul.mubr.f32.gmra.mrb[0].mxu0 %v6578
    %v7236 = vpop.f32.mrb[0].mxu0
    %v7237 = vadd.f32 0.0, %v7236
    %v7238 = vpop.f32.mrb[0].mxu0
    %7239 = vmatprep.mubr.f32.mxu0 %v6588
    %7240 = vmatmul.mubr.f32.gmra.mrb[0].mxu0 %v6587
    %v7241 = vpop.f32.mrb[0].mxu0
    %v7242 = vadd.f32 0.0, %v7241
    %v7243 = vpop.f32.mrb[0].mxu0
    %7244 = vmatprep.mubr.f32.mxu0 %v6597
    %7245 = vmatmul.mubr.f32.gmra.mrb[0].mxu0 %v6596
    %v7246 = vpop.f32.mrb[0].mxu0
    %v7247 = vadd.f32 0.0, %v7246
    %v7248 = vpop.f32.mrb[0].mxu0
    %7249 = vmatprep.mubr.f32.mxu0 %v6606
    %7250 = vmatmul.mubr.f32.gmra.mrb[0].mxu0 %v6605
    %v7251 = vpop.f32.mrb[0].mxu0
    %v7252 = vadd.f32 0.0, %v7251
    %v7253 = vpop.f32.mrb[0].mxu0
    %7254 = vmatprep.mubr.f32.mxu0 %v6615
    %7255 = vmatmul.mubr.f32.gmra.mrb[0].mxu0 %v6614
    %v7256 = vpop.f32.mrb[0].mxu0
    %v7257 = vadd.f32 0.0, %v7256
    %v7258 = vpop.f32.mrb[0].mxu0
    %7259 = vmatprep.mubr.f32.mxu0 %v6624
    %7260 = vmatmul.mubr.f32.gmra.mrb[0].mxu0 %v6623
    %v7261 = vpop.f32.mrb[0].mxu0
    %v7262 = vadd.f32 0.0, %v7261
    %v7263 = vpop.f32.mrb[0].mxu0
    %7264 = vmatprep.mubr.f32.mxu0 %v6633
    %7265 = vmatmul.mubr.f32.gmra.mrb[0].mxu0 %v6632
    %v7266 = vpop.f32.mrb[0].mxu0
    %v7267 = vadd.f32 0.0, %v7266
    %v7268 = vpop.f32.mrb[0].mxu0
    %7269 = vmatprep.mubr.f32.mxu0 %v6642
    %7270 = vmatmul.mubr.f32.gmra.mrb[0].mxu0 %v6641
    %v7271 = vpop.f32.mrb[0].mxu0
    %v7272 = vadd.f32 0.0, %v7271
    %v7273 = vpop.f32.mrb[0].mxu0
    %7274 = vmatprep.mubr.f32.mxu0 %v6651
    %7275 = vmatmul.mubr.f32.gmra.mrb[0].mxu0 %v6650
    %v7276 = vpop.f32.mrb[0].mxu0
    %v7277 = vadd.f32 0.0, %v7276
    %v7278 = vpop.f32.mrb[0].mxu0
    %7279 = vmatprep.mubr.f32.mxu0 %v6660
    %7280 = vmatmul.mubr.f32.gmra.mrb[0].mxu0 %v6659
    %v7281 = vpop.f32.mrb[0].mxu0
    %v7282 = vadd.f32 0.0, %v7281
    %v7283 = vpop.f32.mrb[0].mxu0
    %7284 = vmatprep.mubr.f32.mxu0 %v6669
    %7285 = vmatmul.mubr.f32.gmra.mrb[0].mxu0 %v6668
    %v7286 = vpop.f32.mrb[0].mxu0
    %v7287 = vadd.f32 0.0, %v7286
    %v7288 = vpop.f32.mrb[0].mxu0
    %7289 = vmatprep.mubr.f32.mxu0 %v6678
    %7290 = vmatmul.mubr.f32.gmra.mrb[0].mxu0 %v6677
    %v7291 = vpop.f32.mrb[0].mxu0
    %v7292 = vadd.f32 0.0, %v7291
    %v7293 = vpop.f32.mrb[0].mxu0
    %7294 = vmatprep.mubr.f32.mxu0 %v6687
    %7295 = vmatmul.mubr.f32.gmra.mrb[0].mxu0 %v6686
    %v7296 = vpop.f32.mrb[0].mxu0
    %v7297 = vadd.f32 0.0, %v7296
    %v7298 = vpop.f32.mrb[0].mxu0
    %7299 = vmatprep.mubr.f32.mxu0 %v6696
    %7300 = vmatmul.mubr.f32.gmra.mrb[0].mxu0 %v6695
    %v7301 = vpop.f32.mrb[0].mxu0
    %v7302 = vadd.f32 0.0, %v7301
    %v7303 = vpop.f32.mrb[0].mxu0
    %7304 = vmatprep.mubr.f32.mxu0 %v6705
    %7305 = vmatmul.mubr.f32.gmra.mrb[0].mxu0 %v6704
    %v7306 = vpop.f32.mrb[0].mxu0
    %v7307 = vadd.f32 0.0, %v7306
    %v7308 = vpop.f32.mrb[0].mxu0
    %7309 = vmatprep.mubr.f32.mxu0 %v6714
    %7310 = vmatmul.mubr.f32.gmra.mrb[0].mxu0 %v6713
    %v7311 = vpop.f32.mrb[0].mxu0
    %v7312 = vadd.f32 0.0, %v7311
    %v7313 = vpop.f32.mrb[0].mxu0
    %7314 = vmatprep.mubr.f32.mxu0 %v6723
    %7315 = vmatmul.mubr.f32.gmra.mrb[0].mxu0 %v6722
    %v7316 = vpop.f32.mrb[0].mxu0
    %v7317 = vadd.f32 0.0, %v7316
    %v7318 = vpop.f32.mrb[0].mxu0
    %7319 = vmatprep.mubr.f32.mxu0 %v6732
    %7320 = vmatmul.mubr.f32.gmra.mrb[0].mxu0 %v6731
    %v7321 = vpop.f32.mrb[0].mxu0
    %v7322 = vadd.f32 0.0, %v7321
    %v7323 = vpop.f32.mrb[0].mxu0
    %7324 = vmatprep.mubr.f32.mxu0 %v6741
    %7325 = vmatmul.mubr.f32.gmra.mrb[0].mxu0 %v6740
    %v7326 = vpop.f32.mrb[0].mxu0
    %v7327 = vadd.f32 0.0, %v7326
    %v7328 = vpop.f32.mrb[0].mxu0
    %7329 = vmatprep.mubr.f32.mxu0 %v6750
    %7330 = vmatmul.mubr.f32.gmra.mrb[0].mxu0 %v6749
    %v7331 = vpop.f32.mrb[0].mxu0
    %v7332 = vadd.f32 0.0, %v7331
    %v7333 = vpop.f32.mrb[0].mxu0
    %7334 = vmatprep.mubr.f32.mxu0 %v6759
    %7335 = vmatmul.mubr.f32.gmra.mrb[0].mxu0 %v6758
    %v7336 = vpop.f32.mrb[0].mxu0
    %v7337 = vadd.f32 0.0, %v7336
    %v7338 = vpop.f32.mrb[0].mxu0
    %7339 = vmatprep.mubr.f32.mxu0 %v6768
    %7340 = vmatmul.mubr.f32.gmra.mrb[0].mxu0 %v6767
    %v7341 = vpop.f32.mrb[0].mxu0
    %v7342 = vadd.f32 0.0, %v7341
    %v7343 = vpop.f32.mrb[0].mxu0
    %7344 = vmatprep.mubr.f32.mxu0 %v6777
    %7345 = vmatmul.mubr.f32.gmra.mrb[0].mxu0 %v6776
    %v7346 = vpop.f32.mrb[0].mxu0
    %v7347 = vadd.f32 0.0, %v7346
    %v7348 = vpop.f32.mrb[0].mxu0
    %7349 = vmatprep.mubr.f32.mxu0 %v6786
    %7350 = vmatmul.mubr.f32.gmra.mrb[0].mxu0 %v6785
    %v7351 = vpop.f32.mrb[0].mxu0
    %v7352 = vadd.f32 0.0, %v7351
    %v7353 = vpop.f32.mrb[0].mxu0
    %7354 = vmatprep.mubr.f32.mxu0 %v6795
    %7355 = vmatmul.mubr.f32.gmra.mrb[0].mxu0 %v6794
    %v7356 = vpop.f32.mrb[0].mxu0
    %v7357 = vadd.f32 0.0, %v7356
    %v7358 = vpop.f32.mrb[0].mxu0
    %7359 = vmatprep.mubr.f32.mxu0 %v6804
    %7360 = vmatmul.mubr.f32.gmra.mrb[0].mxu0 %v6803
    %v7361 = vpop.f32.mrb[0].mxu0
    %v7362 = vadd.f32 0.0, %v7361
    %v7363 = vpop.f32.mrb[0].mxu0
    %7364 = vmatprep.mubr.f32.mxu0 %v6813
    %7365 = vmatmul.mubr.f32.gmra.mrb[0].mxu0 %v6812
    %v7366 = vpop.f32.mrb[0].mxu0
    %v7367 = vadd.f32 0.0, %v7366
    %v7368 = vpop.f32.mrb[0].mxu0
    %7369 = vmatprep.mubr.f32.mxu0 %v6822
    %7370 = vmatmul.mubr.f32.gmra.mrb[0].mxu0 %v6821
    %v7371 = vpop.f32.mrb[0].mxu0
    %v7372 = vadd.f32 0.0, %v7371
    %v7373 = vpop.f32.mrb[0].mxu0
    %7374 = vmatprep.mubr.f32.mxu0 %v6831
    %7375 = vmatmul.mubr.f32.gmra.mrb[0].mxu0 %v6830
    %v7376 = vpop.f32.mrb[0].mxu0
    %v7377 = vadd.f32 0.0, %v7376
    %v7378 = vpop.f32.mrb[0].mxu0
    %7379 = vmatprep.mubr.f32.mxu0 %v6840
    %7380 = vmatmul.mubr.f32.gmra.mrb[0].mxu0 %v6839
    %v7381 = vpop.f32.mrb[0].mxu0
    %v7382 = vadd.f32 0.0, %v7381
    %v7383 = vpop.f32.mrb[0].mxu0
    %7384 = vmatprep.mubr.f32.mxu0 %v6849
    %7385 = vmatmul.mubr.f32.gmra.mrb[0].mxu0 %v6848
    %v7386 = vpop.f32.mrb[0].mxu0
    %v7387 = vadd.f32 0.0, %v7386
    %v7388 = vpop.f32.mrb[0].mxu0
    %7389 = vmatprep.mubr.f32.mxu0 %v6858
    %7390 = vmatmul.mubr.f32.gmra.mrb[0].mxu0 %v6857
    %v7391 = vpop.f32.mrb[0].mxu0
    %v7392 = vadd.f32 0.0, %v7391
    %v7393 = vpop.f32.mrb[0].mxu0
    %7394 = vdwg.mxu0
    %7395 = vmatprep.subr.mxu0 0.0
    %7396 = vmatpush1.msra.mxu0 %v6898
    %7397 = vmatprep.subr.mxu0 0.0
    %7398 = vmatpush1.msra.mxu0 %v6899
    %7399 = vmatprep.subr.mxu0 0.0
    %7400 = vmatpush1.msra.mxu0 %v6900
    %7401 = vmatprep.subr.mxu0 0.0
    %7402 = vmatpush1.msra.mxu0 %v6901
    %7403 = vmatprep.subr.mxu0 0.0
    %7404 = vmatpush1.msra.mxu0 %v6902
    %7405 = vmatprep.subr.mxu0 0.0
    %7406 = vmatpush1.msra.mxu0 %v6903
    %7407 = vmatprep.subr.mxu0 0.0
    %7408 = vmatpush1.msra.mxu0 %v6904
    %7409 = vmatprep.subr.mxu0 0.0
    %7410 = vmatpush1.msra.mxu0 %v6905
    %7411 = vmatprep.subr.mxu0 0.0
    %7412 = vmatpush1.msra.mxu0 %v6906
    %7413 = vmatprep.subr.mxu0 0.0
    %7414 = vmatpush1.msra.mxu0 %v6907
    %7415 = vmatprep.subr.mxu0 0.0
    %7416 = vmatpush1.msra.mxu0 %v6908
    %7417 = vmatprep.subr.mxu0 0.0
    %7418 = vmatpush1.msra.mxu0 %v6909
    %7419 = vmatprep.subr.mxu0 0.0
    %7420 = vmatpush1.msra.mxu0 %v6910
    %7421 = vmatprep.subr.mxu0 0.0
    %7422 = vmatpush1.msra.mxu0 %v6911
    %7423 = vmatprep.subr.mxu0 0.0
    %7424 = vmatpush1.msra.mxu0 %v6912
    %7425 = vmatprep.subr.mxu0 0.0
    %7426 = vmatpush1.msra.mxu0 %v6913
    %7427 = vmatprep.subr.mxu0 0.0
    %7428 = vmatpush1.msra.mxu0 %v6914
    %7429 = vmatprep.subr.mxu0 0.0
    %7430 = vmatpush1.msra.mxu0 %v6915
    %7431 = vmatprep.subr.mxu0 0.0
    %7432 = vmatpush1.msra.mxu0 %v6916
    %7433 = vmatprep.subr.mxu0 0.0
    %7434 = vmatpush1.msra.mxu0 %v6917
    %7435 = vmatprep.subr.mxu0 0.0
    %7436 = vmatpush1.msra.mxu0 %v6918
    %7437 = vmatprep.subr.mxu0 0.0
    %7438 = vmatpush1.msra.mxu0 %v6919
    %7439 = vmatprep.subr.mxu0 0.0
    %7440 = vmatpush1.msra.mxu0 %v6920
    %7441 = vmatprep.subr.mxu0 0.0
    %7442 = vmatpush1.msra.mxu0 %v6921
    %7443 = vmatprep.subr.mxu0 0.0
    %7444 = vmatpush1.msra.mxu0 %v6922
    %7445 = vmatprep.subr.mxu0 0.0
    %7446 = vmatpush1.msra.mxu0 %v6923
    %7447 = vmatprep.subr.mxu0 0.0
    %7448 = vmatpush1.msra.mxu0 %v6924
    %7449 = vmatprep.subr.mxu0 0.0
    %7450 = vmatpush1.msra.mxu0 %v6925
    %7451 = vmatprep.subr.mxu0 0.0
    %7452 = vmatpush1.msra.mxu0 %v6926
    %7453 = vmatprep.subr.mxu0 0.0
    %7454 = vmatpush1.msra.mxu0 %v6927
    %7455 = vmatprep.subr.mxu0 0.0
    %7456 = vmatpush1.msra.mxu0 %v6928
    %7457 = vmatprep.subr.mxu0 0.0
    %7458 = vmatpush1.msra.mxu0 %v6929
    %7459 = vmatprep.mubr.f32.mxu0 %v6293
    %7460 = vmatmul.mubr.f32.gmra.mrb[0].mxu0 %v6292
    %v7461 = vpop.f32.mrb[0].mxu0
    %v7462 = vadd.f32 %v7077, %v7461
    %v7463 = vpop.f32.mrb[0].mxu0
    %7464 = vmatprep.mubr.f32.mxu0 %v6302
    %7465 = vmatmul.mubr.f32.gmra.mrb[0].mxu0 %v6301
    %v7466 = vpop.f32.mrb[0].mxu0
    %v7467 = vadd.f32 %v7082, %v7466
    %v7468 = vpop.f32.mrb[0].mxu0
    %7469 = vmatprep.mubr.f32.mxu0 %v6311
    %7470 = vmatmul.mubr.f32.gmra.mrb[0].mxu0 %v6310
    %v7471 = vpop.f32.mrb[0].mxu0
    %v7472 = vadd.f32 %v7087, %v7471
    %v7473 = vpop.f32.mrb[0].mxu0
    %7474 = vmatprep.mubr.f32.mxu0 %v6320
    %7475 = vmatmul.mubr.f32.gmra.mrb[0].mxu0 %v6319
    %v7476 = vpop.f32.mrb[0].mxu0
    %v7477 = vadd.f32 %v7092, %v7476
    %v7478 = vpop.f32.mrb[0].mxu0
    %7479 = vmatprep.mubr.f32.mxu0 %v6329
    %7480 = vmatmul.mubr.f32.gmra.mrb[0].mxu0 %v6328
    %v7481 = vpop.f32.mrb[0].mxu0
    %v7482 = vadd.f32 %v7097, %v7481
    %v7483 = vpop.f32.mrb[0].mxu0
    %7484 = vmatprep.mubr.f32.mxu0 %v6338
    %7485 = vmatmul.mubr.f32.gmra.mrb[0].mxu0 %v6337
    %v7486 = vpop.f32.mrb[0].mxu0
    %v7487 = vadd.f32 %v7102, %v7486
    %v7488 = vpop.f32.mrb[0].mxu0
    %7489 = vmatprep.mubr.f32.mxu0 %v6347
    %7490 = vmatmul.mubr.f32.gmra.mrb[0].mxu0 %v6346
    %v7491 = vpop.f32.mrb[0].mxu0
    %v7492 = vadd.f32 %v7107, %v7491
    %v7493 = vpop.f32.mrb[0].mxu0
    %7494 = vmatprep.mubr.f32.mxu0 %v6356
    %7495 = vmatmul.mubr.f32.gmra.mrb[0].mxu0 %v6355
    %v7496 = vpop.f32.mrb[0].mxu0
    %v7497 = vadd.f32 %v7112, %v7496
    %v7498 = vpop.f32.mrb[0].mxu0
    %7499 = vmatprep.mubr.f32.mxu0 %v6365
    %7500 = vmatmul.mubr.f32.gmra.mrb[0].mxu0 %v6364
    %v7501 = vpop.f32.mrb[0].mxu0
    %v7502 = vadd.f32 %v7117, %v7501
    %v7503 = vpop.f32.mrb[0].mxu0
    %7504 = vmatprep.mubr.f32.mxu0 %v6374
    %7505 = vmatmul.mubr.f32.gmra.mrb[0].mxu0 %v6373
    %v7506 = vpop.f32.mrb[0].mxu0
    %v7507 = vadd.f32 %v7122, %v7506
    %v7508 = vpop.f32.mrb[0].mxu0
    %7509 = vmatprep.mubr.f32.mxu0 %v6383
    %7510 = vmatmul.mubr.f32.gmra.mrb[0].mxu0 %v6382
    %v7511 = vpop.f32.mrb[0].mxu0
    %v7512 = vadd.f32 %v7127, %v7511
    %v7513 = vpop.f32.mrb[0].mxu0
    %7514 = vmatprep.mubr.f32.mxu0 %v6392
    %7515 = vmatmul.mubr.f32.gmra.mrb[0].mxu0 %v6391
    %v7516 = vpop.f32.mrb[0].mxu0
    %v7517 = vadd.f32 %v7132, %v7516
    %v7518 = vpop.f32.mrb[0].mxu0
    %7519 = vmatprep.mubr.f32.mxu0 %v6401
    %7520 = vmatmul.mubr.f32.gmra.mrb[0].mxu0 %v6400
    %v7521 = vpop.f32.mrb[0].mxu0
    %v7522 = vadd.f32 %v7137, %v7521
    %v7523 = vpop.f32.mrb[0].mxu0
    %7524 = vmatprep.mubr.f32.mxu0 %v6410
    %7525 = vmatmul.mubr.f32.gmra.mrb[0].mxu0 %v6409
    %v7526 = vpop.f32.mrb[0].mxu0
    %v7527 = vadd.f32 %v7142, %v7526
    %v7528 = vpop.f32.mrb[0].mxu0
    %7529 = vmatprep.mubr.f32.mxu0 %v6419
    %7530 = vmatmul.mubr.f32.gmra.mrb[0].mxu0 %v6418
    %v7531 = vpop.f32.mrb[0].mxu0
    %v7532 = vadd.f32 %v7147, %v7531
    %v7533 = vpop.f32.mrb[0].mxu0
    %7534 = vmatprep.mubr.f32.mxu0 %v6428
    %7535 = vmatmul.mubr.f32.gmra.mrb[0].mxu0 %v6427
    %v7536 = vpop.f32.mrb[0].mxu0
    %v7537 = vadd.f32 %v7152, %v7536
    %v7538 = vpop.f32.mrb[0].mxu0
    %7539 = vmatprep.mubr.f32.mxu0 %v6437
    %7540 = vmatmul.mubr.f32.gmra.mrb[0].mxu0 %v6436
    %v7541 = vpop.f32.mrb[0].mxu0
    %v7542 = vadd.f32 %v7157, %v7541
    %v7543 = vpop.f32.mrb[0].mxu0
    %7544 = vmatprep.mubr.f32.mxu0 %v6446
    %7545 = vmatmul.mubr.f32.gmra.mrb[0].mxu0 %v6445
    %v7546 = vpop.f32.mrb[0].mxu0
    %v7547 = vadd.f32 %v7162, %v7546
    %v7548 = vpop.f32.mrb[0].mxu0
    %7549 = vmatprep.mubr.f32.mxu0 %v6455
    %7550 = vmatmul.mubr.f32.gmra.mrb[0].mxu0 %v6454
    %v7551 = vpop.f32.mrb[0].mxu0
    %v7552 = vadd.f32 %v7167, %v7551
    %v7553 = vpop.f32.mrb[0].mxu0
    %7554 = vmatprep.mubr.f32.mxu0 %v6464
    %7555 = vmatmul.mubr.f32.gmra.mrb[0].mxu0 %v6463
    %v7556 = vpop.f32.mrb[0].mxu0
    %v7557 = vadd.f32 %v7172, %v7556
    %v7558 = vpop.f32.mrb[0].mxu0
    %7559 = vmatprep.mubr.f32.mxu0 %v6473
    %7560 = vmatmul.mubr.f32.gmra.mrb[0].mxu0 %v6472
    %v7561 = vpop.f32.mrb[0].mxu0
    %v7562 = vadd.f32 %v7177, %v7561
    %v7563 = vpop.f32.mrb[0].mxu0
    %7564 = vmatprep.mubr.f32.mxu0 %v6482
    %7565 = vmatmul.mubr.f32.gmra.mrb[0].mxu0 %v6481
    %v7566 = vpop.f32.mrb[0].mxu0
    %v7567 = vadd.f32 %v7182, %v7566
    %v7568 = vpop.f32.mrb[0].mxu0
    %7569 = vmatprep.mubr.f32.mxu0 %v6491
    %7570 = vmatmul.mubr.f32.gmra.mrb[0].mxu0 %v6490
    %v7571 = vpop.f32.mrb[0].mxu0
    %v7572 = vadd.f32 %v7187, %v7571
    %v7573 = vpop.f32.mrb[0].mxu0
    %7574 = vmatprep.mubr.f32.mxu0 %v6500
    %7575 = vmatmul.mubr.f32.gmra.mrb[0].mxu0 %v6499
    %v7576 = vpop.f32.mrb[0].mxu0
    %v7577 = vadd.f32 %v7192, %v7576
    %v7578 = vpop.f32.mrb[0].mxu0
    %7579 = vmatprep.mubr.f32.mxu0 %v6509
    %7580 = vmatmul.mubr.f32.gmra.mrb[0].mxu0 %v6508
    %v7581 = vpop.f32.mrb[0].mxu0
    %v7582 = vadd.f32 %v7197, %v7581
    %v7583 = vpop.f32.mrb[0].mxu0
    %7584 = vmatprep.mubr.f32.mxu0 %v6518
    %7585 = vmatmul.mubr.f32.gmra.mrb[0].mxu0 %v6517
    %v7586 = vpop.f32.mrb[0].mxu0
    %v7587 = vadd.f32 %v7202, %v7586
    %v7588 = vpop.f32.mrb[0].mxu0
    %7589 = vmatprep.mubr.f32.mxu0 %v6527
    %7590 = vmatmul.mubr.f32.gmra.mrb[0].mxu0 %v6526
    %v7591 = vpop.f32.mrb[0].mxu0
    %v7592 = vadd.f32 %v7207, %v7591
    %v7593 = vpop.f32.mrb[0].mxu0
    %7594 = vmatprep.mubr.f32.mxu0 %v6536
    %7595 = vmatmul.mubr.f32.gmra.mrb[0].mxu0 %v6535
    %v7596 = vpop.f32.mrb[0].mxu0
    %v7597 = vadd.f32 %v7212, %v7596
    %v7598 = vpop.f32.mrb[0].mxu0
    %7599 = vmatprep.mubr.f32.mxu0 %v6545
    %7600 = vmatmul.mubr.f32.gmra.mrb[0].mxu0 %v6544
    %v7601 = vpop.f32.mrb[0].mxu0
    %v7602 = vadd.f32 %v7217, %v7601
    %v7603 = vpop.f32.mrb[0].mxu0
    %7604 = vmatprep.mubr.f32.mxu0 %v6554
    %7605 = vmatmul.mubr.f32.gmra.mrb[0].mxu0 %v6553
    %v7606 = vpop.f32.mrb[0].mxu0
    %v7607 = vadd.f32 %v7222, %v7606
    %v7608 = vpop.f32.mrb[0].mxu0
    %7609 = vmatprep.mubr.f32.mxu0 %v6563
    %7610 = vmatmul.mubr.f32.gmra.mrb[0].mxu0 %v6562
    %v7611 = vpop.f32.mrb[0].mxu0
    %v7612 = vadd.f32 %v7227, %v7611
    %v7613 = vpop.f32.mrb[0].mxu0
    %7614 = vmatprep.mubr.f32.mxu0 %v6572
    %7615 = vmatmul.mubr.f32.gmra.mrb[0].mxu0 %v6571
    %v7616 = vpop.f32.mrb[0].mxu0
    %v7617 = vadd.f32 %v7232, %v7616
    %v7618 = vpop.f32.mrb[0].mxu0
    %7619 = vmatprep.mubr.f32.mxu0 %v6581
    %7620 = vmatmul.mubr.f32.gmra.mrb[0].mxu0 %v6580
    %v7621 = vpop.f32.mrb[0].mxu0
    %v7622 = vadd.f32 %v7237, %v7621
    %v7623 = vpop.f32.mrb[0].mxu0
    %7624 = vmatprep.mubr.f32.mxu0 %v6590
    %7625 = vmatmul.mubr.f32.gmra.mrb[0].mxu0 %v6589
    %v7626 = vpop.f32.mrb[0].mxu0
    %v7627 = vadd.f32 %v7242, %v7626
    %v7628 = vpop.f32.mrb[0].mxu0
    %7629 = vmatprep.mubr.f32.mxu0 %v6599
    %7630 = vmatmul.mubr.f32.gmra.mrb[0].mxu0 %v6598
    %v7631 = vpop.f32.mrb[0].mxu0
    %v7632 = vadd.f32 %v7247, %v7631
    %v7633 = vpop.f32.mrb[0].mxu0
    %7634 = vmatprep.mubr.f32.mxu0 %v6608
    %7635 = vmatmul.mubr.f32.gmra.mrb[0].mxu0 %v6607
    %v7636 = vpop.f32.mrb[0].mxu0
    %v7637 = vadd.f32 %v7252, %v7636
    %v7638 = vpop.f32.mrb[0].mxu0
    %7639 = vmatprep.mubr.f32.mxu0 %v6617
    %7640 = vmatmul.mubr.f32.gmra.mrb[0].mxu0 %v6616
    %v7641 = vpop.f32.mrb[0].mxu0
    %v7642 = vadd.f32 %v7257, %v7641
    %v7643 = vpop.f32.mrb[0].mxu0
    %7644 = vmatprep.mubr.f32.mxu0 %v6626
    %7645 = vmatmul.mubr.f32.gmra.mrb[0].mxu0 %v6625
    %v7646 = vpop.f32.mrb[0].mxu0
    %v7647 = vadd.f32 %v7262, %v7646
    %v7648 = vpop.f32.mrb[0].mxu0
    %7649 = vmatprep.mubr.f32.mxu0 %v6635
    %7650 = vmatmul.mubr.f32.gmra.mrb[0].mxu0 %v6634
    %v7651 = vpop.f32.mrb[0].mxu0
    %v7652 = vadd.f32 %v7267, %v7651
    %v7653 = vpop.f32.mrb[0].mxu0
    %7654 = vmatprep.mubr.f32.mxu0 %v6644
    %7655 = vmatmul.mubr.f32.gmra.mrb[0].mxu0 %v6643
    %v7656 = vpop.f32.mrb[0].mxu0
    %v7657 = vadd.f32 %v7272, %v7656
    %v7658 = vpop.f32.mrb[0].mxu0
    %7659 = vmatprep.mubr.f32.mxu0 %v6653
    %7660 = vmatmul.mubr.f32.gmra.mrb[0].mxu0 %v6652
    %v7661 = vpop.f32.mrb[0].mxu0
    %v7662 = vadd.f32 %v7277, %v7661
    %v7663 = vpop.f32.mrb[0].mxu0
    %7664 = vmatprep.mubr.f32.mxu0 %v6662
    %7665 = vmatmul.mubr.f32.gmra.mrb[0].mxu0 %v6661
    %v7666 = vpop.f32.mrb[0].mxu0
    %v7667 = vadd.f32 %v7282, %v7666
    %v7668 = vpop.f32.mrb[0].mxu0
    %7669 = vmatprep.mubr.f32.mxu0 %v6671
    %7670 = vmatmul.mubr.f32.gmra.mrb[0].mxu0 %v6670
    %v7671 = vpop.f32.mrb[0].mxu0
    %v7672 = vadd.f32 %v7287, %v7671
    %v7673 = vpop.f32.mrb[0].mxu0
    %7674 = vmatprep.mubr.f32.mxu0 %v6680
    %7675 = vmatmul.mubr.f32.gmra.mrb[0].mxu0 %v6679
    %v7676 = vpop.f32.mrb[0].mxu0
    %v7677 = vadd.f32 %v7292, %v7676
    %v7678 = vpop.f32.mrb[0].mxu0
    %7679 = vmatprep.mubr.f32.mxu0 %v6689
    %7680 = vmatmul.mubr.f32.gmra.mrb[0].mxu0 %v6688
    %v7681 = vpop.f32.mrb[0].mxu0
    %v7682 = vadd.f32 %v7297, %v7681
    %v7683 = vpop.f32.mrb[0].mxu0
    %7684 = vmatprep.mubr.f32.mxu0 %v6698
    %7685 = vmatmul.mubr.f32.gmra.mrb[0].mxu0 %v6697
    %v7686 = vpop.f32.mrb[0].mxu0
    %v7687 = vadd.f32 %v7302, %v7686
    %v7688 = vpop.f32.mrb[0].mxu0
    %7689 = vmatprep.mubr.f32.mxu0 %v6707
    %7690 = vmatmul.mubr.f32.gmra.mrb[0].mxu0 %v6706
    %v7691 = vpop.f32.mrb[0].mxu0
    %v7692 = vadd.f32 %v7307, %v7691
    %v7693 = vpop.f32.mrb[0].mxu0
    %7694 = vmatprep.mubr.f32.mxu0 %v6716
    %7695 = vmatmul.mubr.f32.gmra.mrb[0].mxu0 %v6715
    %v7696 = vpop.f32.mrb[0].mxu0
    %v7697 = vadd.f32 %v7312, %v7696
    %v7698 = vpop.f32.mrb[0].mxu0
    %7699 = vmatprep.mubr.f32.mxu0 %v6725
    %7700 = vmatmul.mubr.f32.gmra.mrb[0].mxu0 %v6724
    %v7701 = vpop.f32.mrb[0].mxu0
    %v7702 = vadd.f32 %v7317, %v7701
    %v7703 = vpop.f32.mrb[0].mxu0
    %7704 = vmatprep.mubr.f32.mxu0 %v6734
    %7705 = vmatmul.mubr.f32.gmra.mrb[0].mxu0 %v6733
    %v7706 = vpop.f32.mrb[0].mxu0
    %v7707 = vadd.f32 %v7322, %v7706
    %v7708 = vpop.f32.mrb[0].mxu0
    %7709 = vmatprep.mubr.f32.mxu0 %v6743
    %7710 = vmatmul.mubr.f32.gmra.mrb[0].mxu0 %v6742
    %v7711 = vpop.f32.mrb[0].mxu0
    %v7712 = vadd.f32 %v7327, %v7711
    %v7713 = vpop.f32.mrb[0].mxu0
    %7714 = vmatprep.mubr.f32.mxu0 %v6752
    %7715 = vmatmul.mubr.f32.gmra.mrb[0].mxu0 %v6751
    %v7716 = vpop.f32.mrb[0].mxu0
    %v7717 = vadd.f32 %v7332, %v7716
    %v7718 = vpop.f32.mrb[0].mxu0
    %7719 = vmatprep.mubr.f32.mxu0 %v6761
    %7720 = vmatmul.mubr.f32.gmra.mrb[0].mxu0 %v6760
    %v7721 = vpop.f32.mrb[0].mxu0
    %v7722 = vadd.f32 %v7337, %v7721
    %v7723 = vpop.f32.mrb[0].mxu0
    %7724 = vmatprep.mubr.f32.mxu0 %v6770
    %7725 = vmatmul.mubr.f32.gmra.mrb[0].mxu0 %v6769
    %v7726 = vpop.f32.mrb[0].mxu0
    %v7727 = vadd.f32 %v7342, %v7726
    %v7728 = vpop.f32.mrb[0].mxu0
    %7729 = vmatprep.mubr.f32.mxu0 %v6779
    %7730 = vmatmul.mubr.f32.gmra.mrb[0].mxu0 %v6778
    %v7731 = vpop.f32.mrb[0].mxu0
    %v7732 = vadd.f32 %v7347, %v7731
    %v7733 = vpop.f32.mrb[0].mxu0
    %7734 = vmatprep.mubr.f32.mxu0 %v6788
    %7735 = vmatmul.mubr.f32.gmra.mrb[0].mxu0 %v6787
    %v7736 = vpop.f32.mrb[0].mxu0
    %v7737 = vadd.f32 %v7352, %v7736
    %v7738 = vpop.f32.mrb[0].mxu0
    %7739 = vmatprep.mubr.f32.mxu0 %v6797
    %7740 = vmatmul.mubr.f32.gmra.mrb[0].mxu0 %v6796
    %v7741 = vpop.f32.mrb[0].mxu0
    %v7742 = vadd.f32 %v7357, %v7741
    %v7743 = vpop.f32.mrb[0].mxu0
    %7744 = vmatprep.mubr.f32.mxu0 %v6806
    %7745 = vmatmul.mubr.f32.gmra.mrb[0].mxu0 %v6805
    %v7746 = vpop.f32.mrb[0].mxu0
    %v7747 = vadd.f32 %v7362, %v7746
    %v7748 = vpop.f32.mrb[0].mxu0
    %7749 = vmatprep.mubr.f32.mxu0 %v6815
    %7750 = vmatmul.mubr.f32.gmra.mrb[0].mxu0 %v6814
    %v7751 = vpop.f32.mrb[0].mxu0
    %v7752 = vadd.f32 %v7367, %v7751
    %v7753 = vpop.f32.mrb[0].mxu0
    %7754 = vmatprep.mubr.f32.mxu0 %v6824
    %7755 = vmatmul.mubr.f32.gmra.mrb[0].mxu0 %v6823
    %v7756 = vpop.f32.mrb[0].mxu0
    %v7757 = vadd.f32 %v7372, %v7756
    %v7758 = vpop.f32.mrb[0].mxu0
    %7759 = vmatprep.mubr.f32.mxu0 %v6833
    %7760 = vmatmul.mubr.f32.gmra.mrb[0].mxu0 %v6832
    %v7761 = vpop.f32.mrb[0].mxu0
    %v7762 = vadd.f32 %v7377, %v7761
    %v7763 = vpop.f32.mrb[0].mxu0
    %7764 = vmatprep.mubr.f32.mxu0 %v6842
    %7765 = vmatmul.mubr.f32.gmra.mrb[0].mxu0 %v6841
    %v7766 = vpop.f32.mrb[0].mxu0
    %v7767 = vadd.f32 %v7382, %v7766
    %v7768 = vpop.f32.mrb[0].mxu0
    %7769 = vmatprep.mubr.f32.mxu0 %v6851
    %7770 = vmatmul.mubr.f32.gmra.mrb[0].mxu0 %v6850
    %v7771 = vpop.f32.mrb[0].mxu0
    %v7772 = vadd.f32 %v7387, %v7771
    %v7773 = vpop.f32.mrb[0].mxu0
    %7774 = vmatprep.mubr.f32.mxu0 %v6860
    %7775 = vmatmul.mubr.f32.gmra.mrb[0].mxu0 %v6859
    %v7776 = vpop.f32.mrb[0].mxu0
    %v7777 = vadd.f32 %v7392, %v7776
    %v7778 = vpop.f32.mrb[0].mxu0
    %7779 = vdwg.mxu0
    %7780 = vmatprep.subr.mxu0 0.0
    %7781 = vmatpush1.msra.mxu0 %v6930
    %7782 = vmatprep.subr.mxu0 0.0
    %7783 = vmatpush1.msra.mxu0 %v6931
    %7784 = vmatprep.subr.mxu0 0.0
    %7785 = vmatpush1.msra.mxu0 %v6932
    %7786 = vmatprep.subr.mxu0 0.0
    %7787 = vmatpush1.msra.mxu0 %v6933
    %7788 = vmatprep.subr.mxu0 0.0
    %7789 = vmatpush1.msra.mxu0 %v6934
    %7790 = vmatprep.subr.mxu0 0.0
    %7791 = vmatpush1.msra.mxu0 %v6935
    %7792 = vmatprep.subr.mxu0 0.0
    %7793 = vmatpush1.msra.mxu0 %v6936
    %7794 = vmatprep.subr.mxu0 0.0
    %7795 = vmatpush1.msra.mxu0 %v6937
    %7796 = vmatprep.subr.mxu0 0.0
    %7797 = vmatpush1.msra.mxu0 %v6938
    %7798 = vmatprep.subr.mxu0 0.0
    %7799 = vmatpush1.msra.mxu0 %v6939
    %7800 = vmatprep.subr.mxu0 0.0
    %7801 = vmatpush1.msra.mxu0 %v6940
    %7802 = vmatprep.subr.mxu0 0.0
    %7803 = vmatpush1.msra.mxu0 %v6941
    %7804 = vmatprep.subr.mxu0 0.0
    %7805 = vmatpush1.msra.mxu0 %v6942
    %7806 = vmatprep.subr.mxu0 0.0
    %7807 = vmatpush1.msra.mxu0 %v6943
    %7808 = vmatprep.subr.mxu0 0.0
    %7809 = vmatpush1.msra.mxu0 %v6944
    %7810 = vmatprep.subr.mxu0 0.0
    %7811 = vmatpush1.msra.mxu0 %v6945
    %7812 = vmatprep.subr.mxu0 0.0
    %7813 = vmatpush1.msra.mxu0 %v6946
    %7814 = vmatprep.subr.mxu0 0.0
    %7815 = vmatpush1.msra.mxu0 %v6947
    %7816 = vmatprep.subr.mxu0 0.0
    %7817 = vmatpush1.msra.mxu0 %v6948
    %7818 = vmatprep.subr.mxu0 0.0
    %7819 = vmatpush1.msra.mxu0 %v6949
    %7820 = vmatprep.subr.mxu0 0.0
    %7821 = vmatpush1.msra.mxu0 %v6950
    %7822 = vmatprep.subr.mxu0 0.0
    %7823 = vmatpush1.msra.mxu0 %v6951
    %7824 = vmatprep.subr.mxu0 0.0
    %7825 = vmatpush1.msra.mxu0 %v6952
    %7826 = vmatprep.subr.mxu0 0.0
    %7827 = vmatpush1.msra.mxu0 %v6953
    %7828 = vmatprep.subr.mxu0 0.0
    %7829 = vmatpush1.msra.mxu0 %v6954
    %7830 = vmatprep.subr.mxu0 0.0
    %7831 = vmatpush1.msra.mxu0 %v6955
    %7832 = vmatprep.subr.mxu0 0.0
    %7833 = vmatpush1.msra.mxu0 %v6956
    %7834 = vmatprep.subr.mxu0 0.0
    %7835 = vmatpush1.msra.mxu0 %v6957
    %7836 = vmatprep.subr.mxu0 0.0
    %7837 = vmatpush1.msra.mxu0 %v6958
    %7838 = vmatprep.subr.mxu0 0.0
    %7839 = vmatpush1.msra.mxu0 %v6959
    %7840 = vmatprep.subr.mxu0 0.0
    %7841 = vmatpush1.msra.mxu0 %v6960
    %7842 = vmatprep.subr.mxu0 0.0
    %7843 = vmatpush1.msra.mxu0 %v6961
    %7844 = vmatprep.mubr.f32.mxu0 %v6295
    %7845 = vmatmul.mubr.f32.gmra.mrb[0].mxu0 %v6294
    %v7846 = vpop.f32.mrb[0].mxu0
    %v7847 = vadd.f32 %v7462, %v7846
    %v7848 = vpop.f32.mrb[0].mxu0
    %7849 = vmatprep.mubr.f32.mxu0 %v6304
    %7850 = vmatmul.mubr.f32.gmra.mrb[0].mxu0 %v6303
    %v7851 = vpop.f32.mrb[0].mxu0
    %v7852 = vadd.f32 %v7467, %v7851
    %v7853 = vpop.f32.mrb[0].mxu0
    %7854 = vmatprep.mubr.f32.mxu0 %v6313
    %7855 = vmatmul.mubr.f32.gmra.mrb[0].mxu0 %v6312
    %v7856 = vpop.f32.mrb[0].mxu0
    %v7857 = vadd.f32 %v7472, %v7856
    %v7858 = vpop.f32.mrb[0].mxu0
    %7859 = vmatprep.mubr.f32.mxu0 %v6322
    %7860 = vmatmul.mubr.f32.gmra.mrb[0].mxu0 %v6321
    %v7861 = vpop.f32.mrb[0].mxu0
    %v7862 = vadd.f32 %v7477, %v7861
    %v7863 = vpop.f32.mrb[0].mxu0
    %7864 = vmatprep.mubr.f32.mxu0 %v6331
    %7865 = vmatmul.mubr.f32.gmra.mrb[0].mxu0 %v6330
    %v7866 = vpop.f32.mrb[0].mxu0
    %v7867 = vadd.f32 %v7482, %v7866
    %v7868 = vpop.f32.mrb[0].mxu0
    %7869 = vmatprep.mubr.f32.mxu0 %v6340
    %7870 = vmatmul.mubr.f32.gmra.mrb[0].mxu0 %v6339
    %v7871 = vpop.f32.mrb[0].mxu0
    %v7872 = vadd.f32 %v7487, %v7871
    %v7873 = vpop.f32.mrb[0].mxu0
    %7874 = vmatprep.mubr.f32.mxu0 %v6349
    %7875 = vmatmul.mubr.f32.gmra.mrb[0].mxu0 %v6348
    %v7876 = vpop.f32.mrb[0].mxu0
    %v7877 = vadd.f32 %v7492, %v7876
    %v7878 = vpop.f32.mrb[0].mxu0
    %7879 = vmatprep.mubr.f32.mxu0 %v6358
    %7880 = vmatmul.mubr.f32.gmra.mrb[0].mxu0 %v6357
    %v7881 = vpop.f32.mrb[0].mxu0
    %v7882 = vadd.f32 %v7497, %v7881
    %v7883 = vpop.f32.mrb[0].mxu0
    %7884 = vmatprep.mubr.f32.mxu0 %v6367
    %7885 = vmatmul.mubr.f32.gmra.mrb[0].mxu0 %v6366
    %v7886 = vpop.f32.mrb[0].mxu0
    %v7887 = vadd.f32 %v7502, %v7886
    %v7888 = vpop.f32.mrb[0].mxu0
    %7889 = vmatprep.mubr.f32.mxu0 %v6376
    %7890 = vmatmul.mubr.f32.gmra.mrb[0].mxu0 %v6375
    %v7891 = vpop.f32.mrb[0].mxu0
    %v7892 = vadd.f32 %v7507, %v7891
    %v7893 = vpop.f32.mrb[0].mxu0
    %7894 = vmatprep.mubr.f32.mxu0 %v6385
    %7895 = vmatmul.mubr.f32.gmra.mrb[0].mxu0 %v6384
    %v7896 = vpop.f32.mrb[0].mxu0
    %v7897 = vadd.f32 %v7512, %v7896
    %v7898 = vpop.f32.mrb[0].mxu0
    %7899 = vmatprep.mubr.f32.mxu0 %v6394
    %7900 = vmatmul.mubr.f32.gmra.mrb[0].mxu0 %v6393
    %v7901 = vpop.f32.mrb[0].mxu0
    %v7902 = vadd.f32 %v7517, %v7901
    %v7903 = vpop.f32.mrb[0].mxu0
    %7904 = vmatprep.mubr.f32.mxu0 %v6403
    %7905 = vmatmul.mubr.f32.gmra.mrb[0].mxu0 %v6402
    %v7906 = vpop.f32.mrb[0].mxu0
    %v7907 = vadd.f32 %v7522, %v7906
    %v7908 = vpop.f32.mrb[0].mxu0
    %7909 = vmatprep.mubr.f32.mxu0 %v6412
    %7910 = vmatmul.mubr.f32.gmra.mrb[0].mxu0 %v6411
    %v7911 = vpop.f32.mrb[0].mxu0
    %v7912 = vadd.f32 %v7527, %v7911
    %v7913 = vpop.f32.mrb[0].mxu0
    %7914 = vmatprep.mubr.f32.mxu0 %v6421
    %7915 = vmatmul.mubr.f32.gmra.mrb[0].mxu0 %v6420
    %v7916 = vpop.f32.mrb[0].mxu0
    %v7917 = vadd.f32 %v7532, %v7916
    %v7918 = vpop.f32.mrb[0].mxu0
    %7919 = vmatprep.mubr.f32.mxu0 %v6430
    %7920 = vmatmul.mubr.f32.gmra.mrb[0].mxu0 %v6429
    %v7921 = vpop.f32.mrb[0].mxu0
    %v7922 = vadd.f32 %v7537, %v7921
    %v7923 = vpop.f32.mrb[0].mxu0
    %7924 = vmatprep.mubr.f32.mxu0 %v6439
    %7925 = vmatmul.mubr.f32.gmra.mrb[0].mxu0 %v6438
    %v7926 = vpop.f32.mrb[0].mxu0
    %v7927 = vadd.f32 %v7542, %v7926
    %v7928 = vpop.f32.mrb[0].mxu0
    %7929 = vmatprep.mubr.f32.mxu0 %v6448
    %7930 = vmatmul.mubr.f32.gmra.mrb[0].mxu0 %v6447
    %v7931 = vpop.f32.mrb[0].mxu0
    %v7932 = vadd.f32 %v7547, %v7931
    %v7933 = vpop.f32.mrb[0].mxu0
    %7934 = vmatprep.mubr.f32.mxu0 %v6457
    %7935 = vmatmul.mubr.f32.gmra.mrb[0].mxu0 %v6456
    %v7936 = vpop.f32.mrb[0].mxu0
    %v7937 = vadd.f32 %v7552, %v7936
    %v7938 = vpop.f32.mrb[0].mxu0
    %7939 = vmatprep.mubr.f32.mxu0 %v6466
    %7940 = vmatmul.mubr.f32.gmra.mrb[0].mxu0 %v6465
    %v7941 = vpop.f32.mrb[0].mxu0
    %v7942 = vadd.f32 %v7557, %v7941
    %v7943 = vpop.f32.mrb[0].mxu0
    %7944 = vmatprep.mubr.f32.mxu0 %v6475
    %7945 = vmatmul.mubr.f32.gmra.mrb[0].mxu0 %v6474
    %v7946 = vpop.f32.mrb[0].mxu0
    %v7947 = vadd.f32 %v7562, %v7946
    %v7948 = vpop.f32.mrb[0].mxu0
    %7949 = vmatprep.mubr.f32.mxu0 %v6484
    %7950 = vmatmul.mubr.f32.gmra.mrb[0].mxu0 %v6483
    %v7951 = vpop.f32.mrb[0].mxu0
    %v7952 = vadd.f32 %v7567, %v7951
    %v7953 = vpop.f32.mrb[0].mxu0
    %7954 = vmatprep.mubr.f32.mxu0 %v6493
    %7955 = vmatmul.mubr.f32.gmra.mrb[0].mxu0 %v6492
    %v7956 = vpop.f32.mrb[0].mxu0
    %v7957 = vadd.f32 %v7572, %v7956
    %v7958 = vpop.f32.mrb[0].mxu0
    %7959 = vmatprep.mubr.f32.mxu0 %v6502
    %7960 = vmatmul.mubr.f32.gmra.mrb[0].mxu0 %v6501
    %v7961 = vpop.f32.mrb[0].mxu0
    %v7962 = vadd.f32 %v7577, %v7961
    %v7963 = vpop.f32.mrb[0].mxu0
    %7964 = vmatprep.mubr.f32.mxu0 %v6511
    %7965 = vmatmul.mubr.f32.gmra.mrb[0].mxu0 %v6510
    %v7966 = vpop.f32.mrb[0].mxu0
    %v7967 = vadd.f32 %v7582, %v7966
    %v7968 = vpop.f32.mrb[0].mxu0
    %7969 = vmatprep.mubr.f32.mxu0 %v6520
    %7970 = vmatmul.mubr.f32.gmra.mrb[0].mxu0 %v6519
    %v7971 = vpop.f32.mrb[0].mxu0
    %v7972 = vadd.f32 %v7587, %v7971
    %v7973 = vpop.f32.mrb[0].mxu0
    %7974 = vmatprep.mubr.f32.mxu0 %v6529
    %7975 = vmatmul.mubr.f32.gmra.mrb[0].mxu0 %v6528
    %v7976 = vpop.f32.mrb[0].mxu0
    %v7977 = vadd.f32 %v7592, %v7976
    %v7978 = vpop.f32.mrb[0].mxu0
    %7979 = vmatprep.mubr.f32.mxu0 %v6538
    %7980 = vmatmul.mubr.f32.gmra.mrb[0].mxu0 %v6537
    %v7981 = vpop.f32.mrb[0].mxu0
    %v7982 = vadd.f32 %v7597, %v7981
    %v7983 = vpop.f32.mrb[0].mxu0
    %7984 = vmatprep.mubr.f32.mxu0 %v6547
    %7985 = vmatmul.mubr.f32.gmra.mrb[0].mxu0 %v6546
    %v7986 = vpop.f32.mrb[0].mxu0
    %v7987 = vadd.f32 %v7602, %v7986
    %v7988 = vpop.f32.mrb[0].mxu0
    %7989 = vmatprep.mubr.f32.mxu0 %v6556
    %7990 = vmatmul.mubr.f32.gmra.mrb[0].mxu0 %v6555
    %v7991 = vpop.f32.mrb[0].mxu0
    %v7992 = vadd.f32 %v7607, %v7991
    %v7993 = vpop.f32.mrb[0].mxu0
    %7994 = vmatprep.mubr.f32.mxu0 %v6565
    %7995 = vmatmul.mubr.f32.gmra.mrb[0].mxu0 %v6564
    %v7996 = vpop.f32.mrb[0].mxu0
    %v7997 = vadd.f32 %v7612, %v7996
    %v7998 = vpop.f32.mrb[0].mxu0
    %7999 = vmatprep.mubr.f32.mxu0 %v6574
    %8000 = vmatmul.mubr.f32.gmra.mrb[0].mxu0 %v6573
    %v8001 = vpop.f32.mrb[0].mxu0
    %v8002 = vadd.f32 %v7617, %v8001
    %v8003 = vpop.f32.mrb[0].mxu0
    %8004 = vmatprep.mubr.f32.mxu0 %v6583
    %8005 = vmatmul.mubr.f32.gmra.mrb[0].mxu0 %v6582
    %v8006 = vpop.f32.mrb[0].mxu0
    %v8007 = vadd.f32 %v7622, %v8006
    %v8008 = vpop.f32.mrb[0].mxu0
    %8009 = vmatprep.mubr.f32.mxu0 %v6592
    %8010 = vmatmul.mubr.f32.gmra.mrb[0].mxu0 %v6591
    %v8011 = vpop.f32.mrb[0].mxu0
    %v8012 = vadd.f32 %v7627, %v8011
    %v8013 = vpop.f32.mrb[0].mxu0
    %8014 = vmatprep.mubr.f32.mxu0 %v6601
    %8015 = vmatmul.mubr.f32.gmra.mrb[0].mxu0 %v6600
    %v8016 = vpop.f32.mrb[0].mxu0
    %v8017 = vadd.f32 %v7632, %v8016
    %v8018 = vpop.f32.mrb[0].mxu0
    %8019 = vmatprep.mubr.f32.mxu0 %v6610
    %8020 = vmatmul.mubr.f32.gmra.mrb[0].mxu0 %v6609
    %v8021 = vpop.f32.mrb[0].mxu0
    %v8022 = vadd.f32 %v7637, %v8021
    %v8023 = vpop.f32.mrb[0].mxu0
    %8024 = vmatprep.mubr.f32.mxu0 %v6619
    %8025 = vmatmul.mubr.f32.gmra.mrb[0].mxu0 %v6618
    %v8026 = vpop.f32.mrb[0].mxu0
    %v8027 = vadd.f32 %v7642, %v8026
    %v8028 = vpop.f32.mrb[0].mxu0
    %8029 = vmatprep.mubr.f32.mxu0 %v6628
    %8030 = vmatmul.mubr.f32.gmra.mrb[0].mxu0 %v6627
    %v8031 = vpop.f32.mrb[0].mxu0
    %v8032 = vadd.f32 %v7647, %v8031
    %v8033 = vpop.f32.mrb[0].mxu0
    %8034 = vmatprep.mubr.f32.mxu0 %v6637
    %8035 = vmatmul.mubr.f32.gmra.mrb[0].mxu0 %v6636
    %v8036 = vpop.f32.mrb[0].mxu0
    %v8037 = vadd.f32 %v7652, %v8036
    %v8038 = vpop.f32.mrb[0].mxu0
    %8039 = vmatprep.mubr.f32.mxu0 %v6646
    %8040 = vmatmul.mubr.f32.gmra.mrb[0].mxu0 %v6645
    %v8041 = vpop.f32.mrb[0].mxu0
    %v8042 = vadd.f32 %v7657, %v8041
    %v8043 = vpop.f32.mrb[0].mxu0
    %8044 = vmatprep.mubr.f32.mxu0 %v6655
    %8045 = vmatmul.mubr.f32.gmra.mrb[0].mxu0 %v6654
    %v8046 = vpop.f32.mrb[0].mxu0
    %v8047 = vadd.f32 %v7662, %v8046
    %v8048 = vpop.f32.mrb[0].mxu0
    %8049 = vmatprep.mubr.f32.mxu0 %v6664
    %8050 = vmatmul.mubr.f32.gmra.mrb[0].mxu0 %v6663
    %v8051 = vpop.f32.mrb[0].mxu0
    %v8052 = vadd.f32 %v7667, %v8051
    %v8053 = vpop.f32.mrb[0].mxu0
    %8054 = vmatprep.mubr.f32.mxu0 %v6673
    %8055 = vmatmul.mubr.f32.gmra.mrb[0].mxu0 %v6672
    %v8056 = vpop.f32.mrb[0].mxu0
    %v8057 = vadd.f32 %v7672, %v8056
    %v8058 = vpop.f32.mrb[0].mxu0
    %8059 = vmatprep.mubr.f32.mxu0 %v6682
    %8060 = vmatmul.mubr.f32.gmra.mrb[0].mxu0 %v6681
    %v8061 = vpop.f32.mrb[0].mxu0
    %v8062 = vadd.f32 %v7677, %v8061
    %v8063 = vpop.f32.mrb[0].mxu0
    %8064 = vmatprep.mubr.f32.mxu0 %v6691
    %8065 = vmatmul.mubr.f32.gmra.mrb[0].mxu0 %v6690
    %v8066 = vpop.f32.mrb[0].mxu0
    %v8067 = vadd.f32 %v7682, %v8066
    %v8068 = vpop.f32.mrb[0].mxu0
    %8069 = vmatprep.mubr.f32.mxu0 %v6700
    %8070 = vmatmul.mubr.f32.gmra.mrb[0].mxu0 %v6699
    %v8071 = vpop.f32.mrb[0].mxu0
    %v8072 = vadd.f32 %v7687, %v8071
    %v8073 = vpop.f32.mrb[0].mxu0
    %8074 = vmatprep.mubr.f32.mxu0 %v6709
    %8075 = vmatmul.mubr.f32.gmra.mrb[0].mxu0 %v6708
    %v8076 = vpop.f32.mrb[0].mxu0
    %v8077 = vadd.f32 %v7692, %v8076
    %v8078 = vpop.f32.mrb[0].mxu0
    %8079 = vmatprep.mubr.f32.mxu0 %v6718
    %8080 = vmatmul.mubr.f32.gmra.mrb[0].mxu0 %v6717
    %v8081 = vpop.f32.mrb[0].mxu0
    %v8082 = vadd.f32 %v7697, %v8081
    %v8083 = vpop.f32.mrb[0].mxu0
    %8084 = vmatprep.mubr.f32.mxu0 %v6727
    %8085 = vmatmul.mubr.f32.gmra.mrb[0].mxu0 %v6726
    %v8086 = vpop.f32.mrb[0].mxu0
    %v8087 = vadd.f32 %v7702, %v8086
    %v8088 = vpop.f32.mrb[0].mxu0
    %8089 = vmatprep.mubr.f32.mxu0 %v6736
    %8090 = vmatmul.mubr.f32.gmra.mrb[0].mxu0 %v6735
    %v8091 = vpop.f32.mrb[0].mxu0
    %v8092 = vadd.f32 %v7707, %v8091
    %v8093 = vpop.f32.mrb[0].mxu0
    %8094 = vmatprep.mubr.f32.mxu0 %v6745
    %8095 = vmatmul.mubr.f32.gmra.mrb[0].mxu0 %v6744
    %v8096 = vpop.f32.mrb[0].mxu0
    %v8097 = vadd.f32 %v7712, %v8096
    %v8098 = vpop.f32.mrb[0].mxu0
    %8099 = vmatprep.mubr.f32.mxu0 %v6754
    %8100 = vmatmul.mubr.f32.gmra.mrb[0].mxu0 %v6753
    %v8101 = vpop.f32.mrb[0].mxu0
    %v8102 = vadd.f32 %v7717, %v8101
    %v8103 = vpop.f32.mrb[0].mxu0
    %8104 = vmatprep.mubr.f32.mxu0 %v6763
    %8105 = vmatmul.mubr.f32.gmra.mrb[0].mxu0 %v6762
    %v8106 = vpop.f32.mrb[0].mxu0
    %v8107 = vadd.f32 %v7722, %v8106
    %v8108 = vpop.f32.mrb[0].mxu0
    %8109 = vmatprep.mubr.f32.mxu0 %v6772
    %8110 = vmatmul.mubr.f32.gmra.mrb[0].mxu0 %v6771
    %v8111 = vpop.f32.mrb[0].mxu0
    %v8112 = vadd.f32 %v7727, %v8111
    %v8113 = vpop.f32.mrb[0].mxu0
    %8114 = vmatprep.mubr.f32.mxu0 %v6781
    %8115 = vmatmul.mubr.f32.gmra.mrb[0].mxu0 %v6780
    %v8116 = vpop.f32.mrb[0].mxu0
    %v8117 = vadd.f32 %v7732, %v8116
    %v8118 = vpop.f32.mrb[0].mxu0
    %8119 = vmatprep.mubr.f32.mxu0 %v6790
    %8120 = vmatmul.mubr.f32.gmra.mrb[0].mxu0 %v6789
    %v8121 = vpop.f32.mrb[0].mxu0
    %v8122 = vadd.f32 %v7737, %v8121
    %v8123 = vpop.f32.mrb[0].mxu0
    %8124 = vmatprep.mubr.f32.mxu0 %v6799
    %8125 = vmatmul.mubr.f32.gmra.mrb[0].mxu0 %v6798
    %v8126 = vpop.f32.mrb[0].mxu0
    %v8127 = vadd.f32 %v7742, %v8126
    %v8128 = vpop.f32.mrb[0].mxu0
    %8129 = vmatprep.mubr.f32.mxu0 %v6808
    %8130 = vmatmul.mubr.f32.gmra.mrb[0].mxu0 %v6807
    %v8131 = vpop.f32.mrb[0].mxu0
    %v8132 = vadd.f32 %v7747, %v8131
    %v8133 = vpop.f32.mrb[0].mxu0
    %8134 = vmatprep.mubr.f32.mxu0 %v6817
    %8135 = vmatmul.mubr.f32.gmra.mrb[0].mxu0 %v6816
    %v8136 = vpop.f32.mrb[0].mxu0
    %v8137 = vadd.f32 %v7752, %v8136
    %v8138 = vpop.f32.mrb[0].mxu0
    %8139 = vmatprep.mubr.f32.mxu0 %v6826
    %8140 = vmatmul.mubr.f32.gmra.mrb[0].mxu0 %v6825
    %v8141 = vpop.f32.mrb[0].mxu0
    %v8142 = vadd.f32 %v7757, %v8141
    %v8143 = vpop.f32.mrb[0].mxu0
    %8144 = vmatprep.mubr.f32.mxu0 %v6835
    %8145 = vmatmul.mubr.f32.gmra.mrb[0].mxu0 %v6834
    %v8146 = vpop.f32.mrb[0].mxu0
    %v8147 = vadd.f32 %v7762, %v8146
    %v8148 = vpop.f32.mrb[0].mxu0
    %8149 = vmatprep.mubr.f32.mxu0 %v6844
    %8150 = vmatmul.mubr.f32.gmra.mrb[0].mxu0 %v6843
    %v8151 = vpop.f32.mrb[0].mxu0
    %v8152 = vadd.f32 %v7767, %v8151
    %v8153 = vpop.f32.mrb[0].mxu0
    %8154 = vmatprep.mubr.f32.mxu0 %v6853
    %8155 = vmatmul.mubr.f32.gmra.mrb[0].mxu0 %v6852
    %v8156 = vpop.f32.mrb[0].mxu0
    %v8157 = vadd.f32 %v7772, %v8156
    %v8158 = vpop.f32.mrb[0].mxu0
    %8159 = vmatprep.mubr.f32.mxu0 %v6862
    %8160 = vmatmul.mubr.f32.gmra.mrb[0].mxu0 %v6861
    %v8161 = vpop.f32.mrb[0].mxu0
    %v8162 = vadd.f32 %v7777, %v8161
    %v8163 = vpop.f32.mrb[0].mxu0
    %8164 = vdwg.mxu0
    %8165 = vmatprep.subr.mxu0 0.0
    %8166 = vmatpush1.msra.mxu0 %v6962
    %8167 = vmatprep.subr.mxu0 0.0
    %8168 = vmatpush1.msra.mxu0 %v6963
    %8169 = vmatprep.subr.mxu0 0.0
    %8170 = vmatpush1.msra.mxu0 %v6964
    %8171 = vmatprep.subr.mxu0 0.0
    %8172 = vmatpush1.msra.mxu0 %v6965
    %8173 = vmatprep.subr.mxu0 0.0
    %8174 = vmatpush1.msra.mxu0 %v6966
    %8175 = vmatprep.subr.mxu0 0.0
    %8176 = vmatpush1.msra.mxu0 %v6967
    %8177 = vmatprep.subr.mxu0 0.0
    %8178 = vmatpush1.msra.mxu0 %v6968
    %8179 = vmatprep.subr.mxu0 0.0
    %8180 = vmatpush1.msra.mxu0 %v6969
    %8181 = vmatprep.subr.mxu0 0.0
    %8182 = vmatpush1.msra.mxu0 %v6970
    %8183 = vmatprep.subr.mxu0 0.0
    %8184 = vmatpush1.msra.mxu0 %v6971
    %8185 = vmatprep.subr.mxu0 0.0
    %8186 = vmatpush1.msra.mxu0 %v6972
    %8187 = vmatprep.subr.mxu0 0.0
    %8188 = vmatpush1.msra.mxu0 %v6973
    %8189 = vmatprep.subr.mxu0 0.0
    %8190 = vmatpush1.msra.mxu0 %v6974
    %8191 = vmatprep.subr.mxu0 0.0
    %8192 = vmatpush1.msra.mxu0 %v6975
    %8193 = vmatprep.subr.mxu0 0.0
    %8194 = vmatpush1.msra.mxu0 %v6976
    %8195 = vmatprep.subr.mxu0 0.0
    %8196 = vmatpush1.msra.mxu0 %v6977
    %8197 = vmatprep.subr.mxu0 0.0
    %8198 = vmatpush1.msra.mxu0 %v6978
    %8199 = vmatprep.subr.mxu0 0.0
    %8200 = vmatpush1.msra.mxu0 %v6979
    %8201 = vmatprep.subr.mxu0 0.0
    %8202 = vmatpush1.msra.mxu0 %v6980
    %8203 = vmatprep.subr.mxu0 0.0
    %8204 = vmatpush1.msra.mxu0 %v6981
    %8205 = vmatprep.subr.mxu0 0.0
    %8206 = vmatpush1.msra.mxu0 %v6982
    %8207 = vmatprep.subr.mxu0 0.0
    %8208 = vmatpush1.msra.mxu0 %v6983
    %8209 = vmatprep.subr.mxu0 0.0
    %8210 = vmatpush1.msra.mxu0 %v6984
    %8211 = vmatprep.subr.mxu0 0.0
    %8212 = vmatpush1.msra.mxu0 %v6985
    %8213 = vmatprep.subr.mxu0 0.0
    %8214 = vmatpush1.msra.mxu0 %v6986
    %8215 = vmatprep.subr.mxu0 0.0
    %8216 = vmatpush1.msra.mxu0 %v6987
    %8217 = vmatprep.subr.mxu0 0.0
    %8218 = vmatpush1.msra.mxu0 %v6988
    %8219 = vmatprep.subr.mxu0 0.0
    %8220 = vmatpush1.msra.mxu0 %v6989
    %8221 = vmatprep.subr.mxu0 0.0
    %8222 = vmatpush1.msra.mxu0 %v6990
    %8223 = vmatprep.subr.mxu0 0.0
    %8224 = vmatpush1.msra.mxu0 %v6991
    %8225 = vmatprep.subr.mxu0 0.0
    %8226 = vmatpush1.msra.mxu0 %v6992
    %8227 = vmatprep.subr.mxu0 0.0
    %8228 = vmatpush1.msra.mxu0 %v6993
    %8229 = vmatprep.mubr.f32.mxu0 %v6297
    %8230 = vmatmul.mubr.f32.gmra.mrb[0].mxu0 %v6296
    %v8231 = vpop.f32.mrb[0].mxu0
    %v8232 = vadd.f32 %v7847, %v8231
    %v8233 = vpop.f32.mrb[0].mxu0
    %8234 = vmatprep.mubr.f32.mxu0 %v6306
    %8235 = vmatmul.mubr.f32.gmra.mrb[0].mxu0 %v6305
    %v8236 = vpop.f32.mrb[0].mxu0
    %v8237 = vadd.f32 %v7852, %v8236
    %v8238 = vpop.f32.mrb[0].mxu0
    %8239 = vmatprep.mubr.f32.mxu0 %v6315
    %8240 = vmatmul.mubr.f32.gmra.mrb[0].mxu0 %v6314
    %v8241 = vpop.f32.mrb[0].mxu0
    %v8242 = vadd.f32 %v7857, %v8241
    %v8243 = vpop.f32.mrb[0].mxu0
    %8244 = vmatprep.mubr.f32.mxu0 %v6324
    %8245 = vmatmul.mubr.f32.gmra.mrb[0].mxu0 %v6323
    %v8246 = vpop.f32.mrb[0].mxu0
    %v8247 = vadd.f32 %v7862, %v8246
    %v8248 = vpop.f32.mrb[0].mxu0
    %8249 = vmatprep.mubr.f32.mxu0 %v6333
    %8250 = vmatmul.mubr.f32.gmra.mrb[0].mxu0 %v6332
    %v8251 = vpop.f32.mrb[0].mxu0
    %v8252 = vadd.f32 %v7867, %v8251
    %v8253 = vpop.f32.mrb[0].mxu0
    %8254 = vmatprep.mubr.f32.mxu0 %v6342
    %8255 = vmatmul.mubr.f32.gmra.mrb[0].mxu0 %v6341
    %v8256 = vpop.f32.mrb[0].mxu0
    %v8257 = vadd.f32 %v7872, %v8256
    %v8258 = vpop.f32.mrb[0].mxu0
    %8259 = vmatprep.mubr.f32.mxu0 %v6351
    %8260 = vmatmul.mubr.f32.gmra.mrb[0].mxu0 %v6350
    %v8261 = vpop.f32.mrb[0].mxu0
    %v8262 = vadd.f32 %v7877, %v8261
    %v8263 = vpop.f32.mrb[0].mxu0
    %8264 = vmatprep.mubr.f32.mxu0 %v6360
    %8265 = vmatmul.mubr.f32.gmra.mrb[0].mxu0 %v6359
    %v8266 = vpop.f32.mrb[0].mxu0
    %v8267 = vadd.f32 %v7882, %v8266
    %v8268 = vpop.f32.mrb[0].mxu0
    %8269 = vmatprep.mubr.f32.mxu0 %v6369
    %8270 = vmatmul.mubr.f32.gmra.mrb[0].mxu0 %v6368
    %v8271 = vpop.f32.mrb[0].mxu0
    %v8272 = vadd.f32 %v7887, %v8271
    %v8273 = vpop.f32.mrb[0].mxu0
    %8274 = vmatprep.mubr.f32.mxu0 %v6378
    %8275 = vmatmul.mubr.f32.gmra.mrb[0].mxu0 %v6377
    %v8276 = vpop.f32.mrb[0].mxu0
    %v8277 = vadd.f32 %v7892, %v8276
    %v8278 = vpop.f32.mrb[0].mxu0
    %8279 = vmatprep.mubr.f32.mxu0 %v6387
    %8280 = vmatmul.mubr.f32.gmra.mrb[0].mxu0 %v6386
    %v8281 = vpop.f32.mrb[0].mxu0
    %v8282 = vadd.f32 %v7897, %v8281
    %v8283 = vpop.f32.mrb[0].mxu0
    %8284 = vmatprep.mubr.f32.mxu0 %v6396
    %8285 = vmatmul.mubr.f32.gmra.mrb[0].mxu0 %v6395
    %v8286 = vpop.f32.mrb[0].mxu0
    %v8287 = vadd.f32 %v7902, %v8286
    %v8288 = vpop.f32.mrb[0].mxu0
    %8289 = vmatprep.mubr.f32.mxu0 %v6405
    %8290 = vmatmul.mubr.f32.gmra.mrb[0].mxu0 %v6404
    %v8291 = vpop.f32.mrb[0].mxu0
    %v8292 = vadd.f32 %v7907, %v8291
    %v8293 = vpop.f32.mrb[0].mxu0
    %8294 = vmatprep.mubr.f32.mxu0 %v6414
    %8295 = vmatmul.mubr.f32.gmra.mrb[0].mxu0 %v6413
    %v8296 = vpop.f32.mrb[0].mxu0
    %v8297 = vadd.f32 %v7912, %v8296
    %v8298 = vpop.f32.mrb[0].mxu0
    %8299 = vmatprep.mubr.f32.mxu0 %v6423
    %8300 = vmatmul.mubr.f32.gmra.mrb[0].mxu0 %v6422
    %v8301 = vpop.f32.mrb[0].mxu0
    %v8302 = vadd.f32 %v7917, %v8301
    %v8303 = vpop.f32.mrb[0].mxu0
    %8304 = vmatprep.mubr.f32.mxu0 %v6432
    %8305 = vmatmul.mubr.f32.gmra.mrb[0].mxu0 %v6431
    %v8306 = vpop.f32.mrb[0].mxu0
    %v8307 = vadd.f32 %v7922, %v8306
    %v8308 = vpop.f32.mrb[0].mxu0
    %8309 = vmatprep.mubr.f32.mxu0 %v6441
    %8310 = vmatmul.mubr.f32.gmra.mrb[0].mxu0 %v6440
    %v8311 = vpop.f32.mrb[0].mxu0
    %v8312 = vadd.f32 %v7927, %v8311
    %v8313 = vpop.f32.mrb[0].mxu0
    %8314 = vmatprep.mubr.f32.mxu0 %v6450
    %8315 = vmatmul.mubr.f32.gmra.mrb[0].mxu0 %v6449
    %v8316 = vpop.f32.mrb[0].mxu0
    %v8317 = vadd.f32 %v7932, %v8316
    %v8318 = vpop.f32.mrb[0].mxu0
    %8319 = vmatprep.mubr.f32.mxu0 %v6459
    %8320 = vmatmul.mubr.f32.gmra.mrb[0].mxu0 %v6458
    %v8321 = vpop.f32.mrb[0].mxu0
    %v8322 = vadd.f32 %v7937, %v8321
    %v8323 = vpop.f32.mrb[0].mxu0
    %8324 = vmatprep.mubr.f32.mxu0 %v6468
    %8325 = vmatmul.mubr.f32.gmra.mrb[0].mxu0 %v6467
    %v8326 = vpop.f32.mrb[0].mxu0
    %v8327 = vadd.f32 %v7942, %v8326
    %v8328 = vpop.f32.mrb[0].mxu0
    %8329 = vmatprep.mubr.f32.mxu0 %v6477
    %8330 = vmatmul.mubr.f32.gmra.mrb[0].mxu0 %v6476
    %v8331 = vpop.f32.mrb[0].mxu0
    %v8332 = vadd.f32 %v7947, %v8331
    %v8333 = vpop.f32.mrb[0].mxu0
    %8334 = vmatprep.mubr.f32.mxu0 %v6486
    %8335 = vmatmul.mubr.f32.gmra.mrb[0].mxu0 %v6485
    %v8336 = vpop.f32.mrb[0].mxu0
    %v8337 = vadd.f32 %v7952, %v8336
    %v8338 = vpop.f32.mrb[0].mxu0
    %8339 = vmatprep.mubr.f32.mxu0 %v6495
    %8340 = vmatmul.mubr.f32.gmra.mrb[0].mxu0 %v6494
    %v8341 = vpop.f32.mrb[0].mxu0
    %v8342 = vadd.f32 %v7957, %v8341
    %v8343 = vpop.f32.mrb[0].mxu0
    %8344 = vmatprep.mubr.f32.mxu0 %v6504
    %8345 = vmatmul.mubr.f32.gmra.mrb[0].mxu0 %v6503
    %v8346 = vpop.f32.mrb[0].mxu0
    %v8347 = vadd.f32 %v7962, %v8346
    %v8348 = vpop.f32.mrb[0].mxu0
    %8349 = vmatprep.mubr.f32.mxu0 %v6513
    %8350 = vmatmul.mubr.f32.gmra.mrb[0].mxu0 %v6512
    %v8351 = vpop.f32.mrb[0].mxu0
    %v8352 = vadd.f32 %v7967, %v8351
    %v8353 = vpop.f32.mrb[0].mxu0
    %8354 = vmatprep.mubr.f32.mxu0 %v6522
    %8355 = vmatmul.mubr.f32.gmra.mrb[0].mxu0 %v6521
    %v8356 = vpop.f32.mrb[0].mxu0
    %v8357 = vadd.f32 %v7972, %v8356
    %v8358 = vpop.f32.mrb[0].mxu0
    %8359 = vmatprep.mubr.f32.mxu0 %v6531
    %8360 = vmatmul.mubr.f32.gmra.mrb[0].mxu0 %v6530
    %v8361 = vpop.f32.mrb[0].mxu0
    %v8362 = vadd.f32 %v7977, %v8361
    %v8363 = vpop.f32.mrb[0].mxu0
    %8364 = vmatprep.mubr.f32.mxu0 %v6540
    %8365 = vmatmul.mubr.f32.gmra.mrb[0].mxu0 %v6539
    %v8366 = vpop.f32.mrb[0].mxu0
    %v8367 = vadd.f32 %v7982, %v8366
    %v8368 = vpop.f32.mrb[0].mxu0
    %8369 = vmatprep.mubr.f32.mxu0 %v6549
    %8370 = vmatmul.mubr.f32.gmra.mrb[0].mxu0 %v6548
    %v8371 = vpop.f32.mrb[0].mxu0
    %v8372 = vadd.f32 %v7987, %v8371
    %v8373 = vpop.f32.mrb[0].mxu0
    %8374 = vmatprep.mubr.f32.mxu0 %v6558
    %8375 = vmatmul.mubr.f32.gmra.mrb[0].mxu0 %v6557
    %v8376 = vpop.f32.mrb[0].mxu0
    %v8377 = vadd.f32 %v7992, %v8376
    %v8378 = vpop.f32.mrb[0].mxu0
    %8379 = vmatprep.mubr.f32.mxu0 %v6567
    %8380 = vmatmul.mubr.f32.gmra.mrb[0].mxu0 %v6566
    %v8381 = vpop.f32.mrb[0].mxu0
    %v8382 = vadd.f32 %v7997, %v8381
    %v8383 = vpop.f32.mrb[0].mxu0
    %8384 = vmatprep.mubr.f32.mxu0 %v6576
    %8385 = vmatmul.mubr.f32.gmra.mrb[0].mxu0 %v6575
    %v8386 = vpop.f32.mrb[0].mxu0
    %v8387 = vadd.f32 %v8002, %v8386
    %v8388 = vpop.f32.mrb[0].mxu0
    %8389 = vmatprep.mubr.f32.mxu0 %v6585
    %8390 = vmatmul.mubr.f32.gmra.mrb[0].mxu0 %v6584
    %v8391 = vpop.f32.mrb[0].mxu0
    %v8392 = vadd.f32 %v8007, %v8391
    %v8393 = vpop.f32.mrb[0].mxu0
    %8394 = vmatprep.mubr.f32.mxu0 %v6594
    %8395 = vmatmul.mubr.f32.gmra.mrb[0].mxu0 %v6593
    %v8396 = vpop.f32.mrb[0].mxu0
    %v8397 = vadd.f32 %v8012, %v8396
    %v8398 = vpop.f32.mrb[0].mxu0
    %8399 = vmatprep.mubr.f32.mxu0 %v6603
    %8400 = vmatmul.mubr.f32.gmra.mrb[0].mxu0 %v6602
    %v8401 = vpop.f32.mrb[0].mxu0
    %v8402 = vadd.f32 %v8017, %v8401
    %v8403 = vpop.f32.mrb[0].mxu0
    %8404 = vmatprep.mubr.f32.mxu0 %v6612
    %8405 = vmatmul.mubr.f32.gmra.mrb[0].mxu0 %v6611
    %v8406 = vpop.f32.mrb[0].mxu0
    %v8407 = vadd.f32 %v8022, %v8406
    %v8408 = vpop.f32.mrb[0].mxu0
    %8409 = vmatprep.mubr.f32.mxu0 %v6621
    %8410 = vmatmul.mubr.f32.gmra.mrb[0].mxu0 %v6620
    %v8411 = vpop.f32.mrb[0].mxu0
    %v8412 = vadd.f32 %v8027, %v8411
    %v8413 = vpop.f32.mrb[0].mxu0
    %8414 = vmatprep.mubr.f32.mxu0 %v6630
    %8415 = vmatmul.mubr.f32.gmra.mrb[0].mxu0 %v6629
    %v8416 = vpop.f32.mrb[0].mxu0
    %v8417 = vadd.f32 %v8032, %v8416
    %v8418 = vpop.f32.mrb[0].mxu0
    %8419 = vmatprep.mubr.f32.mxu0 %v6639
    %8420 = vmatmul.mubr.f32.gmra.mrb[0].mxu0 %v6638
    %v8421 = vpop.f32.mrb[0].mxu0
    %v8422 = vadd.f32 %v8037, %v8421
    %v8423 = vpop.f32.mrb[0].mxu0
    %8424 = vmatprep.mubr.f32.mxu0 %v6648
    %8425 = vmatmul.mubr.f32.gmra.mrb[0].mxu0 %v6647
    %v8426 = vpop.f32.mrb[0].mxu0
    %v8427 = vadd.f32 %v8042, %v8426
    %v8428 = vpop.f32.mrb[0].mxu0
    %8429 = vmatprep.mubr.f32.mxu0 %v6657
    %8430 = vmatmul.mubr.f32.gmra.mrb[0].mxu0 %v6656
    %v8431 = vpop.f32.mrb[0].mxu0
    %v8432 = vadd.f32 %v8047, %v8431
    %v8433 = vpop.f32.mrb[0].mxu0
    %8434 = vmatprep.mubr.f32.mxu0 %v6666
    %8435 = vmatmul.mubr.f32.gmra.mrb[0].mxu0 %v6665
    %v8436 = vpop.f32.mrb[0].mxu0
    %v8437 = vadd.f32 %v8052, %v8436
    %v8438 = vpop.f32.mrb[0].mxu0
    %8439 = vmatprep.mubr.f32.mxu0 %v6675
    %8440 = vmatmul.mubr.f32.gmra.mrb[0].mxu0 %v6674
    %v8441 = vpop.f32.mrb[0].mxu0
    %v8442 = vadd.f32 %v8057, %v8441
    %v8443 = vpop.f32.mrb[0].mxu0
    %8444 = vmatprep.mubr.f32.mxu0 %v6684
    %8445 = vmatmul.mubr.f32.gmra.mrb[0].mxu0 %v6683
    %v8446 = vpop.f32.mrb[0].mxu0
    %v8447 = vadd.f32 %v8062, %v8446
    %v8448 = vpop.f32.mrb[0].mxu0
    %8449 = vmatprep.mubr.f32.mxu0 %v6693
    %8450 = vmatmul.mubr.f32.gmra.mrb[0].mxu0 %v6692
    %v8451 = vpop.f32.mrb[0].mxu0
    %v8452 = vadd.f32 %v8067, %v8451
    %v8453 = vpop.f32.mrb[0].mxu0
    %8454 = vmatprep.mubr.f32.mxu0 %v6702
    %8455 = vmatmul.mubr.f32.gmra.mrb[0].mxu0 %v6701
    %v8456 = vpop.f32.mrb[0].mxu0
    %v8457 = vadd.f32 %v8072, %v8456
    %v8458 = vpop.f32.mrb[0].mxu0
    %8459 = vmatprep.mubr.f32.mxu0 %v6711
    %8460 = vmatmul.mubr.f32.gmra.mrb[0].mxu0 %v6710
    %v8461 = vpop.f32.mrb[0].mxu0
    %v8462 = vadd.f32 %v8077, %v8461
    %v8463 = vpop.f32.mrb[0].mxu0
    %8464 = vmatprep.mubr.f32.mxu0 %v6720
    %8465 = vmatmul.mubr.f32.gmra.mrb[0].mxu0 %v6719
    %v8466 = vpop.f32.mrb[0].mxu0
    %v8467 = vadd.f32 %v8082, %v8466
    %v8468 = vpop.f32.mrb[0].mxu0
    %8469 = vmatprep.mubr.f32.mxu0 %v6729
    %8470 = vmatmul.mubr.f32.gmra.mrb[0].mxu0 %v6728
    %v8471 = vpop.f32.mrb[0].mxu0
    %v8472 = vadd.f32 %v8087, %v8471
    %v8473 = vpop.f32.mrb[0].mxu0
    %8474 = vmatprep.mubr.f32.mxu0 %v6738
    %8475 = vmatmul.mubr.f32.gmra.mrb[0].mxu0 %v6737
    %v8476 = vpop.f32.mrb[0].mxu0
    %v8477 = vadd.f32 %v8092, %v8476
    %v8478 = vpop.f32.mrb[0].mxu0
    %8479 = vmatprep.mubr.f32.mxu0 %v6747
    %8480 = vmatmul.mubr.f32.gmra.mrb[0].mxu0 %v6746
    %v8481 = vpop.f32.mrb[0].mxu0
    %v8482 = vadd.f32 %v8097, %v8481
    %v8483 = vpop.f32.mrb[0].mxu0
    %8484 = vmatprep.mubr.f32.mxu0 %v6756
    %8485 = vmatmul.mubr.f32.gmra.mrb[0].mxu0 %v6755
    %v8486 = vpop.f32.mrb[0].mxu0
    %v8487 = vadd.f32 %v8102, %v8486
    %v8488 = vpop.f32.mrb[0].mxu0
    %8489 = vmatprep.mubr.f32.mxu0 %v6765
    %8490 = vmatmul.mubr.f32.gmra.mrb[0].mxu0 %v6764
    %v8491 = vpop.f32.mrb[0].mxu0
    %v8492 = vadd.f32 %v8107, %v8491
    %v8493 = vpop.f32.mrb[0].mxu0
    %8494 = vmatprep.mubr.f32.mxu0 %v6774
    %8495 = vmatmul.mubr.f32.gmra.mrb[0].mxu0 %v6773
    %v8496 = vpop.f32.mrb[0].mxu0
    %v8497 = vadd.f32 %v8112, %v8496
    %v8498 = vpop.f32.mrb[0].mxu0
    %8499 = vmatprep.mubr.f32.mxu0 %v6783
    %8500 = vmatmul.mubr.f32.gmra.mrb[0].mxu0 %v6782
    %v8501 = vpop.f32.mrb[0].mxu0
    %v8502 = vadd.f32 %v8117, %v8501
    %v8503 = vpop.f32.mrb[0].mxu0
    %8504 = vmatprep.mubr.f32.mxu0 %v6792
    %8505 = vmatmul.mubr.f32.gmra.mrb[0].mxu0 %v6791
    %v8506 = vpop.f32.mrb[0].mxu0
    %v8507 = vadd.f32 %v8122, %v8506
    %v8508 = vpop.f32.mrb[0].mxu0
    %8509 = vmatprep.mubr.f32.mxu0 %v6801
    %8510 = vmatmul.mubr.f32.gmra.mrb[0].mxu0 %v6800
    %v8511 = vpop.f32.mrb[0].mxu0
    %v8512 = vadd.f32 %v8127, %v8511
    %v8513 = vpop.f32.mrb[0].mxu0
    %8514 = vmatprep.mubr.f32.mxu0 %v6810
    %8515 = vmatmul.mubr.f32.gmra.mrb[0].mxu0 %v6809
    %v8516 = vpop.f32.mrb[0].mxu0
    %v8517 = vadd.f32 %v8132, %v8516
    %v8518 = vpop.f32.mrb[0].mxu0
    %8519 = vmatprep.mubr.f32.mxu0 %v6819
    %8520 = vmatmul.mubr.f32.gmra.mrb[0].mxu0 %v6818
    %v8521 = vpop.f32.mrb[0].mxu0
    %v8522 = vadd.f32 %v8137, %v8521
    %v8523 = vpop.f32.mrb[0].mxu0
    %8524 = vmatprep.mubr.f32.mxu0 %v6828
    %8525 = vmatmul.mubr.f32.gmra.mrb[0].mxu0 %v6827
    %v8526 = vpop.f32.mrb[0].mxu0
    %v8527 = vadd.f32 %v8142, %v8526
    %v8528 = vpop.f32.mrb[0].mxu0
    %8529 = vmatprep.mubr.f32.mxu0 %v6837
    %8530 = vmatmul.mubr.f32.gmra.mrb[0].mxu0 %v6836
    %v8531 = vpop.f32.mrb[0].mxu0
    %v8532 = vadd.f32 %v8147, %v8531
    %v8533 = vpop.f32.mrb[0].mxu0
    %8534 = vmatprep.mubr.f32.mxu0 %v6846
    %8535 = vmatmul.mubr.f32.gmra.mrb[0].mxu0 %v6845
    %v8536 = vpop.f32.mrb[0].mxu0
    %v8537 = vadd.f32 %v8152, %v8536
    %v8538 = vpop.f32.mrb[0].mxu0
    %8539 = vmatprep.mubr.f32.mxu0 %v6855
    %8540 = vmatmul.mubr.f32.gmra.mrb[0].mxu0 %v6854
    %v8541 = vpop.f32.mrb[0].mxu0
    %v8542 = vadd.f32 %v8157, %v8541
    %v8543 = vpop.f32.mrb[0].mxu0
    %8544 = vmatprep.mubr.f32.mxu0 %v6864
    %8545 = vmatmul.mubr.f32.gmra.mrb[0].mxu0 %v6863
    %v8546 = vpop.f32.mrb[0].mxu0
    %v8547 = vadd.f32 %v8162, %v8546
    %v8548 = vpop.f32.mrb[0].mxu0
    %8549 = vdwg.mxu0
    %8550 = vmatprep.subr.mxu0 0.0
    %8551 = vmatpush1.msra.mxu0 %v6994
    %8552 = vmatprep.subr.mxu0 0.0
    %8553 = vmatpush1.msra.mxu0 %v6995
    %8554 = vmatprep.subr.mxu0 0.0
    %8555 = vmatpush1.msra.mxu0 %v6996
    %8556 = vmatprep.subr.mxu0 0.0
    %8557 = vmatpush1.msra.mxu0 %v6997
    %8558 = vmatprep.subr.mxu0 0.0
    %8559 = vmatpush1.msra.mxu0 %v6998
    %8560 = vmatprep.subr.mxu0 0.0
    %8561 = vmatpush1.msra.mxu0 %v6999
    %8562 = vmatprep.subr.mxu0 0.0
    %8563 = vmatpush1.msra.mxu0 %v7000
    %8564 = vmatprep.subr.mxu0 0.0
    %8565 = vmatpush1.msra.mxu0 %v7001
    %8566 = vmatprep.subr.mxu0 0.0
    %8567 = vmatpush1.msra.mxu0 %v7002
    %8568 = vmatprep.subr.mxu0 0.0
    %8569 = vmatpush1.msra.mxu0 %v7003
    %8570 = vmatprep.subr.mxu0 0.0
    %8571 = vmatpush1.msra.mxu0 %v7004
    %8572 = vmatprep.subr.mxu0 0.0
    %8573 = vmatpush1.msra.mxu0 %v7005
    %8574 = vmatprep.subr.mxu0 0.0
    %8575 = vmatpush1.msra.mxu0 %v7006
    %8576 = vmatprep.subr.mxu0 0.0
    %8577 = vmatpush1.msra.mxu0 %v7007
    %8578 = vmatprep.subr.mxu0 0.0
    %8579 = vmatpush1.msra.mxu0 %v7008
    %8580 = vmatprep.subr.mxu0 0.0
    %8581 = vmatpush1.msra.mxu0 %v7009
    %8582 = vmatprep.subr.mxu0 0.0
    %8583 = vmatpush1.msra.mxu0 0.0
    %8584 = vmatprep.subr.mxu0 0.0
    %8585 = vmatpush1.msra.mxu0 0.0
    %8586 = vmatprep.subr.mxu0 0.0
    %8587 = vmatpush1.msra.mxu0 0.0
    %8588 = vmatprep.subr.mxu0 0.0
    %8589 = vmatpush1.msra.mxu0 0.0
    %8590 = vmatprep.subr.mxu0 0.0
    %8591 = vmatpush1.msra.mxu0 0.0
    %8592 = vmatprep.subr.mxu0 0.0
    %8593 = vmatpush1.msra.mxu0 0.0
    %8594 = vmatprep.subr.mxu0 0.0
    %8595 = vmatpush1.msra.mxu0 0.0
    %8596 = vmatprep.subr.mxu0 0.0
    %8597 = vmatpush1.msra.mxu0 0.0
    %8598 = vmatprep.subr.mxu0 0.0
    %8599 = vmatpush1.msra.mxu0 0.0
    %8600 = vmatprep.subr.mxu0 0.0
    %8601 = vmatpush1.msra.mxu0 0.0
    %8602 = vmatprep.subr.mxu0 0.0
    %8603 = vmatpush1.msra.mxu0 0.0
    %8604 = vmatprep.subr.mxu0 0.0
    %8605 = vmatpush1.msra.mxu0 0.0
    %8606 = vmatprep.subr.mxu0 0.0
    %8607 = vmatpush1.msra.mxu0 0.0
    %8608 = vmatprep.subr.mxu0 0.0
    %8609 = vmatpush1.msra.mxu0 0.0
    %8610 = vmatprep.subr.mxu0 0.0
    %8611 = vmatpush1.msra.mxu0 0.0
    %8612 = vmatprep.subr.mxu0 0.0
    %8613 = vmatpush1.msra.mxu0 0.0
    %8614 = vmatprep.mubr.f32.mxu0 0.0
    %8615 = vmatmul.mubr.f32.gmra.mrb[0].mxu0 %v6298
    %v8616 = vpop.f32.mrb[0].mxu0
    %v8617 = vadd.f32 %v8232, %v8616
    %v8618 = vpop.f32.mrb[0].mxu0
    %8619 = vmatprep.mubr.f32.mxu0 0.0
    %8620 = vmatmul.mubr.f32.gmra.mrb[0].mxu0 %v6307
    %v8621 = vpop.f32.mrb[0].mxu0
    %v8622 = vadd.f32 %v8237, %v8621
    %v8623 = vpop.f32.mrb[0].mxu0
    %8624 = vmatprep.mubr.f32.mxu0 0.0
    %8625 = vmatmul.mubr.f32.gmra.mrb[0].mxu0 %v6316
    %v8626 = vpop.f32.mrb[0].mxu0
    %v8627 = vadd.f32 %v8242, %v8626
    %v8628 = vpop.f32.mrb[0].mxu0
    %8629 = vmatprep.mubr.f32.mxu0 0.0
    %8630 = vmatmul.mubr.f32.gmra.mrb[0].mxu0 %v6325
    %v8631 = vpop.f32.mrb[0].mxu0
    %v8632 = vadd.f32 %v8247, %v8631
    %v8633 = vpop.f32.mrb[0].mxu0
    %8634 = vmatprep.mubr.f32.mxu0 0.0
    %8635 = vmatmul.mubr.f32.gmra.mrb[0].mxu0 %v6334
    %v8636 = vpop.f32.mrb[0].mxu0
    %v8637 = vadd.f32 %v8252, %v8636
    %v8638 = vpop.f32.mrb[0].mxu0
    %8639 = vmatprep.mubr.f32.mxu0 0.0
    %8640 = vmatmul.mubr.f32.gmra.mrb[0].mxu0 %v6343
    %v8641 = vpop.f32.mrb[0].mxu0
    %v8642 = vadd.f32 %v8257, %v8641
    %v8643 = vpop.f32.mrb[0].mxu0
    %8644 = vmatprep.mubr.f32.mxu0 0.0
    %8645 = vmatmul.mubr.f32.gmra.mrb[0].mxu0 %v6352
    %v8646 = vpop.f32.mrb[0].mxu0
    %v8647 = vadd.f32 %v8262, %v8646
    %v8648 = vpop.f32.mrb[0].mxu0
    %8649 = vmatprep.mubr.f32.mxu0 0.0
    %8650 = vmatmul.mubr.f32.gmra.mrb[0].mxu0 %v6361
    %v8651 = vpop.f32.mrb[0].mxu0
    %v8652 = vadd.f32 %v8267, %v8651
    %v8653 = vpop.f32.mrb[0].mxu0
    %8654 = vmatprep.mubr.f32.mxu0 0.0
    %8655 = vmatmul.mubr.f32.gmra.mrb[0].mxu0 %v6370
    %v8656 = vpop.f32.mrb[0].mxu0
    %v8657 = vadd.f32 %v8272, %v8656
    %v8658 = vpop.f32.mrb[0].mxu0
    %8659 = vmatprep.mubr.f32.mxu0 0.0
    %8660 = vmatmul.mubr.f32.gmra.mrb[0].mxu0 %v6379
    %v8661 = vpop.f32.mrb[0].mxu0
    %v8662 = vadd.f32 %v8277, %v8661
    %v8663 = vpop.f32.mrb[0].mxu0
    %8664 = vmatprep.mubr.f32.mxu0 0.0
    %8665 = vmatmul.mubr.f32.gmra.mrb[0].mxu0 %v6388
    %v8666 = vpop.f32.mrb[0].mxu0
    %v8667 = vadd.f32 %v8282, %v8666
    %v8668 = vpop.f32.mrb[0].mxu0
    %8669 = vmatprep.mubr.f32.mxu0 0.0
    %8670 = vmatmul.mubr.f32.gmra.mrb[0].mxu0 %v6397
    %v8671 = vpop.f32.mrb[0].mxu0
    %v8672 = vadd.f32 %v8287, %v8671
    %v8673 = vpop.f32.mrb[0].mxu0
    %8674 = vmatprep.mubr.f32.mxu0 0.0
    %8675 = vmatmul.mubr.f32.gmra.mrb[0].mxu0 %v6406
    %v8676 = vpop.f32.mrb[0].mxu0
    %v8677 = vadd.f32 %v8292, %v8676
    %v8678 = vpop.f32.mrb[0].mxu0
    %8679 = vmatprep.mubr.f32.mxu0 0.0
    %8680 = vmatmul.mubr.f32.gmra.mrb[0].mxu0 %v6415
    %v8681 = vpop.f32.mrb[0].mxu0
    %v8682 = vadd.f32 %v8297, %v8681
    %v8683 = vpop.f32.mrb[0].mxu0
    %8684 = vmatprep.mubr.f32.mxu0 0.0
    %8685 = vmatmul.mubr.f32.gmra.mrb[0].mxu0 %v6424
    %v8686 = vpop.f32.mrb[0].mxu0
    %v8687 = vadd.f32 %v8302, %v8686
    %v8688 = vpop.f32.mrb[0].mxu0
    %8689 = vmatprep.mubr.f32.mxu0 0.0
    %8690 = vmatmul.mubr.f32.gmra.mrb[0].mxu0 %v6433
    %v8691 = vpop.f32.mrb[0].mxu0
    %v8692 = vadd.f32 %v8307, %v8691
    %v8693 = vpop.f32.mrb[0].mxu0
    %8694 = vmatprep.mubr.f32.mxu0 0.0
    %8695 = vmatmul.mubr.f32.gmra.mrb[0].mxu0 %v6442
    %v8696 = vpop.f32.mrb[0].mxu0
    %v8697 = vadd.f32 %v8312, %v8696
    %v8698 = vpop.f32.mrb[0].mxu0
    %8699 = vmatprep.mubr.f32.mxu0 0.0
    %8700 = vmatmul.mubr.f32.gmra.mrb[0].mxu0 %v6451
    %v8701 = vpop.f32.mrb[0].mxu0
    %v8702 = vadd.f32 %v8317, %v8701
    %v8703 = vpop.f32.mrb[0].mxu0
    %8704 = vmatprep.mubr.f32.mxu0 0.0
    %8705 = vmatmul.mubr.f32.gmra.mrb[0].mxu0 %v6460
    %v8706 = vpop.f32.mrb[0].mxu0
    %v8707 = vadd.f32 %v8322, %v8706
    %v8708 = vpop.f32.mrb[0].mxu0
    %8709 = vmatprep.mubr.f32.mxu0 0.0
    %8710 = vmatmul.mubr.f32.gmra.mrb[0].mxu0 %v6469
    %v8711 = vpop.f32.mrb[0].mxu0
    %v8712 = vadd.f32 %v8327, %v8711
    %v8713 = vpop.f32.mrb[0].mxu0
    %8714 = vmatprep.mubr.f32.mxu0 0.0
    %8715 = vmatmul.mubr.f32.gmra.mrb[0].mxu0 %v6478
    %v8716 = vpop.f32.mrb[0].mxu0
    %v8717 = vadd.f32 %v8332, %v8716
    %v8718 = vpop.f32.mrb[0].mxu0
    %8719 = vmatprep.mubr.f32.mxu0 0.0
    %8720 = vmatmul.mubr.f32.gmra.mrb[0].mxu0 %v6487
    %v8721 = vpop.f32.mrb[0].mxu0
    %v8722 = vadd.f32 %v8337, %v8721
    %v8723 = vpop.f32.mrb[0].mxu0
    %8724 = vmatprep.mubr.f32.mxu0 0.0
    %8725 = vmatmul.mubr.f32.gmra.mrb[0].mxu0 %v6496
    %v8726 = vpop.f32.mrb[0].mxu0
    %v8727 = vadd.f32 %v8342, %v8726
    %v8728 = vpop.f32.mrb[0].mxu0
    %8729 = vmatprep.mubr.f32.mxu0 0.0
    %8730 = vmatmul.mubr.f32.gmra.mrb[0].mxu0 %v6505
    %v8731 = vpop.f32.mrb[0].mxu0
    %v8732 = vadd.f32 %v8347, %v8731
    %v8733 = vpop.f32.mrb[0].mxu0
    %8734 = vmatprep.mubr.f32.mxu0 0.0
    %8735 = vmatmul.mubr.f32.gmra.mrb[0].mxu0 %v6514
    %v8736 = vpop.f32.mrb[0].mxu0
    %v8737 = vadd.f32 %v8352, %v8736
    %v8738 = vpop.f32.mrb[0].mxu0
    %8739 = vmatprep.mubr.f32.mxu0 0.0
    %8740 = vmatmul.mubr.f32.gmra.mrb[0].mxu0 %v6523
    %v8741 = vpop.f32.mrb[0].mxu0
    %v8742 = vadd.f32 %v8357, %v8741
    %v8743 = vpop.f32.mrb[0].mxu0
    %8744 = vmatprep.mubr.f32.mxu0 0.0
    %8745 = vmatmul.mubr.f32.gmra.mrb[0].mxu0 %v6532
    %v8746 = vpop.f32.mrb[0].mxu0
    %v8747 = vadd.f32 %v8362, %v8746
    %v8748 = vpop.f32.mrb[0].mxu0
    %8749 = vmatprep.mubr.f32.mxu0 0.0
    %8750 = vmatmul.mubr.f32.gmra.mrb[0].mxu0 %v6541
    %v8751 = vpop.f32.mrb[0].mxu0
    %v8752 = vadd.f32 %v8367, %v8751
    %v8753 = vpop.f32.mrb[0].mxu0
    %8754 = vmatprep.mubr.f32.mxu0 0.0
    %8755 = vmatmul.mubr.f32.gmra.mrb[0].mxu0 %v6550
    %v8756 = vpop.f32.mrb[0].mxu0
    %v8757 = vadd.f32 %v8372, %v8756
    %v8758 = vpop.f32.mrb[0].mxu0
    %8759 = vmatprep.mubr.f32.mxu0 0.0
    %8760 = vmatmul.mubr.f32.gmra.mrb[0].mxu0 %v6559
    %v8761 = vpop.f32.mrb[0].mxu0
    %v8762 = vadd.f32 %v8377, %v8761
    %v8763 = vpop.f32.mrb[0].mxu0
    %8764 = vmatprep.mubr.f32.mxu0 0.0
    %8765 = vmatmul.mubr.f32.gmra.mrb[0].mxu0 %v6568
    %v8766 = vpop.f32.mrb[0].mxu0
    %v8767 = vadd.f32 %v8382, %v8766
    %v8768 = vpop.f32.mrb[0].mxu0
    %8769 = vmatprep.mubr.f32.mxu0 0.0
    %8770 = vmatmul.mubr.f32.gmra.mrb[0].mxu0 %v6577
    %v8771 = vpop.f32.mrb[0].mxu0
    %v8772 = vadd.f32 %v8387, %v8771
    %v8773 = vpop.f32.mrb[0].mxu0
    %8774 = vmatprep.mubr.f32.mxu0 0.0
    %8775 = vmatmul.mubr.f32.gmra.mrb[0].mxu0 %v6586
    %v8776 = vpop.f32.mrb[0].mxu0
    %v8777 = vadd.f32 %v8392, %v8776
    %v8778 = vpop.f32.mrb[0].mxu0
    %8779 = vmatprep.mubr.f32.mxu0 0.0
    %8780 = vmatmul.mubr.f32.gmra.mrb[0].mxu0 %v6595
    %v8781 = vpop.f32.mrb[0].mxu0
    %v8782 = vadd.f32 %v8397, %v8781
    %v8783 = vpop.f32.mrb[0].mxu0
    %8784 = vmatprep.mubr.f32.mxu0 0.0
    %8785 = vmatmul.mubr.f32.gmra.mrb[0].mxu0 %v6604
    %v8786 = vpop.f32.mrb[0].mxu0
    %v8787 = vadd.f32 %v8402, %v8786
    %v8788 = vpop.f32.mrb[0].mxu0
    %8789 = vmatprep.mubr.f32.mxu0 0.0
    %8790 = vmatmul.mubr.f32.gmra.mrb[0].mxu0 %v6613
    %v8791 = vpop.f32.mrb[0].mxu0
    %v8792 = vadd.f32 %v8407, %v8791
    %v8793 = vpop.f32.mrb[0].mxu0
    %8794 = vmatprep.mubr.f32.mxu0 0.0
    %8795 = vmatmul.mubr.f32.gmra.mrb[0].mxu0 %v6622
    %v8796 = vpop.f32.mrb[0].mxu0
    %v8797 = vadd.f32 %v8412, %v8796
    %v8798 = vpop.f32.mrb[0].mxu0
    %8799 = vmatprep.mubr.f32.mxu0 0.0
    %8800 = vmatmul.mubr.f32.gmra.mrb[0].mxu0 %v6631
    %v8801 = vpop.f32.mrb[0].mxu0
    %v8802 = vadd.f32 %v8417, %v8801
    %v8803 = vpop.f32.mrb[0].mxu0
    %8804 = vmatprep.mubr.f32.mxu0 0.0
    %8805 = vmatmul.mubr.f32.gmra.mrb[0].mxu0 %v6640
    %v8806 = vpop.f32.mrb[0].mxu0
    %v8807 = vadd.f32 %v8422, %v8806
    %v8808 = vpop.f32.mrb[0].mxu0
    %8809 = vmatprep.mubr.f32.mxu0 0.0
    %8810 = vmatmul.mubr.f32.gmra.mrb[0].mxu0 %v6649
    %v8811 = vpop.f32.mrb[0].mxu0
    %v8812 = vadd.f32 %v8427, %v8811
    %v8813 = vpop.f32.mrb[0].mxu0
    %8814 = vmatprep.mubr.f32.mxu0 0.0
    %8815 = vmatmul.mubr.f32.gmra.mrb[0].mxu0 %v6658
    %v8816 = vpop.f32.mrb[0].mxu0
    %v8817 = vadd.f32 %v8432, %v8816
    %v8818 = vpop.f32.mrb[0].mxu0
    %8819 = vmatprep.mubr.f32.mxu0 0.0
    %8820 = vmatmul.mubr.f32.gmra.mrb[0].mxu0 %v6667
    %v8821 = vpop.f32.mrb[0].mxu0
    %v8822 = vadd.f32 %v8437, %v8821
    %v8823 = vpop.f32.mrb[0].mxu0
    %8824 = vmatprep.mubr.f32.mxu0 0.0
    %8825 = vmatmul.mubr.f32.gmra.mrb[0].mxu0 %v6676
    %v8826 = vpop.f32.mrb[0].mxu0
    %v8827 = vadd.f32 %v8442, %v8826
    %v8828 = vpop.f32.mrb[0].mxu0
    %8829 = vmatprep.mubr.f32.mxu0 0.0
    %8830 = vmatmul.mubr.f32.gmra.mrb[0].mxu0 %v6685
    %v8831 = vpop.f32.mrb[0].mxu0
    %v8832 = vadd.f32 %v8447, %v8831
    %v8833 = vpop.f32.mrb[0].mxu0
    %8834 = vmatprep.mubr.f32.mxu0 0.0
    %8835 = vmatmul.mubr.f32.gmra.mrb[0].mxu0 %v6694
    %v8836 = vpop.f32.mrb[0].mxu0
    %v8837 = vadd.f32 %v8452, %v8836
    %v8838 = vpop.f32.mrb[0].mxu0
    %8839 = vmatprep.mubr.f32.mxu0 0.0
    %8840 = vmatmul.mubr.f32.gmra.mrb[0].mxu0 %v6703
    %v8841 = vpop.f32.mrb[0].mxu0
    %v8842 = vadd.f32 %v8457, %v8841
    %v8843 = vpop.f32.mrb[0].mxu0
    %8844 = vmatprep.mubr.f32.mxu0 0.0
    %8845 = vmatmul.mubr.f32.gmra.mrb[0].mxu0 %v6712
    %v8846 = vpop.f32.mrb[0].mxu0
    %v8847 = vadd.f32 %v8462, %v8846
    %v8848 = vpop.f32.mrb[0].mxu0
    %8849 = vmatprep.mubr.f32.mxu0 0.0
    %8850 = vmatmul.mubr.f32.gmra.mrb[0].mxu0 %v6721
    %v8851 = vpop.f32.mrb[0].mxu0
    %v8852 = vadd.f32 %v8467, %v8851
    %v8853 = vpop.f32.mrb[0].mxu0
    %8854 = vmatprep.mubr.f32.mxu0 0.0
    %8855 = vmatmul.mubr.f32.gmra.mrb[0].mxu0 %v6730
    %v8856 = vpop.f32.mrb[0].mxu0
    %v8857 = vadd.f32 %v8472, %v8856
    %v8858 = vpop.f32.mrb[0].mxu0
    %8859 = vmatprep.mubr.f32.mxu0 0.0
    %8860 = vmatmul.mubr.f32.gmra.mrb[0].mxu0 %v6739
    %v8861 = vpop.f32.mrb[0].mxu0
    %v8862 = vadd.f32 %v8477, %v8861
    %v8863 = vpop.f32.mrb[0].mxu0
    %8864 = vmatprep.mubr.f32.mxu0 0.0
    %8865 = vmatmul.mubr.f32.gmra.mrb[0].mxu0 %v6748
    %v8866 = vpop.f32.mrb[0].mxu0
    %v8867 = vadd.f32 %v8482, %v8866
    %v8868 = vpop.f32.mrb[0].mxu0
    %8869 = vmatprep.mubr.f32.mxu0 0.0
    %8870 = vmatmul.mubr.f32.gmra.mrb[0].mxu0 %v6757
    %v8871 = vpop.f32.mrb[0].mxu0
    %v8872 = vadd.f32 %v8487, %v8871
    %v8873 = vpop.f32.mrb[0].mxu0
    %8874 = vmatprep.mubr.f32.mxu0 0.0
    %8875 = vmatmul.mubr.f32.gmra.mrb[0].mxu0 %v6766
    %v8876 = vpop.f32.mrb[0].mxu0
    %v8877 = vadd.f32 %v8492, %v8876
    %v8878 = vpop.f32.mrb[0].mxu0
    %8879 = vmatprep.mubr.f32.mxu0 0.0
    %8880 = vmatmul.mubr.f32.gmra.mrb[0].mxu0 %v6775
    %v8881 = vpop.f32.mrb[0].mxu0
    %v8882 = vadd.f32 %v8497, %v8881
    %v8883 = vpop.f32.mrb[0].mxu0
    %8884 = vmatprep.mubr.f32.mxu0 0.0
    %8885 = vmatmul.mubr.f32.gmra.mrb[0].mxu0 %v6784
    %v8886 = vpop.f32.mrb[0].mxu0
    %v8887 = vadd.f32 %v8502, %v8886
    %v8888 = vpop.f32.mrb[0].mxu0
    %8889 = vmatprep.mubr.f32.mxu0 0.0
    %8890 = vmatmul.mubr.f32.gmra.mrb[0].mxu0 %v6793
    %v8891 = vpop.f32.mrb[0].mxu0
    %v8892 = vadd.f32 %v8507, %v8891
    %v8893 = vpop.f32.mrb[0].mxu0
    %8894 = vmatprep.mubr.f32.mxu0 0.0
    %8895 = vmatmul.mubr.f32.gmra.mrb[0].mxu0 %v6802
    %v8896 = vpop.f32.mrb[0].mxu0
    %v8897 = vadd.f32 %v8512, %v8896
    %v8898 = vpop.f32.mrb[0].mxu0
    %8899 = vmatprep.mubr.f32.mxu0 0.0
    %8900 = vmatmul.mubr.f32.gmra.mrb[0].mxu0 %v6811
    %v8901 = vpop.f32.mrb[0].mxu0
    %v8902 = vadd.f32 %v8517, %v8901
    %v8903 = vpop.f32.mrb[0].mxu0
    %8904 = vmatprep.mubr.f32.mxu0 0.0
    %8905 = vmatmul.mubr.f32.gmra.mrb[0].mxu0 %v6820
    %v8906 = vpop.f32.mrb[0].mxu0
    %v8907 = vadd.f32 %v8522, %v8906
    %v8908 = vpop.f32.mrb[0].mxu0
    %8909 = vmatprep.mubr.f32.mxu0 0.0
    %8910 = vmatmul.mubr.f32.gmra.mrb[0].mxu0 %v6829
    %v8911 = vpop.f32.mrb[0].mxu0
    %v8912 = vadd.f32 %v8527, %v8911
    %v8913 = vpop.f32.mrb[0].mxu0
    %8914 = vmatprep.mubr.f32.mxu0 0.0
    %8915 = vmatmul.mubr.f32.gmra.mrb[0].mxu0 %v6838
    %v8916 = vpop.f32.mrb[0].mxu0
    %v8917 = vadd.f32 %v8532, %v8916
    %v8918 = vpop.f32.mrb[0].mxu0
    %8919 = vmatprep.mubr.f32.mxu0 0.0
    %8920 = vmatmul.mubr.f32.gmra.mrb[0].mxu0 %v6847
    %v8921 = vpop.f32.mrb[0].mxu0
    %v8922 = vadd.f32 %v8537, %v8921
    %v8923 = vpop.f32.mrb[0].mxu0
    %8924 = vmatprep.mubr.f32.mxu0 0.0
    %8925 = vmatmul.mubr.f32.gmra.mrb[0].mxu0 %v6856
    %v8926 = vpop.f32.mrb[0].mxu0
    %v8927 = vadd.f32 %v8542, %v8926
    %v8928 = vpop.f32.mrb[0].mxu0
    %8929 = vmatprep.mubr.f32.mxu0 0.0
    %8930 = vmatmul.mubr.f32.gmra.mrb[0].mxu0 %v6865
    %v8931 = vpop.f32.mrb[0].mxu0
    %v8932 = vadd.f32 %v8547, %v8931
    %v8933 = vpop.f32.mrb[0].mxu0
    %8934 = vdwg.mxu0
    %v8935 = vadd.f32 %v8617, %v8622
    %v8936 = vadd.f32 %v8935, %v8627
    %v8937 = vadd.f32 %v8936, %v8632
    %v8938 = vadd.f32 %v8937, %v8637
    %v8939 = vadd.f32 %v8938, %v8642
    %v8940 = vadd.f32 %v8939, %v8647
    %v8941 = vadd.f32 %v8940, %v8652
    %v8942 = vadd.f32 %v8941, %v8657
    %v8943 = vadd.f32 %v8942, %v8662
    %v8944 = vadd.f32 %v8943, %v8667
    %v8945 = vadd.f32 %v8944, %v8672
    %v8946 = vadd.f32 %v8945, %v8677
    %v8947 = vadd.f32 %v8946, %v8682
    %v8948 = vadd.f32 %v8947, %v8687
    %v8949 = vadd.f32 %v8948, %v8692
    %v8950 = vadd.f32 %v8949, %v8697
    %v8951 = vadd.f32 %v8950, %v8702
    %v8952 = vadd.f32 %v8951, %v8707
    %v8953 = vadd.f32 %v8952, %v8712
    %v8954 = vadd.f32 %v8953, %v8717
    %v8955 = vadd.f32 %v8954, %v8722
    %v8956 = vadd.f32 %v8955, %v8727
    %v8957 = vadd.f32 %v8956, %v8732
    %v8958 = vadd.f32 %v8957, %v8737
    %v8959 = vadd.f32 %v8958, %v8742
    %v8960 = vadd.f32 %v8959, %v8747
    %v8961 = vadd.f32 %v8960, %v8752
    %v8962 = vadd.f32 %v8961, %v8757
    %v8963 = vadd.f32 %v8962, %v8762
    %v8964 = vadd.f32 %v8963, %v8767
    %v8965 = vadd.f32 %v8964, %v8772
    %v8966 = vadd.f32 %v8965, %v8777
    %v8967 = vadd.f32 %v8966, %v8782
    %v8968 = vadd.f32 %v8967, %v8787
    %v8969 = vadd.f32 %v8968, %v8792
    %v8970 = vadd.f32 %v8969, %v8797
    %v8971 = vadd.f32 %v8970, %v8802
    %v8972 = vadd.f32 %v8971, %v8807
    %v8973 = vadd.f32 %v8972, %v8812
    %v8974 = vadd.f32 %v8973, %v8817
    %v8975 = vadd.f32 %v8974, %v8822
    %v8976 = vadd.f32 %v8975, %v8827
    %v8977 = vadd.f32 %v8976, %v8832
    %v8978 = vadd.f32 %v8977, %v8837
    %v8979 = vadd.f32 %v8978, %v8842
    %v8980 = vadd.f32 %v8979, %v8847
    %v8981 = vadd.f32 %v8980, %v8852
    %v8982 = vadd.f32 %v8981, %v8857
    %v8983 = vadd.f32 %v8982, %v8862
    %v8984 = vadd.f32 %v8983, %v8867
    %v8985 = vadd.f32 %v8984, %v8872
    %v8986 = vadd.f32 %v8985, %v8877
    %v8987 = vadd.f32 %v8986, %v8882
    %v8988 = vadd.f32 %v8987, %v8887
    %v8989 = vadd.f32 %v8988, %v8892
    %v8990 = vadd.f32 %v8989, %v8897
    %v8991 = vadd.f32 %v8990, %v8902
    %v8992 = vadd.f32 %v8991, %v8907
    %v8993 = vadd.f32 %v8992, %v8912
    %v8994 = vadd.f32 %v8993, %v8917
    %v8995 = vadd.f32 %v8994, %v8922
    %v8996 = vadd.f32 %v8995, %v8927
    %v8997 = vadd.f32 %v8996, %v8932
    %v8998 = vrot.slane %v8997, 4
    %v8999 = vadd.f32 %v8997, %v8998
    %v9000 = vrot.slane %v8999, 2
    %v9001 = vadd.f32 %v8999, %v9000
    %v9002 = vrot.slane %v9001, 1
    %v9003 = vadd.f32 %v9001, %v9002
    %v9004 = vmul.f32 %v8617, %v8617
    %v9005 = vmul.f32 %v8622, %v8622
    %v9006 = vmul.f32 %v8627, %v8627
    %v9007 = vmul.f32 %v8632, %v8632
    %v9008 = vmul.f32 %v8637, %v8637
    %v9009 = vmul.f32 %v8642, %v8642
    %v9010 = vmul.f32 %v8647, %v8647
    %v9011 = vmul.f32 %v8652, %v8652
    %v9012 = vmul.f32 %v8657, %v8657
    %v9013 = vmul.f32 %v8662, %v8662
    %v9014 = vmul.f32 %v8667, %v8667
    %v9015 = vmul.f32 %v8672, %v8672
    %v9016 = vmul.f32 %v8677, %v8677
    %v9017 = vmul.f32 %v8682, %v8682
    %v9018 = vmul.f32 %v8687, %v8687
    %v9019 = vmul.f32 %v8692, %v8692
    %v9020 = vmul.f32 %v8697, %v8697
    %v9021 = vmul.f32 %v8702, %v8702
    %v9022 = vmul.f32 %v8707, %v8707
    %v9023 = vmul.f32 %v8712, %v8712
    %v9024 = vmul.f32 %v8717, %v8717
    %v9025 = vmul.f32 %v8722, %v8722
    %v9026 = vmul.f32 %v8727, %v8727
    %v9027 = vmul.f32 %v8732, %v8732
    %v9028 = vmul.f32 %v8737, %v8737
    %v9029 = vmul.f32 %v8742, %v8742
    %v9030 = vmul.f32 %v8747, %v8747
    %v9031 = vmul.f32 %v8752, %v8752
    %v9032 = vmul.f32 %v8757, %v8757
    %v9033 = vmul.f32 %v8762, %v8762
    %v9034 = vmul.f32 %v8767, %v8767
    %v9035 = vmul.f32 %v8772, %v8772
    %v9036 = vmul.f32 %v8777, %v8777
    %v9037 = vmul.f32 %v8782, %v8782
    %v9038 = vmul.f32 %v8787, %v8787
    %v9039 = vmul.f32 %v8792, %v8792
    %v9040 = vmul.f32 %v8797, %v8797
    %v9041 = vmul.f32 %v8802, %v8802
    %v9042 = vmul.f32 %v8807, %v8807
    %v9043 = vmul.f32 %v8812, %v8812
    %v9044 = vmul.f32 %v8817, %v8817
    %v9045 = vmul.f32 %v8822, %v8822
    %v9046 = vmul.f32 %v8827, %v8827
    %v9047 = vmul.f32 %v8832, %v8832
    %v9048 = vmul.f32 %v8837, %v8837
    %v9049 = vmul.f32 %v8842, %v8842
    %v9050 = vmul.f32 %v8847, %v8847
    %v9051 = vmul.f32 %v8852, %v8852
    %v9052 = vmul.f32 %v8857, %v8857
    %v9053 = vmul.f32 %v8862, %v8862
    %v9054 = vmul.f32 %v8867, %v8867
    %v9055 = vmul.f32 %v8872, %v8872
    %v9056 = vmul.f32 %v8877, %v8877
    %v9057 = vmul.f32 %v8882, %v8882
    %v9058 = vmul.f32 %v8887, %v8887
    %v9059 = vmul.f32 %v8892, %v8892
    %v9060 = vmul.f32 %v8897, %v8897
    %v9061 = vmul.f32 %v8902, %v8902
    %v9062 = vmul.f32 %v8907, %v8907
    %v9063 = vmul.f32 %v8912, %v8912
    %v9064 = vmul.f32 %v8917, %v8917
    %v9065 = vmul.f32 %v8922, %v8922
    %v9066 = vmul.f32 %v8927, %v8927
    %v9067 = vmul.f32 %v8932, %v8932
    %v9068 = vadd.f32 %v9004, %v9005
    %v9069 = vadd.f32 %v9068, %v9006
    %v9070 = vadd.f32 %v9069, %v9007
    %v9071 = vadd.f32 %v9070, %v9008
    %v9072 = vadd.f32 %v9071, %v9009
    %v9073 = vadd.f32 %v9072, %v9010
    %v9074 = vadd.f32 %v9073, %v9011
    %v9075 = vadd.f32 %v9074, %v9012
    %v9076 = vadd.f32 %v9075, %v9013
    %v9077 = vadd.f32 %v9076, %v9014
    %v9078 = vadd.f32 %v9077, %v9015
    %v9079 = vadd.f32 %v9078, %v9016
    %v9080 = vadd.f32 %v9079, %v9017
    %v9081 = vadd.f32 %v9080, %v9018
    %v9082 = vadd.f32 %v9081, %v9019
    %v9083 = vadd.f32 %v9082, %v9020
    %v9084 = vadd.f32 %v9083, %v9021
    %v9085 = vadd.f32 %v9084, %v9022
    %v9086 = vadd.f32 %v9085, %v9023
    %v9087 = vadd.f32 %v9086, %v9024
    %v9088 = vadd.f32 %v9087, %v9025
    %v9089 = vadd.f32 %v9088, %v9026
    %v9090 = vadd.f32 %v9089, %v9027
    %v9091 = vadd.f32 %v9090, %v9028
    %v9092 = vadd.f32 %v9091, %v9029
    %v9093 = vadd.f32 %v9092, %v9030
    %v9094 = vadd.f32 %v9093, %v9031
    %v9095 = vadd.f32 %v9094, %v9032
    %v9096 = vadd.f32 %v9095, %v9033
    %v9097 = vadd.f32 %v9096, %v9034
    %v9098 = vadd.f32 %v9097, %v9035
    %v9099 = vadd.f32 %v9098, %v9036
    %v9100 = vadd.f32 %v9099, %v9037
    %v9101 = vadd.f32 %v9100, %v9038
    %v9102 = vadd.f32 %v9101, %v9039
    %v9103 = vadd.f32 %v9102, %v9040
    %v9104 = vadd.f32 %v9103, %v9041
    %v9105 = vadd.f32 %v9104, %v9042
    %v9106 = vadd.f32 %v9105, %v9043
    %v9107 = vadd.f32 %v9106, %v9044
    %v9108 = vadd.f32 %v9107, %v9045
    %v9109 = vadd.f32 %v9108, %v9046
    %v9110 = vadd.f32 %v9109, %v9047
    %v9111 = vadd.f32 %v9110, %v9048
    %v9112 = vadd.f32 %v9111, %v9049
    %v9113 = vadd.f32 %v9112, %v9050
    %v9114 = vadd.f32 %v9113, %v9051
    %v9115 = vadd.f32 %v9114, %v9052
    %v9116 = vadd.f32 %v9115, %v9053
    %v9117 = vadd.f32 %v9116, %v9054
    %v9118 = vadd.f32 %v9117, %v9055
    %v9119 = vadd.f32 %v9118, %v9056
    %v9120 = vadd.f32 %v9119, %v9057
    %v9121 = vadd.f32 %v9120, %v9058
    %v9122 = vadd.f32 %v9121, %v9059
    %v9123 = vadd.f32 %v9122, %v9060
    %v9124 = vadd.f32 %v9123, %v9061
    %v9125 = vadd.f32 %v9124, %v9062
    %v9126 = vadd.f32 %v9125, %v9063
    %v9127 = vadd.f32 %v9126, %v9064
    %v9128 = vadd.f32 %v9127, %v9065
    %v9129 = vadd.f32 %v9128, %v9066
    %v9130 = vadd.f32 %v9129, %v9067
    %v9131 = vrot.slane %v9130, 4
    %v9132 = vadd.f32 %v9130, %v9131
    %v9133 = vrot.slane %v9132, 2
    %v9134 = vadd.f32 %v9132, %v9133
    %v9135 = vrot.slane %v9134, 1
    %v9136 = vadd.f32 %v9134, %v9135
    %v9137 = vmul.f32 %v9003, 0.001953125
    %v9138 = vmul.f32 %v9136, 0.001953125
    %v9139 = vmul.f32 %v9137, %v9137
    %v9140 = vsub.f32 %v9138, %v9139
    %v9141 = vmax.f32 %v9140, 0.0
    %v9142 = vld [vmem:[%s5] sm:$0x1]
    %v9143 = vadd.f32 %v9141, 1e-05
    %v9144 = vrsqrt.pop %v9143
    %v9145 = vmul.f32 %v9142, %v9144
    %v9146 = vld [vmem:[%s6] sm:$0x1]
    %v9147 = vmul.f32 %v9137, %v9145
    %v9148 = vsub.f32 %v9146, %v9147
    %v9150 = vlaneseq
    %v9151 = vshrl.u32 %v9150, 7
    %v9152 = vsub.s32 0, %v9151
    %v9153 = vrot.slane %v9145, %v9152
    %v9155 = vmul.f32 %v8617, %v9153
    %v9156 = vmul.f32 %v8622, %v9153
    %v9157 = vmul.f32 %v8627, %v9153
    %v9158 = vmul.f32 %v8632, %v9153
    %v9159 = vmul.f32 %v8637, %v9153
    %v9160 = vmul.f32 %v8642, %v9153
    %v9161 = vmul.f32 %v8647, %v9153
    %v9162 = vmul.f32 %v8652, %v9153
    %v9163 = vmul.f32 %v8657, %v9153
    %v9164 = vmul.f32 %v8662, %v9153
    %v9165 = vmul.f32 %v8667, %v9153
    %v9166 = vmul.f32 %v8672, %v9153
    %v9167 = vmul.f32 %v8677, %v9153
    %v9168 = vmul.f32 %v8682, %v9153
    %v9169 = vmul.f32 %v8687, %v9153
    %v9170 = vmul.f32 %v8692, %v9153
    %v9171 = vmul.f32 %v8697, %v9153
    %v9172 = vmul.f32 %v8702, %v9153
    %v9173 = vmul.f32 %v8707, %v9153
    %v9174 = vmul.f32 %v8712, %v9153
    %v9175 = vmul.f32 %v8717, %v9153
    %v9176 = vmul.f32 %v8722, %v9153
    %v9177 = vmul.f32 %v8727, %v9153
    %v9178 = vmul.f32 %v8732, %v9153
    %v9179 = vmul.f32 %v8737, %v9153
    %v9180 = vmul.f32 %v8742, %v9153
    %v9181 = vmul.f32 %v8747, %v9153
    %v9182 = vmul.f32 %v8752, %v9153
    %v9183 = vmul.f32 %v8757, %v9153
    %v9184 = vmul.f32 %v8762, %v9153
    %v9185 = vmul.f32 %v8767, %v9153
    %v9186 = vmul.f32 %v8772, %v9153
    %v9187 = vmul.f32 %v8777, %v9153
    %v9188 = vmul.f32 %v8782, %v9153
    %v9189 = vmul.f32 %v8787, %v9153
    %v9190 = vmul.f32 %v8792, %v9153
    %v9191 = vmul.f32 %v8797, %v9153
    %v9192 = vmul.f32 %v8802, %v9153
    %v9193 = vmul.f32 %v8807, %v9153
    %v9194 = vmul.f32 %v8812, %v9153
    %v9195 = vmul.f32 %v8817, %v9153
    %v9196 = vmul.f32 %v8822, %v9153
    %v9197 = vmul.f32 %v8827, %v9153
    %v9198 = vmul.f32 %v8832, %v9153
    %v9199 = vmul.f32 %v8837, %v9153
    %v9200 = vmul.f32 %v8842, %v9153
    %v9201 = vmul.f32 %v8847, %v9153
    %v9202 = vmul.f32 %v8852, %v9153
    %v9203 = vmul.f32 %v8857, %v9153
    %v9204 = vmul.f32 %v8862, %v9153
    %v9205 = vmul.f32 %v8867, %v9153
    %v9206 = vmul.f32 %v8872, %v9153
    %v9207 = vmul.f32 %v8877, %v9153
    %v9208 = vmul.f32 %v8882, %v9153
    %v9209 = vmul.f32 %v8887, %v9153
    %v9210 = vmul.f32 %v8892, %v9153
    %v9211 = vmul.f32 %v8897, %v9153
    %v9212 = vmul.f32 %v8902, %v9153
    %v9213 = vmul.f32 %v8907, %v9153
    %v9214 = vmul.f32 %v8912, %v9153
    %v9215 = vmul.f32 %v8917, %v9153
    %v9216 = vmul.f32 %v8922, %v9153
    %v9217 = vmul.f32 %v8927, %v9153
    %v9218 = vmul.f32 %v8932, %v9153
    %v9220 = vlaneseq
    %v9221 = vshrl.u32 %v9220, 7
    %v9222 = vsub.s32 0, %v9221
    %v9223 = vrot.slane %v9148, %v9222
    %v9225 = vadd.f32 %v9155, %v9223
    %v9226 = vadd.f32 %v9156, %v9223
    %v9227 = vadd.f32 %v9157, %v9223
    %v9228 = vadd.f32 %v9158, %v9223
    %v9229 = vadd.f32 %v9159, %v9223
    %v9230 = vadd.f32 %v9160, %v9223
    %v9231 = vadd.f32 %v9161, %v9223
    %v9232 = vadd.f32 %v9162, %v9223
    %v9233 = vadd.f32 %v9163, %v9223
    %v9234 = vadd.f32 %v9164, %v9223
    %v9235 = vadd.f32 %v9165, %v9223
    %v9236 = vadd.f32 %v9166, %v9223
    %v9237 = vadd.f32 %v9167, %v9223
    %v9238 = vadd.f32 %v9168, %v9223
    %v9239 = vadd.f32 %v9169, %v9223
    %v9240 = vadd.f32 %v9170, %v9223
    %v9241 = vadd.f32 %v9171, %v9223
    %v9242 = vadd.f32 %v9172, %v9223
    %v9243 = vadd.f32 %v9173, %v9223
    %v9244 = vadd.f32 %v9174, %v9223
    %v9245 = vadd.f32 %v9175, %v9223
    %v9246 = vadd.f32 %v9176, %v9223
    %v9247 = vadd.f32 %v9177, %v9223
    %v9248 = vadd.f32 %v9178, %v9223
    %v9249 = vadd.f32 %v9179, %v9223
    %v9250 = vadd.f32 %v9180, %v9223
    %v9251 = vadd.f32 %v9181, %v9223
    %v9252 = vadd.f32 %v9182, %v9223
    %v9253 = vadd.f32 %v9183, %v9223
    %v9254 = vadd.f32 %v9184, %v9223
    %v9255 = vadd.f32 %v9185, %v9223
    %v9256 = vadd.f32 %v9186, %v9223
    %v9257 = vadd.f32 %v9187, %v9223
    %v9258 = vadd.f32 %v9188, %v9223
    %v9259 = vadd.f32 %v9189, %v9223
    %v9260 = vadd.f32 %v9190, %v9223
    %v9261 = vadd.f32 %v9191, %v9223
    %v9262 = vadd.f32 %v9192, %v9223
    %v9263 = vadd.f32 %v9193, %v9223
    %v9264 = vadd.f32 %v9194, %v9223
    %v9265 = vadd.f32 %v9195, %v9223
    %v9266 = vadd.f32 %v9196, %v9223
    %v9267 = vadd.f32 %v9197, %v9223
    %v9268 = vadd.f32 %v9198, %v9223
    %v9269 = vadd.f32 %v9199, %v9223
    %v9270 = vadd.f32 %v9200, %v9223
    %v9271 = vadd.f32 %v9201, %v9223
    %v9272 = vadd.f32 %v9202, %v9223
    %v9273 = vadd.f32 %v9203, %v9223
    %v9274 = vadd.f32 %v9204, %v9223
    %v9275 = vadd.f32 %v9205, %v9223
    %v9276 = vadd.f32 %v9206, %v9223
    %v9277 = vadd.f32 %v9207, %v9223
    %v9278 = vadd.f32 %v9208, %v9223
    %v9279 = vadd.f32 %v9209, %v9223
    %v9280 = vadd.f32 %v9210, %v9223
    %v9281 = vadd.f32 %v9211, %v9223
    %v9282 = vadd.f32 %v9212, %v9223
    %v9283 = vadd.f32 %v9213, %v9223
    %v9284 = vadd.f32 %v9214, %v9223
    %v9285 = vadd.f32 %v9215, %v9223
    %v9286 = vadd.f32 %v9216, %v9223
    %v9287 = vadd.f32 %v9217, %v9223
    %v9288 = vadd.f32 %v9218, %v9223
    %v9289 = vadd.f32 %v9225, %v475
    %v9290 = vadd.f32 %v9226, %v480
    %v9291 = vadd.f32 %v9227, %v485
    %v9292 = vadd.f32 %v9228, %v490
    %v9293 = vadd.f32 %v9229, %v495
    %v9294 = vadd.f32 %v9230, %v500
    %v9295 = vadd.f32 %v9231, %v505
    %v9296 = vadd.f32 %v9232, %v510
    %v9297 = vadd.f32 %v9233, %v515
    %v9298 = vadd.f32 %v9234, %v520
    %v9299 = vadd.f32 %v9235, %v525
    %v9300 = vadd.f32 %v9236, %v530
    %v9301 = vadd.f32 %v9237, %v535
    %v9302 = vadd.f32 %v9238, %v540
    %v9303 = vadd.f32 %v9239, %v545
    %v9304 = vadd.f32 %v9240, %v550
    %v9305 = vadd.f32 %v9241, %v555
    %v9306 = vadd.f32 %v9242, %v560
    %v9307 = vadd.f32 %v9243, %v565
    %v9308 = vadd.f32 %v9244, %v570
    %v9309 = vadd.f32 %v9245, %v575
    %v9310 = vadd.f32 %v9246, %v580
    %v9311 = vadd.f32 %v9247, %v585
    %v9312 = vadd.f32 %v9248, %v590
    %v9313 = vadd.f32 %v9249, %v595
    %v9314 = vadd.f32 %v9250, %v600
    %v9315 = vadd.f32 %v9251, %v605
    %v9316 = vadd.f32 %v9252, %v610
    %v9317 = vadd.f32 %v9253, %v615
    %v9318 = vadd.f32 %v9254, %v620
    %v9319 = vadd.f32 %v9255, %v625
    %v9320 = vadd.f32 %v9256, %v630
    %v9321 = vadd.f32 %v9257, %v635
    %v9322 = vadd.f32 %v9258, %v640
    %v9323 = vadd.f32 %v9259, %v645
    %v9324 = vadd.f32 %v9260, %v650
    %v9325 = vadd.f32 %v9261, %v655
    %v9326 = vadd.f32 %v9262, %v660
    %v9327 = vadd.f32 %v9263, %v665
    %v9328 = vadd.f32 %v9264, %v670
    %v9329 = vadd.f32 %v9265, %v675
    %v9330 = vadd.f32 %v9266, %v680
    %v9331 = vadd.f32 %v9267, %v685
    %v9332 = vadd.f32 %v9268, %v690
    %v9333 = vadd.f32 %v9269, %v695
    %v9334 = vadd.f32 %v9270, %v700
    %v9335 = vadd.f32 %v9271, %v705
    %v9336 = vadd.f32 %v9272, %v710
    %v9337 = vadd.f32 %v9273, %v715
    %v9338 = vadd.f32 %v9274, %v720
    %v9339 = vadd.f32 %v9275, %v725
    %v9340 = vadd.f32 %v9276, %v730
    %v9341 = vadd.f32 %v9277, %v735
    %v9342 = vadd.f32 %v9278, %v740
    %v9343 = vadd.f32 %v9279, %v745
    %v9344 = vadd.f32 %v9280, %v750
    %v9345 = vadd.f32 %v9281, %v755
    %v9346 = vadd.f32 %v9282, %v760
    %v9347 = vadd.f32 %v9283, %v765
    %v9348 = vadd.f32 %v9284, %v770
    %v9349 = vadd.f32 %v9285, %v775
    %v9350 = vadd.f32 %v9286, %v780
    %v9351 = vadd.f32 %v9287, %v785
    %v9352 = vadd.f32 %v9288, %v790
    %v9353 = vmax.f32 %v9289, 0.0
    %v9354 = vmax.f32 %v9290, 0.0
    %v9355 = vmax.f32 %v9291, 0.0
    %v9356 = vmax.f32 %v9292, 0.0
    %v9357 = vmax.f32 %v9293, 0.0
    %v9358 = vmax.f32 %v9294, 0.0
    %v9359 = vmax.f32 %v9295, 0.0
    %v9360 = vmax.f32 %v9296, 0.0
    %v9361 = vmax.f32 %v9297, 0.0
    %v9362 = vmax.f32 %v9298, 0.0
    %v9363 = vmax.f32 %v9299, 0.0
    %v9364 = vmax.f32 %v9300, 0.0
    %v9365 = vmax.f32 %v9301, 0.0
    %v9366 = vmax.f32 %v9302, 0.0
    %v9367 = vmax.f32 %v9303, 0.0
    %v9368 = vmax.f32 %v9304, 0.0
    %v9369 = vmax.f32 %v9305, 0.0
    %v9370 = vmax.f32 %v9306, 0.0
    %v9371 = vmax.f32 %v9307, 0.0
    %v9372 = vmax.f32 %v9308, 0.0
    %v9373 = vmax.f32 %v9309, 0.0
    %v9374 = vmax.f32 %v9310, 0.0
    %v9375 = vmax.f32 %v9311, 0.0
    %v9376 = vmax.f32 %v9312, 0.0
    %v9377 = vmax.f32 %v9313, 0.0
    %v9378 = vmax.f32 %v9314, 0.0
    %v9379 = vmax.f32 %v9315, 0.0
    %v9380 = vmax.f32 %v9316, 0.0
    %v9381 = vmax.f32 %v9317, 0.0
    %v9382 = vmax.f32 %v9318, 0.0
    %v9383 = vmax.f32 %v9319, 0.0
    %v9384 = vmax.f32 %v9320, 0.0
    %v9385 = vmax.f32 %v9321, 0.0
    %v9386 = vmax.f32 %v9322, 0.0
    %v9387 = vmax.f32 %v9323, 0.0
    %v9388 = vmax.f32 %v9324, 0.0
    %v9389 = vmax.f32 %v9325, 0.0
    %v9390 = vmax.f32 %v9326, 0.0
    %v9391 = vmax.f32 %v9327, 0.0
    %v9392 = vmax.f32 %v9328, 0.0
    %v9393 = vmax.f32 %v9329, 0.0
    %v9394 = vmax.f32 %v9330, 0.0
    %v9395 = vmax.f32 %v9331, 0.0
    %v9396 = vmax.f32 %v9332, 0.0
    %v9397 = vmax.f32 %v9333, 0.0
    %v9398 = vmax.f32 %v9334, 0.0
    %v9399 = vmax.f32 %v9335, 0.0
    %v9400 = vmax.f32 %v9336, 0.0
    %v9401 = vmax.f32 %v9337, 0.0
    %v9402 = vmax.f32 %v9338, 0.0
    %v9403 = vmax.f32 %v9339, 0.0
    %v9404 = vmax.f32 %v9340, 0.0
    %v9405 = vmax.f32 %v9341, 0.0
    %v9406 = vmax.f32 %v9342, 0.0
    %v9407 = vmax.f32 %v9343, 0.0
    %v9408 = vmax.f32 %v9344, 0.0
    %v9409 = vmax.f32 %v9345, 0.0
    %v9410 = vmax.f32 %v9346, 0.0
    %v9411 = vmax.f32 %v9347, 0.0
    %v9412 = vmax.f32 %v9348, 0.0
    %v9413 = vmax.f32 %v9349, 0.0
    %v9414 = vmax.f32 %v9350, 0.0
    %v9415 = vmax.f32 %v9351, 0.0
    %v9416 = vmax.f32 %v9352, 0.0
    %9417 = vst [vmem:[#allocation9] sm:$0xff] %v9353
    %9418 = vst [vmem:[#allocation9 + $0x8] sm:$0xff] %v9354
    %9419 = vst [vmem:[#allocation9 + $0x10] sm:$0xff] %v9355
    %9420 = vst [vmem:[#allocation9 + $0x18] sm:$0xff] %v9356
    %9421 = vst [vmem:[#allocation9 + $0x20] sm:$0xff] %v9357
    %9422 = vst [vmem:[#allocation9 + $0x28] sm:$0xff] %v9358
    %9423 = vst [vmem:[#allocation9 + $0x30] sm:$0xff] %v9359
    %9424 = vst [vmem:[#allocation9 + $0x38] sm:$0xff] %v9360
    %9425 = vst [vmem:[#allocation9 + $0x40] sm:$0xff] %v9361
    %9426 = vst [vmem:[#allocation9 + $0x48] sm:$0xff] %v9362
    %9427 = vst [vmem:[#allocation9 + $0x50] sm:$0xff] %v9363
    %9428 = vst [vmem:[#allocation9 + $0x58] sm:$0xff] %v9364
    %9429 = vst [vmem:[#allocation9 + $0x60] sm:$0xff] %v9365
    %9430 = vst [vmem:[#allocation9 + $0x68] sm:$0xff] %v9366
    %9431 = vst [vmem:[#allocation9 + $0x70] sm:$0xff] %v9367
    %9432 = vst [vmem:[#allocation9 + $0x78] sm:$0xff] %v9368
    %9433 = vst [vmem:[#allocation9 + $0x80] sm:$0xff] %v9369
    %9434 = vst [vmem:[#allocation9 + $0x88] sm:$0xff] %v9370
    %9435 = vst [vmem:[#allocation9 + $0x90] sm:$0xff] %v9371
    %9436 = vst [vmem:[#allocation9 + $0x98] sm:$0xff] %v9372
    %9437 = vst [vmem:[#allocation9 + $0xa0] sm:$0xff] %v9373
    %9438 = vst [vmem:[#allocation9 + $0xa8] sm:$0xff] %v9374
    %9439 = vst [vmem:[#allocation9 + $0xb0] sm:$0xff] %v9375
    %9440 = vst [vmem:[#allocation9 + $0xb8] sm:$0xff] %v9376
    %9441 = vst [vmem:[#allocation9 + $0xc0] sm:$0xff] %v9377
    %9442 = vst [vmem:[#allocation9 + $0xc8] sm:$0xff] %v9378
    %9443 = vst [vmem:[#allocation9 + $0xd0] sm:$0xff] %v9379
    %9444 = vst [vmem:[#allocation9 + $0xd8] sm:$0xff] %v9380
    %9445 = vst [vmem:[#allocation9 + $0xe0] sm:$0xff] %v9381
    %9446 = vst [vmem:[#allocation9 + $0xe8] sm:$0xff] %v9382
    %9447 = vst [vmem:[#allocation9 + $0xf0] sm:$0xff] %v9383
    %9448 = vst [vmem:[#allocation9 + $0xf8] sm:$0xff] %v9384
    %9449 = vst [vmem:[#allocation9 + $0x100] sm:$0xff] %v9385
    %9450 = vst [vmem:[#allocation9 + $0x108] sm:$0xff] %v9386
    %9451 = vst [vmem:[#allocation9 + $0x110] sm:$0xff] %v9387
    %9452 = vst [vmem:[#allocation9 + $0x118] sm:$0xff] %v9388
    %9453 = vst [vmem:[#allocation9 + $0x120] sm:$0xff] %v9389
    %9454 = vst [vmem:[#allocation9 + $0x128] sm:$0xff] %v9390
    %9455 = vst [vmem:[#allocation9 + $0x130] sm:$0xff] %v9391
    %9456 = vst [vmem:[#allocation9 + $0x138] sm:$0xff] %v9392
    %9457 = vst [vmem:[#allocation9 + $0x140] sm:$0xff] %v9393
    %9458 = vst [vmem:[#allocation9 + $0x148] sm:$0xff] %v9394
    %9459 = vst [vmem:[#allocation9 + $0x150] sm:$0xff] %v9395
    %9460 = vst [vmem:[#allocation9 + $0x158] sm:$0xff] %v9396
    %9461 = vst [vmem:[#allocation9 + $0x160] sm:$0xff] %v9397
    %9462 = vst [vmem:[#allocation9 + $0x168] sm:$0xff] %v9398
    %9463 = vst [vmem:[#allocation9 + $0x170] sm:$0xff] %v9399
    %9464 = vst [vmem:[#allocation9 + $0x178] sm:$0xff] %v9400
    %9465 = vst [vmem:[#allocation9 + $0x180] sm:$0xff] %v9401
    %9466 = vst [vmem:[#allocation9 + $0x188] sm:$0xff] %v9402
    %9467 = vst [vmem:[#allocation9 + $0x190] sm:$0xff] %v9403
    %9468 = vst [vmem:[#allocation9 + $0x198] sm:$0xff] %v9404
    %9469 = vst [vmem:[#allocation9 + $0x1a0] sm:$0xff] %v9405
    %9470 = vst [vmem:[#allocation9 + $0x1a8] sm:$0xff] %v9406
    %9471 = vst [vmem:[#allocation9 + $0x1b0] sm:$0xff] %v9407
    %9472 = vst [vmem:[#allocation9 + $0x1b8] sm:$0xff] %v9408
    %9473 = vst [vmem:[#allocation9 + $0x1c0] sm:$0xff] %v9409
    %9474 = vst [vmem:[#allocation9 + $0x1c8] sm:$0xff] %v9410
    %9475 = vst [vmem:[#allocation9 + $0x1d0] sm:$0xff] %v9411
    %9476 = vst [vmem:[#allocation9 + $0x1d8] sm:$0xff] %v9412
    %9477 = vst [vmem:[#allocation9 + $0x1e0] sm:$0xff] %v9413
    %9478 = vst [vmem:[#allocation9 + $0x1e8] sm:$0xff] %v9414
    %9479 = vst [vmem:[#allocation9 + $0x1f0] sm:$0xff] %v9415
    %9480 = vst [vmem:[#allocation9 + $0x1f8] sm:$0xff] %v9416
    // Predicated region
    $region38: #{tpu_custom_call.1} parent=1 // pred_check
      _
    $region39: #{tpu_custom_call.1} parent=1 // pred_check_branch
      %9482 = sbr.rel (0) target = $region41
    $region40: #{tpu_custom_call.1} parent=1 // pred_region
      %s9484 = ssub.s32 8192, 8192
      %9485 = vsyncadd [#allocation6], %s9484
      %s9486 = sshll.u32 [#allocation9], 4
      %s9487 = int_to_ptr.vmem [resolvable:$true] %s9486
      %9492 = dma.vmem_to_hbm [thread:$0]  %s9487, 8192, %s7, [#allocation6], 128, 128, 8
    $region41: #{tpu_custom_call.1} parent=1 // pred_fallthru
      _
    // Predicated region
    $region42: #{tpu_custom_call.1} parent=1 // pred_check
      _
    $region43: #{tpu_custom_call.1} parent=1 // pred_check_branch
      %9494 = sbr.rel (0) target = $region45
    $region44: #{tpu_custom_call.1} parent=1 // pred_region
      %9495 = dma.done [#allocation6], 8192
    $region45: #{tpu_custom_call.1} parent=1 // pred_fallthru
      _
    %9496 = vsyncpa [#allocation5], 1
    %9497 = vsyncpa [#allocation8], 1
    %9498 = vsyncpa [#allocation6], 1

</llo_original>
